<compile_context>
chip_gen: v6e
topology: v6e:2x2x1
jax: 0.10.0
libtpu: 0.0.40
codegen_flags: <defaults>
</compile_context>

<pallas_src>
import math

import jax
import jax.numpy as jnp
from jax.experimental import pallas as pl
from jax.experimental.pallas import tpu as pltpu


def _sigmoid(v):
    return 1.0 / (1.0 + jnp.exp(-v))


def _mamba_layer_kernel(x_ref, gamma_ref, beta_ref, win_x_ref, win_z_ref,
                        convw_ref, convb_ref, wxdt_ref, wxb_ref, wxc_ref,
                        wdt_ref, bdt_ref, aflat_ref, dvec_ref, wout_ref,
                        erep_ref, fred_ref,
                        out_ref,
                        xpad_s, da_s, db_s, h_s):
    L = x_ref.shape[1]
    d_conv, d_inner = convw_ref.shape
    d_state = erep_ref.shape[0]
    SD = d_state * d_inner
    pad_rows = xpad_s.shape[0] - L

    x = x_ref[0]                                              # (L, C)

    # ---------- LayerNorm over channels (eps = 1e-5, PyTorch default) ----------
    mu = jnp.mean(x, axis=-1, keepdims=True)
    xm = x - mu
    var = jnp.mean(xm * xm, axis=-1, keepdims=True)
    x_n = xm * jax.lax.rsqrt(var + 1e-5) * gamma_ref[...] + beta_ref[...]

    # ---------- in_proj (no bias), weights pre-split in the wrapper ----------
    x_in = jnp.dot(x_n, win_x_ref[...], preferred_element_type=jnp.float32)   # (L, d_inner)
    z    = jnp.dot(x_n, win_z_ref[...], preferred_element_type=jnp.float32)   # (L, d_inner)

    # ---------- causal depthwise conv1d via zero-padded scratch + SiLU ----------
    if pad_rows > 0:
        xpad_s[0:pad_rows, :] = jnp.zeros((pad_rows, d_inner), jnp.float32)
    xpad_s[pad_rows:pad_rows + L, :] = x_in
    base = pad_rows - (d_conv - 1)
    conv = jnp.zeros((L, d_inner), jnp.float32)
    for k in range(d_conv):
        conv = conv + convw_ref[k:k + 1, :] * xpad_s[base + k:base + k + L, :]
    conv = conv + convb_ref[...]
    x_c = conv * _sigmoid(conv)                               # SiLU

    # ---------- x_proj (split) and dt_proj + softplus ----------
    dt_in = jnp.dot(x_c, wxdt_ref[...], preferred_element_type=jnp.float32)   # (L, dt_rank)
    b_mat = jnp.dot(x_c, wxb_ref[...], preferred_element_type=jnp.float32)    # (L, d_state)
    c_mat = jnp.dot(x_c, wxc_ref[...], preferred_element_type=jnp.float32)    # (L, d_state)
    dt = jnp.dot(dt_in, wdt_ref[...], preferred_element_type=jnp.float32) + bdt_ref[...]
    dt = jnp.where(dt > 20.0, dt,
                   jnp.log(1.0 + jnp.exp(jnp.minimum(dt, 20.0))))             # softplus

    # ---------- precompute scan coefficients (exp hoisted out of the loop) ----------
    # Flat state layout: column s*d_inner + d <-> (state s, channel d).
    a_row = -jnp.exp(aflat_ref[...])                          # (1, SD)
    dt_rep = jnp.concatenate([dt] * d_state, axis=1)          # (L, SD)
    dbx_rep = jnp.concatenate([dt * x_c] * d_state, axis=1)   # (L, SD)
    b_rep = jnp.dot(b_mat, erep_ref[...], preferred_element_type=jnp.float32)  # (L, SD)
    c_rep = jnp.dot(c_mat, erep_ref[...], preferred_element_type=jnp.float32)  # (L, SD)
    da_s[...] = jnp.exp(dt_rep * a_row)                       # exp(dt * A)
    db_s[...] = dbx_rep * b_rep                               # dt * x * B

    # ---------- sequential selective scan, vectorized over (state, channel) ----------
    blk = 8 if (L % 8 == 0) else 1
    def scan_body(c, h):                                      # h: (1, SD)
        t0 = pl.multiple_of(c * blk, blk)
        da = da_s[pl.ds(t0, blk), :]                          # (blk, SD)
        db = db_s[pl.ds(t0, blk), :]
        rows = []
        for i in range(blk):
            h = da[i:i + 1, :] * h + db[i:i + 1, :]
            rows.append(h)
        h_s[pl.ds(t0, blk), :] = rows[0] if blk == 1 else jnp.concatenate(rows, axis=0)
        return h

    jax.lax.fori_loop(0, L // blk, scan_body, jnp.zeros((1, SD), jnp.float32))

    # ---------- y[t,d] = sum_s h[t,s,d] * C[t,s]  (block reduce via 0/1 matrix) ----------
    y = jnp.dot(h_s[...] * c_rep, fred_ref[...], preferred_element_type=jnp.float32)  # (L, d_inner)
    y = y + dvec_ref[...] * x_c                               # skip term
    y = y * (z * _sigmoid(z))                                 # SiLU gate

    out_ref[0] = jnp.dot(y, wout_ref[...], preferred_element_type=jnp.float32)        # (L, C)


def mamba_layer_forward(x, params):
    """x: (B, C, H, W) float32  ->  (B, C, H, W) float32 (MambaLayer.forward)."""
    B, C, H, W = x.shape
    L = H * W
    x = x.astype(jnp.float32)
    x_flat = jnp.transpose(x.reshape(B, C, L), (0, 2, 1))     # (B, L, C)

    d_inner = params["w_in"].shape[1] // 2
    d_state = params["a_log"].shape[1]
    d_conv = params["conv_w"].shape[0]
    dt_rank = params["w_dt"].shape[0]
    pad_rows = ((d_conv - 1 + 7) // 8) * 8                    # sublane-aligned left pad

    p2 = lambda a: a.reshape(1, -1) if a.ndim == 1 else a

    # Split fused weight matrices in the wrapper (lane-aligned operands in-kernel).
    w_in = params["w_in"]
    w_in_x, w_in_z = w_in[:, :d_inner], w_in[:, d_inner:]
    w_x = params["w_x"]
    w_x_dt = w_x[:, :dt_rank]
    w_x_b = w_x[:, dt_rank:dt_rank + d_state]
    w_x_c = w_x[:, dt_rank + d_state:dt_rank + 2 * d_state]

    # Flattened A (column s*d_inner + d) plus 0/1 replication / reduction matrices.
    a_flat = jnp.transpose(params["a_log"]).reshape(1, d_state * d_inner)
    e_rep = jnp.kron(jnp.eye(d_state, dtype=jnp.float32),
                     jnp.ones((1, d_inner), jnp.float32))               # (S, S*D)
    f_red = jnp.kron(jnp.ones((d_state, 1), jnp.float32),
                     jnp.eye(d_inner, dtype=jnp.float32))               # (S*D, D)

    args = (x_flat,
            p2(params["gamma"]), p2(params["beta"]),
            w_in_x, w_in_z,
            params["conv_w"], p2(params["conv_b"]),
            w_x_dt, w_x_b, w_x_c,
            params["w_dt"], p2(params["b_dt"]),
            a_flat, p2(params["D"]), params["w_out"],
            e_rep, f_red)

    def full_spec(a):
        return pl.BlockSpec(a.shape, lambda b, _n=a.ndim: (0,) * _n)

    in_specs = [pl.BlockSpec((1, L, C), lambda b: (b, 0, 0))]
    in_specs += [full_spec(a) for a in args[1:]]

    out_flat = pl.pallas_call(
        _mamba_layer_kernel,
        out_shape=jax.ShapeDtypeStruct((B, L, C), jnp.float32),
        grid=(B,),
        in_specs=in_specs,
        out_specs=pl.BlockSpec((1, L, C), lambda b: (b, 0, 0)),
        scratch_shapes=[
            pltpu.VMEM((pad_rows + L, d_inner), jnp.float32),           # zero-padded conv input
            pltpu.VMEM((L, d_state * d_inner), jnp.float32),            # exp(dt * A)
            pltpu.VMEM((L, d_state * d_inner), jnp.float32),            # dt * x * B
            pltpu.VMEM((L, d_state * d_inner), jnp.float32),            # scan states h_t
        ],
        compiler_params=pltpu.CompilerParams(
            dimension_semantics=("parallel",),
            vmem_limit_bytes=32 * 1024 * 1024),
    )(*args)

    return jnp.transpose(out_flat, (0, 2, 1)).reshape(B, C, H, W)


def init_params(key, dim, d_state=16, d_conv=4, expand=2):
    """Deterministic synthetic parameters matching the module's shapes."""
    d_inner = expand * dim
    dt_rank = math.ceil(dim / 16)
    ks = jax.random.split(key, 7)
    rnd = lambda k, s, sc: (sc * jax.random.normal(k, s)).astype(jnp.float32)
    return dict(
        gamma=jnp.ones((dim,), jnp.float32),
        beta=jnp.zeros((dim,), jnp.float32),
        w_in=rnd(ks[0], (dim, 2 * d_inner), 1.0 / math.sqrt(dim)),      # Linear(dim, 2*d_inner), no bias
        conv_w=rnd(ks[1], (d_conv, d_inner), 1.0 / math.sqrt(d_conv)),  # depthwise Conv1d (tap, channel)
        conv_b=rnd(ks[2], (d_inner,), 0.1),
        w_x=rnd(ks[3], (d_inner, dt_rank + 2 * d_state), 1.0 / math.sqrt(d_inner)),
        w_dt=rnd(ks[4], (dt_rank, d_inner), 1.0 / math.sqrt(max(dt_rank, 1))),
        b_dt=rnd(ks[5], (d_inner,), 0.1),
        a_log=jnp.log(jnp.broadcast_to(
            jnp.arange(1, d_state + 1, dtype=jnp.float32), (d_inner, d_state))),
        D=jnp.ones((d_inner,), jnp.float32),
        w_out=rnd(ks[6], (d_inner, dim), 1.0 / math.sqrt(d_inner)),     # Linear(d_inner, dim), no bias
    )


def reference_forward(x, p):
    """Pure-JAX reference of MambaLayer.forward (same math, no Pallas)."""
    B, C, H, W = x.shape
    L = H * W
    hp = jax.lax.Precision.HIGHEST
    xf = jnp.transpose(x.reshape(B, C, L), (0, 2, 1))
    mu = xf.mean(-1, keepdims=True)
    var = ((xf - mu) ** 2).mean(-1, keepdims=True)
    xn = (xf - mu) / jnp.sqrt(var + 1e-5) * p["gamma"] + p["beta"]
    xz = jnp.einsum("blc,ce->ble", xn, p["w_in"], precision=hp)
    d_inner = p["w_in"].shape[1] // 2
    x_in, z = xz[..., :d_inner], xz[..., d_inner:]
    K = p["conv_w"].shape[0]
    xpad = jnp.pad(x_in, ((0, 0), (K - 1, 0), (0, 0)))
    conv = sum(p["conv_w"][k] * xpad[:, k:k + L, :] for k in range(K)) + p["conv_b"]
    xc = conv * jax.nn.sigmoid(conv)
    xdbl = jnp.einsum("bld,de->ble", xc, p["w_x"], precision=hp)
    dt_rank = p["w_dt"].shape[0]
    d_state = p["a_log"].shape[1]
    dt = jax.nn.softplus(
        jnp.einsum("blr,rd->bld", xdbl[..., :dt_rank], p["w_dt"], precision=hp) + p["b_dt"])
    Bm = xdbl[..., dt_rank:dt_rank + d_state]
    Cm = xdbl[..., dt_rank + d_state:dt_rank + 2 * d_state]
    A = -jnp.exp(p["a_log"])

    def step(h, inp):
        dt_t, x_t, b_t, c_t = inp
        h = jnp.exp(dt_t[..., None] * A) * h + (dt_t * x_t)[..., None] * b_t[:, None, :]
        return h, jnp.einsum("bds,bs->bd", h, c_t)

    h0 = jnp.zeros((B, d_inner, d_state), jnp.float32)
    _, ys = jax.lax.scan(step, h0, (jnp.swapaxes(dt, 0, 1), jnp.swapaxes(xc, 0, 1),
                                    jnp.swapaxes(Bm, 0, 1), jnp.swapaxes(Cm, 0, 1)))
    y = jnp.swapaxes(ys, 0, 1) + p["D"] * xc
    y = y * (z * jax.nn.sigmoid(z))
    out = jnp.einsum("bld,dc->blc", y, p["w_out"], precision=hp)
    return jnp.transpose(out, (0, 2, 1)).reshape(B, C, H, W)


if __name__ == "__main__":
    key = jax.random.PRNGKey(0)
    kx, kp = jax.random.split(key)

    dim = 4                                   # channel dim of MambaLayer
    x = jax.random.normal(kx, (2, dim, 16, 16), dtype=jnp.float32)
    params = init_params(kp, dim, d_state=16, d_conv=4, expand=2)

    out = jax.jit(mamba_layer_forward)(x, params)
    out = jax.block_until_ready(out)

    assert out.shape == x.shape and out.dtype == jnp.float32
    assert bool(jnp.all(jnp.isfinite(out)))

    ref = reference_forward(x, params)
    max_err = float(jnp.max(jnp.abs(out - ref)))
    assert max_err < 5e-2, f"mismatch vs reference, max abs err = {max_err}"

    print("KERNEL_OK")
</pallas_src>

<mosaic_0001>
module attributes {stable_mosaic.version = 11 : i64} {
  func.func @_mamba_layer_kernel(%arg0: i32, %arg1: memref<1x256x4xf32, #tpu.memory_space<vmem>>, %arg2: memref<1x4xf32, #tpu.memory_space<vmem>>, %arg3: memref<1x4xf32, #tpu.memory_space<vmem>>, %arg4: memref<4x8xf32, #tpu.memory_space<vmem>>, %arg5: memref<4x8xf32, #tpu.memory_space<vmem>>, %arg6: memref<4x8xf32, #tpu.memory_space<vmem>>, %arg7: memref<1x8xf32, #tpu.memory_space<vmem>>, %arg8: memref<8x1xf32, #tpu.memory_space<vmem>>, %arg9: memref<8x16xf32, #tpu.memory_space<vmem>>, %arg10: memref<8x16xf32, #tpu.memory_space<vmem>>, %arg11: memref<1x8xf32, #tpu.memory_space<vmem>>, %arg12: memref<1x8xf32, #tpu.memory_space<vmem>>, %arg13: memref<1x128xf32, #tpu.memory_space<vmem>>, %arg14: memref<1x8xf32, #tpu.memory_space<vmem>>, %arg15: memref<8x4xf32, #tpu.memory_space<vmem>>, %arg16: memref<16x128xf32, #tpu.memory_space<vmem>>, %arg17: memref<128x8xf32, #tpu.memory_space<vmem>>, %arg18: memref<1x256x4xf32, #tpu.memory_space<vmem>>, %arg19: memref<264x8xf32, #tpu.memory_space<vmem>>, %arg20: memref<256x128xf32, #tpu.memory_space<vmem>>, %arg21: memref<256x128xf32, #tpu.memory_space<vmem>>, %arg22: memref<256x128xf32, #tpu.memory_space<vmem>>) attributes {dimension_semantics = [#tpu.dimension_semantics<parallel>], iteration_bounds = array<i64: 2>, scalar_prefetch = 0 : i64, scratch_operands = 4 : i64, tpu.core_type = #tpu.core_type<tc>, window_params = [{transform_indices = @transform_0, window_bounds = array<i64: 1, 256, 4>}, {pipeline_mode = #tpu.pipeline_mode<synchronous>, transform_indices = @transform_1, window_bounds = array<i64: 1, 4>}, {pipeline_mode = #tpu.pipeline_mode<synchronous>, transform_indices = @transform_2, window_bounds = array<i64: 1, 4>}, {pipeline_mode = #tpu.pipeline_mode<synchronous>, transform_indices = @transform_3, window_bounds = array<i64: 4, 8>}, {pipeline_mode = #tpu.pipeline_mode<synchronous>, transform_indices = @transform_4, window_bounds = array<i64: 4, 8>}, {pipeline_mode = #tpu.pipeline_mode<synchronous>, transform_indices = @transform_5, window_bounds = array<i64: 4, 8>}, {pipeline_mode = #tpu.pipeline_mode<synchronous>, transform_indices = @transform_6, window_bounds = array<i64: 1, 8>}, {pipeline_mode = #tpu.pipeline_mode<synchronous>, transform_indices = @transform_7, window_bounds = array<i64: 8, 1>}, {pipeline_mode = #tpu.pipeline_mode<synchronous>, transform_indices = @transform_8, window_bounds = array<i64: 8, 16>}, {pipeline_mode = #tpu.pipeline_mode<synchronous>, transform_indices = @transform_9, window_bounds = array<i64: 8, 16>}, {pipeline_mode = #tpu.pipeline_mode<synchronous>, transform_indices = @transform_10, window_bounds = array<i64: 1, 8>}, {pipeline_mode = #tpu.pipeline_mode<synchronous>, transform_indices = @transform_11, window_bounds = array<i64: 1, 8>}, {pipeline_mode = #tpu.pipeline_mode<synchronous>, transform_indices = @transform_12, window_bounds = array<i64: 1, 128>}, {pipeline_mode = #tpu.pipeline_mode<synchronous>, transform_indices = @transform_13, window_bounds = array<i64: 1, 8>}, {pipeline_mode = #tpu.pipeline_mode<synchronous>, transform_indices = @transform_14, window_bounds = array<i64: 8, 4>}, {pipeline_mode = #tpu.pipeline_mode<synchronous>, transform_indices = @transform_15, window_bounds = array<i64: 16, 128>}, {pipeline_mode = #tpu.pipeline_mode<synchronous>, transform_indices = @transform_16, window_bounds = array<i64: 128, 8>}, {transform_indices = @transform_17, window_bounds = array<i64: 1, 256, 4>}]} {
    %c0 = arith.constant 0 : index
    %c0_0 = arith.constant 0 : index
    %c0_1 = arith.constant 0 : index
    %0 = vector.load %arg1[%c0, %c0_0, %c0_1] : memref<1x256x4xf32, #tpu.memory_space<vmem>>, vector<1x256x4xf32>
    %1 = vector.shape_cast %0 : vector<1x256x4xf32> to vector<256x4xf32>
    %cst = arith.constant dense<0.000000e+00> : vector<256xf32>
    %2 = vector.multi_reduction <add>, %1, %cst [1] : vector<256x4xf32> to vector<256xf32>
    %3 = vector.shape_cast %2 : vector<256xf32> to vector<256x1xf32>
    %cst_2 = arith.constant 4.000000e+00 : f32
    %4 = vector.broadcast %cst_2 : f32 to vector<256x1xf32>
    %5 = arith.divf %3, %4 : vector<256x1xf32>
    %6 = vector.broadcast %5 : vector<256x1xf32> to vector<256x4xf32>
    %7 = arith.subf %1, %6 : vector<256x4xf32>
    %8 = arith.mulf %7, %7 : vector<256x4xf32>
    %cst_3 = arith.constant dense<0.000000e+00> : vector<256xf32>
    %9 = vector.multi_reduction <add>, %8, %cst_3 [1] : vector<256x4xf32> to vector<256xf32>
    %10 = vector.shape_cast %9 : vector<256xf32> to vector<256x1xf32>
    %cst_4 = arith.constant 4.000000e+00 : f32
    %11 = vector.broadcast %cst_4 : f32 to vector<256x1xf32>
    %12 = arith.divf %10, %11 : vector<256x1xf32>
    %cst_5 = arith.constant 9.99999974E-6 : f32
    %13 = vector.broadcast %cst_5 : f32 to vector<256x1xf32>
    %14 = arith.addf %12, %13 : vector<256x1xf32>
    %15 = math.rsqrt %14 : vector<256x1xf32>
    %16 = vector.broadcast %15 : vector<256x1xf32> to vector<256x4xf32>
    %17 = arith.mulf %7, %16 : vector<256x4xf32>
    %c0_6 = arith.constant 0 : index
    %c0_7 = arith.constant 0 : index
    %18 = vector.load %arg2[%c0_6, %c0_7] : memref<1x4xf32, #tpu.memory_space<vmem>>, vector<1x4xf32>
    %19 = vector.broadcast %18 : vector<1x4xf32> to vector<256x4xf32>
    %20 = arith.mulf %17, %19 : vector<256x4xf32>
    %c0_8 = arith.constant 0 : index
    %c0_9 = arith.constant 0 : index
    %21 = vector.load %arg3[%c0_8, %c0_9] : memref<1x4xf32, #tpu.memory_space<vmem>>, vector<1x4xf32>
    %22 = vector.broadcast %21 : vector<1x4xf32> to vector<256x4xf32>
    %23 = arith.addf %20, %22 : vector<256x4xf32>
    %c0_10 = arith.constant 0 : index
    %c0_11 = arith.constant 0 : index
    %24 = vector.load %arg4[%c0_10, %c0_11] : memref<4x8xf32, #tpu.memory_space<vmem>>, vector<4x8xf32>
    %cst_12 = arith.constant dense<0.000000e+00> : vector<256x8xf32>
    %25 = tpu.matmul %23, %24, %cst_12 {dimension_numbers = #tpu.dot_dimension_numbers<[1], [0], [0], [1], [0, 0, 1, 1], [], []>} : vector<256x4xf32>, vector<4x8xf32>, vector<256x8xf32> -> vector<256x8xf32>
    %c0_13 = arith.constant 0 : index
    %c0_14 = arith.constant 0 : index
    %26 = vector.load %arg5[%c0_13, %c0_14] : memref<4x8xf32, #tpu.memory_space<vmem>>, vector<4x8xf32>
    %cst_15 = arith.constant dense<0.000000e+00> : vector<256x8xf32>
    %27 = tpu.matmul %23, %26, %cst_15 {dimension_numbers = #tpu.dot_dimension_numbers<[1], [0], [0], [1], [0, 0, 1, 1], [], []>} : vector<256x4xf32>, vector<4x8xf32>, vector<256x8xf32> -> vector<256x8xf32>
    %cst_16 = arith.constant 0.000000e+00 : f32
    %28 = vector.broadcast %cst_16 : f32 to vector<8x8xf32>
    %c0_17 = arith.constant 0 : index
    %c0_18 = arith.constant 0 : index
    %29 = vector.load %arg19[%c0_17, %c0_18] : memref<264x8xf32, #tpu.memory_space<vmem>>, vector<8x8xf32>
    tpu.vector_store %arg19[%c0_17, %c0_18], %28 {strides = array<i32>} : memref<264x8xf32, #tpu.memory_space<vmem>>, vector<8x8xf32>,
    %c8 = arith.constant 8 : index
    %c0_19 = arith.constant 0 : index
    %30 = vector.load %arg19[%c8, %c0_19] : memref<264x8xf32, #tpu.memory_space<vmem>>, vector<256x8xf32>
    tpu.vector_store %arg19[%c8, %c0_19], %25 {strides = array<i32>} : memref<264x8xf32, #tpu.memory_space<vmem>>, vector<256x8xf32>,
    %cst_20 = arith.constant 0.000000e+00 : f32
    %31 = vector.broadcast %cst_20 : f32 to vector<256x8xf32>
    %c0_21 = arith.constant 0 : index
    %c0_22 = arith.constant 0 : index
    %32 = vector.load %arg6[%c0_21, %c0_22] : memref<4x8xf32, #tpu.memory_space<vmem>>, vector<1x8xf32>
    %c5 = arith.constant 5 : index
    %c0_23 = arith.constant 0 : index
    %33 = vector.load %arg19[%c5, %c0_23] : memref<264x8xf32, #tpu.memory_space<vmem>>, vector<256x8xf32>
    %34 = vector.broadcast %32 : vector<1x8xf32> to vector<256x8xf32>
    %35 = arith.mulf %34, %33 : vector<256x8xf32>
    %36 = arith.addf %31, %35 : vector<256x8xf32>
    %c1 = arith.constant 1 : index
    %c0_24 = arith.constant 0 : index
    %37 = vector.load %arg6[%c1, %c0_24] : memref<4x8xf32, #tpu.memory_space<vmem>>, vector<1x8xf32>
    %c6 = arith.constant 6 : index
    %c0_25 = arith.constant 0 : index
    %38 = vector.load %arg19[%c6, %c0_25] : memref<264x8xf32, #tpu.memory_space<vmem>>, vector<256x8xf32>
    %39 = vector.broadcast %37 : vector<1x8xf32> to vector<256x8xf32>
    %40 = arith.mulf %39, %38 : vector<256x8xf32>
    %41 = arith.addf %36, %40 : vector<256x8xf32>
    %c2 = arith.constant 2 : index
    %c0_26 = arith.constant 0 : index
    %42 = vector.load %arg6[%c2, %c0_26] : memref<4x8xf32, #tpu.memory_space<vmem>>, vector<1x8xf32>
    %c7 = arith.constant 7 : index
    %c0_27 = arith.constant 0 : index
    %43 = vector.load %arg19[%c7, %c0_27] : memref<264x8xf32, #tpu.memory_space<vmem>>, vector<256x8xf32>
    %44 = vector.broadcast %42 : vector<1x8xf32> to vector<256x8xf32>
    %45 = arith.mulf %44, %43 : vector<256x8xf32>
    %46 = arith.addf %41, %45 : vector<256x8xf32>
    %c3 = arith.constant 3 : index
    %c0_28 = arith.constant 0 : index
    %47 = vector.load %arg6[%c3, %c0_28] : memref<4x8xf32, #tpu.memory_space<vmem>>, vector<1x8xf32>
    %c8_29 = arith.constant 8 : index
    %c0_30 = arith.constant 0 : index
    %48 = vector.load %arg19[%c8_29, %c0_30] : memref<264x8xf32, #tpu.memory_space<vmem>>, vector<256x8xf32>
    %49 = vector.broadcast %47 : vector<1x8xf32> to vector<256x8xf32>
    %50 = arith.mulf %49, %48 : vector<256x8xf32>
    %51 = arith.addf %46, %50 : vector<256x8xf32>
    %c0_31 = arith.constant 0 : index
    %c0_32 = arith.constant 0 : index
    %52 = vector.load %arg7[%c0_31, %c0_32] : memref<1x8xf32, #tpu.memory_space<vmem>>, vector<1x8xf32>
    %53 = vector.broadcast %52 : vector<1x8xf32> to vector<256x8xf32>
    %54 = arith.addf %51, %53 : vector<256x8xf32>
    %cst_33 = arith.constant 0.000000e+00 : f32
    %55 = vector.broadcast %cst_33 : f32 to vector<256x8xf32>
    %56 = arith.subf %55, %54 : vector<256x8xf32>
    %57 = math.exp %56 : vector<256x8xf32>
    %cst_34 = arith.constant 1.000000e+00 : f32
    %58 = vector.broadcast %cst_34 : f32 to vector<256x8xf32>
    %59 = arith.addf %58, %57 : vector<256x8xf32>
    %cst_35 = arith.constant 1.000000e+00 : f32
    %60 = vector.broadcast %cst_35 : f32 to vector<256x8xf32>
    %61 = arith.divf %60, %59 : vector<256x8xf32>
    %62 = arith.mulf %54, %61 : vector<256x8xf32>
    %c0_36 = arith.constant 0 : index
    %c0_37 = arith.constant 0 : index
    %63 = vector.load %arg8[%c0_36, %c0_37] : memref<8x1xf32, #tpu.memory_space<vmem>>, vector<8x1xf32>
    %cst_38 = arith.constant dense<0.000000e+00> : vector<256x1xf32>
    %64 = tpu.matmul %62, %63, %cst_38 {dimension_numbers = #tpu.dot_dimension_numbers<[1], [0], [0], [1], [0, 0, 1, 1], [], []>} : vector<256x8xf32>, vector<8x1xf32>, vector<256x1xf32> -> vector<256x1xf32>
    %c0_39 = arith.constant 0 : index
    %c0_40 = arith.constant 0 : index
    %65 = vector.load %arg9[%c0_39, %c0_40] : memref<8x16xf32, #tpu.memory_space<vmem>>, vector<8x16xf32>
    %cst_41 = arith.constant dense<0.000000e+00> : vector<256x16xf32>
    %66 = tpu.matmul %62, %65, %cst_41 {dimension_numbers = #tpu.dot_dimension_numbers<[1], [0], [0], [1], [0, 0, 1, 1], [], []>} : vector<256x8xf32>, vector<8x16xf32>, vector<256x16xf32> -> vector<256x16xf32>
    %c0_42 = arith.constant 0 : index
    %c0_43 = arith.constant 0 : index
    %67 = vector.load %arg10[%c0_42, %c0_43] : memref<8x16xf32, #tpu.memory_space<vmem>>, vector<8x16xf32>
    %cst_44 = arith.constant dense<0.000000e+00> : vector<256x16xf32>
    %68 = tpu.matmul %62, %67, %cst_44 {dimension_numbers = #tpu.dot_dimension_numbers<[1], [0], [0], [1], [0, 0, 1, 1], [], []>} : vector<256x8xf32>, vector<8x16xf32>, vector<256x16xf32> -> vector<256x16xf32>
    %c0_45 = arith.constant 0 : index
    %c0_46 = arith.constant 0 : index
    %69 = vector.load %arg11[%c0_45, %c0_46] : memref<1x8xf32, #tpu.memory_space<vmem>>, vector<1x8xf32>
    %cst_47 = arith.constant dense<0.000000e+00> : vector<256x8xf32>
    %70 = tpu.matmul %64, %69, %cst_47 {dimension_numbers = #tpu.dot_dimension_numbers<[1], [0], [0], [1], [0, 0, 1, 1], [], []>} : vector<256x1xf32>, vector<1x8xf32>, vector<256x8xf32> -> vector<256x8xf32>
    %c0_48 = arith.constant 0 : index
    %c0_49 = arith.constant 0 : index
    %71 = vector.load %arg12[%c0_48, %c0_49] : memref<1x8xf32, #tpu.memory_space<vmem>>, vector<1x8xf32>
    %72 = vector.broadcast %71 : vector<1x8xf32> to vector<256x8xf32>
    %73 = arith.addf %70, %72 : vector<256x8xf32>
    %cst_50 = arith.constant 2.000000e+01 : f32
    %74 = vector.broadcast %cst_50 : f32 to vector<256x8xf32>
    %75 = arith.cmpf ogt, %73, %74 : vector<256x8xf32>
    %cst_51 = arith.constant 2.000000e+01 : f32
    %76 = vector.broadcast %cst_51 : f32 to vector<256x8xf32>
    %77 = arith.minimumf %73, %76 : vector<256x8xf32>
    %78 = math.exp %77 : vector<256x8xf32>
    %cst_52 = arith.constant 1.000000e+00 : f32
    %79 = vector.broadcast %cst_52 : f32 to vector<256x8xf32>
    %80 = arith.addf %79, %78 : vector<256x8xf32>
    %81 = math.log %80 : vector<256x8xf32>
    %82 = arith.select %75, %73, %81 : vector<256x8xi1>, vector<256x8xf32>
    %c0_53 = arith.constant 0 : index
    %c0_54 = arith.constant 0 : index
    %83 = vector.load %arg13[%c0_53, %c0_54] : memref<1x128xf32, #tpu.memory_space<vmem>>, vector<1x128xf32>
    %84 = math.exp %83 : vector<1x128xf32>
    %cst_55 = arith.constant 0.000000e+00 : f32
    %85 = vector.broadcast %cst_55 : f32 to vector<1x128xf32>
    %86 = arith.subf %85, %84 : vector<1x128xf32>
    %87 = tpu.concatenate %82, %82, %82, %82, %82, %82, %82, %82, %82, %82, %82, %82, %82, %82, %82, %82 in 1 : vector<256x8xf32>, vector<256x8xf32>, vector<256x8xf32>, vector<256x8xf32>, vector<256x8xf32>, vector<256x8xf32>, vector<256x8xf32>, vector<256x8xf32>, vector<256x8xf32>, vector<256x8xf32>, vector<256x8xf32>, vector<256x8xf32>, vector<256x8xf32>, vector<256x8xf32>, vector<256x8xf32>, vector<256x8xf32> -> vector<256x128xf32>
    %88 = arith.mulf %82, %62 : vector<256x8xf32>
    %89 = tpu.concatenate %88, %88, %88, %88, %88, %88, %88, %88, %88, %88, %88, %88, %88, %88, %88, %88 in 1 : vector<256x8xf32>, vector<256x8xf32>, vector<256x8xf32>, vector<256x8xf32>, vector<256x8xf32>, vector<256x8xf32>, vector<256x8xf32>, vector<256x8xf32>, vector<256x8xf32>, vector<256x8xf32>, vector<256x8xf32>, vector<256x8xf32>, vector<256x8xf32>, vector<256x8xf32>, vector<256x8xf32>, vector<256x8xf32> -> vector<256x128xf32>
    %c0_56 = arith.constant 0 : index
    %c0_57 = arith.constant 0 : index
    %90 = vector.load %arg16[%c0_56, %c0_57] : memref<16x128xf32, #tpu.memory_space<vmem>>, vector<16x128xf32>
    %cst_58 = arith.constant dense<0.000000e+00> : vector<256x128xf32>
    %91 = tpu.matmul %66, %90, %cst_58 {dimension_numbers = #tpu.dot_dimension_numbers<[1], [0], [0], [1], [0, 0, 1, 1], [], []>} : vector<256x16xf32>, vector<16x128xf32>, vector<256x128xf32> -> vector<256x128xf32>
    %c0_59 = arith.constant 0 : index
    %c0_60 = arith.constant 0 : index
    %92 = vector.load %arg16[%c0_59, %c0_60] : memref<16x128xf32, #tpu.memory_space<vmem>>, vector<16x128xf32>
    %cst_61 = arith.constant dense<0.000000e+00> : vector<256x128xf32>
    %93 = tpu.matmul %68, %92, %cst_61 {dimension_numbers = #tpu.dot_dimension_numbers<[1], [0], [0], [1], [0, 0, 1, 1], [], []>} : vector<256x16xf32>, vector<16x128xf32>, vector<256x128xf32> -> vector<256x128xf32>
    %94 = vector.broadcast %86 : vector<1x128xf32> to vector<256x128xf32>
    %95 = arith.mulf %87, %94 : vector<256x128xf32>
    %96 = math.exp %95 : vector<256x128xf32>
    %c0_62 = arith.constant 0 : index
    %c0_63 = arith.constant 0 : index
    %97 = vector.load %arg20[%c0_62, %c0_63] : memref<256x128xf32, #tpu.memory_space<vmem>>, vector<256x128xf32>
    tpu.vector_store %arg20[%c0_62, %c0_63], %96 {strides = array<i32>} : memref<256x128xf32, #tpu.memory_space<vmem>>, vector<256x128xf32>,
    %98 = arith.mulf %89, %91 : vector<256x128xf32>
    %c0_64 = arith.constant 0 : index
    %c0_65 = arith.constant 0 : index
    %99 = vector.load %arg21[%c0_64, %c0_65] : memref<256x128xf32, #tpu.memory_space<vmem>>, vector<256x128xf32>
    tpu.vector_store %arg21[%c0_64, %c0_65], %98 {strides = array<i32>} : memref<256x128xf32, #tpu.memory_space<vmem>>, vector<256x128xf32>,
    %cst_66 = arith.constant 0.000000e+00 : f32
    %100 = vector.broadcast %cst_66 : f32 to vector<1x128xf32>
    %c0_i32 = arith.constant 0 : i32
    %c32_i32 = arith.constant 32 : i32
    %101 = arith.addi %c0_i32, %c32_i32 : i32
    %c1_i32 = arith.constant 1 : i32
    %102 = scf.for %arg23 = %c0_i32 to %101 step %c1_i32 iter_args(%arg24 = %100) -> (vector<1x128xf32>)  : i32 {
      %c8_i32 = arith.constant 8 : i32
      %125 = arith.muli %arg23, %c8_i32 : i32
      %126 = tpu.assume_multiple %125, 8 : i32
      %127 = arith.index_cast %126 : i32 to index
      %c0_84 = arith.constant 0 : index
      %128 = vector.load %arg20[%127, %c0_84] : memref<256x128xf32, #tpu.memory_space<vmem>>, vector<8x128xf32>
      %129 = arith.index_cast %126 : i32 to index
      %c0_85 = arith.constant 0 : index
      %130 = vector.load %arg21[%129, %c0_85] : memref<256x128xf32, #tpu.memory_space<vmem>>, vector<8x128xf32>
      %131 = vector.extract_strided_slice %128 {offsets = [0, 0], sizes = [1, 128], strides = [1, 1]} : vector<8x128xf32> to vector<1x128xf32>
      %132 = arith.mulf %131, %arg24 : vector<1x128xf32>
      %133 = vector.extract_strided_slice %130 {offsets = [0, 0], sizes = [1, 128], strides = [1, 1]} : vector<8x128xf32> to vector<1x128xf32>
      %134 = arith.addf %132, %133 : vector<1x128xf32>
      %135 = vector.extract_strided_slice %128 {offsets = [1, 0], sizes = [1, 128], strides = [1, 1]} : vector<8x128xf32> to vector<1x128xf32>
      %136 = arith.mulf %135, %134 : vector<1x128xf32>
      %137 = vector.extract_strided_slice %130 {offsets = [1, 0], sizes = [1, 128], strides = [1, 1]} : vector<8x128xf32> to vector<1x128xf32>
      %138 = arith.addf %136, %137 : vector<1x128xf32>
      %139 = vector.extract_strided_slice %128 {offsets = [2, 0], sizes = [1, 128], strides = [1, 1]} : vector<8x128xf32> to vector<1x128xf32>
      %140 = arith.mulf %139, %138 : vector<1x128xf32>
      %141 = vector.extract_strided_slice %130 {offsets = [2, 0], sizes = [1, 128], strides = [1, 1]} : vector<8x128xf32> to vector<1x128xf32>
      %142 = arith.addf %140, %141 : vector<1x128xf32>
      %143 = vector.extract_strided_slice %128 {offsets = [3, 0], sizes = [1, 128], strides = [1, 1]} : vector<8x128xf32> to vector<1x128xf32>
      %144 = arith.mulf %143, %142 : vector<1x128xf32>
      %145 = vector.extract_strided_slice %130 {offsets = [3, 0], sizes = [1, 128], strides = [1, 1]} : vector<8x128xf32> to vector<1x128xf32>
      %146 = arith.addf %144, %145 : vector<1x128xf32>
      %147 = vector.extract_strided_slice %128 {offsets = [4, 0], sizes = [1, 128], strides = [1, 1]} : vector<8x128xf32> to vector<1x128xf32>
      %148 = arith.mulf %147, %146 : vector<1x128xf32>
      %149 = vector.extract_strided_slice %130 {offsets = [4, 0], sizes = [1, 128], strides = [1, 1]} : vector<8x128xf32> to vector<1x128xf32>
      %150 = arith.addf %148, %149 : vector<1x128xf32>
      %151 = vector.extract_strided_slice %128 {offsets = [5, 0], sizes = [1, 128], strides = [1, 1]} : vector<8x128xf32> to vector<1x128xf32>
      %152 = arith.mulf %151, %150 : vector<1x128xf32>
      %153 = vector.extract_strided_slice %130 {offsets = [5, 0], sizes = [1, 128], strides = [1, 1]} : vector<8x128xf32> to vector<1x128xf32>
      %154 = arith.addf %152, %153 : vector<1x128xf32>
      %155 = vector.extract_strided_slice %128 {offsets = [6, 0], sizes = [1, 128], strides = [1, 1]} : vector<8x128xf32> to vector<1x128xf32>
      %156 = arith.mulf %155, %154 : vector<1x128xf32>
      %157 = vector.extract_strided_slice %130 {offsets = [6, 0], sizes = [1, 128], strides = [1, 1]} : vector<8x128xf32> to vector<1x128xf32>
      %158 = arith.addf %156, %157 : vector<1x128xf32>
      %159 = vector.extract_strided_slice %128 {offsets = [7, 0], sizes = [1, 128], strides = [1, 1]} : vector<8x128xf32> to vector<1x128xf32>
      %160 = arith.mulf %159, %158 : vector<1x128xf32>
      %161 = vector.extract_strided_slice %130 {offsets = [7, 0], sizes = [1, 128], strides = [1, 1]} : vector<8x128xf32> to vector<1x128xf32>
      %162 = arith.addf %160, %161 : vector<1x128xf32>
      %163 = tpu.concatenate %134, %138, %142, %146, %150, %154, %158, %162 in 0 : vector<1x128xf32>, vector<1x128xf32>, vector<1x128xf32>, vector<1x128xf32>, vector<1x128xf32>, vector<1x128xf32>, vector<1x128xf32>, vector<1x128xf32> -> vector<8x128xf32>
      %164 = arith.index_cast %126 : i32 to index
      %c0_86 = arith.constant 0 : index
      %165 = vector.load %arg22[%164, %c0_86] : memref<256x128xf32, #tpu.memory_space<vmem>>, vector<8x128xf32>
      tpu.vector_store %arg22[%164, %c0_86], %163 {strides = array<i32>} : memref<256x128xf32, #tpu.memory_space<vmem>>, vector<8x128xf32>,
      scf.yield %162 : vector<1x128xf32>
    }
    %c32_i32_67 = arith.constant 32 : i32
    %c0_68 = arith.constant 0 : index
    %c0_69 = arith.constant 0 : index
    %103 = vector.load %arg22[%c0_68, %c0_69] : memref<256x128xf32, #tpu.memory_space<vmem>>, vector<256x128xf32>
    %104 = arith.mulf %103, %93 : vector<256x128xf32>
    %c0_70 = arith.constant 0 : index
    %c0_71 = arith.constant 0 : index
    %105 = vector.load %arg17[%c0_70, %c0_71] : memref<128x8xf32, #tpu.memory_space<vmem>>, vector<128x8xf32>
    %cst_72 = arith.constant dense<0.000000e+00> : vector<256x8xf32>
    %106 = tpu.matmul %104, %105, %cst_72 {dimension_numbers = #tpu.dot_dimension_numbers<[1], [0], [0], [1], [0, 0, 1, 1], [], []>} : vector<256x128xf32>, vector<128x8xf32>, vector<256x8xf32> -> vector<256x8xf32>
    %c0_73 = arith.constant 0 : index
    %c0_74 = arith.constant 0 : index
    %107 = vector.load %arg14[%c0_73, %c0_74] : memref<1x8xf32, #tpu.memory_space<vmem>>, vector<1x8xf32>
    %108 = vector.broadcast %107 : vector<1x8xf32> to vector<256x8xf32>
    %109 = arith.mulf %108, %62 : vector<256x8xf32>
    %110 = arith.addf %106, %109 : vector<256x8xf32>
    %cst_75 = arith.constant 0.000000e+00 : f32
    %111 = vector.broadcast %cst_75 : f32 to vector<256x8xf32>
    %112 = arith.subf %111, %27 : vector<256x8xf32>
    %113 = math.exp %112 : vector<256x8xf32>
    %cst_76 = arith.constant 1.000000e+00 : f32
    %114 = vector.broadcast %cst_76 : f32 to vector<256x8xf32>
    %115 = arith.addf %114, %113 : vector<256x8xf32>
    %cst_77 = arith.constant 1.000000e+00 : f32
    %116 = vector.broadcast %cst_77 : f32 to vector<256x8xf32>
    %117 = arith.divf %116, %115 : vector<256x8xf32>
    %118 = arith.mulf %27, %117 : vector<256x8xf32>
    %119 = arith.mulf %110, %118 : vector<256x8xf32>
    %c0_78 = arith.constant 0 : index
    %c0_79 = arith.constant 0 : index
    %120 = vector.load %arg15[%c0_78, %c0_79] : memref<8x4xf32, #tpu.memory_space<vmem>>, vector<8x4xf32>
    %cst_80 = arith.constant dense<0.000000e+00> : vector<256x4xf32>
    %121 = tpu.matmul %119, %120, %cst_80 {dimension_numbers = #tpu.dot_dimension_numbers<[1], [0], [0], [1], [0, 0, 1, 1], [], []>} : vector<256x8xf32>, vector<8x4xf32>, vector<256x4xf32> -> vector<256x4xf32>
    %c0_81 = arith.constant 0 : index
    %c0_82 = arith.constant 0 : index
    %c0_83 = arith.constant 0 : index
    %122 = vector.load %arg18[%c0_81, %c0_82, %c0_83] : memref<1x256x4xf32, #tpu.memory_space<vmem>>, vector<1x256x4xf32>
    %123 = vector.shape_cast %122 : vector<1x256x4xf32> to vector<256x4xf32>
    %124 = vector.shape_cast %121 : vector<256x4xf32> to vector<1x256x4xf32>
    tpu.vector_store %arg18[%c0_81, %c0_82, %c0_83], %124 {strides = array<i32>} : memref<1x256x4xf32, #tpu.memory_space<vmem>>, vector<1x256x4xf32>,
    return
  }
  func.func @transform_0(%arg0: i32) -> (i32, i32, i32) {
    %c0_i32 = arith.constant 0 : i32
    %c0_i32_0 = arith.constant 0 : i32
    %c0_i32_1 = arith.constant 0 : i32
    return %arg0, %c0_i32, %c0_i32_0 : i32, i32, i32
  }
  func.func @transform_1(%arg0: i32) -> (i32, i32) {
    %c0_i32 = arith.constant 0 : i32
    %c0_i32_0 = arith.constant 0 : i32
    %c0_i32_1 = arith.constant 0 : i32
    return %c0_i32, %c0_i32_0 : i32, i32
  }
  func.func @transform_2(%arg0: i32) -> (i32, i32) {
    %c0_i32 = arith.constant 0 : i32
    %c0_i32_0 = arith.constant 0 : i32
    %c0_i32_1 = arith.constant 0 : i32
    return %c0_i32, %c0_i32_0 : i32, i32
  }
  func.func @transform_3(%arg0: i32) -> (i32, i32) {
    %c0_i32 = arith.constant 0 : i32
    %c0_i32_0 = arith.constant 0 : i32
    %c0_i32_1 = arith.constant 0 : i32
    return %c0_i32, %c0_i32_0 : i32, i32
  }
  func.func @transform_4(%arg0: i32) -> (i32, i32) {
    %c0_i32 = arith.constant 0 : i32
    %c0_i32_0 = arith.constant 0 : i32
    %c0_i32_1 = arith.constant 0 : i32
    return %c0_i32, %c0_i32_0 : i32, i32
  }
  func.func @transform_5(%arg0: i32) -> (i32, i32) {
    %c0_i32 = arith.constant 0 : i32
    %c0_i32_0 = arith.constant 0 : i32
    %c0_i32_1 = arith.constant 0 : i32
    return %c0_i32, %c0_i32_0 : i32, i32
  }
  func.func @transform_6(%arg0: i32) -> (i32, i32) {
    %c0_i32 = arith.constant 0 : i32
    %c0_i32_0 = arith.constant 0 : i32
    %c0_i32_1 = arith.constant 0 : i32
    return %c0_i32, %c0_i32_0 : i32, i32
  }
  func.func @transform_7(%arg0: i32) -> (i32, i32) {
    %c0_i32 = arith.constant 0 : i32
    %c0_i32_0 = arith.constant 0 : i32
    %c0_i32_1 = arith.constant 0 : i32
    return %c0_i32, %c0_i32_0 : i32, i32
  }
  func.func @transform_8(%arg0: i32) -> (i32, i32) {
    %c0_i32 = arith.constant 0 : i32
    %c0_i32_0 = arith.constant 0 : i32
    %c0_i32_1 = arith.constant 0 : i32
    return %c0_i32, %c0_i32_0 : i32, i32
  }
  func.func @transform_9(%arg0: i32) -> (i32, i32) {
    %c0_i32 = arith.constant 0 : i32
    %c0_i32_0 = arith.constant 0 : i32
    %c0_i32_1 = arith.constant 0 : i32
    return %c0_i32, %c0_i32_0 : i32, i32
  }
  func.func @transform_10(%arg0: i32) -> (i32, i32) {
    %c0_i32 = arith.constant 0 : i32
    %c0_i32_0 = arith.constant 0 : i32
    %c0_i32_1 = arith.constant 0 : i32
    return %c0_i32, %c0_i32_0 : i32, i32
  }
  func.func @transform_11(%arg0: i32) -> (i32, i32) {
    %c0_i32 = arith.constant 0 : i32
    %c0_i32_0 = arith.constant 0 : i32
    %c0_i32_1 = arith.constant 0 : i32
    return %c0_i32, %c0_i32_0 : i32, i32
  }
  func.func @transform_12(%arg0: i32) -> (i32, i32) {
    %c0_i32 = arith.constant 0 : i32
    %c0_i32_0 = arith.constant 0 : i32
    %c0_i32_1 = arith.constant 0 : i32
    return %c0_i32, %c0_i32_0 : i32, i32
  }
  func.func @transform_13(%arg0: i32) -> (i32, i32) {
    %c0_i32 = arith.constant 0 : i32
    %c0_i32_0 = arith.constant 0 : i32
    %c0_i32_1 = arith.constant 0 : i32
    return %c0_i32, %c0_i32_0 : i32, i32
  }
  func.func @transform_14(%arg0: i32) -> (i32, i32) {
    %c0_i32 = arith.constant 0 : i32
    %c0_i32_0 = arith.constant 0 : i32
    %c0_i32_1 = arith.constant 0 : i32
    return %c0_i32, %c0_i32_0 : i32, i32
  }
  func.func @transform_15(%arg0: i32) -> (i32, i32) {
    %c0_i32 = arith.constant 0 : i32
    %c0_i32_0 = arith.constant 0 : i32
    %c0_i32_1 = arith.constant 0 : i32
    return %c0_i32, %c0_i32_0 : i32, i32
  }
  func.func @transform_16(%arg0: i32) -> (i32, i32) {
    %c0_i32 = arith.constant 0 : i32
    %c0_i32_0 = arith.constant 0 : i32
    %c0_i32_1 = arith.constant 0 : i32
    return %c0_i32, %c0_i32_0 : i32, i32
  }
  func.func @transform_17(%arg0: i32) -> (i32, i32, i32) {
    %c0_i32 = arith.constant 0 : i32
    %c0_i32_0 = arith.constant 0 : i32
    %c0_i32_1 = arith.constant 0 : i32
    return %arg0, %c0_i32, %c0_i32_0 : i32, i32, i32
  }
}

</mosaic_0001>

<llo_original>
// kernel: mamba_layer_forward.1
$region0: #{mamba_layer_forward.1}
  #allocation0 [shape = 'u32[]', space=smem, size = 0x4, offset = 0x4, fixed_abs, tag = 'smem constant byte address 0x4 - core index']
  #allocation1 [shape = 'u32[144,128]{1,0:T(1,128)}', space=vmem, size = 0x12000, scoped, tag = 'internal scratch']
  #allocation2 [shape = 'f32[264,8]{1,0:T(8,128)}', space=vmem, size = 0x21000, scoped, tag = 'scratch operand']
  #allocation3 [shape = 'f32[256,128]{1,0:T(8,128)}', space=vmem, size = 0x20000, scoped, tag = 'scratch operand']
  #allocation4 [shape = 'f32[256,128]{1,0:T(8,128)}', space=vmem, size = 0x20000, scoped, tag = 'scratch operand']
  #allocation5 [shape = 'f32[256,128]{1,0:T(8,128)}', space=vmem, size = 0x20000, scoped, tag = 'scratch operand']
  %s0 = inlined_call_operand.vmem [shape: f32[2,256,4], index: 0, kind: input, shape index: {}]
  %s1 = inlined_call_operand.vmem [shape: f32[1,4], index: 1, kind: input, shape index: {}]
  %s2 = inlined_call_operand.vmem [shape: f32[1,4], index: 2, kind: input, shape index: {}]
  %s3 = inlined_call_operand.vmem [shape: f32[4,8], index: 3, kind: input, shape index: {}]
  %s4 = inlined_call_operand.vmem [shape: f32[4,8], index: 4, kind: input, shape index: {}]
  %s5 = inlined_call_operand.vmem [shape: f32[4,8], index: 5, kind: input, shape index: {}]
  %s6 = inlined_call_operand.vmem [shape: f32[1,8], index: 6, kind: input, shape index: {}]
  %s7 = inlined_call_operand.vmem [shape: f32[8,1], index: 7, kind: input, shape index: {}]
  %s8 = inlined_call_operand.vmem [shape: f32[8,16], index: 8, kind: input, shape index: {}]
  %s9 = inlined_call_operand.vmem [shape: f32[8,16], index: 9, kind: input, shape index: {}]
  %s10 = inlined_call_operand.vmem [shape: f32[1,8], index: 10, kind: input, shape index: {}]
  %s11 = inlined_call_operand.vmem [shape: f32[1,8], index: 11, kind: input, shape index: {}]
  %s12 = inlined_call_operand.vmem [shape: f32[1,128], index: 12, kind: input, shape index: {}]
  %s13 = inlined_call_operand.vmem [shape: f32[1,8], index: 13, kind: input, shape index: {}]
  %s14 = inlined_call_operand.vmem [shape: f32[8,4], index: 14, kind: input, shape index: {}]
  %s15 = inlined_call_operand.vmem [shape: f32[16,128], index: 15, kind: input, shape index: {}]
  %s16 = inlined_call_operand.vmem [shape: f32[128,8], index: 16, kind: input, shape index: {}]
  %s17 = inlined_call_operand.vmem [shape: f32[2,256,4], index: 17, kind: output, shape index: {}]
  %s18 = sld [smem:[#allocation0]]
  $region108: #{mamba_layer_forward.1} parent=0
    _
  %s20 = ssub.s32 1, %s18
  %s21 = scalar_select 0, %s20, %s18
  loop: start=0, step=1, limit=4
  $region2: #{mamba_layer_forward.1} parent=0 // loop_pre_header
    _
  $region3: #{mamba_layer_forward.1} parent=0 // loop_header
    %s23 = sphi 0, %s27
    %p24 = scmp.ge.s32.totalorder %s23, 4
    %s33 = sphi 0, %s35
    %s36 = sphi 0, %s33
    %s37 = sphi 0, %s36
    %s53 = sphi 0, %s37
    %s57 = sphi 0, %s57
    %s59 = sphi 0, %s57
    %s60 = sphi 0, %s59
    %s74 = sphi 0, %s60
    %s78 = sphi 0, %s78
    %s80 = sphi 0, %s78
    %s81 = sphi 0, %s80
    %s95 = sphi 0, %s81
    %s99 = sphi 0, %s99
    %s101 = sphi 0, %s99
    %s102 = sphi 0, %s101
    %s116 = sphi 0, %s102
    %s120 = sphi 0, %s120
    %s122 = sphi 0, %s120
    %s123 = sphi 0, %s122
    %s137 = sphi 0, %s123
    %s141 = sphi 0, %s141
    %s143 = sphi 0, %s141
    %s144 = sphi 0, %s143
    %s158 = sphi 0, %s144
    %s162 = sphi 0, %s162
    %s164 = sphi 0, %s162
    %s165 = sphi 0, %s164
    %s179 = sphi 0, %s165
    %s183 = sphi 0, %s183
    %s185 = sphi 0, %s183
    %s186 = sphi 0, %s185
    %s200 = sphi 0, %s186
    %s204 = sphi 0, %s204
    %s206 = sphi 0, %s204
    %s207 = sphi 0, %s206
    %s221 = sphi 0, %s207
    %s225 = sphi 0, %s225
    %s227 = sphi 0, %s225
    %s228 = sphi 0, %s227
    %s242 = sphi 0, %s228
    %s246 = sphi 0, %s246
    %s248 = sphi 0, %s246
    %s249 = sphi 0, %s248
    %s263 = sphi 0, %s249
    %s267 = sphi 0, %s267
    %s269 = sphi 0, %s267
    %s270 = sphi 0, %s269
    %s284 = sphi 0, %s270
    %s288 = sphi 0, %s288
    %s290 = sphi 0, %s288
    %s291 = sphi 0, %s290
    %s305 = sphi 0, %s291
    %s309 = sphi 0, %s309
    %s311 = sphi 0, %s309
    %s312 = sphi 0, %s311
    %s326 = sphi 0, %s312
    %s330 = sphi 0, %s330
    %s332 = sphi 0, %s330
    %s333 = sphi 0, %s332
    %s347 = sphi 0, %s333
    %s351 = sphi 0, %s351
    %s353 = sphi 0, %s351
    %s354 = sphi 0, %s353
    %s368 = sphi 0, %s354
    %s372 = sphi 0, %s372
    %s374 = sphi 0, %s372
    %s375 = sphi 0, %s374
    %s389 = sphi 0, %s375
    %s395 = sphi 0, %s397
    %s398 = sphi 0, %s395
    %s399 = sphi 0, %s398
    %s415 = sphi 0, %s399
  $region4: #{mamba_layer_forward.1} parent=0 // loop_header_branch
    %26 = sbr.rel (%p24) target = $region8
  $region5: #{mamba_layer_forward.1} parent=0 // loop_body
    %s28 = ssub.s32 %s23, 1
    %s29 = ssub.s32 %s23, 2
    %s30 = sadd.s32 %s23, 1
    %s31 = ssub.s32 %s23, %s30
    %p32 = scmp.eq.s32.totalorder %s31, 0
    %s34 = sadd.s32 %s33, 1
    %s35 = scalar_select %p32, %s33, %s34
    %p38 = pneg %p32
    %p39 = scmp.eq.s32.totalorder %s23, 1
    %p40 = por %p38, %p39
    %p41 = scmp.ne.s32.totalorder %s33, %s36
    %p42 = scmp.eq.s32.totalorder %s23, 0
    %p43 = por %p41, %p42
    %p44 = scmp.ne.s32.totalorder %s33, %s36
    %p45 = scmp.eq.s32.totalorder %s28, 1
    %p46 = por %p44, %p45
    %p47 = scmp.ne.s32.totalorder %s36, %s37
    %p48 = scmp.eq.s32.totalorder %s28, 0
    %p49 = por %p47, %p48
    %p50 = scmp.ne.s32.totalorder %s36, %s37
    %p51 = scmp.eq.s32.totalorder %s29, 1
    %p52 = por %p50, %p51
    %p54 = scmp.ne.s32.totalorder %s37, %s53
    %p55 = scmp.eq.s32.totalorder %s29, 0
    %p56 = por %p54, %p55
    %s58 = sadd.s32 %s57, 1
    %p61 = scmp.eq.s32.totalorder %s23, 1
    %p62 = scmp.ne.s32.totalorder %s57, %s59
    %p63 = scmp.eq.s32.totalorder %s23, 0
    %p64 = por %p62, %p63
    %p65 = scmp.ne.s32.totalorder %s57, %s59
    %p66 = scmp.eq.s32.totalorder %s28, 1
    %p67 = por %p65, %p66
    %p68 = scmp.ne.s32.totalorder %s59, %s60
    %p69 = scmp.eq.s32.totalorder %s28, 0
    %p70 = por %p68, %p69
    %p71 = scmp.ne.s32.totalorder %s59, %s60
    %p72 = scmp.eq.s32.totalorder %s29, 1
    %p73 = por %p71, %p72
    %p75 = scmp.ne.s32.totalorder %s60, %s74
    %p76 = scmp.eq.s32.totalorder %s29, 0
    %p77 = por %p75, %p76
    %s79 = sadd.s32 %s78, 1
    %p82 = scmp.eq.s32.totalorder %s23, 1
    %p83 = scmp.ne.s32.totalorder %s78, %s80
    %p84 = scmp.eq.s32.totalorder %s23, 0
    %p85 = por %p83, %p84
    %p86 = scmp.ne.s32.totalorder %s78, %s80
    %p87 = scmp.eq.s32.totalorder %s28, 1
    %p88 = por %p86, %p87
    %p89 = scmp.ne.s32.totalorder %s80, %s81
    %p90 = scmp.eq.s32.totalorder %s28, 0
    %p91 = por %p89, %p90
    %p92 = scmp.ne.s32.totalorder %s80, %s81
    %p93 = scmp.eq.s32.totalorder %s29, 1
    %p94 = por %p92, %p93
    %p96 = scmp.ne.s32.totalorder %s81, %s95
    %p97 = scmp.eq.s32.totalorder %s29, 0
    %p98 = por %p96, %p97
    %s100 = sadd.s32 %s99, 1
    %p103 = scmp.eq.s32.totalorder %s23, 1
    %p104 = scmp.ne.s32.totalorder %s99, %s101
    %p105 = scmp.eq.s32.totalorder %s23, 0
    %p106 = por %p104, %p105
    %p107 = scmp.ne.s32.totalorder %s99, %s101
    %p108 = scmp.eq.s32.totalorder %s28, 1
    %p109 = por %p107, %p108
    %p110 = scmp.ne.s32.totalorder %s101, %s102
    %p111 = scmp.eq.s32.totalorder %s28, 0
    %p112 = por %p110, %p111
    %p113 = scmp.ne.s32.totalorder %s101, %s102
    %p114 = scmp.eq.s32.totalorder %s29, 1
    %p115 = por %p113, %p114
    %p117 = scmp.ne.s32.totalorder %s102, %s116
    %p118 = scmp.eq.s32.totalorder %s29, 0
    %p119 = por %p117, %p118
    %s121 = sadd.s32 %s120, 1
    %p124 = scmp.eq.s32.totalorder %s23, 1
    %p125 = scmp.ne.s32.totalorder %s120, %s122
    %p126 = scmp.eq.s32.totalorder %s23, 0
    %p127 = por %p125, %p126
    %p128 = scmp.ne.s32.totalorder %s120, %s122
    %p129 = scmp.eq.s32.totalorder %s28, 1
    %p130 = por %p128, %p129
    %p131 = scmp.ne.s32.totalorder %s122, %s123
    %p132 = scmp.eq.s32.totalorder %s28, 0
    %p133 = por %p131, %p132
    %p134 = scmp.ne.s32.totalorder %s122, %s123
    %p135 = scmp.eq.s32.totalorder %s29, 1
    %p136 = por %p134, %p135
    %p138 = scmp.ne.s32.totalorder %s123, %s137
    %p139 = scmp.eq.s32.totalorder %s29, 0
    %p140 = por %p138, %p139
    %s142 = sadd.s32 %s141, 1
    %p145 = scmp.eq.s32.totalorder %s23, 1
    %p146 = scmp.ne.s32.totalorder %s141, %s143
    %p147 = scmp.eq.s32.totalorder %s23, 0
    %p148 = por %p146, %p147
    %p149 = scmp.ne.s32.totalorder %s141, %s143
    %p150 = scmp.eq.s32.totalorder %s28, 1
    %p151 = por %p149, %p150
    %p152 = scmp.ne.s32.totalorder %s143, %s144
    %p153 = scmp.eq.s32.totalorder %s28, 0
    %p154 = por %p152, %p153
    %p155 = scmp.ne.s32.totalorder %s143, %s144
    %p156 = scmp.eq.s32.totalorder %s29, 1
    %p157 = por %p155, %p156
    %p159 = scmp.ne.s32.totalorder %s144, %s158
    %p160 = scmp.eq.s32.totalorder %s29, 0
    %p161 = por %p159, %p160
    %s163 = sadd.s32 %s162, 1
    %p166 = scmp.eq.s32.totalorder %s23, 1
    %p167 = scmp.ne.s32.totalorder %s162, %s164
    %p168 = scmp.eq.s32.totalorder %s23, 0
    %p169 = por %p167, %p168
    %p170 = scmp.ne.s32.totalorder %s162, %s164
    %p171 = scmp.eq.s32.totalorder %s28, 1
    %p172 = por %p170, %p171
    %p173 = scmp.ne.s32.totalorder %s164, %s165
    %p174 = scmp.eq.s32.totalorder %s28, 0
    %p175 = por %p173, %p174
    %p176 = scmp.ne.s32.totalorder %s164, %s165
    %p177 = scmp.eq.s32.totalorder %s29, 1
    %p178 = por %p176, %p177
    %p180 = scmp.ne.s32.totalorder %s165, %s179
    %p181 = scmp.eq.s32.totalorder %s29, 0
    %p182 = por %p180, %p181
    %s184 = sadd.s32 %s183, 1
    %p187 = scmp.eq.s32.totalorder %s23, 1
    %p188 = scmp.ne.s32.totalorder %s183, %s185
    %p189 = scmp.eq.s32.totalorder %s23, 0
    %p190 = por %p188, %p189
    %p191 = scmp.ne.s32.totalorder %s183, %s185
    %p192 = scmp.eq.s32.totalorder %s28, 1
    %p193 = por %p191, %p192
    %p194 = scmp.ne.s32.totalorder %s185, %s186
    %p195 = scmp.eq.s32.totalorder %s28, 0
    %p196 = por %p194, %p195
    %p197 = scmp.ne.s32.totalorder %s185, %s186
    %p198 = scmp.eq.s32.totalorder %s29, 1
    %p199 = por %p197, %p198
    %p201 = scmp.ne.s32.totalorder %s186, %s200
    %p202 = scmp.eq.s32.totalorder %s29, 0
    %p203 = por %p201, %p202
    %s205 = sadd.s32 %s204, 1
    %p208 = scmp.eq.s32.totalorder %s23, 1
    %p209 = scmp.ne.s32.totalorder %s204, %s206
    %p210 = scmp.eq.s32.totalorder %s23, 0
    %p211 = por %p209, %p210
    %p212 = scmp.ne.s32.totalorder %s204, %s206
    %p213 = scmp.eq.s32.totalorder %s28, 1
    %p214 = por %p212, %p213
    %p215 = scmp.ne.s32.totalorder %s206, %s207
    %p216 = scmp.eq.s32.totalorder %s28, 0
    %p217 = por %p215, %p216
    %p218 = scmp.ne.s32.totalorder %s206, %s207
    %p219 = scmp.eq.s32.totalorder %s29, 1
    %p220 = por %p218, %p219
    %p222 = scmp.ne.s32.totalorder %s207, %s221
    %p223 = scmp.eq.s32.totalorder %s29, 0
    %p224 = por %p222, %p223
    %s226 = sadd.s32 %s225, 1
    %p229 = scmp.eq.s32.totalorder %s23, 1
    %p230 = scmp.ne.s32.totalorder %s225, %s227
    %p231 = scmp.eq.s32.totalorder %s23, 0
    %p232 = por %p230, %p231
    %p233 = scmp.ne.s32.totalorder %s225, %s227
    %p234 = scmp.eq.s32.totalorder %s28, 1
    %p235 = por %p233, %p234
    %p236 = scmp.ne.s32.totalorder %s227, %s228
    %p237 = scmp.eq.s32.totalorder %s28, 0
    %p238 = por %p236, %p237
    %p239 = scmp.ne.s32.totalorder %s227, %s228
    %p240 = scmp.eq.s32.totalorder %s29, 1
    %p241 = por %p239, %p240
    %p243 = scmp.ne.s32.totalorder %s228, %s242
    %p244 = scmp.eq.s32.totalorder %s29, 0
    %p245 = por %p243, %p244
    %s247 = sadd.s32 %s246, 1
    %p250 = scmp.eq.s32.totalorder %s23, 1
    %p251 = scmp.ne.s32.totalorder %s246, %s248
    %p252 = scmp.eq.s32.totalorder %s23, 0
    %p253 = por %p251, %p252
    %p254 = scmp.ne.s32.totalorder %s246, %s248
    %p255 = scmp.eq.s32.totalorder %s28, 1
    %p256 = por %p254, %p255
    %p257 = scmp.ne.s32.totalorder %s248, %s249
    %p258 = scmp.eq.s32.totalorder %s28, 0
    %p259 = por %p257, %p258
    %p260 = scmp.ne.s32.totalorder %s248, %s249
    %p261 = scmp.eq.s32.totalorder %s29, 1
    %p262 = por %p260, %p261
    %p264 = scmp.ne.s32.totalorder %s249, %s263
    %p265 = scmp.eq.s32.totalorder %s29, 0
    %p266 = por %p264, %p265
    %s268 = sadd.s32 %s267, 1
    %p271 = scmp.eq.s32.totalorder %s23, 1
    %p272 = scmp.ne.s32.totalorder %s267, %s269
    %p273 = scmp.eq.s32.totalorder %s23, 0
    %p274 = por %p272, %p273
    %p275 = scmp.ne.s32.totalorder %s267, %s269
    %p276 = scmp.eq.s32.totalorder %s28, 1
    %p277 = por %p275, %p276
    %p278 = scmp.ne.s32.totalorder %s269, %s270
    %p279 = scmp.eq.s32.totalorder %s28, 0
    %p280 = por %p278, %p279
    %p281 = scmp.ne.s32.totalorder %s269, %s270
    %p282 = scmp.eq.s32.totalorder %s29, 1
    %p283 = por %p281, %p282
    %p285 = scmp.ne.s32.totalorder %s270, %s284
    %p286 = scmp.eq.s32.totalorder %s29, 0
    %p287 = por %p285, %p286
    %s289 = sadd.s32 %s288, 1
    %p292 = scmp.eq.s32.totalorder %s23, 1
    %p293 = scmp.ne.s32.totalorder %s288, %s290
    %p294 = scmp.eq.s32.totalorder %s23, 0
    %p295 = por %p293, %p294
    %p296 = scmp.ne.s32.totalorder %s288, %s290
    %p297 = scmp.eq.s32.totalorder %s28, 1
    %p298 = por %p296, %p297
    %p299 = scmp.ne.s32.totalorder %s290, %s291
    %p300 = scmp.eq.s32.totalorder %s28, 0
    %p301 = por %p299, %p300
    %p302 = scmp.ne.s32.totalorder %s290, %s291
    %p303 = scmp.eq.s32.totalorder %s29, 1
    %p304 = por %p302, %p303
    %p306 = scmp.ne.s32.totalorder %s291, %s305
    %p307 = scmp.eq.s32.totalorder %s29, 0
    %p308 = por %p306, %p307
    %s310 = sadd.s32 %s309, 1
    %p313 = scmp.eq.s32.totalorder %s23, 1
    %p314 = scmp.ne.s32.totalorder %s309, %s311
    %p315 = scmp.eq.s32.totalorder %s23, 0
    %p316 = por %p314, %p315
    %p317 = scmp.ne.s32.totalorder %s309, %s311
    %p318 = scmp.eq.s32.totalorder %s28, 1
    %p319 = por %p317, %p318
    %p320 = scmp.ne.s32.totalorder %s311, %s312
    %p321 = scmp.eq.s32.totalorder %s28, 0
    %p322 = por %p320, %p321
    %p323 = scmp.ne.s32.totalorder %s311, %s312
    %p324 = scmp.eq.s32.totalorder %s29, 1
    %p325 = por %p323, %p324
    %p327 = scmp.ne.s32.totalorder %s312, %s326
    %p328 = scmp.eq.s32.totalorder %s29, 0
    %p329 = por %p327, %p328
    %s331 = sadd.s32 %s330, 1
    %p334 = scmp.eq.s32.totalorder %s23, 1
    %p335 = scmp.ne.s32.totalorder %s330, %s332
    %p336 = scmp.eq.s32.totalorder %s23, 0
    %p337 = por %p335, %p336
    %p338 = scmp.ne.s32.totalorder %s330, %s332
    %p339 = scmp.eq.s32.totalorder %s28, 1
    %p340 = por %p338, %p339
    %p341 = scmp.ne.s32.totalorder %s332, %s333
    %p342 = scmp.eq.s32.totalorder %s28, 0
    %p343 = por %p341, %p342
    %p344 = scmp.ne.s32.totalorder %s332, %s333
    %p345 = scmp.eq.s32.totalorder %s29, 1
    %p346 = por %p344, %p345
    %p348 = scmp.ne.s32.totalorder %s333, %s347
    %p349 = scmp.eq.s32.totalorder %s29, 0
    %p350 = por %p348, %p349
    %s352 = sadd.s32 %s351, 1
    %p355 = scmp.eq.s32.totalorder %s23, 1
    %p356 = scmp.ne.s32.totalorder %s351, %s353
    %p357 = scmp.eq.s32.totalorder %s23, 0
    %p358 = por %p356, %p357
    %p359 = scmp.ne.s32.totalorder %s351, %s353
    %p360 = scmp.eq.s32.totalorder %s28, 1
    %p361 = por %p359, %p360
    %p362 = scmp.ne.s32.totalorder %s353, %s354
    %p363 = scmp.eq.s32.totalorder %s28, 0
    %p364 = por %p362, %p363
    %p365 = scmp.ne.s32.totalorder %s353, %s354
    %p366 = scmp.eq.s32.totalorder %s29, 1
    %p367 = por %p365, %p366
    %p369 = scmp.ne.s32.totalorder %s354, %s368
    %p370 = scmp.eq.s32.totalorder %s29, 0
    %p371 = por %p369, %p370
    %s373 = sadd.s32 %s372, 1
    %p376 = scmp.eq.s32.totalorder %s23, 1
    %p377 = scmp.ne.s32.totalorder %s372, %s374
    %p378 = scmp.eq.s32.totalorder %s23, 0
    %p379 = por %p377, %p378
    %p380 = scmp.ne.s32.totalorder %s372, %s374
    %p381 = scmp.eq.s32.totalorder %s28, 1
    %p382 = por %p380, %p381
    %p383 = scmp.ne.s32.totalorder %s374, %s375
    %p384 = scmp.eq.s32.totalorder %s28, 0
    %p385 = por %p383, %p384
    %p386 = scmp.ne.s32.totalorder %s374, %s375
    %p387 = scmp.eq.s32.totalorder %s29, 1
    %p388 = por %p386, %p387
    %p390 = scmp.ne.s32.totalorder %s375, %s389
    %p391 = scmp.eq.s32.totalorder %s29, 0
    %p392 = por %p390, %p391
    %s393 = ssub.s32 %s23, %s30
    %p394 = scmp.eq.s32.totalorder %s393, 0
    %s396 = sadd.s32 %s395, 1
    %s397 = scalar_select %p394, %s395, %s396
    %p400 = pneg %p394
    %p401 = scmp.eq.s32.totalorder %s23, 1
    %p402 = por %p400, %p401
    %p403 = scmp.ne.s32.totalorder %s395, %s398
    %p404 = scmp.eq.s32.totalorder %s23, 0
    %p405 = por %p403, %p404
    %p406 = scmp.ne.s32.totalorder %s395, %s398
    %p407 = scmp.eq.s32.totalorder %s28, 1
    %p408 = por %p406, %p407
    %p409 = scmp.ne.s32.totalorder %s398, %s399
    %p410 = scmp.eq.s32.totalorder %s28, 0
    %p411 = por %p409, %p410
    %p412 = scmp.ne.s32.totalorder %s398, %s399
    %p413 = scmp.eq.s32.totalorder %s29, 1
    %p414 = por %p412, %p413
    %p416 = scmp.ne.s32.totalorder %s399, %s415
    %p417 = scmp.eq.s32.totalorder %s29, 0
    %p418 = por %p416, %p417
    %p419 = scmp.le.s32.totalorder 1, %s23
    %p420 = scmp.lt.s32.totalorder %s23, 3
    %p421 = pnand %p419, %p420
    %p422 = pneg %p421
    // Predicated region
    $region9: #{mamba_layer_forward.1} parent=5 // pred_check
      _
    $region10: #{mamba_layer_forward.1} parent=5 // pred_check_branch
      %424 = sbr.rel (%p421) target = $region12
    $region11: #{mamba_layer_forward.1} parent=5 // pred_region
      %s425 = ssub.s32 %s23, 1
      // Predicated region
      $region13: #{mamba_layer_forward.1} parent=11 // pred_check
        %p426 = pneg %p70
      $region14: #{mamba_layer_forward.1} parent=11 // pred_check_branch
        %428 = sbr.rel (%p426) target = $region16
      $region15: #{mamba_layer_forward.1} parent=11 // pred_region
        _
      $region16: #{mamba_layer_forward.1} parent=11 // pred_fallthru
        _
      // Predicated region
      $region17: #{mamba_layer_forward.1} parent=11 // pred_check
        %p429 = pneg %p91
      $region18: #{mamba_layer_forward.1} parent=11 // pred_check_branch
        %431 = sbr.rel (%p429) target = $region20
      $region19: #{mamba_layer_forward.1} parent=11 // pred_region
        _
      $region20: #{mamba_layer_forward.1} parent=11 // pred_fallthru
        _
      // Predicated region
      $region21: #{mamba_layer_forward.1} parent=11 // pred_check
        %p432 = pneg %p112
      $region22: #{mamba_layer_forward.1} parent=11 // pred_check_branch
        %434 = sbr.rel (%p432) target = $region24
      $region23: #{mamba_layer_forward.1} parent=11 // pred_region
        _
      $region24: #{mamba_layer_forward.1} parent=11 // pred_fallthru
        _
      // Predicated region
      $region25: #{mamba_layer_forward.1} parent=11 // pred_check
        %p435 = pneg %p133
      $region26: #{mamba_layer_forward.1} parent=11 // pred_check_branch
        %437 = sbr.rel (%p435) target = $region28
      $region27: #{mamba_layer_forward.1} parent=11 // pred_region
        _
      $region28: #{mamba_layer_forward.1} parent=11 // pred_fallthru
        _
      // Predicated region
      $region29: #{mamba_layer_forward.1} parent=11 // pred_check
        %p438 = pneg %p154
      $region30: #{mamba_layer_forward.1} parent=11 // pred_check_branch
        %440 = sbr.rel (%p438) target = $region32
      $region31: #{mamba_layer_forward.1} parent=11 // pred_region
        _
      $region32: #{mamba_layer_forward.1} parent=11 // pred_fallthru
        _
      // Predicated region
      $region33: #{mamba_layer_forward.1} parent=11 // pred_check
        %p441 = pneg %p175
      $region34: #{mamba_layer_forward.1} parent=11 // pred_check_branch
        %443 = sbr.rel (%p441) target = $region36
      $region35: #{mamba_layer_forward.1} parent=11 // pred_region
        _
      $region36: #{mamba_layer_forward.1} parent=11 // pred_fallthru
        _
      // Predicated region
      $region37: #{mamba_layer_forward.1} parent=11 // pred_check
        %p444 = pneg %p196
      $region38: #{mamba_layer_forward.1} parent=11 // pred_check_branch
        %446 = sbr.rel (%p444) target = $region40
      $region39: #{mamba_layer_forward.1} parent=11 // pred_region
        _
      $region40: #{mamba_layer_forward.1} parent=11 // pred_fallthru
        _
      // Predicated region
      $region41: #{mamba_layer_forward.1} parent=11 // pred_check
        %p447 = pneg %p217
      $region42: #{mamba_layer_forward.1} parent=11 // pred_check_branch
        %449 = sbr.rel (%p447) target = $region44
      $region43: #{mamba_layer_forward.1} parent=11 // pred_region
        _
      $region44: #{mamba_layer_forward.1} parent=11 // pred_fallthru
        _
      // Predicated region
      $region45: #{mamba_layer_forward.1} parent=11 // pred_check
        %p450 = pneg %p238
      $region46: #{mamba_layer_forward.1} parent=11 // pred_check_branch
        %452 = sbr.rel (%p450) target = $region48
      $region47: #{mamba_layer_forward.1} parent=11 // pred_region
        _
      $region48: #{mamba_layer_forward.1} parent=11 // pred_fallthru
        _
      // Predicated region
      $region49: #{mamba_layer_forward.1} parent=11 // pred_check
        %p453 = pneg %p259
      $region50: #{mamba_layer_forward.1} parent=11 // pred_check_branch
        %455 = sbr.rel (%p453) target = $region52
      $region51: #{mamba_layer_forward.1} parent=11 // pred_region
        _
      $region52: #{mamba_layer_forward.1} parent=11 // pred_fallthru
        _
      // Predicated region
      $region53: #{mamba_layer_forward.1} parent=11 // pred_check
        %p456 = pneg %p280
      $region54: #{mamba_layer_forward.1} parent=11 // pred_check_branch
        %458 = sbr.rel (%p456) target = $region56
      $region55: #{mamba_layer_forward.1} parent=11 // pred_region
        _
      $region56: #{mamba_layer_forward.1} parent=11 // pred_fallthru
        _
      // Predicated region
      $region57: #{mamba_layer_forward.1} parent=11 // pred_check
        %p459 = pneg %p301
      $region58: #{mamba_layer_forward.1} parent=11 // pred_check_branch
        %461 = sbr.rel (%p459) target = $region60
      $region59: #{mamba_layer_forward.1} parent=11 // pred_region
        _
      $region60: #{mamba_layer_forward.1} parent=11 // pred_fallthru
        _
      // Predicated region
      $region61: #{mamba_layer_forward.1} parent=11 // pred_check
        %p462 = pneg %p322
      $region62: #{mamba_layer_forward.1} parent=11 // pred_check_branch
        %464 = sbr.rel (%p462) target = $region64
      $region63: #{mamba_layer_forward.1} parent=11 // pred_region
        _
      $region64: #{mamba_layer_forward.1} parent=11 // pred_fallthru
        _
      // Predicated region
      $region65: #{mamba_layer_forward.1} parent=11 // pred_check
        %p465 = pneg %p343
      $region66: #{mamba_layer_forward.1} parent=11 // pred_check_branch
        %467 = sbr.rel (%p465) target = $region68
      $region67: #{mamba_layer_forward.1} parent=11 // pred_region
        _
      $region68: #{mamba_layer_forward.1} parent=11 // pred_fallthru
        _
      // Predicated region
      $region69: #{mamba_layer_forward.1} parent=11 // pred_check
        %p468 = pneg %p364
      $region70: #{mamba_layer_forward.1} parent=11 // pred_check_branch
        %470 = sbr.rel (%p468) target = $region72
      $region71: #{mamba_layer_forward.1} parent=11 // pred_region
        _
      $region72: #{mamba_layer_forward.1} parent=11 // pred_fallthru
        _
      // Predicated region
      $region73: #{mamba_layer_forward.1} parent=11 // pred_check
        %p471 = pneg %p385
      $region74: #{mamba_layer_forward.1} parent=11 // pred_check_branch
        %473 = sbr.rel (%p471) target = $region76
      $region75: #{mamba_layer_forward.1} parent=11 // pred_region
        _
      $region76: #{mamba_layer_forward.1} parent=11 // pred_fallthru
        _
    $region12: #{mamba_layer_forward.1} parent=5 // pred_fallthru
      _
    %p474 = scmp.lt.s32.totalorder %s23, 2
    // Predicated region
    $region77: #{mamba_layer_forward.1} parent=5 // pred_check
      %p475 = pneg %p474
    $region78: #{mamba_layer_forward.1} parent=5 // pred_check_branch
      %477 = sbr.rel (%p475) target = $region80
    $region79: #{mamba_layer_forward.1} parent=5 // pred_region
      // Predicated region
      $region81: #{mamba_layer_forward.1} parent=79 // pred_check
        %p478 = pneg %p43
      $region82: #{mamba_layer_forward.1} parent=79 // pred_check_branch
        %480 = sbr.rel (%p478) target = $region84
      $region83: #{mamba_layer_forward.1} parent=79 // pred_region
        %p481 = scmp.lt.s32.totalorder %s23, 1
        %s482 = scalar_select %p481, %s23, 1
        %s483 = smul.addr %s482, 32
        %s484 = smul.addr %s483, 8
        %s485 = scalar_lea.vmem %s0, %s484
      $region84: #{mamba_layer_forward.1} parent=79 // pred_fallthru
        _
    $region80: #{mamba_layer_forward.1} parent=5 // pred_fallthru
      _
    %p486 = scmp.le.s32.totalorder 1, %s23
    %p487 = scmp.lt.s32.totalorder %s23, 3
    %p488 = pnand %p486, %p487
    %p489 = pneg %p488
    // Predicated region
    $region85: #{mamba_layer_forward.1} parent=5 // pred_check
      _
    $region86: #{mamba_layer_forward.1} parent=5 // pred_check_branch
      %491 = sbr.rel (%p488) target = $region88
    $region87: #{mamba_layer_forward.1} parent=5 // pred_region
      %s492 = ssub.s32 %s23, 1
      %p493 = scmp.lt.s32.totalorder %s28, 1
      %s494 = scalar_select %p493, %s28, 1
      %s495 = smul.addr %s494, 32
      %s496 = smul.addr %s495, 8
      %s497 = scalar_lea.vmem %s0, %s496
      %p498 = pneg %p49
      %p499 = pneg %p46
      %p500 = pneg %p70
      %p501 = pneg %p67
      %p502 = pneg %p91
      %p503 = pneg %p88
      %p504 = pneg %p112
      %p505 = pneg %p109
      %p506 = pneg %p133
      %p507 = pneg %p130
      %p508 = pneg %p154
      %p509 = pneg %p151
      %p510 = pneg %p175
      %p511 = pneg %p172
      %p512 = pneg %p196
      %p513 = pneg %p193
      %p514 = pneg %p217
      %p515 = pneg %p214
      %p516 = pneg %p238
      %p517 = pneg %p235
      %p518 = pneg %p259
      %p519 = pneg %p256
      %p520 = pneg %p280
      %p521 = pneg %p277
      %p522 = pneg %p301
      %p523 = pneg %p298
      %p524 = pneg %p322
      %p525 = pneg %p319
      %p526 = pneg %p343
      %p527 = pneg %p340
      %p528 = pneg %p364
      %p529 = pneg %p361
      %p530 = pneg %p385
      %p531 = pneg %p382
      %p532 = pneg %p411
      %p533 = pneg %p408
      %p534 = scmp.lt.s32.totalorder %s28, 1
      %s535 = scalar_select %p534, %s28, 1
      %s536 = smul.addr %s535, 32
      %s537 = smul.addr %s536, 8
      %s538 = scalar_lea.vmem %s17, %s537
      %p539 = scmp.lt.s32.totalorder %s28, 1
      %s540 = scalar_select %p539, %s28, 1
      %s541 = smul.addr %s540, 32
      %s542 = smul.addr %s541, 8
      %s543 = scalar_lea.vmem %s0, %s542
      %p544 = scmp.lt.s32.totalorder %s28, 1
      %s545 = scalar_select %p544, %s28, 1
      %s546 = smul.addr %s545, 32
      %s547 = smul.addr %s546, 8
      %s548 = scalar_lea.vmem %s17, %s547
      %v549 = vld [vmem:[%s543] sm:$0xff]
      %v550 = vld [vmem:[%s543 + $0x8] sm:$0xff]
      %v551 = vld [vmem:[%s543 + $0x10] sm:$0xff]
      %v552 = vld [vmem:[%s543 + $0x18] sm:$0xff]
      %v553 = vld [vmem:[%s543 + $0x20] sm:$0xff]
      %v554 = vld [vmem:[%s543 + $0x28] sm:$0xff]
      %v555 = vld [vmem:[%s543 + $0x30] sm:$0xff]
      %v556 = vld [vmem:[%s543 + $0x38] sm:$0xff]
      %v557 = vld [vmem:[%s543 + $0x40] sm:$0xff]
      %v558 = vld [vmem:[%s543 + $0x48] sm:$0xff]
      %v559 = vld [vmem:[%s543 + $0x50] sm:$0xff]
      %v560 = vld [vmem:[%s543 + $0x58] sm:$0xff]
      %v561 = vld [vmem:[%s543 + $0x60] sm:$0xff]
      %v562 = vld [vmem:[%s543 + $0x68] sm:$0xff]
      %v563 = vld [vmem:[%s543 + $0x70] sm:$0xff]
      %v564 = vld [vmem:[%s543 + $0x78] sm:$0xff]
      %v565 = vld [vmem:[%s543 + $0x80] sm:$0xff]
      %v566 = vld [vmem:[%s543 + $0x88] sm:$0xff]
      %v567 = vld [vmem:[%s543 + $0x90] sm:$0xff]
      %v568 = vld [vmem:[%s543 + $0x98] sm:$0xff]
      %v569 = vld [vmem:[%s543 + $0xa0] sm:$0xff]
      %v570 = vld [vmem:[%s543 + $0xa8] sm:$0xff]
      %v571 = vld [vmem:[%s543 + $0xb0] sm:$0xff]
      %v572 = vld [vmem:[%s543 + $0xb8] sm:$0xff]
      %v573 = vld [vmem:[%s543 + $0xc0] sm:$0xff]
      %v574 = vld [vmem:[%s543 + $0xc8] sm:$0xff]
      %v575 = vld [vmem:[%s543 + $0xd0] sm:$0xff]
      %v576 = vld [vmem:[%s543 + $0xd8] sm:$0xff]
      %v577 = vld [vmem:[%s543 + $0xe0] sm:$0xff]
      %v578 = vld [vmem:[%s543 + $0xe8] sm:$0xff]
      %v579 = vld [vmem:[%s543 + $0xf0] sm:$0xff]
      %v580 = vld [vmem:[%s543 + $0xf8] sm:$0xff]
      %vm581 = vcmask 31744
      %v582 = vsel %vm581, %v549, 0.0
      %583 = vadd.xlane.f32.xlu0 %v582
      %v584 = vpop.xlane.xlu0 %583
      %v585 = vsel %vm581, %v550, 0.0
      %586 = vadd.xlane.f32.xlu0 %v585
      %v587 = vpop.xlane.xlu0 %586
      %v588 = vsel %vm581, %v551, 0.0
      %589 = vadd.xlane.f32.xlu0 %v588
      %v590 = vpop.xlane.xlu0 %589
      %v591 = vsel %vm581, %v552, 0.0
      %592 = vadd.xlane.f32.xlu0 %v591
      %v593 = vpop.xlane.xlu0 %592
      %v594 = vsel %vm581, %v553, 0.0
      %595 = vadd.xlane.f32.xlu0 %v594
      %v596 = vpop.xlane.xlu0 %595
      %v597 = vsel %vm581, %v554, 0.0
      %598 = vadd.xlane.f32.xlu0 %v597
      %v599 = vpop.xlane.xlu0 %598
      %v600 = vsel %vm581, %v555, 0.0
      %601 = vadd.xlane.f32.xlu0 %v600
      %v602 = vpop.xlane.xlu0 %601
      %v603 = vsel %vm581, %v556, 0.0
      %604 = vadd.xlane.f32.xlu0 %v603
      %v605 = vpop.xlane.xlu0 %604
      %v606 = vsel %vm581, %v557, 0.0
      %607 = vadd.xlane.f32.xlu0 %v606
      %v608 = vpop.xlane.xlu0 %607
      %v609 = vsel %vm581, %v558, 0.0
      %610 = vadd.xlane.f32.xlu0 %v609
      %v611 = vpop.xlane.xlu0 %610
      %v612 = vsel %vm581, %v559, 0.0
      %613 = vadd.xlane.f32.xlu0 %v612
      %v614 = vpop.xlane.xlu0 %613
      %v615 = vsel %vm581, %v560, 0.0
      %616 = vadd.xlane.f32.xlu0 %v615
      %v617 = vpop.xlane.xlu0 %616
      %v618 = vsel %vm581, %v561, 0.0
      %619 = vadd.xlane.f32.xlu0 %v618
      %v620 = vpop.xlane.xlu0 %619
      %v621 = vsel %vm581, %v562, 0.0
      %622 = vadd.xlane.f32.xlu0 %v621
      %v623 = vpop.xlane.xlu0 %622
      %v624 = vsel %vm581, %v563, 0.0
      %625 = vadd.xlane.f32.xlu0 %v624
      %v626 = vpop.xlane.xlu0 %625
      %v627 = vsel %vm581, %v564, 0.0
      %628 = vadd.xlane.f32.xlu0 %v627
      %v629 = vpop.xlane.xlu0 %628
      %v630 = vsel %vm581, %v565, 0.0
      %631 = vadd.xlane.f32.xlu0 %v630
      %v632 = vpop.xlane.xlu0 %631
      %v633 = vsel %vm581, %v566, 0.0
      %634 = vadd.xlane.f32.xlu0 %v633
      %v635 = vpop.xlane.xlu0 %634
      %v636 = vsel %vm581, %v567, 0.0
      %637 = vadd.xlane.f32.xlu0 %v636
      %v638 = vpop.xlane.xlu0 %637
      %v639 = vsel %vm581, %v568, 0.0
      %640 = vadd.xlane.f32.xlu0 %v639
      %v641 = vpop.xlane.xlu0 %640
      %v642 = vsel %vm581, %v569, 0.0
      %643 = vadd.xlane.f32.xlu0 %v642
      %v644 = vpop.xlane.xlu0 %643
      %v645 = vsel %vm581, %v570, 0.0
      %646 = vadd.xlane.f32.xlu0 %v645
      %v647 = vpop.xlane.xlu0 %646
      %v648 = vsel %vm581, %v571, 0.0
      %649 = vadd.xlane.f32.xlu0 %v648
      %v650 = vpop.xlane.xlu0 %649
      %v651 = vsel %vm581, %v572, 0.0
      %652 = vadd.xlane.f32.xlu0 %v651
      %v653 = vpop.xlane.xlu0 %652
      %v654 = vsel %vm581, %v573, 0.0
      %655 = vadd.xlane.f32.xlu0 %v654
      %v656 = vpop.xlane.xlu0 %655
      %v657 = vsel %vm581, %v574, 0.0
      %658 = vadd.xlane.f32.xlu0 %v657
      %v659 = vpop.xlane.xlu0 %658
      %v660 = vsel %vm581, %v575, 0.0
      %661 = vadd.xlane.f32.xlu0 %v660
      %v662 = vpop.xlane.xlu0 %661
      %v663 = vsel %vm581, %v576, 0.0
      %664 = vadd.xlane.f32.xlu0 %v663
      %v665 = vpop.xlane.xlu0 %664
      %v666 = vsel %vm581, %v577, 0.0
      %667 = vadd.xlane.f32.xlu0 %v666
      %v668 = vpop.xlane.xlu0 %667
      %v669 = vsel %vm581, %v578, 0.0
      %670 = vadd.xlane.f32.xlu0 %v669
      %v671 = vpop.xlane.xlu0 %670
      %v672 = vsel %vm581, %v579, 0.0
      %673 = vadd.xlane.f32.xlu0 %v672
      %v674 = vpop.xlane.xlu0 %673
      %v675 = vsel %vm581, %v580, 0.0
      %676 = vadd.xlane.f32.xlu0 %v675
      %v677 = vpop.xlane.xlu0 %676
      %v678 = vrcp.pop 4.0
      %v679 = vmul.f32 %v584, %v678
      %v680 = vmul.f32 %v587, %v678
      %v681 = vmul.f32 %v590, %v678
      %v682 = vmul.f32 %v593, %v678
      %v683 = vmul.f32 %v596, %v678
      %v684 = vmul.f32 %v599, %v678
      %v685 = vmul.f32 %v602, %v678
      %v686 = vmul.f32 %v605, %v678
      %v687 = vmul.f32 %v608, %v678
      %v688 = vmul.f32 %v611, %v678
      %v689 = vmul.f32 %v614, %v678
      %v690 = vmul.f32 %v617, %v678
      %v691 = vmul.f32 %v620, %v678
      %v692 = vmul.f32 %v623, %v678
      %v693 = vmul.f32 %v626, %v678
      %v694 = vmul.f32 %v629, %v678
      %v695 = vmul.f32 %v632, %v678
      %v696 = vmul.f32 %v635, %v678
      %v697 = vmul.f32 %v638, %v678
      %v698 = vmul.f32 %v641, %v678
      %v699 = vmul.f32 %v644, %v678
      %v700 = vmul.f32 %v647, %v678
      %v701 = vmul.f32 %v650, %v678
      %v702 = vmul.f32 %v653, %v678
      %v703 = vmul.f32 %v656, %v678
      %v704 = vmul.f32 %v659, %v678
      %v705 = vmul.f32 %v662, %v678
      %v706 = vmul.f32 %v665, %v678
      %v707 = vmul.f32 %v668, %v678
      %v708 = vmul.f32 %v671, %v678
      %v709 = vmul.f32 %v674, %v678
      %v710 = vmul.f32 %v677, %v678
      %v711 = vsub.f32 %v549, %v679
      %v712 = vsub.f32 %v550, %v680
      %v713 = vsub.f32 %v551, %v681
      %v714 = vsub.f32 %v552, %v682
      %v715 = vsub.f32 %v553, %v683
      %v716 = vsub.f32 %v554, %v684
      %v717 = vsub.f32 %v555, %v685
      %v718 = vsub.f32 %v556, %v686
      %v719 = vsub.f32 %v557, %v687
      %v720 = vsub.f32 %v558, %v688
      %v721 = vsub.f32 %v559, %v689
      %v722 = vsub.f32 %v560, %v690
      %v723 = vsub.f32 %v561, %v691
      %v724 = vsub.f32 %v562, %v692
      %v725 = vsub.f32 %v563, %v693
      %v726 = vsub.f32 %v564, %v694
      %v727 = vsub.f32 %v565, %v695
      %v728 = vsub.f32 %v566, %v696
      %v729 = vsub.f32 %v567, %v697
      %v730 = vsub.f32 %v568, %v698
      %v731 = vsub.f32 %v569, %v699
      %v732 = vsub.f32 %v570, %v700
      %v733 = vsub.f32 %v571, %v701
      %v734 = vsub.f32 %v572, %v702
      %v735 = vsub.f32 %v573, %v703
      %v736 = vsub.f32 %v574, %v704
      %v737 = vsub.f32 %v575, %v705
      %v738 = vsub.f32 %v576, %v706
      %v739 = vsub.f32 %v577, %v707
      %v740 = vsub.f32 %v578, %v708
      %v741 = vsub.f32 %v579, %v709
      %v742 = vsub.f32 %v580, %v710
      %v743 = vmul.f32 %v711, %v711
      %v744 = vmul.f32 %v712, %v712
      %v745 = vmul.f32 %v713, %v713
      %v746 = vmul.f32 %v714, %v714
      %v747 = vmul.f32 %v715, %v715
      %v748 = vmul.f32 %v716, %v716
      %v749 = vmul.f32 %v717, %v717
      %v750 = vmul.f32 %v718, %v718
      %v751 = vmul.f32 %v719, %v719
      %v752 = vmul.f32 %v720, %v720
      %v753 = vmul.f32 %v721, %v721
      %v754 = vmul.f32 %v722, %v722
      %v755 = vmul.f32 %v723, %v723
      %v756 = vmul.f32 %v724, %v724
      %v757 = vmul.f32 %v725, %v725
      %v758 = vmul.f32 %v726, %v726
      %v759 = vmul.f32 %v727, %v727
      %v760 = vmul.f32 %v728, %v728
      %v761 = vmul.f32 %v729, %v729
      %v762 = vmul.f32 %v730, %v730
      %v763 = vmul.f32 %v731, %v731
      %v764 = vmul.f32 %v732, %v732
      %v765 = vmul.f32 %v733, %v733
      %v766 = vmul.f32 %v734, %v734
      %v767 = vmul.f32 %v735, %v735
      %v768 = vmul.f32 %v736, %v736
      %v769 = vmul.f32 %v737, %v737
      %v770 = vmul.f32 %v738, %v738
      %v771 = vmul.f32 %v739, %v739
      %v772 = vmul.f32 %v740, %v740
      %v773 = vmul.f32 %v741, %v741
      %v774 = vmul.f32 %v742, %v742
      %v775 = vsel %vm581, %v743, 0.0
      %776 = vadd.xlane.f32.xlu0 %v775
      %v777 = vpop.xlane.xlu0 %776
      %v778 = vsel %vm581, %v744, 0.0
      %779 = vadd.xlane.f32.xlu0 %v778
      %v780 = vpop.xlane.xlu0 %779
      %v781 = vsel %vm581, %v745, 0.0
      %782 = vadd.xlane.f32.xlu0 %v781
      %v783 = vpop.xlane.xlu0 %782
      %v784 = vsel %vm581, %v746, 0.0
      %785 = vadd.xlane.f32.xlu0 %v784
      %v786 = vpop.xlane.xlu0 %785
      %v787 = vsel %vm581, %v747, 0.0
      %788 = vadd.xlane.f32.xlu0 %v787
      %v789 = vpop.xlane.xlu0 %788
      %v790 = vsel %vm581, %v748, 0.0
      %791 = vadd.xlane.f32.xlu0 %v790
      %v792 = vpop.xlane.xlu0 %791
      %v793 = vsel %vm581, %v749, 0.0
      %794 = vadd.xlane.f32.xlu0 %v793
      %v795 = vpop.xlane.xlu0 %794
      %v796 = vsel %vm581, %v750, 0.0
      %797 = vadd.xlane.f32.xlu0 %v796
      %v798 = vpop.xlane.xlu0 %797
      %v799 = vsel %vm581, %v751, 0.0
      %800 = vadd.xlane.f32.xlu0 %v799
      %v801 = vpop.xlane.xlu0 %800
      %v802 = vsel %vm581, %v752, 0.0
      %803 = vadd.xlane.f32.xlu0 %v802
      %v804 = vpop.xlane.xlu0 %803
      %v805 = vsel %vm581, %v753, 0.0
      %806 = vadd.xlane.f32.xlu0 %v805
      %v807 = vpop.xlane.xlu0 %806
      %v808 = vsel %vm581, %v754, 0.0
      %809 = vadd.xlane.f32.xlu0 %v808
      %v810 = vpop.xlane.xlu0 %809
      %v811 = vsel %vm581, %v755, 0.0
      %812 = vadd.xlane.f32.xlu0 %v811
      %v813 = vpop.xlane.xlu0 %812
      %v814 = vsel %vm581, %v756, 0.0
      %815 = vadd.xlane.f32.xlu0 %v814
      %v816 = vpop.xlane.xlu0 %815
      %v817 = vsel %vm581, %v757, 0.0
      %818 = vadd.xlane.f32.xlu0 %v817
      %v819 = vpop.xlane.xlu0 %818
      %v820 = vsel %vm581, %v758, 0.0
      %821 = vadd.xlane.f32.xlu0 %v820
      %v822 = vpop.xlane.xlu0 %821
      %v823 = vsel %vm581, %v759, 0.0
      %824 = vadd.xlane.f32.xlu0 %v823
      %v825 = vpop.xlane.xlu0 %824
      %v826 = vsel %vm581, %v760, 0.0
      %827 = vadd.xlane.f32.xlu0 %v826
      %v828 = vpop.xlane.xlu0 %827
      %v829 = vsel %vm581, %v761, 0.0
      %830 = vadd.xlane.f32.xlu0 %v829
      %v831 = vpop.xlane.xlu0 %830
      %v832 = vsel %vm581, %v762, 0.0
      %833 = vadd.xlane.f32.xlu0 %v832
      %v834 = vpop.xlane.xlu0 %833
      %v835 = vsel %vm581, %v763, 0.0
      %836 = vadd.xlane.f32.xlu0 %v835
      %v837 = vpop.xlane.xlu0 %836
      %v838 = vsel %vm581, %v764, 0.0
      %839 = vadd.xlane.f32.xlu0 %v838
      %v840 = vpop.xlane.xlu0 %839
      %v841 = vsel %vm581, %v765, 0.0
      %842 = vadd.xlane.f32.xlu0 %v841
      %v843 = vpop.xlane.xlu0 %842
      %v844 = vsel %vm581, %v766, 0.0
      %845 = vadd.xlane.f32.xlu0 %v844
      %v846 = vpop.xlane.xlu0 %845
      %v847 = vsel %vm581, %v767, 0.0
      %848 = vadd.xlane.f32.xlu0 %v847
      %v849 = vpop.xlane.xlu0 %848
      %v850 = vsel %vm581, %v768, 0.0
      %851 = vadd.xlane.f32.xlu0 %v850
      %v852 = vpop.xlane.xlu0 %851
      %v853 = vsel %vm581, %v769, 0.0
      %854 = vadd.xlane.f32.xlu0 %v853
      %v855 = vpop.xlane.xlu0 %854
      %v856 = vsel %vm581, %v770, 0.0
      %857 = vadd.xlane.f32.xlu0 %v856
      %v858 = vpop.xlane.xlu0 %857
      %v859 = vsel %vm581, %v771, 0.0
      %860 = vadd.xlane.f32.xlu0 %v859
      %v861 = vpop.xlane.xlu0 %860
      %v862 = vsel %vm581, %v772, 0.0
      %863 = vadd.xlane.f32.xlu0 %v862
      %v864 = vpop.xlane.xlu0 %863
      %v865 = vsel %vm581, %v773, 0.0
      %866 = vadd.xlane.f32.xlu0 %v865
      %v867 = vpop.xlane.xlu0 %866
      %v868 = vsel %vm581, %v774, 0.0
      %869 = vadd.xlane.f32.xlu0 %v868
      %v870 = vpop.xlane.xlu0 %869
      %v871 = vmul.f32 %v777, %v678
      %v872 = vmul.f32 %v780, %v678
      %v873 = vmul.f32 %v783, %v678
      %v874 = vmul.f32 %v786, %v678
      %v875 = vmul.f32 %v789, %v678
      %v876 = vmul.f32 %v792, %v678
      %v877 = vmul.f32 %v795, %v678
      %v878 = vmul.f32 %v798, %v678
      %v879 = vmul.f32 %v801, %v678
      %v880 = vmul.f32 %v804, %v678
      %v881 = vmul.f32 %v807, %v678
      %v882 = vmul.f32 %v810, %v678
      %v883 = vmul.f32 %v813, %v678
      %v884 = vmul.f32 %v816, %v678
      %v885 = vmul.f32 %v819, %v678
      %v886 = vmul.f32 %v822, %v678
      %v887 = vmul.f32 %v825, %v678
      %v888 = vmul.f32 %v828, %v678
      %v889 = vmul.f32 %v831, %v678
      %v890 = vmul.f32 %v834, %v678
      %v891 = vmul.f32 %v837, %v678
      %v892 = vmul.f32 %v840, %v678
      %v893 = vmul.f32 %v843, %v678
      %v894 = vmul.f32 %v846, %v678
      %v895 = vmul.f32 %v849, %v678
      %v896 = vmul.f32 %v852, %v678
      %v897 = vmul.f32 %v855, %v678
      %v898 = vmul.f32 %v858, %v678
      %v899 = vmul.f32 %v861, %v678
      %v900 = vmul.f32 %v864, %v678
      %v901 = vmul.f32 %v867, %v678
      %v902 = vmul.f32 %v870, %v678
      %v903 = vadd.f32 %v871, 1e-05
      %v904 = vadd.f32 %v872, 1e-05
      %v905 = vadd.f32 %v873, 1e-05
      %v906 = vadd.f32 %v874, 1e-05
      %v907 = vadd.f32 %v875, 1e-05
      %v908 = vadd.f32 %v876, 1e-05
      %v909 = vadd.f32 %v877, 1e-05
      %v910 = vadd.f32 %v878, 1e-05
      %v911 = vadd.f32 %v879, 1e-05
      %v912 = vadd.f32 %v880, 1e-05
      %v913 = vadd.f32 %v881, 1e-05
      %v914 = vadd.f32 %v882, 1e-05
      %v915 = vadd.f32 %v883, 1e-05
      %v916 = vadd.f32 %v884, 1e-05
      %v917 = vadd.f32 %v885, 1e-05
      %v918 = vadd.f32 %v886, 1e-05
      %v919 = vadd.f32 %v887, 1e-05
      %v920 = vadd.f32 %v888, 1e-05
      %v921 = vadd.f32 %v889, 1e-05
      %v922 = vadd.f32 %v890, 1e-05
      %v923 = vadd.f32 %v891, 1e-05
      %v924 = vadd.f32 %v892, 1e-05
      %v925 = vadd.f32 %v893, 1e-05
      %v926 = vadd.f32 %v894, 1e-05
      %v927 = vadd.f32 %v895, 1e-05
      %v928 = vadd.f32 %v896, 1e-05
      %v929 = vadd.f32 %v897, 1e-05
      %v930 = vadd.f32 %v898, 1e-05
      %v931 = vadd.f32 %v899, 1e-05
      %v932 = vadd.f32 %v900, 1e-05
      %v933 = vadd.f32 %v901, 1e-05
      %v934 = vadd.f32 %v902, 1e-05
      %v935 = vrsqrt.pop %v903
      %v936 = vrsqrt.pop %v904
      %v937 = vrsqrt.pop %v905
      %v938 = vrsqrt.pop %v906
      %v939 = vrsqrt.pop %v907
      %v940 = vrsqrt.pop %v908
      %v941 = vrsqrt.pop %v909
      %v942 = vrsqrt.pop %v910
      %v943 = vrsqrt.pop %v911
      %v944 = vrsqrt.pop %v912
      %v945 = vrsqrt.pop %v913
      %v946 = vrsqrt.pop %v914
      %v947 = vrsqrt.pop %v915
      %v948 = vrsqrt.pop %v916
      %v949 = vrsqrt.pop %v917
      %v950 = vrsqrt.pop %v918
      %v951 = vrsqrt.pop %v919
      %v952 = vrsqrt.pop %v920
      %v953 = vrsqrt.pop %v921
      %v954 = vrsqrt.pop %v922
      %v955 = vrsqrt.pop %v923
      %v956 = vrsqrt.pop %v924
      %v957 = vrsqrt.pop %v925
      %v958 = vrsqrt.pop %v926
      %v959 = vrsqrt.pop %v927
      %v960 = vrsqrt.pop %v928
      %v961 = vrsqrt.pop %v929
      %v962 = vrsqrt.pop %v930
      %v963 = vrsqrt.pop %v931
      %v964 = vrsqrt.pop %v932
      %v965 = vrsqrt.pop %v933
      %v966 = vrsqrt.pop %v934
      %v967 = vmul.f32 %v711, %v935
      %v968 = vmul.f32 %v712, %v936
      %v969 = vmul.f32 %v713, %v937
      %v970 = vmul.f32 %v714, %v938
      %v971 = vmul.f32 %v715, %v939
      %v972 = vmul.f32 %v716, %v940
      %v973 = vmul.f32 %v717, %v941
      %v974 = vmul.f32 %v718, %v942
      %v975 = vmul.f32 %v719, %v943
      %v976 = vmul.f32 %v720, %v944
      %v977 = vmul.f32 %v721, %v945
      %v978 = vmul.f32 %v722, %v946
      %v979 = vmul.f32 %v723, %v947
      %v980 = vmul.f32 %v724, %v948
      %v981 = vmul.f32 %v725, %v949
      %v982 = vmul.f32 %v726, %v950
      %v983 = vmul.f32 %v727, %v951
      %v984 = vmul.f32 %v728, %v952
      %v985 = vmul.f32 %v729, %v953
      %v986 = vmul.f32 %v730, %v954
      %v987 = vmul.f32 %v731, %v955
      %v988 = vmul.f32 %v732, %v956
      %v989 = vmul.f32 %v733, %v957
      %v990 = vmul.f32 %v734, %v958
      %v991 = vmul.f32 %v735, %v959
      %v992 = vmul.f32 %v736, %v960
      %v993 = vmul.f32 %v737, %v961
      %v994 = vmul.f32 %v738, %v962
      %v995 = vmul.f32 %v739, %v963
      %v996 = vmul.f32 %v740, %v964
      %v997 = vmul.f32 %v741, %v965
      %v998 = vmul.f32 %v742, %v966
      %v999 = vld [vmem:[%s1] sm:$0x1]
      %v1001 = vlaneseq
      %v1002 = vshrl.u32 %v1001, 7
      %v1003 = vsub.s32 0, %v1002
      %v1004 = vrot.slane %v999, %v1003
      %v1006 = vmul.f32 %v967, %v1004
      %v1007 = vmul.f32 %v968, %v1004
      %v1008 = vmul.f32 %v969, %v1004
      %v1009 = vmul.f32 %v970, %v1004
      %v1010 = vmul.f32 %v971, %v1004
      %v1011 = vmul.f32 %v972, %v1004
      %v1012 = vmul.f32 %v973, %v1004
      %v1013 = vmul.f32 %v974, %v1004
      %v1014 = vmul.f32 %v975, %v1004
      %v1015 = vmul.f32 %v976, %v1004
      %v1016 = vmul.f32 %v977, %v1004
      %v1017 = vmul.f32 %v978, %v1004
      %v1018 = vmul.f32 %v979, %v1004
      %v1019 = vmul.f32 %v980, %v1004
      %v1020 = vmul.f32 %v981, %v1004
      %v1021 = vmul.f32 %v982, %v1004
      %v1022 = vmul.f32 %v983, %v1004
      %v1023 = vmul.f32 %v984, %v1004
      %v1024 = vmul.f32 %v985, %v1004
      %v1025 = vmul.f32 %v986, %v1004
      %v1026 = vmul.f32 %v987, %v1004
      %v1027 = vmul.f32 %v988, %v1004
      %v1028 = vmul.f32 %v989, %v1004
      %v1029 = vmul.f32 %v990, %v1004
      %v1030 = vmul.f32 %v991, %v1004
      %v1031 = vmul.f32 %v992, %v1004
      %v1032 = vmul.f32 %v993, %v1004
      %v1033 = vmul.f32 %v994, %v1004
      %v1034 = vmul.f32 %v995, %v1004
      %v1035 = vmul.f32 %v996, %v1004
      %v1036 = vmul.f32 %v997, %v1004
      %v1037 = vmul.f32 %v998, %v1004
      %v1038 = vld [vmem:[%s2] sm:$0x1]
      %v1040 = vlaneseq
      %v1041 = vshrl.u32 %v1040, 7
      %v1042 = vsub.s32 0, %v1041
      %v1043 = vrot.slane %v1038, %v1042
      %v1045 = vadd.f32 %v1006, %v1043
      %v1046 = vadd.f32 %v1007, %v1043
      %v1047 = vadd.f32 %v1008, %v1043
      %v1048 = vadd.f32 %v1009, %v1043
      %v1049 = vadd.f32 %v1010, %v1043
      %v1050 = vadd.f32 %v1011, %v1043
      %v1051 = vadd.f32 %v1012, %v1043
      %v1052 = vadd.f32 %v1013, %v1043
      %v1053 = vadd.f32 %v1014, %v1043
      %v1054 = vadd.f32 %v1015, %v1043
      %v1055 = vadd.f32 %v1016, %v1043
      %v1056 = vadd.f32 %v1017, %v1043
      %v1057 = vadd.f32 %v1018, %v1043
      %v1058 = vadd.f32 %v1019, %v1043
      %v1059 = vadd.f32 %v1020, %v1043
      %v1060 = vadd.f32 %v1021, %v1043
      %v1061 = vadd.f32 %v1022, %v1043
      %v1062 = vadd.f32 %v1023, %v1043
      %v1063 = vadd.f32 %v1024, %v1043
      %v1064 = vadd.f32 %v1025, %v1043
      %v1065 = vadd.f32 %v1026, %v1043
      %v1066 = vadd.f32 %v1027, %v1043
      %v1067 = vadd.f32 %v1028, %v1043
      %v1068 = vadd.f32 %v1029, %v1043
      %v1069 = vadd.f32 %v1030, %v1043
      %v1070 = vadd.f32 %v1031, %v1043
      %v1071 = vadd.f32 %v1032, %v1043
      %v1072 = vadd.f32 %v1033, %v1043
      %v1073 = vadd.f32 %v1034, %v1043
      %v1074 = vadd.f32 %v1035, %v1043
      %v1075 = vadd.f32 %v1036, %v1043
      %v1076 = vadd.f32 %v1037, %v1043
      %v1077 = vld [vmem:[%s3] sm:$0xf]
      %v1079 = vsel %vm581, %v1045, 0
      %v1082 = vsel %vm581, %v1046, 0
      %v1085 = vsel %vm581, %v1047, 0
      %v1088 = vsel %vm581, %v1048, 0
      %v1091 = vsel %vm581, %v1049, 0
      %v1094 = vsel %vm581, %v1050, 0
      %v1097 = vsel %vm581, %v1051, 0
      %v1100 = vsel %vm581, %v1052, 0
      %v1103 = vsel %vm581, %v1053, 0
      %v1106 = vsel %vm581, %v1054, 0
      %v1109 = vsel %vm581, %v1055, 0
      %v1112 = vsel %vm581, %v1056, 0
      %v1115 = vsel %vm581, %v1057, 0
      %v1118 = vsel %vm581, %v1058, 0
      %v1121 = vsel %vm581, %v1059, 0
      %v1124 = vsel %vm581, %v1060, 0
      %v1127 = vsel %vm581, %v1061, 0
      %v1130 = vsel %vm581, %v1062, 0
      %v1133 = vsel %vm581, %v1063, 0
      %v1136 = vsel %vm581, %v1064, 0
      %v1139 = vsel %vm581, %v1065, 0
      %v1142 = vsel %vm581, %v1066, 0
      %v1145 = vsel %vm581, %v1067, 0
      %v1148 = vsel %vm581, %v1068, 0
      %v1151 = vsel %vm581, %v1069, 0
      %v1154 = vsel %vm581, %v1070, 0
      %v1157 = vsel %vm581, %v1071, 0
      %v1160 = vsel %vm581, %v1072, 0
      %v1163 = vsel %vm581, %v1073, 0
      %v1166 = vsel %vm581, %v1074, 0
      %v1169 = vsel %vm581, %v1075, 0
      %v1172 = vsel %vm581, %v1076, 0
      %vm1174 = vcmask 1043456
      %v1176 = vsel %vm1174, %v1077, 0
      %1178 = vmatprep.subr.mxu0 0.0
      %1179 = vmatpush1.msra.mxu0 0.0
      %1180 = vmatprep.subr.mxu0 0.0
      %1181 = vmatpush1.msra.mxu0 0.0
      %1182 = vmatprep.subr.mxu0 0.0
      %1183 = vmatpush1.msra.mxu0 0.0
      %1184 = vmatprep.subr.mxu0 0.0
      %1185 = vmatpush1.msra.mxu0 0.0
      %1186 = vmatprep.subr.mxu0 0.0
      %1187 = vmatpush1.msra.mxu0 0.0
      %1188 = vmatprep.subr.mxu0 0.0
      %1189 = vmatpush1.msra.mxu0 0.0
      %1190 = vmatprep.subr.mxu0 0.0
      %1191 = vmatpush1.msra.mxu0 0.0
      %1192 = vmatprep.subr.mxu0 0.0
      %1193 = vmatpush1.msra.mxu0 0.0
      %1194 = vmatprep.subr.mxu0 0.0
      %1195 = vmatpush1.msra.mxu0 0.0
      %1196 = vmatprep.subr.mxu0 0.0
      %1197 = vmatpush1.msra.mxu0 0.0
      %1198 = vmatprep.subr.mxu0 0.0
      %1199 = vmatpush1.msra.mxu0 0.0
      %1200 = vmatprep.subr.mxu0 0.0
      %1201 = vmatpush1.msra.mxu0 0.0
      %1202 = vmatprep.subr.mxu0 0.0
      %1203 = vmatpush1.msra.mxu0 0.0
      %1204 = vmatprep.subr.mxu0 0.0
      %1205 = vmatpush1.msra.mxu0 0.0
      %1206 = vmatprep.subr.mxu0 0.0
      %1207 = vmatpush1.msra.mxu0 0.0
      %1208 = vmatprep.subr.mxu0 0.0
      %1209 = vmatpush1.msra.mxu0 %v1176
      %1210 = vmatprep.subr.mxu0 0.0
      %1211 = vmatpush2.msra.mxu0 0.0
      %1212 = vmatprep.subr.mxu0 0.0
      %1213 = vmatpush2.msra.mxu0 0.0
      %1214 = vmatprep.subr.mxu0 0.0
      %1215 = vmatpush2.msra.mxu0 0.0
      %1216 = vmatprep.subr.mxu0 0.0
      %1217 = vmatpush2.msra.mxu0 0.0
      %1218 = vmatprep.subr.mxu0 0.0
      %1219 = vmatpush2.msra.mxu0 0.0
      %1220 = vmatprep.subr.mxu0 0.0
      %1221 = vmatpush2.msra.mxu0 0.0
      %1222 = vmatprep.subr.mxu0 0.0
      %1223 = vmatpush2.msra.mxu0 0.0
      %1224 = vmatprep.subr.mxu0 0.0
      %1225 = vmatpush2.msra.mxu0 0.0
      %1226 = vmatprep.subr.mxu0 0.0
      %1227 = vmatpush2.msra.mxu0 0.0
      %1228 = vmatprep.subr.mxu0 0.0
      %1229 = vmatpush2.msra.mxu0 0.0
      %1230 = vmatprep.subr.mxu0 0.0
      %1231 = vmatpush2.msra.mxu0 0.0
      %1232 = vmatprep.subr.mxu0 0.0
      %1233 = vmatpush2.msra.mxu0 0.0
      %1234 = vmatprep.subr.mxu0 0.0
      %1235 = vmatpush2.msra.mxu0 0.0
      %1236 = vmatprep.subr.mxu0 0.0
      %1237 = vmatpush2.msra.mxu0 0.0
      %1238 = vmatprep.subr.mxu0 0.0
      %1239 = vmatpush2.msra.mxu0 0.0
      %1240 = vmatprep.subr.mxu0 0.0
      %1241 = vmatpush2.msra.mxu0 0.0
      %1242 = vmatprep.mubr.f32.mxu0 0.0
      %1243 = vmatmul.mubr.f32.gmra.mxu0 %v1079
      %v1244 = vpop.f32.mrf.mxu0
      %v1245 = vadd.f32 0.0, %v1244
      %v1246 = vpop.f32.mrf.mxu0
      %1247 = vmatprep.mubr.f32.mxu0 0.0
      %1248 = vmatmul.mubr.f32.gmra.mxu0 %v1082
      %v1249 = vpop.f32.mrf.mxu0
      %v1250 = vadd.f32 0.0, %v1249
      %v1251 = vpop.f32.mrf.mxu0
      %1252 = vmatprep.mubr.f32.mxu0 0.0
      %1253 = vmatmul.mubr.f32.gmra.mxu0 %v1085
      %v1254 = vpop.f32.mrf.mxu0
      %v1255 = vadd.f32 0.0, %v1254
      %v1256 = vpop.f32.mrf.mxu0
      %1257 = vmatprep.mubr.f32.mxu0 0.0
      %1258 = vmatmul.mubr.f32.gmra.mxu0 %v1088
      %v1259 = vpop.f32.mrf.mxu0
      %v1260 = vadd.f32 0.0, %v1259
      %v1261 = vpop.f32.mrf.mxu0
      %1262 = vmatprep.mubr.f32.mxu0 0.0
      %1263 = vmatmul.mubr.f32.gmra.mxu0 %v1091
      %v1264 = vpop.f32.mrf.mxu0
      %v1265 = vadd.f32 0.0, %v1264
      %v1266 = vpop.f32.mrf.mxu0
      %1267 = vmatprep.mubr.f32.mxu0 0.0
      %1268 = vmatmul.mubr.f32.gmra.mxu0 %v1094
      %v1269 = vpop.f32.mrf.mxu0
      %v1270 = vadd.f32 0.0, %v1269
      %v1271 = vpop.f32.mrf.mxu0
      %1272 = vmatprep.mubr.f32.mxu0 0.0
      %1273 = vmatmul.mubr.f32.gmra.mxu0 %v1097
      %v1274 = vpop.f32.mrf.mxu0
      %v1275 = vadd.f32 0.0, %v1274
      %v1276 = vpop.f32.mrf.mxu0
      %1277 = vmatprep.mubr.f32.mxu0 0.0
      %1278 = vmatmul.mubr.f32.gmra.mxu0 %v1100
      %v1279 = vpop.f32.mrf.mxu0
      %v1280 = vadd.f32 0.0, %v1279
      %v1281 = vpop.f32.mrf.mxu0
      %1282 = vmatprep.mubr.f32.mxu0 0.0
      %1283 = vmatmul.mubr.f32.gmra.mxu0 %v1103
      %v1284 = vpop.f32.mrf.mxu0
      %v1285 = vadd.f32 0.0, %v1284
      %v1286 = vpop.f32.mrf.mxu0
      %1287 = vmatprep.mubr.f32.mxu0 0.0
      %1288 = vmatmul.mubr.f32.gmra.mxu0 %v1106
      %v1289 = vpop.f32.mrf.mxu0
      %v1290 = vadd.f32 0.0, %v1289
      %v1291 = vpop.f32.mrf.mxu0
      %1292 = vmatprep.mubr.f32.mxu0 0.0
      %1293 = vmatmul.mubr.f32.gmra.mxu0 %v1109
      %v1294 = vpop.f32.mrf.mxu0
      %v1295 = vadd.f32 0.0, %v1294
      %v1296 = vpop.f32.mrf.mxu0
      %1297 = vmatprep.mubr.f32.mxu0 0.0
      %1298 = vmatmul.mubr.f32.gmra.mxu0 %v1112
      %v1299 = vpop.f32.mrf.mxu0
      %v1300 = vadd.f32 0.0, %v1299
      %v1301 = vpop.f32.mrf.mxu0
      %1302 = vmatprep.mubr.f32.mxu0 0.0
      %1303 = vmatmul.mubr.f32.gmra.mxu0 %v1115
      %v1304 = vpop.f32.mrf.mxu0
      %v1305 = vadd.f32 0.0, %v1304
      %v1306 = vpop.f32.mrf.mxu0
      %1307 = vmatprep.mubr.f32.mxu0 0.0
      %1308 = vmatmul.mubr.f32.gmra.mxu0 %v1118
      %v1309 = vpop.f32.mrf.mxu0
      %v1310 = vadd.f32 0.0, %v1309
      %v1311 = vpop.f32.mrf.mxu0
      %1312 = vmatprep.mubr.f32.mxu0 0.0
      %1313 = vmatmul.mubr.f32.gmra.mxu0 %v1121
      %v1314 = vpop.f32.mrf.mxu0
      %v1315 = vadd.f32 0.0, %v1314
      %v1316 = vpop.f32.mrf.mxu0
      %1317 = vmatprep.mubr.f32.mxu0 0.0
      %1318 = vmatmul.mubr.f32.gmra.mxu0 %v1124
      %v1319 = vpop.f32.mrf.mxu0
      %v1320 = vadd.f32 0.0, %v1319
      %v1321 = vpop.f32.mrf.mxu0
      %1322 = vmatprep.mubr.f32.mxu0 0.0
      %1323 = vmatmul.mubr.f32.gmra.mxu0 %v1127
      %v1324 = vpop.f32.mrf.mxu0
      %v1325 = vadd.f32 0.0, %v1324
      %v1326 = vpop.f32.mrf.mxu0
      %1327 = vmatprep.mubr.f32.mxu0 0.0
      %1328 = vmatmul.mubr.f32.gmra.mxu0 %v1130
      %v1329 = vpop.f32.mrf.mxu0
      %v1330 = vadd.f32 0.0, %v1329
      %v1331 = vpop.f32.mrf.mxu0
      %1332 = vmatprep.mubr.f32.mxu0 0.0
      %1333 = vmatmul.mubr.f32.gmra.mxu0 %v1133
      %v1334 = vpop.f32.mrf.mxu0
      %v1335 = vadd.f32 0.0, %v1334
      %v1336 = vpop.f32.mrf.mxu0
      %1337 = vmatprep.mubr.f32.mxu0 0.0
      %1338 = vmatmul.mubr.f32.gmra.mxu0 %v1136
      %v1339 = vpop.f32.mrf.mxu0
      %v1340 = vadd.f32 0.0, %v1339
      %v1341 = vpop.f32.mrf.mxu0
      %1342 = vmatprep.mubr.f32.mxu0 0.0
      %1343 = vmatmul.mubr.f32.gmra.mxu0 %v1139
      %v1344 = vpop.f32.mrf.mxu0
      %v1345 = vadd.f32 0.0, %v1344
      %v1346 = vpop.f32.mrf.mxu0
      %1347 = vmatprep.mubr.f32.mxu0 0.0
      %1348 = vmatmul.mubr.f32.gmra.mxu0 %v1142
      %v1349 = vpop.f32.mrf.mxu0
      %v1350 = vadd.f32 0.0, %v1349
      %v1351 = vpop.f32.mrf.mxu0
      %1352 = vmatprep.mubr.f32.mxu0 0.0
      %1353 = vmatmul.mubr.f32.gmra.mxu0 %v1145
      %v1354 = vpop.f32.mrf.mxu0
      %v1355 = vadd.f32 0.0, %v1354
      %v1356 = vpop.f32.mrf.mxu0
      %1357 = vmatprep.mubr.f32.mxu0 0.0
      %1358 = vmatmul.mubr.f32.gmra.mxu0 %v1148
      %v1359 = vpop.f32.mrf.mxu0
      %v1360 = vadd.f32 0.0, %v1359
      %v1361 = vpop.f32.mrf.mxu0
      %1362 = vmatprep.mubr.f32.mxu0 0.0
      %1363 = vmatmul.mubr.f32.gmra.mxu0 %v1151
      %v1364 = vpop.f32.mrf.mxu0
      %v1365 = vadd.f32 0.0, %v1364
      %v1366 = vpop.f32.mrf.mxu0
      %1367 = vmatprep.mubr.f32.mxu0 0.0
      %1368 = vmatmul.mubr.f32.gmra.mxu0 %v1154
      %v1369 = vpop.f32.mrf.mxu0
      %v1370 = vadd.f32 0.0, %v1369
      %v1371 = vpop.f32.mrf.mxu0
      %1372 = vmatprep.mubr.f32.mxu0 0.0
      %1373 = vmatmul.mubr.f32.gmra.mxu0 %v1157
      %v1374 = vpop.f32.mrf.mxu0
      %v1375 = vadd.f32 0.0, %v1374
      %v1376 = vpop.f32.mrf.mxu0
      %1377 = vmatprep.mubr.f32.mxu0 0.0
      %1378 = vmatmul.mubr.f32.gmra.mxu0 %v1160
      %v1379 = vpop.f32.mrf.mxu0
      %v1380 = vadd.f32 0.0, %v1379
      %v1381 = vpop.f32.mrf.mxu0
      %1382 = vmatprep.mubr.f32.mxu0 0.0
      %1383 = vmatmul.mubr.f32.gmra.mxu0 %v1163
      %v1384 = vpop.f32.mrf.mxu0
      %v1385 = vadd.f32 0.0, %v1384
      %v1386 = vpop.f32.mrf.mxu0
      %1387 = vmatprep.mubr.f32.mxu0 0.0
      %1388 = vmatmul.mubr.f32.gmra.mxu0 %v1166
      %v1389 = vpop.f32.mrf.mxu0
      %v1390 = vadd.f32 0.0, %v1389
      %v1391 = vpop.f32.mrf.mxu0
      %1392 = vmatprep.mubr.f32.mxu0 0.0
      %1393 = vmatmul.mubr.f32.gmra.mxu0 %v1169
      %v1394 = vpop.f32.mrf.mxu0
      %v1395 = vadd.f32 0.0, %v1394
      %v1396 = vpop.f32.mrf.mxu0
      %1397 = vmatprep.mubr.f32.mxu0 0.0
      %1398 = vmatmul.mubr.f32.gmra.mxu0 %v1172
      %v1399 = vpop.f32.mrf.mxu0
      %v1400 = vadd.f32 0.0, %v1399
      %v1401 = vpop.f32.mrf.mxu0
      %1402 = vdwg.mxu0
      %v1403 = vld [vmem:[%s4] sm:$0xf]
      %v1405 = vsel %vm1174, %v1403, 0
      %1407 = vmatprep.subr.mxu0 0.0
      %1408 = vmatpush1.msra.mxu0 0.0
      %1409 = vmatprep.subr.mxu0 0.0
      %1410 = vmatpush1.msra.mxu0 0.0
      %1411 = vmatprep.subr.mxu0 0.0
      %1412 = vmatpush1.msra.mxu0 0.0
      %1413 = vmatprep.subr.mxu0 0.0
      %1414 = vmatpush1.msra.mxu0 0.0
      %1415 = vmatprep.subr.mxu0 0.0
      %1416 = vmatpush1.msra.mxu0 0.0
      %1417 = vmatprep.subr.mxu0 0.0
      %1418 = vmatpush1.msra.mxu0 0.0
      %1419 = vmatprep.subr.mxu0 0.0
      %1420 = vmatpush1.msra.mxu0 0.0
      %1421 = vmatprep.subr.mxu0 0.0
      %1422 = vmatpush1.msra.mxu0 0.0
      %1423 = vmatprep.subr.mxu0 0.0
      %1424 = vmatpush1.msra.mxu0 0.0
      %1425 = vmatprep.subr.mxu0 0.0
      %1426 = vmatpush1.msra.mxu0 0.0
      %1427 = vmatprep.subr.mxu0 0.0
      %1428 = vmatpush1.msra.mxu0 0.0
      %1429 = vmatprep.subr.mxu0 0.0
      %1430 = vmatpush1.msra.mxu0 0.0
      %1431 = vmatprep.subr.mxu0 0.0
      %1432 = vmatpush1.msra.mxu0 0.0
      %1433 = vmatprep.subr.mxu0 0.0
      %1434 = vmatpush1.msra.mxu0 0.0
      %1435 = vmatprep.subr.mxu0 0.0
      %1436 = vmatpush1.msra.mxu0 0.0
      %1437 = vmatprep.subr.mxu0 0.0
      %1438 = vmatpush1.msra.mxu0 %v1405
      %1439 = vmatprep.subr.mxu0 0.0
      %1440 = vmatpush2.msra.mxu0 0.0
      %1441 = vmatprep.subr.mxu0 0.0
      %1442 = vmatpush2.msra.mxu0 0.0
      %1443 = vmatprep.subr.mxu0 0.0
      %1444 = vmatpush2.msra.mxu0 0.0
      %1445 = vmatprep.subr.mxu0 0.0
      %1446 = vmatpush2.msra.mxu0 0.0
      %1447 = vmatprep.subr.mxu0 0.0
      %1448 = vmatpush2.msra.mxu0 0.0
      %1449 = vmatprep.subr.mxu0 0.0
      %1450 = vmatpush2.msra.mxu0 0.0
      %1451 = vmatprep.subr.mxu0 0.0
      %1452 = vmatpush2.msra.mxu0 0.0
      %1453 = vmatprep.subr.mxu0 0.0
      %1454 = vmatpush2.msra.mxu0 0.0
      %1455 = vmatprep.subr.mxu0 0.0
      %1456 = vmatpush2.msra.mxu0 0.0
      %1457 = vmatprep.subr.mxu0 0.0
      %1458 = vmatpush2.msra.mxu0 0.0
      %1459 = vmatprep.subr.mxu0 0.0
      %1460 = vmatpush2.msra.mxu0 0.0
      %1461 = vmatprep.subr.mxu0 0.0
      %1462 = vmatpush2.msra.mxu0 0.0
      %1463 = vmatprep.subr.mxu0 0.0
      %1464 = vmatpush2.msra.mxu0 0.0
      %1465 = vmatprep.subr.mxu0 0.0
      %1466 = vmatpush2.msra.mxu0 0.0
      %1467 = vmatprep.subr.mxu0 0.0
      %1468 = vmatpush2.msra.mxu0 0.0
      %1469 = vmatprep.subr.mxu0 0.0
      %1470 = vmatpush2.msra.mxu0 0.0
      %1471 = vmatprep.mubr.f32.mxu0 0.0
      %1472 = vmatmul.mubr.f32.gmra.mxu0 %v1079
      %v1473 = vpop.f32.mrf.mxu0
      %v1474 = vadd.f32 0.0, %v1473
      %v1475 = vpop.f32.mrf.mxu0
      %1476 = vmatprep.mubr.f32.mxu0 0.0
      %1477 = vmatmul.mubr.f32.gmra.mxu0 %v1082
      %v1478 = vpop.f32.mrf.mxu0
      %v1479 = vadd.f32 0.0, %v1478
      %v1480 = vpop.f32.mrf.mxu0
      %1481 = vmatprep.mubr.f32.mxu0 0.0
      %1482 = vmatmul.mubr.f32.gmra.mxu0 %v1085
      %v1483 = vpop.f32.mrf.mxu0
      %v1484 = vadd.f32 0.0, %v1483
      %v1485 = vpop.f32.mrf.mxu0
      %1486 = vmatprep.mubr.f32.mxu0 0.0
      %1487 = vmatmul.mubr.f32.gmra.mxu0 %v1088
      %v1488 = vpop.f32.mrf.mxu0
      %v1489 = vadd.f32 0.0, %v1488
      %v1490 = vpop.f32.mrf.mxu0
      %1491 = vmatprep.mubr.f32.mxu0 0.0
      %1492 = vmatmul.mubr.f32.gmra.mxu0 %v1091
      %v1493 = vpop.f32.mrf.mxu0
      %v1494 = vadd.f32 0.0, %v1493
      %v1495 = vpop.f32.mrf.mxu0
      %1496 = vmatprep.mubr.f32.mxu0 0.0
      %1497 = vmatmul.mubr.f32.gmra.mxu0 %v1094
      %v1498 = vpop.f32.mrf.mxu0
      %v1499 = vadd.f32 0.0, %v1498
      %v1500 = vpop.f32.mrf.mxu0
      %1501 = vmatprep.mubr.f32.mxu0 0.0
      %1502 = vmatmul.mubr.f32.gmra.mxu0 %v1097
      %v1503 = vpop.f32.mrf.mxu0
      %v1504 = vadd.f32 0.0, %v1503
      %v1505 = vpop.f32.mrf.mxu0
      %1506 = vmatprep.mubr.f32.mxu0 0.0
      %1507 = vmatmul.mubr.f32.gmra.mxu0 %v1100
      %v1508 = vpop.f32.mrf.mxu0
      %v1509 = vadd.f32 0.0, %v1508
      %v1510 = vpop.f32.mrf.mxu0
      %1511 = vmatprep.mubr.f32.mxu0 0.0
      %1512 = vmatmul.mubr.f32.gmra.mxu0 %v1103
      %v1513 = vpop.f32.mrf.mxu0
      %v1514 = vadd.f32 0.0, %v1513
      %v1515 = vpop.f32.mrf.mxu0
      %1516 = vmatprep.mubr.f32.mxu0 0.0
      %1517 = vmatmul.mubr.f32.gmra.mxu0 %v1106
      %v1518 = vpop.f32.mrf.mxu0
      %v1519 = vadd.f32 0.0, %v1518
      %v1520 = vpop.f32.mrf.mxu0
      %1521 = vmatprep.mubr.f32.mxu0 0.0
      %1522 = vmatmul.mubr.f32.gmra.mxu0 %v1109
      %v1523 = vpop.f32.mrf.mxu0
      %v1524 = vadd.f32 0.0, %v1523
      %v1525 = vpop.f32.mrf.mxu0
      %1526 = vmatprep.mubr.f32.mxu0 0.0
      %1527 = vmatmul.mubr.f32.gmra.mxu0 %v1112
      %v1528 = vpop.f32.mrf.mxu0
      %v1529 = vadd.f32 0.0, %v1528
      %v1530 = vpop.f32.mrf.mxu0
      %1531 = vmatprep.mubr.f32.mxu0 0.0
      %1532 = vmatmul.mubr.f32.gmra.mxu0 %v1115
      %v1533 = vpop.f32.mrf.mxu0
      %v1534 = vadd.f32 0.0, %v1533
      %v1535 = vpop.f32.mrf.mxu0
      %1536 = vmatprep.mubr.f32.mxu0 0.0
      %1537 = vmatmul.mubr.f32.gmra.mxu0 %v1118
      %v1538 = vpop.f32.mrf.mxu0
      %v1539 = vadd.f32 0.0, %v1538
      %v1540 = vpop.f32.mrf.mxu0
      %1541 = vmatprep.mubr.f32.mxu0 0.0
      %1542 = vmatmul.mubr.f32.gmra.mxu0 %v1121
      %v1543 = vpop.f32.mrf.mxu0
      %v1544 = vadd.f32 0.0, %v1543
      %v1545 = vpop.f32.mrf.mxu0
      %1546 = vmatprep.mubr.f32.mxu0 0.0
      %1547 = vmatmul.mubr.f32.gmra.mxu0 %v1124
      %v1548 = vpop.f32.mrf.mxu0
      %v1549 = vadd.f32 0.0, %v1548
      %v1550 = vpop.f32.mrf.mxu0
      %1551 = vmatprep.mubr.f32.mxu0 0.0
      %1552 = vmatmul.mubr.f32.gmra.mxu0 %v1127
      %v1553 = vpop.f32.mrf.mxu0
      %v1554 = vadd.f32 0.0, %v1553
      %v1555 = vpop.f32.mrf.mxu0
      %1556 = vmatprep.mubr.f32.mxu0 0.0
      %1557 = vmatmul.mubr.f32.gmra.mxu0 %v1130
      %v1558 = vpop.f32.mrf.mxu0
      %v1559 = vadd.f32 0.0, %v1558
      %v1560 = vpop.f32.mrf.mxu0
      %1561 = vmatprep.mubr.f32.mxu0 0.0
      %1562 = vmatmul.mubr.f32.gmra.mxu0 %v1133
      %v1563 = vpop.f32.mrf.mxu0
      %v1564 = vadd.f32 0.0, %v1563
      %v1565 = vpop.f32.mrf.mxu0
      %1566 = vmatprep.mubr.f32.mxu0 0.0
      %1567 = vmatmul.mubr.f32.gmra.mxu0 %v1136
      %v1568 = vpop.f32.mrf.mxu0
      %v1569 = vadd.f32 0.0, %v1568
      %v1570 = vpop.f32.mrf.mxu0
      %1571 = vmatprep.mubr.f32.mxu0 0.0
      %1572 = vmatmul.mubr.f32.gmra.mxu0 %v1139
      %v1573 = vpop.f32.mrf.mxu0
      %v1574 = vadd.f32 0.0, %v1573
      %v1575 = vpop.f32.mrf.mxu0
      %1576 = vmatprep.mubr.f32.mxu0 0.0
      %1577 = vmatmul.mubr.f32.gmra.mxu0 %v1142
      %v1578 = vpop.f32.mrf.mxu0
      %v1579 = vadd.f32 0.0, %v1578
      %v1580 = vpop.f32.mrf.mxu0
      %1581 = vmatprep.mubr.f32.mxu0 0.0
      %1582 = vmatmul.mubr.f32.gmra.mxu0 %v1145
      %v1583 = vpop.f32.mrf.mxu0
      %v1584 = vadd.f32 0.0, %v1583
      %v1585 = vpop.f32.mrf.mxu0
      %1586 = vmatprep.mubr.f32.mxu0 0.0
      %1587 = vmatmul.mubr.f32.gmra.mxu0 %v1148
      %v1588 = vpop.f32.mrf.mxu0
      %v1589 = vadd.f32 0.0, %v1588
      %v1590 = vpop.f32.mrf.mxu0
      %1591 = vmatprep.mubr.f32.mxu0 0.0
      %1592 = vmatmul.mubr.f32.gmra.mxu0 %v1151
      %v1593 = vpop.f32.mrf.mxu0
      %v1594 = vadd.f32 0.0, %v1593
      %v1595 = vpop.f32.mrf.mxu0
      %1596 = vmatprep.mubr.f32.mxu0 0.0
      %1597 = vmatmul.mubr.f32.gmra.mxu0 %v1154
      %v1598 = vpop.f32.mrf.mxu0
      %v1599 = vadd.f32 0.0, %v1598
      %v1600 = vpop.f32.mrf.mxu0
      %1601 = vmatprep.mubr.f32.mxu0 0.0
      %1602 = vmatmul.mubr.f32.gmra.mxu0 %v1157
      %v1603 = vpop.f32.mrf.mxu0
      %v1604 = vadd.f32 0.0, %v1603
      %v1605 = vpop.f32.mrf.mxu0
      %1606 = vmatprep.mubr.f32.mxu0 0.0
      %1607 = vmatmul.mubr.f32.gmra.mxu0 %v1160
      %v1608 = vpop.f32.mrf.mxu0
      %v1609 = vadd.f32 0.0, %v1608
      %v1610 = vpop.f32.mrf.mxu0
      %1611 = vmatprep.mubr.f32.mxu0 0.0
      %1612 = vmatmul.mubr.f32.gmra.mxu0 %v1163
      %v1613 = vpop.f32.mrf.mxu0
      %v1614 = vadd.f32 0.0, %v1613
      %v1615 = vpop.f32.mrf.mxu0
      %1616 = vmatprep.mubr.f32.mxu0 0.0
      %1617 = vmatmul.mubr.f32.gmra.mxu0 %v1166
      %v1618 = vpop.f32.mrf.mxu0
      %v1619 = vadd.f32 0.0, %v1618
      %v1620 = vpop.f32.mrf.mxu0
      %1621 = vmatprep.mubr.f32.mxu0 0.0
      %1622 = vmatmul.mubr.f32.gmra.mxu0 %v1169
      %v1623 = vpop.f32.mrf.mxu0
      %v1624 = vadd.f32 0.0, %v1623
      %v1625 = vpop.f32.mrf.mxu0
      %1626 = vmatprep.mubr.f32.mxu0 0.0
      %1627 = vmatmul.mubr.f32.gmra.mxu0 %v1172
      %v1628 = vpop.f32.mrf.mxu0
      %v1629 = vadd.f32 0.0, %v1628
      %v1630 = vpop.f32.mrf.mxu0
      %1631 = vdwg.mxu0
      %vm1632 = vcmask 64512
      %1633 = vst.msk [vmem:[#allocation2] sm:$0xff] %vm1632, 0.0
      %1634 = vst.msk [vmem:[#allocation2 + $0x8] sm:$0xff] %vm1632, %v1245
      %1635 = vst.msk [vmem:[#allocation2 + $0x10] sm:$0xff] %vm1632, %v1250
      %1636 = vst.msk [vmem:[#allocation2 + $0x18] sm:$0xff] %vm1632, %v1255
      %1637 = vst.msk [vmem:[#allocation2 + $0x20] sm:$0xff] %vm1632, %v1260
      %1638 = vst.msk [vmem:[#allocation2 + $0x28] sm:$0xff] %vm1632, %v1265
      %1639 = vst.msk [vmem:[#allocation2 + $0x30] sm:$0xff] %vm1632, %v1270
      %1640 = vst.msk [vmem:[#allocation2 + $0x38] sm:$0xff] %vm1632, %v1275
      %1641 = vst.msk [vmem:[#allocation2 + $0x40] sm:$0xff] %vm1632, %v1280
      %1642 = vst.msk [vmem:[#allocation2 + $0x48] sm:$0xff] %vm1632, %v1285
      %1643 = vst.msk [vmem:[#allocation2 + $0x50] sm:$0xff] %vm1632, %v1290
      %1644 = vst.msk [vmem:[#allocation2 + $0x58] sm:$0xff] %vm1632, %v1295
      %1645 = vst.msk [vmem:[#allocation2 + $0x60] sm:$0xff] %vm1632, %v1300
      %1646 = vst.msk [vmem:[#allocation2 + $0x68] sm:$0xff] %vm1632, %v1305
      %1647 = vst.msk [vmem:[#allocation2 + $0x70] sm:$0xff] %vm1632, %v1310
      %1648 = vst.msk [vmem:[#allocation2 + $0x78] sm:$0xff] %vm1632, %v1315
      %1649 = vst.msk [vmem:[#allocation2 + $0x80] sm:$0xff] %vm1632, %v1320
      %1650 = vst.msk [vmem:[#allocation2 + $0x88] sm:$0xff] %vm1632, %v1325
      %1651 = vst.msk [vmem:[#allocation2 + $0x90] sm:$0xff] %vm1632, %v1330
      %1652 = vst.msk [vmem:[#allocation2 + $0x98] sm:$0xff] %vm1632, %v1335
      %1653 = vst.msk [vmem:[#allocation2 + $0xa0] sm:$0xff] %vm1632, %v1340
      %1654 = vst.msk [vmem:[#allocation2 + $0xa8] sm:$0xff] %vm1632, %v1345
      %1655 = vst.msk [vmem:[#allocation2 + $0xb0] sm:$0xff] %vm1632, %v1350
      %1656 = vst.msk [vmem:[#allocation2 + $0xb8] sm:$0xff] %vm1632, %v1355
      %1657 = vst.msk [vmem:[#allocation2 + $0xc0] sm:$0xff] %vm1632, %v1360
      %1658 = vst.msk [vmem:[#allocation2 + $0xc8] sm:$0xff] %vm1632, %v1365
      %1659 = vst.msk [vmem:[#allocation2 + $0xd0] sm:$0xff] %vm1632, %v1370
      %1660 = vst.msk [vmem:[#allocation2 + $0xd8] sm:$0xff] %vm1632, %v1375
      %1661 = vst.msk [vmem:[#allocation2 + $0xe0] sm:$0xff] %vm1632, %v1380
      %1662 = vst.msk [vmem:[#allocation2 + $0xe8] sm:$0xff] %vm1632, %v1385
      %1663 = vst.msk [vmem:[#allocation2 + $0xf0] sm:$0xff] %vm1632, %v1390
      %1664 = vst.msk [vmem:[#allocation2 + $0xf8] sm:$0xff] %vm1632, %v1395
      %1665 = vst.msk [vmem:[#allocation2 + $0x100] sm:$0xff] %vm1632, %v1400
      %v1666 = vld [vmem:[%s5] sm:$0x1]
      %v1667 = vld [vmem:[#allocation2 + $0x5] sm:$0xff]
      %v1668 = vld [vmem:[#allocation2 + $0xd] sm:$0xff]
      %v1669 = vld [vmem:[#allocation2 + $0x15] sm:$0xff]
      %v1670 = vld [vmem:[#allocation2 + $0x1d] sm:$0xff]
      %v1671 = vld [vmem:[#allocation2 + $0x25] sm:$0xff]
      %v1672 = vld [vmem:[#allocation2 + $0x2d] sm:$0xff]
      %v1673 = vld [vmem:[#allocation2 + $0x35] sm:$0xff]
      %v1674 = vld [vmem:[#allocation2 + $0x3d] sm:$0xff]
      %v1675 = vld [vmem:[#allocation2 + $0x45] sm:$0xff]
      %v1676 = vld [vmem:[#allocation2 + $0x4d] sm:$0xff]
      %v1677 = vld [vmem:[#allocation2 + $0x55] sm:$0xff]
      %v1678 = vld [vmem:[#allocation2 + $0x5d] sm:$0xff]
      %v1679 = vld [vmem:[#allocation2 + $0x65] sm:$0xff]
      %v1680 = vld [vmem:[#allocation2 + $0x6d] sm:$0xff]
      %v1681 = vld [vmem:[#allocation2 + $0x75] sm:$0xff]
      %v1682 = vld [vmem:[#allocation2 + $0x7d] sm:$0xff]
      %v1683 = vld [vmem:[#allocation2 + $0x85] sm:$0xff]
      %v1684 = vld [vmem:[#allocation2 + $0x8d] sm:$0xff]
      %v1685 = vld [vmem:[#allocation2 + $0x95] sm:$0xff]
      %v1686 = vld [vmem:[#allocation2 + $0x9d] sm:$0xff]
      %v1687 = vld [vmem:[#allocation2 + $0xa5] sm:$0xff]
      %v1688 = vld [vmem:[#allocation2 + $0xad] sm:$0xff]
      %v1689 = vld [vmem:[#allocation2 + $0xb5] sm:$0xff]
      %v1690 = vld [vmem:[#allocation2 + $0xbd] sm:$0xff]
      %v1691 = vld [vmem:[#allocation2 + $0xc5] sm:$0xff]
      %v1692 = vld [vmem:[#allocation2 + $0xcd] sm:$0xff]
      %v1693 = vld [vmem:[#allocation2 + $0xd5] sm:$0xff]
      %v1694 = vld [vmem:[#allocation2 + $0xdd] sm:$0xff]
      %v1695 = vld [vmem:[#allocation2 + $0xe5] sm:$0xff]
      %v1696 = vld [vmem:[#allocation2 + $0xed] sm:$0xff]
      %v1697 = vld [vmem:[#allocation2 + $0xf5] sm:$0xff]
      %v1698 = vld [vmem:[#allocation2 + $0xfd] sm:$0xff]
      %v1699 = vlaneseq
      %v1700 = vshrl.u32 %v1699, 7
      %v1701 = vsub.s32 0, %v1700
      %v1702 = vrot.slane %v1666, %v1701
      %v1703 = vmul.f32 %v1702, %v1667
      %v1704 = vmul.f32 %v1702, %v1668
      %v1705 = vmul.f32 %v1702, %v1669
      %v1706 = vmul.f32 %v1702, %v1670
      %v1707 = vmul.f32 %v1702, %v1671
      %v1708 = vmul.f32 %v1702, %v1672
      %v1709 = vmul.f32 %v1702, %v1673
      %v1710 = vmul.f32 %v1702, %v1674
      %v1711 = vmul.f32 %v1702, %v1675
      %v1712 = vmul.f32 %v1702, %v1676
      %v1713 = vmul.f32 %v1702, %v1677
      %v1714 = vmul.f32 %v1702, %v1678
      %v1715 = vmul.f32 %v1702, %v1679
      %v1716 = vmul.f32 %v1702, %v1680
      %v1717 = vmul.f32 %v1702, %v1681
      %v1718 = vmul.f32 %v1702, %v1682
      %v1719 = vmul.f32 %v1702, %v1683
      %v1720 = vmul.f32 %v1702, %v1684
      %v1721 = vmul.f32 %v1702, %v1685
      %v1722 = vmul.f32 %v1702, %v1686
      %v1723 = vmul.f32 %v1702, %v1687
      %v1724 = vmul.f32 %v1702, %v1688
      %v1725 = vmul.f32 %v1702, %v1689
      %v1726 = vmul.f32 %v1702, %v1690
      %v1727 = vmul.f32 %v1702, %v1691
      %v1728 = vmul.f32 %v1702, %v1692
      %v1729 = vmul.f32 %v1702, %v1693
      %v1730 = vmul.f32 %v1702, %v1694
      %v1731 = vmul.f32 %v1702, %v1695
      %v1732 = vmul.f32 %v1702, %v1696
      %v1733 = vmul.f32 %v1702, %v1697
      %v1734 = vmul.f32 %v1702, %v1698
      %v1735 = vadd.f32 %v1703, 0.0
      %v1736 = vadd.f32 %v1704, 0.0
      %v1737 = vadd.f32 %v1705, 0.0
      %v1738 = vadd.f32 %v1706, 0.0
      %v1739 = vadd.f32 %v1707, 0.0
      %v1740 = vadd.f32 %v1708, 0.0
      %v1741 = vadd.f32 %v1709, 0.0
      %v1742 = vadd.f32 %v1710, 0.0
      %v1743 = vadd.f32 %v1711, 0.0
      %v1744 = vadd.f32 %v1712, 0.0
      %v1745 = vadd.f32 %v1713, 0.0
      %v1746 = vadd.f32 %v1714, 0.0
      %v1747 = vadd.f32 %v1715, 0.0
      %v1748 = vadd.f32 %v1716, 0.0
      %v1749 = vadd.f32 %v1717, 0.0
      %v1750 = vadd.f32 %v1718, 0.0
      %v1751 = vadd.f32 %v1719, 0.0
      %v1752 = vadd.f32 %v1720, 0.0
      %v1753 = vadd.f32 %v1721, 0.0
      %v1754 = vadd.f32 %v1722, 0.0
      %v1755 = vadd.f32 %v1723, 0.0
      %v1756 = vadd.f32 %v1724, 0.0
      %v1757 = vadd.f32 %v1725, 0.0
      %v1758 = vadd.f32 %v1726, 0.0
      %v1759 = vadd.f32 %v1727, 0.0
      %v1760 = vadd.f32 %v1728, 0.0
      %v1761 = vadd.f32 %v1729, 0.0
      %v1762 = vadd.f32 %v1730, 0.0
      %v1763 = vadd.f32 %v1731, 0.0
      %v1764 = vadd.f32 %v1732, 0.0
      %v1765 = vadd.f32 %v1733, 0.0
      %v1766 = vadd.f32 %v1734, 0.0
      %v1767 = vld [vmem:[%s5 + $0x1] sm:$0x1]
      %v1768 = vld [vmem:[#allocation2 + $0x6] sm:$0xff]
      %v1769 = vld [vmem:[#allocation2 + $0xe] sm:$0xff]
      %v1770 = vld [vmem:[#allocation2 + $0x16] sm:$0xff]
      %v1771 = vld [vmem:[#allocation2 + $0x1e] sm:$0xff]
      %v1772 = vld [vmem:[#allocation2 + $0x26] sm:$0xff]
      %v1773 = vld [vmem:[#allocation2 + $0x2e] sm:$0xff]
      %v1774 = vld [vmem:[#allocation2 + $0x36] sm:$0xff]
      %v1775 = vld [vmem:[#allocation2 + $0x3e] sm:$0xff]
      %v1776 = vld [vmem:[#allocation2 + $0x46] sm:$0xff]
      %v1777 = vld [vmem:[#allocation2 + $0x4e] sm:$0xff]
      %v1778 = vld [vmem:[#allocation2 + $0x56] sm:$0xff]
      %v1779 = vld [vmem:[#allocation2 + $0x5e] sm:$0xff]
      %v1780 = vld [vmem:[#allocation2 + $0x66] sm:$0xff]
      %v1781 = vld [vmem:[#allocation2 + $0x6e] sm:$0xff]
      %v1782 = vld [vmem:[#allocation2 + $0x76] sm:$0xff]
      %v1783 = vld [vmem:[#allocation2 + $0x7e] sm:$0xff]
      %v1784 = vld [vmem:[#allocation2 + $0x86] sm:$0xff]
      %v1785 = vld [vmem:[#allocation2 + $0x8e] sm:$0xff]
      %v1786 = vld [vmem:[#allocation2 + $0x96] sm:$0xff]
      %v1787 = vld [vmem:[#allocation2 + $0x9e] sm:$0xff]
      %v1788 = vld [vmem:[#allocation2 + $0xa6] sm:$0xff]
      %v1789 = vld [vmem:[#allocation2 + $0xae] sm:$0xff]
      %v1790 = vld [vmem:[#allocation2 + $0xb6] sm:$0xff]
      %v1791 = vld [vmem:[#allocation2 + $0xbe] sm:$0xff]
      %v1792 = vld [vmem:[#allocation2 + $0xc6] sm:$0xff]
      %v1793 = vld [vmem:[#allocation2 + $0xce] sm:$0xff]
      %v1794 = vld [vmem:[#allocation2 + $0xd6] sm:$0xff]
      %v1795 = vld [vmem:[#allocation2 + $0xde] sm:$0xff]
      %v1796 = vld [vmem:[#allocation2 + $0xe6] sm:$0xff]
      %v1797 = vld [vmem:[#allocation2 + $0xee] sm:$0xff]
      %v1798 = vld [vmem:[#allocation2 + $0xf6] sm:$0xff]
      %v1799 = vld [vmem:[#allocation2 + $0xfe] sm:$0xff]
      %v1800 = vlaneseq
      %v1801 = vshrl.u32 %v1800, 7
      %v1802 = vsub.s32 0, %v1801
      %v1803 = vrot.slane %v1767, %v1802
      %v1804 = vmul.f32 %v1803, %v1768
      %v1805 = vmul.f32 %v1803, %v1769
      %v1806 = vmul.f32 %v1803, %v1770
      %v1807 = vmul.f32 %v1803, %v1771
      %v1808 = vmul.f32 %v1803, %v1772
      %v1809 = vmul.f32 %v1803, %v1773
      %v1810 = vmul.f32 %v1803, %v1774
      %v1811 = vmul.f32 %v1803, %v1775
      %v1812 = vmul.f32 %v1803, %v1776
      %v1813 = vmul.f32 %v1803, %v1777
      %v1814 = vmul.f32 %v1803, %v1778
      %v1815 = vmul.f32 %v1803, %v1779
      %v1816 = vmul.f32 %v1803, %v1780
      %v1817 = vmul.f32 %v1803, %v1781
      %v1818 = vmul.f32 %v1803, %v1782
      %v1819 = vmul.f32 %v1803, %v1783
      %v1820 = vmul.f32 %v1803, %v1784
      %v1821 = vmul.f32 %v1803, %v1785
      %v1822 = vmul.f32 %v1803, %v1786
      %v1823 = vmul.f32 %v1803, %v1787
      %v1824 = vmul.f32 %v1803, %v1788
      %v1825 = vmul.f32 %v1803, %v1789
      %v1826 = vmul.f32 %v1803, %v1790
      %v1827 = vmul.f32 %v1803, %v1791
      %v1828 = vmul.f32 %v1803, %v1792
      %v1829 = vmul.f32 %v1803, %v1793
      %v1830 = vmul.f32 %v1803, %v1794
      %v1831 = vmul.f32 %v1803, %v1795
      %v1832 = vmul.f32 %v1803, %v1796
      %v1833 = vmul.f32 %v1803, %v1797
      %v1834 = vmul.f32 %v1803, %v1798
      %v1835 = vmul.f32 %v1803, %v1799
      %v1836 = vadd.f32 %v1735, %v1804
      %v1837 = vadd.f32 %v1736, %v1805
      %v1838 = vadd.f32 %v1737, %v1806
      %v1839 = vadd.f32 %v1738, %v1807
      %v1840 = vadd.f32 %v1739, %v1808
      %v1841 = vadd.f32 %v1740, %v1809
      %v1842 = vadd.f32 %v1741, %v1810
      %v1843 = vadd.f32 %v1742, %v1811
      %v1844 = vadd.f32 %v1743, %v1812
      %v1845 = vadd.f32 %v1744, %v1813
      %v1846 = vadd.f32 %v1745, %v1814
      %v1847 = vadd.f32 %v1746, %v1815
      %v1848 = vadd.f32 %v1747, %v1816
      %v1849 = vadd.f32 %v1748, %v1817
      %v1850 = vadd.f32 %v1749, %v1818
      %v1851 = vadd.f32 %v1750, %v1819
      %v1852 = vadd.f32 %v1751, %v1820
      %v1853 = vadd.f32 %v1752, %v1821
      %v1854 = vadd.f32 %v1753, %v1822
      %v1855 = vadd.f32 %v1754, %v1823
      %v1856 = vadd.f32 %v1755, %v1824
      %v1857 = vadd.f32 %v1756, %v1825
      %v1858 = vadd.f32 %v1757, %v1826
      %v1859 = vadd.f32 %v1758, %v1827
      %v1860 = vadd.f32 %v1759, %v1828
      %v1861 = vadd.f32 %v1760, %v1829
      %v1862 = vadd.f32 %v1761, %v1830
      %v1863 = vadd.f32 %v1762, %v1831
      %v1864 = vadd.f32 %v1763, %v1832
      %v1865 = vadd.f32 %v1764, %v1833
      %v1866 = vadd.f32 %v1765, %v1834
      %v1867 = vadd.f32 %v1766, %v1835
      %v1868 = vld [vmem:[%s5 + $0x2] sm:$0x1]
      %v1869 = vld [vmem:[#allocation2 + $0x7] sm:$0xff]
      %v1870 = vld [vmem:[#allocation2 + $0xf] sm:$0xff]
      %v1871 = vld [vmem:[#allocation2 + $0x17] sm:$0xff]
      %v1872 = vld [vmem:[#allocation2 + $0x1f] sm:$0xff]
      %v1873 = vld [vmem:[#allocation2 + $0x27] sm:$0xff]
      %v1874 = vld [vmem:[#allocation2 + $0x2f] sm:$0xff]
      %v1875 = vld [vmem:[#allocation2 + $0x37] sm:$0xff]
      %v1876 = vld [vmem:[#allocation2 + $0x3f] sm:$0xff]
      %v1877 = vld [vmem:[#allocation2 + $0x47] sm:$0xff]
      %v1878 = vld [vmem:[#allocation2 + $0x4f] sm:$0xff]
      %v1879 = vld [vmem:[#allocation2 + $0x57] sm:$0xff]
      %v1880 = vld [vmem:[#allocation2 + $0x5f] sm:$0xff]
      %v1881 = vld [vmem:[#allocation2 + $0x67] sm:$0xff]
      %v1882 = vld [vmem:[#allocation2 + $0x6f] sm:$0xff]
      %v1883 = vld [vmem:[#allocation2 + $0x77] sm:$0xff]
      %v1884 = vld [vmem:[#allocation2 + $0x7f] sm:$0xff]
      %v1885 = vld [vmem:[#allocation2 + $0x87] sm:$0xff]
      %v1886 = vld [vmem:[#allocation2 + $0x8f] sm:$0xff]
      %v1887 = vld [vmem:[#allocation2 + $0x97] sm:$0xff]
      %v1888 = vld [vmem:[#allocation2 + $0x9f] sm:$0xff]
      %v1889 = vld [vmem:[#allocation2 + $0xa7] sm:$0xff]
      %v1890 = vld [vmem:[#allocation2 + $0xaf] sm:$0xff]
      %v1891 = vld [vmem:[#allocation2 + $0xb7] sm:$0xff]
      %v1892 = vld [vmem:[#allocation2 + $0xbf] sm:$0xff]
      %v1893 = vld [vmem:[#allocation2 + $0xc7] sm:$0xff]
      %v1894 = vld [vmem:[#allocation2 + $0xcf] sm:$0xff]
      %v1895 = vld [vmem:[#allocation2 + $0xd7] sm:$0xff]
      %v1896 = vld [vmem:[#allocation2 + $0xdf] sm:$0xff]
      %v1897 = vld [vmem:[#allocation2 + $0xe7] sm:$0xff]
      %v1898 = vld [vmem:[#allocation2 + $0xef] sm:$0xff]
      %v1899 = vld [vmem:[#allocation2 + $0xf7] sm:$0xff]
      %v1900 = vld [vmem:[#allocation2 + $0xff] sm:$0xff]
      %v1901 = vlaneseq
      %v1902 = vshrl.u32 %v1901, 7
      %v1903 = vsub.s32 0, %v1902
      %v1904 = vrot.slane %v1868, %v1903
      %v1905 = vmul.f32 %v1904, %v1869
      %v1906 = vmul.f32 %v1904, %v1870
      %v1907 = vmul.f32 %v1904, %v1871
      %v1908 = vmul.f32 %v1904, %v1872
      %v1909 = vmul.f32 %v1904, %v1873
      %v1910 = vmul.f32 %v1904, %v1874
      %v1911 = vmul.f32 %v1904, %v1875
      %v1912 = vmul.f32 %v1904, %v1876
      %v1913 = vmul.f32 %v1904, %v1877
      %v1914 = vmul.f32 %v1904, %v1878
      %v1915 = vmul.f32 %v1904, %v1879
      %v1916 = vmul.f32 %v1904, %v1880
      %v1917 = vmul.f32 %v1904, %v1881
      %v1918 = vmul.f32 %v1904, %v1882
      %v1919 = vmul.f32 %v1904, %v1883
      %v1920 = vmul.f32 %v1904, %v1884
      %v1921 = vmul.f32 %v1904, %v1885
      %v1922 = vmul.f32 %v1904, %v1886
      %v1923 = vmul.f32 %v1904, %v1887
      %v1924 = vmul.f32 %v1904, %v1888
      %v1925 = vmul.f32 %v1904, %v1889
      %v1926 = vmul.f32 %v1904, %v1890
      %v1927 = vmul.f32 %v1904, %v1891
      %v1928 = vmul.f32 %v1904, %v1892
      %v1929 = vmul.f32 %v1904, %v1893
      %v1930 = vmul.f32 %v1904, %v1894
      %v1931 = vmul.f32 %v1904, %v1895
      %v1932 = vmul.f32 %v1904, %v1896
      %v1933 = vmul.f32 %v1904, %v1897
      %v1934 = vmul.f32 %v1904, %v1898
      %v1935 = vmul.f32 %v1904, %v1899
      %v1936 = vmul.f32 %v1904, %v1900
      %v1937 = vadd.f32 %v1836, %v1905
      %v1938 = vadd.f32 %v1837, %v1906
      %v1939 = vadd.f32 %v1838, %v1907
      %v1940 = vadd.f32 %v1839, %v1908
      %v1941 = vadd.f32 %v1840, %v1909
      %v1942 = vadd.f32 %v1841, %v1910
      %v1943 = vadd.f32 %v1842, %v1911
      %v1944 = vadd.f32 %v1843, %v1912
      %v1945 = vadd.f32 %v1844, %v1913
      %v1946 = vadd.f32 %v1845, %v1914
      %v1947 = vadd.f32 %v1846, %v1915
      %v1948 = vadd.f32 %v1847, %v1916
      %v1949 = vadd.f32 %v1848, %v1917
      %v1950 = vadd.f32 %v1849, %v1918
      %v1951 = vadd.f32 %v1850, %v1919
      %v1952 = vadd.f32 %v1851, %v1920
      %v1953 = vadd.f32 %v1852, %v1921
      %v1954 = vadd.f32 %v1853, %v1922
      %v1955 = vadd.f32 %v1854, %v1923
      %v1956 = vadd.f32 %v1855, %v1924
      %v1957 = vadd.f32 %v1856, %v1925
      %v1958 = vadd.f32 %v1857, %v1926
      %v1959 = vadd.f32 %v1858, %v1927
      %v1960 = vadd.f32 %v1859, %v1928
      %v1961 = vadd.f32 %v1860, %v1929
      %v1962 = vadd.f32 %v1861, %v1930
      %v1963 = vadd.f32 %v1862, %v1931
      %v1964 = vadd.f32 %v1863, %v1932
      %v1965 = vadd.f32 %v1864, %v1933
      %v1966 = vadd.f32 %v1865, %v1934
      %v1967 = vadd.f32 %v1866, %v1935
      %v1968 = vadd.f32 %v1867, %v1936
      %v1969 = vld [vmem:[%s5 + $0x3] sm:$0x1]
      %v1970 = vld [vmem:[#allocation2 + $0x8] sm:$0xff]
      %v1971 = vld [vmem:[#allocation2 + $0x10] sm:$0xff]
      %v1972 = vld [vmem:[#allocation2 + $0x18] sm:$0xff]
      %v1973 = vld [vmem:[#allocation2 + $0x20] sm:$0xff]
      %v1974 = vld [vmem:[#allocation2 + $0x28] sm:$0xff]
      %v1975 = vld [vmem:[#allocation2 + $0x30] sm:$0xff]
      %v1976 = vld [vmem:[#allocation2 + $0x38] sm:$0xff]
      %v1977 = vld [vmem:[#allocation2 + $0x40] sm:$0xff]
      %v1978 = vld [vmem:[#allocation2 + $0x48] sm:$0xff]
      %v1979 = vld [vmem:[#allocation2 + $0x50] sm:$0xff]
      %v1980 = vld [vmem:[#allocation2 + $0x58] sm:$0xff]
      %v1981 = vld [vmem:[#allocation2 + $0x60] sm:$0xff]
      %v1982 = vld [vmem:[#allocation2 + $0x68] sm:$0xff]
      %v1983 = vld [vmem:[#allocation2 + $0x70] sm:$0xff]
      %v1984 = vld [vmem:[#allocation2 + $0x78] sm:$0xff]
      %v1985 = vld [vmem:[#allocation2 + $0x80] sm:$0xff]
      %v1986 = vld [vmem:[#allocation2 + $0x88] sm:$0xff]
      %v1987 = vld [vmem:[#allocation2 + $0x90] sm:$0xff]
      %v1988 = vld [vmem:[#allocation2 + $0x98] sm:$0xff]
      %v1989 = vld [vmem:[#allocation2 + $0xa0] sm:$0xff]
      %v1990 = vld [vmem:[#allocation2 + $0xa8] sm:$0xff]
      %v1991 = vld [vmem:[#allocation2 + $0xb0] sm:$0xff]
      %v1992 = vld [vmem:[#allocation2 + $0xb8] sm:$0xff]
      %v1993 = vld [vmem:[#allocation2 + $0xc0] sm:$0xff]
      %v1994 = vld [vmem:[#allocation2 + $0xc8] sm:$0xff]
      %v1995 = vld [vmem:[#allocation2 + $0xd0] sm:$0xff]
      %v1996 = vld [vmem:[#allocation2 + $0xd8] sm:$0xff]
      %v1997 = vld [vmem:[#allocation2 + $0xe0] sm:$0xff]
      %v1998 = vld [vmem:[#allocation2 + $0xe8] sm:$0xff]
      %v1999 = vld [vmem:[#allocation2 + $0xf0] sm:$0xff]
      %v2000 = vld [vmem:[#allocation2 + $0xf8] sm:$0xff]
      %v2001 = vld [vmem:[#allocation2 + $0x100] sm:$0xff]
      %v2002 = vlaneseq
      %v2003 = vshrl.u32 %v2002, 7
      %v2004 = vsub.s32 0, %v2003
      %v2005 = vrot.slane %v1969, %v2004
      %v2006 = vmul.f32 %v2005, %v1970
      %v2007 = vmul.f32 %v2005, %v1971
      %v2008 = vmul.f32 %v2005, %v1972
      %v2009 = vmul.f32 %v2005, %v1973
      %v2010 = vmul.f32 %v2005, %v1974
      %v2011 = vmul.f32 %v2005, %v1975
      %v2012 = vmul.f32 %v2005, %v1976
      %v2013 = vmul.f32 %v2005, %v1977
      %v2014 = vmul.f32 %v2005, %v1978
      %v2015 = vmul.f32 %v2005, %v1979
      %v2016 = vmul.f32 %v2005, %v1980
      %v2017 = vmul.f32 %v2005, %v1981
      %v2018 = vmul.f32 %v2005, %v1982
      %v2019 = vmul.f32 %v2005, %v1983
      %v2020 = vmul.f32 %v2005, %v1984
      %v2021 = vmul.f32 %v2005, %v1985
      %v2022 = vmul.f32 %v2005, %v1986
      %v2023 = vmul.f32 %v2005, %v1987
      %v2024 = vmul.f32 %v2005, %v1988
      %v2025 = vmul.f32 %v2005, %v1989
      %v2026 = vmul.f32 %v2005, %v1990
      %v2027 = vmul.f32 %v2005, %v1991
      %v2028 = vmul.f32 %v2005, %v1992
      %v2029 = vmul.f32 %v2005, %v1993
      %v2030 = vmul.f32 %v2005, %v1994
      %v2031 = vmul.f32 %v2005, %v1995
      %v2032 = vmul.f32 %v2005, %v1996
      %v2033 = vmul.f32 %v2005, %v1997
      %v2034 = vmul.f32 %v2005, %v1998
      %v2035 = vmul.f32 %v2005, %v1999
      %v2036 = vmul.f32 %v2005, %v2000
      %v2037 = vmul.f32 %v2005, %v2001
      %v2038 = vadd.f32 %v1937, %v2006
      %v2039 = vadd.f32 %v1938, %v2007
      %v2040 = vadd.f32 %v1939, %v2008
      %v2041 = vadd.f32 %v1940, %v2009
      %v2042 = vadd.f32 %v1941, %v2010
      %v2043 = vadd.f32 %v1942, %v2011
      %v2044 = vadd.f32 %v1943, %v2012
      %v2045 = vadd.f32 %v1944, %v2013
      %v2046 = vadd.f32 %v1945, %v2014
      %v2047 = vadd.f32 %v1946, %v2015
      %v2048 = vadd.f32 %v1947, %v2016
      %v2049 = vadd.f32 %v1948, %v2017
      %v2050 = vadd.f32 %v1949, %v2018
      %v2051 = vadd.f32 %v1950, %v2019
      %v2052 = vadd.f32 %v1951, %v2020
      %v2053 = vadd.f32 %v1952, %v2021
      %v2054 = vadd.f32 %v1953, %v2022
      %v2055 = vadd.f32 %v1954, %v2023
      %v2056 = vadd.f32 %v1955, %v2024
      %v2057 = vadd.f32 %v1956, %v2025
      %v2058 = vadd.f32 %v1957, %v2026
      %v2059 = vadd.f32 %v1958, %v2027
      %v2060 = vadd.f32 %v1959, %v2028
      %v2061 = vadd.f32 %v1960, %v2029
      %v2062 = vadd.f32 %v1961, %v2030
      %v2063 = vadd.f32 %v1962, %v2031
      %v2064 = vadd.f32 %v1963, %v2032
      %v2065 = vadd.f32 %v1964, %v2033
      %v2066 = vadd.f32 %v1965, %v2034
      %v2067 = vadd.f32 %v1966, %v2035
      %v2068 = vadd.f32 %v1967, %v2036
      %v2069 = vadd.f32 %v1968, %v2037
      %v2070 = vld [vmem:[%s6] sm:$0x1]
      %v2072 = vlaneseq
      %v2073 = vshrl.u32 %v2072, 7
      %v2074 = vsub.s32 0, %v2073
      %v2075 = vrot.slane %v2070, %v2074
      %v2077 = vadd.f32 %v2038, %v2075
      %v2078 = vadd.f32 %v2039, %v2075
      %v2079 = vadd.f32 %v2040, %v2075
      %v2080 = vadd.f32 %v2041, %v2075
      %v2081 = vadd.f32 %v2042, %v2075
      %v2082 = vadd.f32 %v2043, %v2075
      %v2083 = vadd.f32 %v2044, %v2075
      %v2084 = vadd.f32 %v2045, %v2075
      %v2085 = vadd.f32 %v2046, %v2075
      %v2086 = vadd.f32 %v2047, %v2075
      %v2087 = vadd.f32 %v2048, %v2075
      %v2088 = vadd.f32 %v2049, %v2075
      %v2089 = vadd.f32 %v2050, %v2075
      %v2090 = vadd.f32 %v2051, %v2075
      %v2091 = vadd.f32 %v2052, %v2075
      %v2092 = vadd.f32 %v2053, %v2075
      %v2093 = vadd.f32 %v2054, %v2075
      %v2094 = vadd.f32 %v2055, %v2075
      %v2095 = vadd.f32 %v2056, %v2075
      %v2096 = vadd.f32 %v2057, %v2075
      %v2097 = vadd.f32 %v2058, %v2075
      %v2098 = vadd.f32 %v2059, %v2075
      %v2099 = vadd.f32 %v2060, %v2075
      %v2100 = vadd.f32 %v2061, %v2075
      %v2101 = vadd.f32 %v2062, %v2075
      %v2102 = vadd.f32 %v2063, %v2075
      %v2103 = vadd.f32 %v2064, %v2075
      %v2104 = vadd.f32 %v2065, %v2075
      %v2105 = vadd.f32 %v2066, %v2075
      %v2106 = vadd.f32 %v2067, %v2075
      %v2107 = vadd.f32 %v2068, %v2075
      %v2108 = vadd.f32 %v2069, %v2075
      %v2109 = vsub.f32 0.0, %v2077
      %v2110 = vsub.f32 0.0, %v2078
      %v2111 = vsub.f32 0.0, %v2079
      %v2112 = vsub.f32 0.0, %v2080
      %v2113 = vsub.f32 0.0, %v2081
      %v2114 = vsub.f32 0.0, %v2082
      %v2115 = vsub.f32 0.0, %v2083
      %v2116 = vsub.f32 0.0, %v2084
      %v2117 = vsub.f32 0.0, %v2085
      %v2118 = vsub.f32 0.0, %v2086
      %v2119 = vsub.f32 0.0, %v2087
      %v2120 = vsub.f32 0.0, %v2088
      %v2121 = vsub.f32 0.0, %v2089
      %v2122 = vsub.f32 0.0, %v2090
      %v2123 = vsub.f32 0.0, %v2091
      %v2124 = vsub.f32 0.0, %v2092
      %v2125 = vsub.f32 0.0, %v2093
      %v2126 = vsub.f32 0.0, %v2094
      %v2127 = vsub.f32 0.0, %v2095
      %v2128 = vsub.f32 0.0, %v2096
      %v2129 = vsub.f32 0.0, %v2097
      %v2130 = vsub.f32 0.0, %v2098
      %v2131 = vsub.f32 0.0, %v2099
      %v2132 = vsub.f32 0.0, %v2100
      %v2133 = vsub.f32 0.0, %v2101
      %v2134 = vsub.f32 0.0, %v2102
      %v2135 = vsub.f32 0.0, %v2103
      %v2136 = vsub.f32 0.0, %v2104
      %v2137 = vsub.f32 0.0, %v2105
      %v2138 = vsub.f32 0.0, %v2106
      %v2139 = vsub.f32 0.0, %v2107
      %v2140 = vsub.f32 0.0, %v2108
      %v2141 = vmul.f32 %v2109, 1.442695
      %v2142 = vpow.pop %v2141
      %v2143 = vmul.f32 %v2110, 1.442695
      %v2144 = vpow.pop %v2143
      %v2145 = vmul.f32 %v2111, 1.442695
      %v2146 = vpow.pop %v2145
      %v2147 = vmul.f32 %v2112, 1.442695
      %v2148 = vpow.pop %v2147
      %v2149 = vmul.f32 %v2113, 1.442695
      %v2150 = vpow.pop %v2149
      %v2151 = vmul.f32 %v2114, 1.442695
      %v2152 = vpow.pop %v2151
      %v2153 = vmul.f32 %v2115, 1.442695
      %v2154 = vpow.pop %v2153
      %v2155 = vmul.f32 %v2116, 1.442695
      %v2156 = vpow.pop %v2155
      %v2157 = vmul.f32 %v2117, 1.442695
      %v2158 = vpow.pop %v2157
      %v2159 = vmul.f32 %v2118, 1.442695
      %v2160 = vpow.pop %v2159
      %v2161 = vmul.f32 %v2119, 1.442695
      %v2162 = vpow.pop %v2161
      %v2163 = vmul.f32 %v2120, 1.442695
      %v2164 = vpow.pop %v2163
      %v2165 = vmul.f32 %v2121, 1.442695
      %v2166 = vpow.pop %v2165
      %v2167 = vmul.f32 %v2122, 1.442695
      %v2168 = vpow.pop %v2167
      %v2169 = vmul.f32 %v2123, 1.442695
      %v2170 = vpow.pop %v2169
      %v2171 = vmul.f32 %v2124, 1.442695
      %v2172 = vpow.pop %v2171
      %v2173 = vmul.f32 %v2125, 1.442695
      %v2174 = vpow.pop %v2173
      %v2175 = vmul.f32 %v2126, 1.442695
      %v2176 = vpow.pop %v2175
      %v2177 = vmul.f32 %v2127, 1.442695
      %v2178 = vpow.pop %v2177
      %v2179 = vmul.f32 %v2128, 1.442695
      %v2180 = vpow.pop %v2179
      %v2181 = vmul.f32 %v2129, 1.442695
      %v2182 = vpow.pop %v2181
      %v2183 = vmul.f32 %v2130, 1.442695
      %v2184 = vpow.pop %v2183
      %v2185 = vmul.f32 %v2131, 1.442695
      %v2186 = vpow.pop %v2185
      %v2187 = vmul.f32 %v2132, 1.442695
      %v2188 = vpow.pop %v2187
      %v2189 = vmul.f32 %v2133, 1.442695
      %v2190 = vpow.pop %v2189
      %v2191 = vmul.f32 %v2134, 1.442695
      %v2192 = vpow.pop %v2191
      %v2193 = vmul.f32 %v2135, 1.442695
      %v2194 = vpow.pop %v2193
      %v2195 = vmul.f32 %v2136, 1.442695
      %v2196 = vpow.pop %v2195
      %v2197 = vmul.f32 %v2137, 1.442695
      %v2198 = vpow.pop %v2197
      %v2199 = vmul.f32 %v2138, 1.442695
      %v2200 = vpow.pop %v2199
      %v2201 = vmul.f32 %v2139, 1.442695
      %v2202 = vpow.pop %v2201
      %v2203 = vmul.f32 %v2140, 1.442695
      %v2204 = vpow.pop %v2203
      %v2205 = vadd.f32 %v2142, 1.0
      %v2206 = vadd.f32 %v2144, 1.0
      %v2207 = vadd.f32 %v2146, 1.0
      %v2208 = vadd.f32 %v2148, 1.0
      %v2209 = vadd.f32 %v2150, 1.0
      %v2210 = vadd.f32 %v2152, 1.0
      %v2211 = vadd.f32 %v2154, 1.0
      %v2212 = vadd.f32 %v2156, 1.0
      %v2213 = vadd.f32 %v2158, 1.0
      %v2214 = vadd.f32 %v2160, 1.0
      %v2215 = vadd.f32 %v2162, 1.0
      %v2216 = vadd.f32 %v2164, 1.0
      %v2217 = vadd.f32 %v2166, 1.0
      %v2218 = vadd.f32 %v2168, 1.0
      %v2219 = vadd.f32 %v2170, 1.0
      %v2220 = vadd.f32 %v2172, 1.0
      %v2221 = vadd.f32 %v2174, 1.0
      %v2222 = vadd.f32 %v2176, 1.0
      %v2223 = vadd.f32 %v2178, 1.0
      %v2224 = vadd.f32 %v2180, 1.0
      %v2225 = vadd.f32 %v2182, 1.0
      %v2226 = vadd.f32 %v2184, 1.0
      %v2227 = vadd.f32 %v2186, 1.0
      %v2228 = vadd.f32 %v2188, 1.0
      %v2229 = vadd.f32 %v2190, 1.0
      %v2230 = vadd.f32 %v2192, 1.0
      %v2231 = vadd.f32 %v2194, 1.0
      %v2232 = vadd.f32 %v2196, 1.0
      %v2233 = vadd.f32 %v2198, 1.0
      %v2234 = vadd.f32 %v2200, 1.0
      %v2235 = vadd.f32 %v2202, 1.0
      %v2236 = vadd.f32 %v2204, 1.0
      %v2237 = vrcp.pop %v2205
      %v2238 = vmul.f32 1.0, %v2237
      %v2239 = vrcp.pop %v2206
      %v2240 = vmul.f32 1.0, %v2239
      %v2241 = vrcp.pop %v2207
      %v2242 = vmul.f32 1.0, %v2241
      %v2243 = vrcp.pop %v2208
      %v2244 = vmul.f32 1.0, %v2243
      %v2245 = vrcp.pop %v2209
      %v2246 = vmul.f32 1.0, %v2245
      %v2247 = vrcp.pop %v2210
      %v2248 = vmul.f32 1.0, %v2247
      %v2249 = vrcp.pop %v2211
      %v2250 = vmul.f32 1.0, %v2249
      %v2251 = vrcp.pop %v2212
      %v2252 = vmul.f32 1.0, %v2251
      %v2253 = vrcp.pop %v2213
      %v2254 = vmul.f32 1.0, %v2253
      %v2255 = vrcp.pop %v2214
      %v2256 = vmul.f32 1.0, %v2255
      %v2257 = vrcp.pop %v2215
      %v2258 = vmul.f32 1.0, %v2257
      %v2259 = vrcp.pop %v2216
      %v2260 = vmul.f32 1.0, %v2259
      %v2261 = vrcp.pop %v2217
      %v2262 = vmul.f32 1.0, %v2261
      %v2263 = vrcp.pop %v2218
      %v2264 = vmul.f32 1.0, %v2263
      %v2265 = vrcp.pop %v2219
      %v2266 = vmul.f32 1.0, %v2265
      %v2267 = vrcp.pop %v2220
      %v2268 = vmul.f32 1.0, %v2267
      %v2269 = vrcp.pop %v2221
      %v2270 = vmul.f32 1.0, %v2269
      %v2271 = vrcp.pop %v2222
      %v2272 = vmul.f32 1.0, %v2271
      %v2273 = vrcp.pop %v2223
      %v2274 = vmul.f32 1.0, %v2273
      %v2275 = vrcp.pop %v2224
      %v2276 = vmul.f32 1.0, %v2275
      %v2277 = vrcp.pop %v2225
      %v2278 = vmul.f32 1.0, %v2277
      %v2279 = vrcp.pop %v2226
      %v2280 = vmul.f32 1.0, %v2279
      %v2281 = vrcp.pop %v2227
      %v2282 = vmul.f32 1.0, %v2281
      %v2283 = vrcp.pop %v2228
      %v2284 = vmul.f32 1.0, %v2283
      %v2285 = vrcp.pop %v2229
      %v2286 = vmul.f32 1.0, %v2285
      %v2287 = vrcp.pop %v2230
      %v2288 = vmul.f32 1.0, %v2287
      %v2289 = vrcp.pop %v2231
      %v2290 = vmul.f32 1.0, %v2289
      %v2291 = vrcp.pop %v2232
      %v2292 = vmul.f32 1.0, %v2291
      %v2293 = vrcp.pop %v2233
      %v2294 = vmul.f32 1.0, %v2293
      %v2295 = vrcp.pop %v2234
      %v2296 = vmul.f32 1.0, %v2295
      %v2297 = vrcp.pop %v2235
      %v2298 = vmul.f32 1.0, %v2297
      %v2299 = vrcp.pop %v2236
      %v2300 = vmul.f32 1.0, %v2299
      %v2301 = vmul.f32 %v2077, %v2238
      %v2302 = vmul.f32 %v2078, %v2240
      %v2303 = vmul.f32 %v2079, %v2242
      %v2304 = vmul.f32 %v2080, %v2244
      %v2305 = vmul.f32 %v2081, %v2246
      %v2306 = vmul.f32 %v2082, %v2248
      %v2307 = vmul.f32 %v2083, %v2250
      %v2308 = vmul.f32 %v2084, %v2252
      %v2309 = vmul.f32 %v2085, %v2254
      %v2310 = vmul.f32 %v2086, %v2256
      %v2311 = vmul.f32 %v2087, %v2258
      %v2312 = vmul.f32 %v2088, %v2260
      %v2313 = vmul.f32 %v2089, %v2262
      %v2314 = vmul.f32 %v2090, %v2264
      %v2315 = vmul.f32 %v2091, %v2266
      %v2316 = vmul.f32 %v2092, %v2268
      %v2317 = vmul.f32 %v2093, %v2270
      %v2318 = vmul.f32 %v2094, %v2272
      %v2319 = vmul.f32 %v2095, %v2274
      %v2320 = vmul.f32 %v2096, %v2276
      %v2321 = vmul.f32 %v2097, %v2278
      %v2322 = vmul.f32 %v2098, %v2280
      %v2323 = vmul.f32 %v2099, %v2282
      %v2324 = vmul.f32 %v2100, %v2284
      %v2325 = vmul.f32 %v2101, %v2286
      %v2326 = vmul.f32 %v2102, %v2288
      %v2327 = vmul.f32 %v2103, %v2290
      %v2328 = vmul.f32 %v2104, %v2292
      %v2329 = vmul.f32 %v2105, %v2294
      %v2330 = vmul.f32 %v2106, %v2296
      %v2331 = vmul.f32 %v2107, %v2298
      %v2332 = vmul.f32 %v2108, %v2300
      %v2333 = vld [vmem:[%s7] sm:$0xff]
      %v2335 = vsel %vm1632, %v2301, 0
      %v2338 = vsel %vm1632, %v2302, 0
      %v2341 = vsel %vm1632, %v2303, 0
      %v2344 = vsel %vm1632, %v2304, 0
      %v2347 = vsel %vm1632, %v2305, 0
      %v2350 = vsel %vm1632, %v2306, 0
      %v2353 = vsel %vm1632, %v2307, 0
      %v2356 = vsel %vm1632, %v2308, 0
      %v2359 = vsel %vm1632, %v2309, 0
      %v2362 = vsel %vm1632, %v2310, 0
      %v2365 = vsel %vm1632, %v2311, 0
      %v2368 = vsel %vm1632, %v2312, 0
      %v2371 = vsel %vm1632, %v2313, 0
      %v2374 = vsel %vm1632, %v2314, 0
      %v2377 = vsel %vm1632, %v2315, 0
      %v2380 = vsel %vm1632, %v2316, 0
      %v2383 = vsel %vm1632, %v2317, 0
      %v2386 = vsel %vm1632, %v2318, 0
      %v2389 = vsel %vm1632, %v2319, 0
      %v2392 = vsel %vm1632, %v2320, 0
      %v2395 = vsel %vm1632, %v2321, 0
      %v2398 = vsel %vm1632, %v2322, 0
      %v2401 = vsel %vm1632, %v2323, 0
      %v2404 = vsel %vm1632, %v2324, 0
      %v2407 = vsel %vm1632, %v2325, 0
      %v2410 = vsel %vm1632, %v2326, 0
      %v2413 = vsel %vm1632, %v2327, 0
      %v2416 = vsel %vm1632, %v2328, 0
      %v2419 = vsel %vm1632, %v2329, 0
      %v2422 = vsel %vm1632, %v2330, 0
      %v2425 = vsel %vm1632, %v2331, 0
      %v2428 = vsel %vm1632, %v2332, 0
      %2430 = vmatprep.subr.mxu0 0.0
      %2431 = vmatpush1.msra.mxu0 0.0
      %2432 = vmatprep.subr.mxu0 0.0
      %2433 = vmatpush1.msra.mxu0 0.0
      %2434 = vmatprep.subr.mxu0 0.0
      %2435 = vmatpush1.msra.mxu0 0.0
      %2436 = vmatprep.subr.mxu0 0.0
      %2437 = vmatpush1.msra.mxu0 0.0
      %2438 = vmatprep.subr.mxu0 0.0
      %2439 = vmatpush1.msra.mxu0 0.0
      %2440 = vmatprep.subr.mxu0 0.0
      %2441 = vmatpush1.msra.mxu0 0.0
      %2442 = vmatprep.subr.mxu0 0.0
      %2443 = vmatpush1.msra.mxu0 0.0
      %2444 = vmatprep.subr.mxu0 0.0
      %2445 = vmatpush1.msra.mxu0 0.0
      %2446 = vmatprep.subr.mxu0 0.0
      %2447 = vmatpush1.msra.mxu0 0.0
      %2448 = vmatprep.subr.mxu0 0.0
      %2449 = vmatpush1.msra.mxu0 0.0
      %2450 = vmatprep.subr.mxu0 0.0
      %2451 = vmatpush1.msra.mxu0 0.0
      %2452 = vmatprep.subr.mxu0 0.0
      %2453 = vmatpush1.msra.mxu0 0.0
      %2454 = vmatprep.subr.mxu0 0.0
      %2455 = vmatpush1.msra.mxu0 0.0
      %2456 = vmatprep.subr.mxu0 0.0
      %2457 = vmatpush1.msra.mxu0 0.0
      %2458 = vmatprep.subr.mxu0 0.0
      %2459 = vmatpush1.msra.mxu0 0.0
      %2460 = vmatprep.subr.mxu0 0.0
      %2461 = vmatpush1.msra.mxu0 %v2333
      %2462 = vmatprep.subr.mxu0 0.0
      %2463 = vmatpush2.msra.mxu0 0.0
      %2464 = vmatprep.subr.mxu0 0.0
      %2465 = vmatpush2.msra.mxu0 0.0
      %2466 = vmatprep.subr.mxu0 0.0
      %2467 = vmatpush2.msra.mxu0 0.0
      %2468 = vmatprep.subr.mxu0 0.0
      %2469 = vmatpush2.msra.mxu0 0.0
      %2470 = vmatprep.subr.mxu0 0.0
      %2471 = vmatpush2.msra.mxu0 0.0
      %2472 = vmatprep.subr.mxu0 0.0
      %2473 = vmatpush2.msra.mxu0 0.0
      %2474 = vmatprep.subr.mxu0 0.0
      %2475 = vmatpush2.msra.mxu0 0.0
      %2476 = vmatprep.subr.mxu0 0.0
      %2477 = vmatpush2.msra.mxu0 0.0
      %2478 = vmatprep.subr.mxu0 0.0
      %2479 = vmatpush2.msra.mxu0 0.0
      %2480 = vmatprep.subr.mxu0 0.0
      %2481 = vmatpush2.msra.mxu0 0.0
      %2482 = vmatprep.subr.mxu0 0.0
      %2483 = vmatpush2.msra.mxu0 0.0
      %2484 = vmatprep.subr.mxu0 0.0
      %2485 = vmatpush2.msra.mxu0 0.0
      %2486 = vmatprep.subr.mxu0 0.0
      %2487 = vmatpush2.msra.mxu0 0.0
      %2488 = vmatprep.subr.mxu0 0.0
      %2489 = vmatpush2.msra.mxu0 0.0
      %2490 = vmatprep.subr.mxu0 0.0
      %2491 = vmatpush2.msra.mxu0 0.0
      %2492 = vmatprep.subr.mxu0 0.0
      %2493 = vmatpush2.msra.mxu0 0.0
      %2494 = vmatprep.mubr.f32.mxu0 0.0
      %2495 = vmatmul.mubr.f32.gmra.mxu0 %v2335
      %v2496 = vpop.f32.mrf.mxu0
      %v2497 = vadd.f32 0.0, %v2496
      %v2498 = vpop.f32.mrf.mxu0
      %2499 = vmatprep.mubr.f32.mxu0 0.0
      %2500 = vmatmul.mubr.f32.gmra.mxu0 %v2338
      %v2501 = vpop.f32.mrf.mxu0
      %v2502 = vadd.f32 0.0, %v2501
      %v2503 = vpop.f32.mrf.mxu0
      %2504 = vmatprep.mubr.f32.mxu0 0.0
      %2505 = vmatmul.mubr.f32.gmra.mxu0 %v2341
      %v2506 = vpop.f32.mrf.mxu0
      %v2507 = vadd.f32 0.0, %v2506
      %v2508 = vpop.f32.mrf.mxu0
      %2509 = vmatprep.mubr.f32.mxu0 0.0
      %2510 = vmatmul.mubr.f32.gmra.mxu0 %v2344
      %v2511 = vpop.f32.mrf.mxu0
      %v2512 = vadd.f32 0.0, %v2511
      %v2513 = vpop.f32.mrf.mxu0
      %2514 = vmatprep.mubr.f32.mxu0 0.0
      %2515 = vmatmul.mubr.f32.gmra.mxu0 %v2347
      %v2516 = vpop.f32.mrf.mxu0
      %v2517 = vadd.f32 0.0, %v2516
      %v2518 = vpop.f32.mrf.mxu0
      %2519 = vmatprep.mubr.f32.mxu0 0.0
      %2520 = vmatmul.mubr.f32.gmra.mxu0 %v2350
      %v2521 = vpop.f32.mrf.mxu0
      %v2522 = vadd.f32 0.0, %v2521
      %v2523 = vpop.f32.mrf.mxu0
      %2524 = vmatprep.mubr.f32.mxu0 0.0
      %2525 = vmatmul.mubr.f32.gmra.mxu0 %v2353
      %v2526 = vpop.f32.mrf.mxu0
      %v2527 = vadd.f32 0.0, %v2526
      %v2528 = vpop.f32.mrf.mxu0
      %2529 = vmatprep.mubr.f32.mxu0 0.0
      %2530 = vmatmul.mubr.f32.gmra.mxu0 %v2356
      %v2531 = vpop.f32.mrf.mxu0
      %v2532 = vadd.f32 0.0, %v2531
      %v2533 = vpop.f32.mrf.mxu0
      %2534 = vmatprep.mubr.f32.mxu0 0.0
      %2535 = vmatmul.mubr.f32.gmra.mxu0 %v2359
      %v2536 = vpop.f32.mrf.mxu0
      %v2537 = vadd.f32 0.0, %v2536
      %v2538 = vpop.f32.mrf.mxu0
      %2539 = vmatprep.mubr.f32.mxu0 0.0
      %2540 = vmatmul.mubr.f32.gmra.mxu0 %v2362
      %v2541 = vpop.f32.mrf.mxu0
      %v2542 = vadd.f32 0.0, %v2541
      %v2543 = vpop.f32.mrf.mxu0
      %2544 = vmatprep.mubr.f32.mxu0 0.0
      %2545 = vmatmul.mubr.f32.gmra.mxu0 %v2365
      %v2546 = vpop.f32.mrf.mxu0
      %v2547 = vadd.f32 0.0, %v2546
      %v2548 = vpop.f32.mrf.mxu0
      %2549 = vmatprep.mubr.f32.mxu0 0.0
      %2550 = vmatmul.mubr.f32.gmra.mxu0 %v2368
      %v2551 = vpop.f32.mrf.mxu0
      %v2552 = vadd.f32 0.0, %v2551
      %v2553 = vpop.f32.mrf.mxu0
      %2554 = vmatprep.mubr.f32.mxu0 0.0
      %2555 = vmatmul.mubr.f32.gmra.mxu0 %v2371
      %v2556 = vpop.f32.mrf.mxu0
      %v2557 = vadd.f32 0.0, %v2556
      %v2558 = vpop.f32.mrf.mxu0
      %2559 = vmatprep.mubr.f32.mxu0 0.0
      %2560 = vmatmul.mubr.f32.gmra.mxu0 %v2374
      %v2561 = vpop.f32.mrf.mxu0
      %v2562 = vadd.f32 0.0, %v2561
      %v2563 = vpop.f32.mrf.mxu0
      %2564 = vmatprep.mubr.f32.mxu0 0.0
      %2565 = vmatmul.mubr.f32.gmra.mxu0 %v2377
      %v2566 = vpop.f32.mrf.mxu0
      %v2567 = vadd.f32 0.0, %v2566
      %v2568 = vpop.f32.mrf.mxu0
      %2569 = vmatprep.mubr.f32.mxu0 0.0
      %2570 = vmatmul.mubr.f32.gmra.mxu0 %v2380
      %v2571 = vpop.f32.mrf.mxu0
      %v2572 = vadd.f32 0.0, %v2571
      %v2573 = vpop.f32.mrf.mxu0
      %2574 = vmatprep.mubr.f32.mxu0 0.0
      %2575 = vmatmul.mubr.f32.gmra.mxu0 %v2383
      %v2576 = vpop.f32.mrf.mxu0
      %v2577 = vadd.f32 0.0, %v2576
      %v2578 = vpop.f32.mrf.mxu0
      %2579 = vmatprep.mubr.f32.mxu0 0.0
      %2580 = vmatmul.mubr.f32.gmra.mxu0 %v2386
      %v2581 = vpop.f32.mrf.mxu0
      %v2582 = vadd.f32 0.0, %v2581
      %v2583 = vpop.f32.mrf.mxu0
      %2584 = vmatprep.mubr.f32.mxu0 0.0
      %2585 = vmatmul.mubr.f32.gmra.mxu0 %v2389
      %v2586 = vpop.f32.mrf.mxu0
      %v2587 = vadd.f32 0.0, %v2586
      %v2588 = vpop.f32.mrf.mxu0
      %2589 = vmatprep.mubr.f32.mxu0 0.0
      %2590 = vmatmul.mubr.f32.gmra.mxu0 %v2392
      %v2591 = vpop.f32.mrf.mxu0
      %v2592 = vadd.f32 0.0, %v2591
      %v2593 = vpop.f32.mrf.mxu0
      %2594 = vmatprep.mubr.f32.mxu0 0.0
      %2595 = vmatmul.mubr.f32.gmra.mxu0 %v2395
      %v2596 = vpop.f32.mrf.mxu0
      %v2597 = vadd.f32 0.0, %v2596
      %v2598 = vpop.f32.mrf.mxu0
      %2599 = vmatprep.mubr.f32.mxu0 0.0
      %2600 = vmatmul.mubr.f32.gmra.mxu0 %v2398
      %v2601 = vpop.f32.mrf.mxu0
      %v2602 = vadd.f32 0.0, %v2601
      %v2603 = vpop.f32.mrf.mxu0
      %2604 = vmatprep.mubr.f32.mxu0 0.0
      %2605 = vmatmul.mubr.f32.gmra.mxu0 %v2401
      %v2606 = vpop.f32.mrf.mxu0
      %v2607 = vadd.f32 0.0, %v2606
      %v2608 = vpop.f32.mrf.mxu0
      %2609 = vmatprep.mubr.f32.mxu0 0.0
      %2610 = vmatmul.mubr.f32.gmra.mxu0 %v2404
      %v2611 = vpop.f32.mrf.mxu0
      %v2612 = vadd.f32 0.0, %v2611
      %v2613 = vpop.f32.mrf.mxu0
      %2614 = vmatprep.mubr.f32.mxu0 0.0
      %2615 = vmatmul.mubr.f32.gmra.mxu0 %v2407
      %v2616 = vpop.f32.mrf.mxu0
      %v2617 = vadd.f32 0.0, %v2616
      %v2618 = vpop.f32.mrf.mxu0
      %2619 = vmatprep.mubr.f32.mxu0 0.0
      %2620 = vmatmul.mubr.f32.gmra.mxu0 %v2410
      %v2621 = vpop.f32.mrf.mxu0
      %v2622 = vadd.f32 0.0, %v2621
      %v2623 = vpop.f32.mrf.mxu0
      %2624 = vmatprep.mubr.f32.mxu0 0.0
      %2625 = vmatmul.mubr.f32.gmra.mxu0 %v2413
      %v2626 = vpop.f32.mrf.mxu0
      %v2627 = vadd.f32 0.0, %v2626
      %v2628 = vpop.f32.mrf.mxu0
      %2629 = vmatprep.mubr.f32.mxu0 0.0
      %2630 = vmatmul.mubr.f32.gmra.mxu0 %v2416
      %v2631 = vpop.f32.mrf.mxu0
      %v2632 = vadd.f32 0.0, %v2631
      %v2633 = vpop.f32.mrf.mxu0
      %2634 = vmatprep.mubr.f32.mxu0 0.0
      %2635 = vmatmul.mubr.f32.gmra.mxu0 %v2419
      %v2636 = vpop.f32.mrf.mxu0
      %v2637 = vadd.f32 0.0, %v2636
      %v2638 = vpop.f32.mrf.mxu0
      %2639 = vmatprep.mubr.f32.mxu0 0.0
      %2640 = vmatmul.mubr.f32.gmra.mxu0 %v2422
      %v2641 = vpop.f32.mrf.mxu0
      %v2642 = vadd.f32 0.0, %v2641
      %v2643 = vpop.f32.mrf.mxu0
      %2644 = vmatprep.mubr.f32.mxu0 0.0
      %2645 = vmatmul.mubr.f32.gmra.mxu0 %v2425
      %v2646 = vpop.f32.mrf.mxu0
      %v2647 = vadd.f32 0.0, %v2646
      %v2648 = vpop.f32.mrf.mxu0
      %2649 = vmatprep.mubr.f32.mxu0 0.0
      %2650 = vmatmul.mubr.f32.gmra.mxu0 %v2428
      %v2651 = vpop.f32.mrf.mxu0
      %v2652 = vadd.f32 0.0, %v2651
      %v2653 = vpop.f32.mrf.mxu0
      %2654 = vdwg.mxu0
      %v2655 = vld [vmem:[%s8] sm:$0xff]
      %2656 = vmatprep.subr.mxu0 0.0
      %2657 = vmatpush1.msra.mxu0 0.0
      %2658 = vmatprep.subr.mxu0 0.0
      %2659 = vmatpush1.msra.mxu0 0.0
      %2660 = vmatprep.subr.mxu0 0.0
      %2661 = vmatpush1.msra.mxu0 0.0
      %2662 = vmatprep.subr.mxu0 0.0
      %2663 = vmatpush1.msra.mxu0 0.0
      %2664 = vmatprep.subr.mxu0 0.0
      %2665 = vmatpush1.msra.mxu0 0.0
      %2666 = vmatprep.subr.mxu0 0.0
      %2667 = vmatpush1.msra.mxu0 0.0
      %2668 = vmatprep.subr.mxu0 0.0
      %2669 = vmatpush1.msra.mxu0 0.0
      %2670 = vmatprep.subr.mxu0 0.0
      %2671 = vmatpush1.msra.mxu0 0.0
      %2672 = vmatprep.subr.mxu0 0.0
      %2673 = vmatpush1.msra.mxu0 0.0
      %2674 = vmatprep.subr.mxu0 0.0
      %2675 = vmatpush1.msra.mxu0 0.0
      %2676 = vmatprep.subr.mxu0 0.0
      %2677 = vmatpush1.msra.mxu0 0.0
      %2678 = vmatprep.subr.mxu0 0.0
      %2679 = vmatpush1.msra.mxu0 0.0
      %2680 = vmatprep.subr.mxu0 0.0
      %2681 = vmatpush1.msra.mxu0 0.0
      %2682 = vmatprep.subr.mxu0 0.0
      %2683 = vmatpush1.msra.mxu0 0.0
      %2684 = vmatprep.subr.mxu0 0.0
      %2685 = vmatpush1.msra.mxu0 0.0
      %2686 = vmatprep.subr.mxu0 0.0
      %2687 = vmatpush1.msra.mxu0 %v2655
      %2688 = vmatprep.subr.mxu0 0.0
      %2689 = vmatpush2.msra.mxu0 0.0
      %2690 = vmatprep.subr.mxu0 0.0
      %2691 = vmatpush2.msra.mxu0 0.0
      %2692 = vmatprep.subr.mxu0 0.0
      %2693 = vmatpush2.msra.mxu0 0.0
      %2694 = vmatprep.subr.mxu0 0.0
      %2695 = vmatpush2.msra.mxu0 0.0
      %2696 = vmatprep.subr.mxu0 0.0
      %2697 = vmatpush2.msra.mxu0 0.0
      %2698 = vmatprep.subr.mxu0 0.0
      %2699 = vmatpush2.msra.mxu0 0.0
      %2700 = vmatprep.subr.mxu0 0.0
      %2701 = vmatpush2.msra.mxu0 0.0
      %2702 = vmatprep.subr.mxu0 0.0
      %2703 = vmatpush2.msra.mxu0 0.0
      %2704 = vmatprep.subr.mxu0 0.0
      %2705 = vmatpush2.msra.mxu0 0.0
      %2706 = vmatprep.subr.mxu0 0.0
      %2707 = vmatpush2.msra.mxu0 0.0
      %2708 = vmatprep.subr.mxu0 0.0
      %2709 = vmatpush2.msra.mxu0 0.0
      %2710 = vmatprep.subr.mxu0 0.0
      %2711 = vmatpush2.msra.mxu0 0.0
      %2712 = vmatprep.subr.mxu0 0.0
      %2713 = vmatpush2.msra.mxu0 0.0
      %2714 = vmatprep.subr.mxu0 0.0
      %2715 = vmatpush2.msra.mxu0 0.0
      %2716 = vmatprep.subr.mxu0 0.0
      %2717 = vmatpush2.msra.mxu0 0.0
      %2718 = vmatprep.subr.mxu0 0.0
      %2719 = vmatpush2.msra.mxu0 0.0
      %2720 = vmatprep.mubr.f32.mxu0 0.0
      %2721 = vmatmul.mubr.f32.gmra.mxu0 %v2335
      %v2722 = vpop.f32.mrf.mxu0
      %v2723 = vadd.f32 0.0, %v2722
      %v2724 = vpop.f32.mrf.mxu0
      %2725 = vmatprep.mubr.f32.mxu0 0.0
      %2726 = vmatmul.mubr.f32.gmra.mxu0 %v2338
      %v2727 = vpop.f32.mrf.mxu0
      %v2728 = vadd.f32 0.0, %v2727
      %v2729 = vpop.f32.mrf.mxu0
      %2730 = vmatprep.mubr.f32.mxu0 0.0
      %2731 = vmatmul.mubr.f32.gmra.mxu0 %v2341
      %v2732 = vpop.f32.mrf.mxu0
      %v2733 = vadd.f32 0.0, %v2732
      %v2734 = vpop.f32.mrf.mxu0
      %2735 = vmatprep.mubr.f32.mxu0 0.0
      %2736 = vmatmul.mubr.f32.gmra.mxu0 %v2344
      %v2737 = vpop.f32.mrf.mxu0
      %v2738 = vadd.f32 0.0, %v2737
      %v2739 = vpop.f32.mrf.mxu0
      %2740 = vmatprep.mubr.f32.mxu0 0.0
      %2741 = vmatmul.mubr.f32.gmra.mxu0 %v2347
      %v2742 = vpop.f32.mrf.mxu0
      %v2743 = vadd.f32 0.0, %v2742
      %v2744 = vpop.f32.mrf.mxu0
      %2745 = vmatprep.mubr.f32.mxu0 0.0
      %2746 = vmatmul.mubr.f32.gmra.mxu0 %v2350
      %v2747 = vpop.f32.mrf.mxu0
      %v2748 = vadd.f32 0.0, %v2747
      %v2749 = vpop.f32.mrf.mxu0
      %2750 = vmatprep.mubr.f32.mxu0 0.0
      %2751 = vmatmul.mubr.f32.gmra.mxu0 %v2353
      %v2752 = vpop.f32.mrf.mxu0
      %v2753 = vadd.f32 0.0, %v2752
      %v2754 = vpop.f32.mrf.mxu0
      %2755 = vmatprep.mubr.f32.mxu0 0.0
      %2756 = vmatmul.mubr.f32.gmra.mxu0 %v2356
      %v2757 = vpop.f32.mrf.mxu0
      %v2758 = vadd.f32 0.0, %v2757
      %v2759 = vpop.f32.mrf.mxu0
      %2760 = vmatprep.mubr.f32.mxu0 0.0
      %2761 = vmatmul.mubr.f32.gmra.mxu0 %v2359
      %v2762 = vpop.f32.mrf.mxu0
      %v2763 = vadd.f32 0.0, %v2762
      %v2764 = vpop.f32.mrf.mxu0
      %2765 = vmatprep.mubr.f32.mxu0 0.0
      %2766 = vmatmul.mubr.f32.gmra.mxu0 %v2362
      %v2767 = vpop.f32.mrf.mxu0
      %v2768 = vadd.f32 0.0, %v2767
      %v2769 = vpop.f32.mrf.mxu0
      %2770 = vmatprep.mubr.f32.mxu0 0.0
      %2771 = vmatmul.mubr.f32.gmra.mxu0 %v2365
      %v2772 = vpop.f32.mrf.mxu0
      %v2773 = vadd.f32 0.0, %v2772
      %v2774 = vpop.f32.mrf.mxu0
      %2775 = vmatprep.mubr.f32.mxu0 0.0
      %2776 = vmatmul.mubr.f32.gmra.mxu0 %v2368
      %v2777 = vpop.f32.mrf.mxu0
      %v2778 = vadd.f32 0.0, %v2777
      %v2779 = vpop.f32.mrf.mxu0
      %2780 = vmatprep.mubr.f32.mxu0 0.0
      %2781 = vmatmul.mubr.f32.gmra.mxu0 %v2371
      %v2782 = vpop.f32.mrf.mxu0
      %v2783 = vadd.f32 0.0, %v2782
      %v2784 = vpop.f32.mrf.mxu0
      %2785 = vmatprep.mubr.f32.mxu0 0.0
      %2786 = vmatmul.mubr.f32.gmra.mxu0 %v2374
      %v2787 = vpop.f32.mrf.mxu0
      %v2788 = vadd.f32 0.0, %v2787
      %v2789 = vpop.f32.mrf.mxu0
      %2790 = vmatprep.mubr.f32.mxu0 0.0
      %2791 = vmatmul.mubr.f32.gmra.mxu0 %v2377
      %v2792 = vpop.f32.mrf.mxu0
      %v2793 = vadd.f32 0.0, %v2792
      %v2794 = vpop.f32.mrf.mxu0
      %2795 = vmatprep.mubr.f32.mxu0 0.0
      %2796 = vmatmul.mubr.f32.gmra.mxu0 %v2380
      %v2797 = vpop.f32.mrf.mxu0
      %v2798 = vadd.f32 0.0, %v2797
      %v2799 = vpop.f32.mrf.mxu0
      %2800 = vmatprep.mubr.f32.mxu0 0.0
      %2801 = vmatmul.mubr.f32.gmra.mxu0 %v2383
      %v2802 = vpop.f32.mrf.mxu0
      %v2803 = vadd.f32 0.0, %v2802
      %v2804 = vpop.f32.mrf.mxu0
      %2805 = vmatprep.mubr.f32.mxu0 0.0
      %2806 = vmatmul.mubr.f32.gmra.mxu0 %v2386
      %v2807 = vpop.f32.mrf.mxu0
      %v2808 = vadd.f32 0.0, %v2807
      %v2809 = vpop.f32.mrf.mxu0
      %2810 = vmatprep.mubr.f32.mxu0 0.0
      %2811 = vmatmul.mubr.f32.gmra.mxu0 %v2389
      %v2812 = vpop.f32.mrf.mxu0
      %v2813 = vadd.f32 0.0, %v2812
      %v2814 = vpop.f32.mrf.mxu0
      %2815 = vmatprep.mubr.f32.mxu0 0.0
      %2816 = vmatmul.mubr.f32.gmra.mxu0 %v2392
      %v2817 = vpop.f32.mrf.mxu0
      %v2818 = vadd.f32 0.0, %v2817
      %v2819 = vpop.f32.mrf.mxu0
      %2820 = vmatprep.mubr.f32.mxu0 0.0
      %2821 = vmatmul.mubr.f32.gmra.mxu0 %v2395
      %v2822 = vpop.f32.mrf.mxu0
      %v2823 = vadd.f32 0.0, %v2822
      %v2824 = vpop.f32.mrf.mxu0
      %2825 = vmatprep.mubr.f32.mxu0 0.0
      %2826 = vmatmul.mubr.f32.gmra.mxu0 %v2398
      %v2827 = vpop.f32.mrf.mxu0
      %v2828 = vadd.f32 0.0, %v2827
      %v2829 = vpop.f32.mrf.mxu0
      %2830 = vmatprep.mubr.f32.mxu0 0.0
      %2831 = vmatmul.mubr.f32.gmra.mxu0 %v2401
      %v2832 = vpop.f32.mrf.mxu0
      %v2833 = vadd.f32 0.0, %v2832
      %v2834 = vpop.f32.mrf.mxu0
      %2835 = vmatprep.mubr.f32.mxu0 0.0
      %2836 = vmatmul.mubr.f32.gmra.mxu0 %v2404
      %v2837 = vpop.f32.mrf.mxu0
      %v2838 = vadd.f32 0.0, %v2837
      %v2839 = vpop.f32.mrf.mxu0
      %2840 = vmatprep.mubr.f32.mxu0 0.0
      %2841 = vmatmul.mubr.f32.gmra.mxu0 %v2407
      %v2842 = vpop.f32.mrf.mxu0
      %v2843 = vadd.f32 0.0, %v2842
      %v2844 = vpop.f32.mrf.mxu0
      %2845 = vmatprep.mubr.f32.mxu0 0.0
      %2846 = vmatmul.mubr.f32.gmra.mxu0 %v2410
      %v2847 = vpop.f32.mrf.mxu0
      %v2848 = vadd.f32 0.0, %v2847
      %v2849 = vpop.f32.mrf.mxu0
      %2850 = vmatprep.mubr.f32.mxu0 0.0
      %2851 = vmatmul.mubr.f32.gmra.mxu0 %v2413
      %v2852 = vpop.f32.mrf.mxu0
      %v2853 = vadd.f32 0.0, %v2852
      %v2854 = vpop.f32.mrf.mxu0
      %2855 = vmatprep.mubr.f32.mxu0 0.0
      %2856 = vmatmul.mubr.f32.gmra.mxu0 %v2416
      %v2857 = vpop.f32.mrf.mxu0
      %v2858 = vadd.f32 0.0, %v2857
      %v2859 = vpop.f32.mrf.mxu0
      %2860 = vmatprep.mubr.f32.mxu0 0.0
      %2861 = vmatmul.mubr.f32.gmra.mxu0 %v2419
      %v2862 = vpop.f32.mrf.mxu0
      %v2863 = vadd.f32 0.0, %v2862
      %v2864 = vpop.f32.mrf.mxu0
      %2865 = vmatprep.mubr.f32.mxu0 0.0
      %2866 = vmatmul.mubr.f32.gmra.mxu0 %v2422
      %v2867 = vpop.f32.mrf.mxu0
      %v2868 = vadd.f32 0.0, %v2867
      %v2869 = vpop.f32.mrf.mxu0
      %2870 = vmatprep.mubr.f32.mxu0 0.0
      %2871 = vmatmul.mubr.f32.gmra.mxu0 %v2425
      %v2872 = vpop.f32.mrf.mxu0
      %v2873 = vadd.f32 0.0, %v2872
      %v2874 = vpop.f32.mrf.mxu0
      %2875 = vmatprep.mubr.f32.mxu0 0.0
      %2876 = vmatmul.mubr.f32.gmra.mxu0 %v2428
      %v2877 = vpop.f32.mrf.mxu0
      %v2878 = vadd.f32 0.0, %v2877
      %v2879 = vpop.f32.mrf.mxu0
      %2880 = vdwg.mxu0
      %v2881 = vld [vmem:[%s9] sm:$0xff]
      %2882 = vmatprep.subr.mxu0 0.0
      %2883 = vmatpush1.msra.mxu0 0.0
      %2884 = vmatprep.subr.mxu0 0.0
      %2885 = vmatpush1.msra.mxu0 0.0
      %2886 = vmatprep.subr.mxu0 0.0
      %2887 = vmatpush1.msra.mxu0 0.0
      %2888 = vmatprep.subr.mxu0 0.0
      %2889 = vmatpush1.msra.mxu0 0.0
      %2890 = vmatprep.subr.mxu0 0.0
      %2891 = vmatpush1.msra.mxu0 0.0
      %2892 = vmatprep.subr.mxu0 0.0
      %2893 = vmatpush1.msra.mxu0 0.0
      %2894 = vmatprep.subr.mxu0 0.0
      %2895 = vmatpush1.msra.mxu0 0.0
      %2896 = vmatprep.subr.mxu0 0.0
      %2897 = vmatpush1.msra.mxu0 0.0
      %2898 = vmatprep.subr.mxu0 0.0
      %2899 = vmatpush1.msra.mxu0 0.0
      %2900 = vmatprep.subr.mxu0 0.0
      %2901 = vmatpush1.msra.mxu0 0.0
      %2902 = vmatprep.subr.mxu0 0.0
      %2903 = vmatpush1.msra.mxu0 0.0
      %2904 = vmatprep.subr.mxu0 0.0
      %2905 = vmatpush1.msra.mxu0 0.0
      %2906 = vmatprep.subr.mxu0 0.0
      %2907 = vmatpush1.msra.mxu0 0.0
      %2908 = vmatprep.subr.mxu0 0.0
      %2909 = vmatpush1.msra.mxu0 0.0
      %2910 = vmatprep.subr.mxu0 0.0
      %2911 = vmatpush1.msra.mxu0 0.0
      %2912 = vmatprep.subr.mxu0 0.0
      %2913 = vmatpush1.msra.mxu0 %v2881
      %2914 = vmatprep.subr.mxu0 0.0
      %2915 = vmatpush2.msra.mxu0 0.0
      %2916 = vmatprep.subr.mxu0 0.0
      %2917 = vmatpush2.msra.mxu0 0.0
      %2918 = vmatprep.subr.mxu0 0.0
      %2919 = vmatpush2.msra.mxu0 0.0
      %2920 = vmatprep.subr.mxu0 0.0
      %2921 = vmatpush2.msra.mxu0 0.0
      %2922 = vmatprep.subr.mxu0 0.0
      %2923 = vmatpush2.msra.mxu0 0.0
      %2924 = vmatprep.subr.mxu0 0.0
      %2925 = vmatpush2.msra.mxu0 0.0
      %2926 = vmatprep.subr.mxu0 0.0
      %2927 = vmatpush2.msra.mxu0 0.0
      %2928 = vmatprep.subr.mxu0 0.0
      %2929 = vmatpush2.msra.mxu0 0.0
      %2930 = vmatprep.subr.mxu0 0.0
      %2931 = vmatpush2.msra.mxu0 0.0
      %2932 = vmatprep.subr.mxu0 0.0
      %2933 = vmatpush2.msra.mxu0 0.0
      %2934 = vmatprep.subr.mxu0 0.0
      %2935 = vmatpush2.msra.mxu0 0.0
      %2936 = vmatprep.subr.mxu0 0.0
      %2937 = vmatpush2.msra.mxu0 0.0
      %2938 = vmatprep.subr.mxu0 0.0
      %2939 = vmatpush2.msra.mxu0 0.0
      %2940 = vmatprep.subr.mxu0 0.0
      %2941 = vmatpush2.msra.mxu0 0.0
      %2942 = vmatprep.subr.mxu0 0.0
      %2943 = vmatpush2.msra.mxu0 0.0
      %2944 = vmatprep.subr.mxu0 0.0
      %2945 = vmatpush2.msra.mxu0 0.0
      %2946 = vmatprep.mubr.f32.mxu0 0.0
      %2947 = vmatmul.mubr.f32.gmra.mxu0 %v2335
      %v2948 = vpop.f32.mrf.mxu0
      %v2949 = vadd.f32 0.0, %v2948
      %v2950 = vpop.f32.mrf.mxu0
      %2951 = vmatprep.mubr.f32.mxu0 0.0
      %2952 = vmatmul.mubr.f32.gmra.mxu0 %v2338
      %v2953 = vpop.f32.mrf.mxu0
      %v2954 = vadd.f32 0.0, %v2953
      %v2955 = vpop.f32.mrf.mxu0
      %2956 = vmatprep.mubr.f32.mxu0 0.0
      %2957 = vmatmul.mubr.f32.gmra.mxu0 %v2341
      %v2958 = vpop.f32.mrf.mxu0
      %v2959 = vadd.f32 0.0, %v2958
      %v2960 = vpop.f32.mrf.mxu0
      %2961 = vmatprep.mubr.f32.mxu0 0.0
      %2962 = vmatmul.mubr.f32.gmra.mxu0 %v2344
      %v2963 = vpop.f32.mrf.mxu0
      %v2964 = vadd.f32 0.0, %v2963
      %v2965 = vpop.f32.mrf.mxu0
      %2966 = vmatprep.mubr.f32.mxu0 0.0
      %2967 = vmatmul.mubr.f32.gmra.mxu0 %v2347
      %v2968 = vpop.f32.mrf.mxu0
      %v2969 = vadd.f32 0.0, %v2968
      %v2970 = vpop.f32.mrf.mxu0
      %2971 = vmatprep.mubr.f32.mxu0 0.0
      %2972 = vmatmul.mubr.f32.gmra.mxu0 %v2350
      %v2973 = vpop.f32.mrf.mxu0
      %v2974 = vadd.f32 0.0, %v2973
      %v2975 = vpop.f32.mrf.mxu0
      %2976 = vmatprep.mubr.f32.mxu0 0.0
      %2977 = vmatmul.mubr.f32.gmra.mxu0 %v2353
      %v2978 = vpop.f32.mrf.mxu0
      %v2979 = vadd.f32 0.0, %v2978
      %v2980 = vpop.f32.mrf.mxu0
      %2981 = vmatprep.mubr.f32.mxu0 0.0
      %2982 = vmatmul.mubr.f32.gmra.mxu0 %v2356
      %v2983 = vpop.f32.mrf.mxu0
      %v2984 = vadd.f32 0.0, %v2983
      %v2985 = vpop.f32.mrf.mxu0
      %2986 = vmatprep.mubr.f32.mxu0 0.0
      %2987 = vmatmul.mubr.f32.gmra.mxu0 %v2359
      %v2988 = vpop.f32.mrf.mxu0
      %v2989 = vadd.f32 0.0, %v2988
      %v2990 = vpop.f32.mrf.mxu0
      %2991 = vmatprep.mubr.f32.mxu0 0.0
      %2992 = vmatmul.mubr.f32.gmra.mxu0 %v2362
      %v2993 = vpop.f32.mrf.mxu0
      %v2994 = vadd.f32 0.0, %v2993
      %v2995 = vpop.f32.mrf.mxu0
      %2996 = vmatprep.mubr.f32.mxu0 0.0
      %2997 = vmatmul.mubr.f32.gmra.mxu0 %v2365
      %v2998 = vpop.f32.mrf.mxu0
      %v2999 = vadd.f32 0.0, %v2998
      %v3000 = vpop.f32.mrf.mxu0
      %3001 = vmatprep.mubr.f32.mxu0 0.0
      %3002 = vmatmul.mubr.f32.gmra.mxu0 %v2368
      %v3003 = vpop.f32.mrf.mxu0
      %v3004 = vadd.f32 0.0, %v3003
      %v3005 = vpop.f32.mrf.mxu0
      %3006 = vmatprep.mubr.f32.mxu0 0.0
      %3007 = vmatmul.mubr.f32.gmra.mxu0 %v2371
      %v3008 = vpop.f32.mrf.mxu0
      %v3009 = vadd.f32 0.0, %v3008
      %v3010 = vpop.f32.mrf.mxu0
      %3011 = vmatprep.mubr.f32.mxu0 0.0
      %3012 = vmatmul.mubr.f32.gmra.mxu0 %v2374
      %v3013 = vpop.f32.mrf.mxu0
      %v3014 = vadd.f32 0.0, %v3013
      %v3015 = vpop.f32.mrf.mxu0
      %3016 = vmatprep.mubr.f32.mxu0 0.0
      %3017 = vmatmul.mubr.f32.gmra.mxu0 %v2377
      %v3018 = vpop.f32.mrf.mxu0
      %v3019 = vadd.f32 0.0, %v3018
      %v3020 = vpop.f32.mrf.mxu0
      %3021 = vmatprep.mubr.f32.mxu0 0.0
      %3022 = vmatmul.mubr.f32.gmra.mxu0 %v2380
      %v3023 = vpop.f32.mrf.mxu0
      %v3024 = vadd.f32 0.0, %v3023
      %v3025 = vpop.f32.mrf.mxu0
      %3026 = vmatprep.mubr.f32.mxu0 0.0
      %3027 = vmatmul.mubr.f32.gmra.mxu0 %v2383
      %v3028 = vpop.f32.mrf.mxu0
      %v3029 = vadd.f32 0.0, %v3028
      %v3030 = vpop.f32.mrf.mxu0
      %3031 = vmatprep.mubr.f32.mxu0 0.0
      %3032 = vmatmul.mubr.f32.gmra.mxu0 %v2386
      %v3033 = vpop.f32.mrf.mxu0
      %v3034 = vadd.f32 0.0, %v3033
      %v3035 = vpop.f32.mrf.mxu0
      %3036 = vmatprep.mubr.f32.mxu0 0.0
      %3037 = vmatmul.mubr.f32.gmra.mxu0 %v2389
      %v3038 = vpop.f32.mrf.mxu0
      %v3039 = vadd.f32 0.0, %v3038
      %v3040 = vpop.f32.mrf.mxu0
      %3041 = vmatprep.mubr.f32.mxu0 0.0
      %3042 = vmatmul.mubr.f32.gmra.mxu0 %v2392
      %v3043 = vpop.f32.mrf.mxu0
      %v3044 = vadd.f32 0.0, %v3043
      %v3045 = vpop.f32.mrf.mxu0
      %3046 = vmatprep.mubr.f32.mxu0 0.0
      %3047 = vmatmul.mubr.f32.gmra.mxu0 %v2395
      %v3048 = vpop.f32.mrf.mxu0
      %v3049 = vadd.f32 0.0, %v3048
      %v3050 = vpop.f32.mrf.mxu0
      %3051 = vmatprep.mubr.f32.mxu0 0.0
      %3052 = vmatmul.mubr.f32.gmra.mxu0 %v2398
      %v3053 = vpop.f32.mrf.mxu0
      %v3054 = vadd.f32 0.0, %v3053
      %v3055 = vpop.f32.mrf.mxu0
      %3056 = vmatprep.mubr.f32.mxu0 0.0
      %3057 = vmatmul.mubr.f32.gmra.mxu0 %v2401
      %v3058 = vpop.f32.mrf.mxu0
      %v3059 = vadd.f32 0.0, %v3058
      %v3060 = vpop.f32.mrf.mxu0
      %3061 = vmatprep.mubr.f32.mxu0 0.0
      %3062 = vmatmul.mubr.f32.gmra.mxu0 %v2404
      %v3063 = vpop.f32.mrf.mxu0
      %v3064 = vadd.f32 0.0, %v3063
      %v3065 = vpop.f32.mrf.mxu0
      %3066 = vmatprep.mubr.f32.mxu0 0.0
      %3067 = vmatmul.mubr.f32.gmra.mxu0 %v2407
      %v3068 = vpop.f32.mrf.mxu0
      %v3069 = vadd.f32 0.0, %v3068
      %v3070 = vpop.f32.mrf.mxu0
      %3071 = vmatprep.mubr.f32.mxu0 0.0
      %3072 = vmatmul.mubr.f32.gmra.mxu0 %v2410
      %v3073 = vpop.f32.mrf.mxu0
      %v3074 = vadd.f32 0.0, %v3073
      %v3075 = vpop.f32.mrf.mxu0
      %3076 = vmatprep.mubr.f32.mxu0 0.0
      %3077 = vmatmul.mubr.f32.gmra.mxu0 %v2413
      %v3078 = vpop.f32.mrf.mxu0
      %v3079 = vadd.f32 0.0, %v3078
      %v3080 = vpop.f32.mrf.mxu0
      %3081 = vmatprep.mubr.f32.mxu0 0.0
      %3082 = vmatmul.mubr.f32.gmra.mxu0 %v2416
      %v3083 = vpop.f32.mrf.mxu0
      %v3084 = vadd.f32 0.0, %v3083
      %v3085 = vpop.f32.mrf.mxu0
      %3086 = vmatprep.mubr.f32.mxu0 0.0
      %3087 = vmatmul.mubr.f32.gmra.mxu0 %v2419
      %v3088 = vpop.f32.mrf.mxu0
      %v3089 = vadd.f32 0.0, %v3088
      %v3090 = vpop.f32.mrf.mxu0
      %3091 = vmatprep.mubr.f32.mxu0 0.0
      %3092 = vmatmul.mubr.f32.gmra.mxu0 %v2422
      %v3093 = vpop.f32.mrf.mxu0
      %v3094 = vadd.f32 0.0, %v3093
      %v3095 = vpop.f32.mrf.mxu0
      %3096 = vmatprep.mubr.f32.mxu0 0.0
      %3097 = vmatmul.mubr.f32.gmra.mxu0 %v2425
      %v3098 = vpop.f32.mrf.mxu0
      %v3099 = vadd.f32 0.0, %v3098
      %v3100 = vpop.f32.mrf.mxu0
      %3101 = vmatprep.mubr.f32.mxu0 0.0
      %3102 = vmatmul.mubr.f32.gmra.mxu0 %v2428
      %v3103 = vpop.f32.mrf.mxu0
      %v3104 = vadd.f32 0.0, %v3103
      %v3105 = vpop.f32.mrf.mxu0
      %3106 = vdwg.mxu0
      %v3107 = vld [vmem:[%s10] sm:$0x1]
      %v3108 = vld [vmem:[%s11] sm:$0x1]
      %v3110 = vlaneseq
      %v3111 = vshrl.u32 %v3110, 7
      %v3112 = vsub.s32 0, %v3111
      %v3113 = vrot.slane %v3108, %v3112
      %vm3115 = vcmask 7168
      %v3117 = vsel %vm3115, %v2497, 0
      %v3120 = vsel %vm3115, %v2502, 0
      %v3123 = vsel %vm3115, %v2507, 0
      %v3126 = vsel %vm3115, %v2512, 0
      %v3129 = vsel %vm3115, %v2517, 0
      %v3132 = vsel %vm3115, %v2522, 0
      %v3135 = vsel %vm3115, %v2527, 0
      %v3138 = vsel %vm3115, %v2532, 0
      %v3141 = vsel %vm3115, %v2537, 0
      %v3144 = vsel %vm3115, %v2542, 0
      %v3147 = vsel %vm3115, %v2547, 0
      %v3150 = vsel %vm3115, %v2552, 0
      %v3153 = vsel %vm3115, %v2557, 0
      %v3156 = vsel %vm3115, %v2562, 0
      %v3159 = vsel %vm3115, %v2567, 0
      %v3162 = vsel %vm3115, %v2572, 0
      %v3165 = vsel %vm3115, %v2577, 0
      %v3168 = vsel %vm3115, %v2582, 0
      %v3171 = vsel %vm3115, %v2587, 0
      %v3174 = vsel %vm3115, %v2592, 0
      %v3177 = vsel %vm3115, %v2597, 0
      %v3180 = vsel %vm3115, %v2602, 0
      %v3183 = vsel %vm3115, %v2607, 0
      %v3186 = vsel %vm3115, %v2612, 0
      %v3189 = vsel %vm3115, %v2617, 0
      %v3192 = vsel %vm3115, %v2622, 0
      %v3195 = vsel %vm3115, %v2627, 0
      %v3198 = vsel %vm3115, %v2632, 0
      %v3201 = vsel %vm3115, %v2637, 0
      %v3204 = vsel %vm3115, %v2642, 0
      %v3207 = vsel %vm3115, %v2647, 0
      %v3210 = vsel %vm3115, %v2652, 0
      %vm3212 = vcmask 1040384
      %v3214 = vsel %vm3212, %v3107, 0
      %3216 = vmatprep.subr.mxu0 0.0
      %3217 = vmatpush1.msra.mxu0 0.0
      %3218 = vmatprep.subr.mxu0 0.0
      %3219 = vmatpush1.msra.mxu0 0.0
      %3220 = vmatprep.subr.mxu0 0.0
      %3221 = vmatpush1.msra.mxu0 0.0
      %3222 = vmatprep.subr.mxu0 0.0
      %3223 = vmatpush1.msra.mxu0 0.0
      %3224 = vmatprep.subr.mxu0 0.0
      %3225 = vmatpush1.msra.mxu0 0.0
      %3226 = vmatprep.subr.mxu0 0.0
      %3227 = vmatpush1.msra.mxu0 0.0
      %3228 = vmatprep.subr.mxu0 0.0
      %3229 = vmatpush1.msra.mxu0 0.0
      %3230 = vmatprep.subr.mxu0 0.0
      %3231 = vmatpush1.msra.mxu0 0.0
      %3232 = vmatprep.subr.mxu0 0.0
      %3233 = vmatpush1.msra.mxu0 0.0
      %3234 = vmatprep.subr.mxu0 0.0
      %3235 = vmatpush1.msra.mxu0 0.0
      %3236 = vmatprep.subr.mxu0 0.0
      %3237 = vmatpush1.msra.mxu0 0.0
      %3238 = vmatprep.subr.mxu0 0.0
      %3239 = vmatpush1.msra.mxu0 0.0
      %3240 = vmatprep.subr.mxu0 0.0
      %3241 = vmatpush1.msra.mxu0 0.0
      %3242 = vmatprep.subr.mxu0 0.0
      %3243 = vmatpush1.msra.mxu0 0.0
      %3244 = vmatprep.subr.mxu0 0.0
      %3245 = vmatpush1.msra.mxu0 0.0
      %3246 = vmatprep.subr.mxu0 0.0
      %3247 = vmatpush1.msra.mxu0 %v3214
      %3248 = vmatprep.subr.mxu0 0.0
      %3249 = vmatpush2.msra.mxu0 0.0
      %3250 = vmatprep.subr.mxu0 0.0
      %3251 = vmatpush2.msra.mxu0 0.0
      %3252 = vmatprep.subr.mxu0 0.0
      %3253 = vmatpush2.msra.mxu0 0.0
      %3254 = vmatprep.subr.mxu0 0.0
      %3255 = vmatpush2.msra.mxu0 0.0
      %3256 = vmatprep.subr.mxu0 0.0
      %3257 = vmatpush2.msra.mxu0 0.0
      %3258 = vmatprep.subr.mxu0 0.0
      %3259 = vmatpush2.msra.mxu0 0.0
      %3260 = vmatprep.subr.mxu0 0.0
      %3261 = vmatpush2.msra.mxu0 0.0
      %3262 = vmatprep.subr.mxu0 0.0
      %3263 = vmatpush2.msra.mxu0 0.0
      %3264 = vmatprep.subr.mxu0 0.0
      %3265 = vmatpush2.msra.mxu0 0.0
      %3266 = vmatprep.subr.mxu0 0.0
      %3267 = vmatpush2.msra.mxu0 0.0
      %3268 = vmatprep.subr.mxu0 0.0
      %3269 = vmatpush2.msra.mxu0 0.0
      %3270 = vmatprep.subr.mxu0 0.0
      %3271 = vmatpush2.msra.mxu0 0.0
      %3272 = vmatprep.subr.mxu0 0.0
      %3273 = vmatpush2.msra.mxu0 0.0
      %3274 = vmatprep.subr.mxu0 0.0
      %3275 = vmatpush2.msra.mxu0 0.0
      %3276 = vmatprep.subr.mxu0 0.0
      %3277 = vmatpush2.msra.mxu0 0.0
      %3278 = vmatprep.subr.mxu0 0.0
      %3279 = vmatpush2.msra.mxu0 0.0
      %3280 = vmatprep.mubr.f32.mxu0 0.0
      %3281 = vmatmul.mubr.f32.gmra.mxu0 %v3117
      %v3282 = vpop.f32.mrf.mxu0
      %v3283 = vadd.f32 %v3113, %v3282
      %v3284 = vpop.f32.mrf.mxu0
      %3285 = vmatprep.mubr.f32.mxu0 0.0
      %3286 = vmatmul.mubr.f32.gmra.mxu0 %v3120
      %v3287 = vpop.f32.mrf.mxu0
      %v3288 = vadd.f32 %v3113, %v3287
      %v3289 = vpop.f32.mrf.mxu0
      %3290 = vmatprep.mubr.f32.mxu0 0.0
      %3291 = vmatmul.mubr.f32.gmra.mxu0 %v3123
      %v3292 = vpop.f32.mrf.mxu0
      %v3293 = vadd.f32 %v3113, %v3292
      %v3294 = vpop.f32.mrf.mxu0
      %3295 = vmatprep.mubr.f32.mxu0 0.0
      %3296 = vmatmul.mubr.f32.gmra.mxu0 %v3126
      %v3297 = vpop.f32.mrf.mxu0
      %v3298 = vadd.f32 %v3113, %v3297
      %v3299 = vpop.f32.mrf.mxu0
      %3300 = vmatprep.mubr.f32.mxu0 0.0
      %3301 = vmatmul.mubr.f32.gmra.mxu0 %v3129
      %v3302 = vpop.f32.mrf.mxu0
      %v3303 = vadd.f32 %v3113, %v3302
      %v3304 = vpop.f32.mrf.mxu0
      %3305 = vmatprep.mubr.f32.mxu0 0.0
      %3306 = vmatmul.mubr.f32.gmra.mxu0 %v3132
      %v3307 = vpop.f32.mrf.mxu0
      %v3308 = vadd.f32 %v3113, %v3307
      %v3309 = vpop.f32.mrf.mxu0
      %3310 = vmatprep.mubr.f32.mxu0 0.0
      %3311 = vmatmul.mubr.f32.gmra.mxu0 %v3135
      %v3312 = vpop.f32.mrf.mxu0
      %v3313 = vadd.f32 %v3113, %v3312
      %v3314 = vpop.f32.mrf.mxu0
      %3315 = vmatprep.mubr.f32.mxu0 0.0
      %3316 = vmatmul.mubr.f32.gmra.mxu0 %v3138
      %v3317 = vpop.f32.mrf.mxu0
      %v3318 = vadd.f32 %v3113, %v3317
      %v3319 = vpop.f32.mrf.mxu0
      %3320 = vmatprep.mubr.f32.mxu0 0.0
      %3321 = vmatmul.mubr.f32.gmra.mxu0 %v3141
      %v3322 = vpop.f32.mrf.mxu0
      %v3323 = vadd.f32 %v3113, %v3322
      %v3324 = vpop.f32.mrf.mxu0
      %3325 = vmatprep.mubr.f32.mxu0 0.0
      %3326 = vmatmul.mubr.f32.gmra.mxu0 %v3144
      %v3327 = vpop.f32.mrf.mxu0
      %v3328 = vadd.f32 %v3113, %v3327
      %v3329 = vpop.f32.mrf.mxu0
      %3330 = vmatprep.mubr.f32.mxu0 0.0
      %3331 = vmatmul.mubr.f32.gmra.mxu0 %v3147
      %v3332 = vpop.f32.mrf.mxu0
      %v3333 = vadd.f32 %v3113, %v3332
      %v3334 = vpop.f32.mrf.mxu0
      %3335 = vmatprep.mubr.f32.mxu0 0.0
      %3336 = vmatmul.mubr.f32.gmra.mxu0 %v3150
      %v3337 = vpop.f32.mrf.mxu0
      %v3338 = vadd.f32 %v3113, %v3337
      %v3339 = vpop.f32.mrf.mxu0
      %3340 = vmatprep.mubr.f32.mxu0 0.0
      %3341 = vmatmul.mubr.f32.gmra.mxu0 %v3153
      %v3342 = vpop.f32.mrf.mxu0
      %v3343 = vadd.f32 %v3113, %v3342
      %v3344 = vpop.f32.mrf.mxu0
      %3345 = vmatprep.mubr.f32.mxu0 0.0
      %3346 = vmatmul.mubr.f32.gmra.mxu0 %v3156
      %v3347 = vpop.f32.mrf.mxu0
      %v3348 = vadd.f32 %v3113, %v3347
      %v3349 = vpop.f32.mrf.mxu0
      %3350 = vmatprep.mubr.f32.mxu0 0.0
      %3351 = vmatmul.mubr.f32.gmra.mxu0 %v3159
      %v3352 = vpop.f32.mrf.mxu0
      %v3353 = vadd.f32 %v3113, %v3352
      %v3354 = vpop.f32.mrf.mxu0
      %3355 = vmatprep.mubr.f32.mxu0 0.0
      %3356 = vmatmul.mubr.f32.gmra.mxu0 %v3162
      %v3357 = vpop.f32.mrf.mxu0
      %v3358 = vadd.f32 %v3113, %v3357
      %v3359 = vpop.f32.mrf.mxu0
      %3360 = vmatprep.mubr.f32.mxu0 0.0
      %3361 = vmatmul.mubr.f32.gmra.mxu0 %v3165
      %v3362 = vpop.f32.mrf.mxu0
      %v3363 = vadd.f32 %v3113, %v3362
      %v3364 = vpop.f32.mrf.mxu0
      %3365 = vmatprep.mubr.f32.mxu0 0.0
      %3366 = vmatmul.mubr.f32.gmra.mxu0 %v3168
      %v3367 = vpop.f32.mrf.mxu0
      %v3368 = vadd.f32 %v3113, %v3367
      %v3369 = vpop.f32.mrf.mxu0
      %3370 = vmatprep.mubr.f32.mxu0 0.0
      %3371 = vmatmul.mubr.f32.gmra.mxu0 %v3171
      %v3372 = vpop.f32.mrf.mxu0
      %v3373 = vadd.f32 %v3113, %v3372
      %v3374 = vpop.f32.mrf.mxu0
      %3375 = vmatprep.mubr.f32.mxu0 0.0
      %3376 = vmatmul.mubr.f32.gmra.mxu0 %v3174
      %v3377 = vpop.f32.mrf.mxu0
      %v3378 = vadd.f32 %v3113, %v3377
      %v3379 = vpop.f32.mrf.mxu0
      %3380 = vmatprep.mubr.f32.mxu0 0.0
      %3381 = vmatmul.mubr.f32.gmra.mxu0 %v3177
      %v3382 = vpop.f32.mrf.mxu0
      %v3383 = vadd.f32 %v3113, %v3382
      %v3384 = vpop.f32.mrf.mxu0
      %3385 = vmatprep.mubr.f32.mxu0 0.0
      %3386 = vmatmul.mubr.f32.gmra.mxu0 %v3180
      %v3387 = vpop.f32.mrf.mxu0
      %v3388 = vadd.f32 %v3113, %v3387
      %v3389 = vpop.f32.mrf.mxu0
      %3390 = vmatprep.mubr.f32.mxu0 0.0
      %3391 = vmatmul.mubr.f32.gmra.mxu0 %v3183
      %v3392 = vpop.f32.mrf.mxu0
      %v3393 = vadd.f32 %v3113, %v3392
      %v3394 = vpop.f32.mrf.mxu0
      %3395 = vmatprep.mubr.f32.mxu0 0.0
      %3396 = vmatmul.mubr.f32.gmra.mxu0 %v3186
      %v3397 = vpop.f32.mrf.mxu0
      %v3398 = vadd.f32 %v3113, %v3397
      %v3399 = vpop.f32.mrf.mxu0
      %3400 = vmatprep.mubr.f32.mxu0 0.0
      %3401 = vmatmul.mubr.f32.gmra.mxu0 %v3189
      %v3402 = vpop.f32.mrf.mxu0
      %v3403 = vadd.f32 %v3113, %v3402
      %v3404 = vpop.f32.mrf.mxu0
      %3405 = vmatprep.mubr.f32.mxu0 0.0
      %3406 = vmatmul.mubr.f32.gmra.mxu0 %v3192
      %v3407 = vpop.f32.mrf.mxu0
      %v3408 = vadd.f32 %v3113, %v3407
      %v3409 = vpop.f32.mrf.mxu0
      %3410 = vmatprep.mubr.f32.mxu0 0.0
      %3411 = vmatmul.mubr.f32.gmra.mxu0 %v3195
      %v3412 = vpop.f32.mrf.mxu0
      %v3413 = vadd.f32 %v3113, %v3412
      %v3414 = vpop.f32.mrf.mxu0
      %3415 = vmatprep.mubr.f32.mxu0 0.0
      %3416 = vmatmul.mubr.f32.gmra.mxu0 %v3198
      %v3417 = vpop.f32.mrf.mxu0
      %v3418 = vadd.f32 %v3113, %v3417
      %v3419 = vpop.f32.mrf.mxu0
      %3420 = vmatprep.mubr.f32.mxu0 0.0
      %3421 = vmatmul.mubr.f32.gmra.mxu0 %v3201
      %v3422 = vpop.f32.mrf.mxu0
      %v3423 = vadd.f32 %v3113, %v3422
      %v3424 = vpop.f32.mrf.mxu0
      %3425 = vmatprep.mubr.f32.mxu0 0.0
      %3426 = vmatmul.mubr.f32.gmra.mxu0 %v3204
      %v3427 = vpop.f32.mrf.mxu0
      %v3428 = vadd.f32 %v3113, %v3427
      %v3429 = vpop.f32.mrf.mxu0
      %3430 = vmatprep.mubr.f32.mxu0 0.0
      %3431 = vmatmul.mubr.f32.gmra.mxu0 %v3207
      %v3432 = vpop.f32.mrf.mxu0
      %v3433 = vadd.f32 %v3113, %v3432
      %v3434 = vpop.f32.mrf.mxu0
      %3435 = vmatprep.mubr.f32.mxu0 0.0
      %3436 = vmatmul.mubr.f32.gmra.mxu0 %v3210
      %v3437 = vpop.f32.mrf.mxu0
      %v3438 = vadd.f32 %v3113, %v3437
      %v3439 = vpop.f32.mrf.mxu0
      %3440 = vdwg.mxu0
      %vm3441 = vcmp.gt.f32.partialorder %v3283, 20.0
      %vm3442 = vcmp.gt.f32.partialorder %v3288, 20.0
      %vm3443 = vcmp.gt.f32.partialorder %v3293, 20.0
      %vm3444 = vcmp.gt.f32.partialorder %v3298, 20.0
      %vm3445 = vcmp.gt.f32.partialorder %v3303, 20.0
      %vm3446 = vcmp.gt.f32.partialorder %v3308, 20.0
      %vm3447 = vcmp.gt.f32.partialorder %v3313, 20.0
      %vm3448 = vcmp.gt.f32.partialorder %v3318, 20.0
      %vm3449 = vcmp.gt.f32.partialorder %v3323, 20.0
      %vm3450 = vcmp.gt.f32.partialorder %v3328, 20.0
      %vm3451 = vcmp.gt.f32.partialorder %v3333, 20.0
      %vm3452 = vcmp.gt.f32.partialorder %v3338, 20.0
      %vm3453 = vcmp.gt.f32.partialorder %v3343, 20.0
      %vm3454 = vcmp.gt.f32.partialorder %v3348, 20.0
      %vm3455 = vcmp.gt.f32.partialorder %v3353, 20.0
      %vm3456 = vcmp.gt.f32.partialorder %v3358, 20.0
      %vm3457 = vcmp.gt.f32.partialorder %v3363, 20.0
      %vm3458 = vcmp.gt.f32.partialorder %v3368, 20.0
      %vm3459 = vcmp.gt.f32.partialorder %v3373, 20.0
      %vm3460 = vcmp.gt.f32.partialorder %v3378, 20.0
      %vm3461 = vcmp.gt.f32.partialorder %v3383, 20.0
      %vm3462 = vcmp.gt.f32.partialorder %v3388, 20.0
      %vm3463 = vcmp.gt.f32.partialorder %v3393, 20.0
      %vm3464 = vcmp.gt.f32.partialorder %v3398, 20.0
      %vm3465 = vcmp.gt.f32.partialorder %v3403, 20.0
      %vm3466 = vcmp.gt.f32.partialorder %v3408, 20.0
      %vm3467 = vcmp.gt.f32.partialorder %v3413, 20.0
      %vm3468 = vcmp.gt.f32.partialorder %v3418, 20.0
      %vm3469 = vcmp.gt.f32.partialorder %v3423, 20.0
      %vm3470 = vcmp.gt.f32.partialorder %v3428, 20.0
      %vm3471 = vcmp.gt.f32.partialorder %v3433, 20.0
      %vm3472 = vcmp.gt.f32.partialorder %v3438, 20.0
      %v3473 = vmin.f32 %v3283, 20.0
      %v3474 = vmin.f32 %v3288, 20.0
      %v3475 = vmin.f32 %v3293, 20.0
      %v3476 = vmin.f32 %v3298, 20.0
      %v3477 = vmin.f32 %v3303, 20.0
      %v3478 = vmin.f32 %v3308, 20.0
      %v3479 = vmin.f32 %v3313, 20.0
      %v3480 = vmin.f32 %v3318, 20.0
      %v3481 = vmin.f32 %v3323, 20.0
      %v3482 = vmin.f32 %v3328, 20.0
      %v3483 = vmin.f32 %v3333, 20.0
      %v3484 = vmin.f32 %v3338, 20.0
      %v3485 = vmin.f32 %v3343, 20.0
      %v3486 = vmin.f32 %v3348, 20.0
      %v3487 = vmin.f32 %v3353, 20.0
      %v3488 = vmin.f32 %v3358, 20.0
      %v3489 = vmin.f32 %v3363, 20.0
      %v3490 = vmin.f32 %v3368, 20.0
      %v3491 = vmin.f32 %v3373, 20.0
      %v3492 = vmin.f32 %v3378, 20.0
      %v3493 = vmin.f32 %v3383, 20.0
      %v3494 = vmin.f32 %v3388, 20.0
      %v3495 = vmin.f32 %v3393, 20.0
      %v3496 = vmin.f32 %v3398, 20.0
      %v3497 = vmin.f32 %v3403, 20.0
      %v3498 = vmin.f32 %v3408, 20.0
      %v3499 = vmin.f32 %v3413, 20.0
      %v3500 = vmin.f32 %v3418, 20.0
      %v3501 = vmin.f32 %v3423, 20.0
      %v3502 = vmin.f32 %v3428, 20.0
      %v3503 = vmin.f32 %v3433, 20.0
      %v3504 = vmin.f32 %v3438, 20.0
      %v3505 = vmul.f32 %v3473, 1.442695
      %v3506 = vpow.pop %v3505
      %v3507 = vmul.f32 %v3474, 1.442695
      %v3508 = vpow.pop %v3507
      %v3509 = vmul.f32 %v3475, 1.442695
      %v3510 = vpow.pop %v3509
      %v3511 = vmul.f32 %v3476, 1.442695
      %v3512 = vpow.pop %v3511
      %v3513 = vmul.f32 %v3477, 1.442695
      %v3514 = vpow.pop %v3513
      %v3515 = vmul.f32 %v3478, 1.442695
      %v3516 = vpow.pop %v3515
      %v3517 = vmul.f32 %v3479, 1.442695
      %v3518 = vpow.pop %v3517
      %v3519 = vmul.f32 %v3480, 1.442695
      %v3520 = vpow.pop %v3519
      %v3521 = vmul.f32 %v3481, 1.442695
      %v3522 = vpow.pop %v3521
      %v3523 = vmul.f32 %v3482, 1.442695
      %v3524 = vpow.pop %v3523
      %v3525 = vmul.f32 %v3483, 1.442695
      %v3526 = vpow.pop %v3525
      %v3527 = vmul.f32 %v3484, 1.442695
      %v3528 = vpow.pop %v3527
      %v3529 = vmul.f32 %v3485, 1.442695
      %v3530 = vpow.pop %v3529
      %v3531 = vmul.f32 %v3486, 1.442695
      %v3532 = vpow.pop %v3531
      %v3533 = vmul.f32 %v3487, 1.442695
      %v3534 = vpow.pop %v3533
      %v3535 = vmul.f32 %v3488, 1.442695
      %v3536 = vpow.pop %v3535
      %v3537 = vmul.f32 %v3489, 1.442695
      %v3538 = vpow.pop %v3537
      %v3539 = vmul.f32 %v3490, 1.442695
      %v3540 = vpow.pop %v3539
      %v3541 = vmul.f32 %v3491, 1.442695
      %v3542 = vpow.pop %v3541
      %v3543 = vmul.f32 %v3492, 1.442695
      %v3544 = vpow.pop %v3543
      %v3545 = vmul.f32 %v3493, 1.442695
      %v3546 = vpow.pop %v3545
      %v3547 = vmul.f32 %v3494, 1.442695
      %v3548 = vpow.pop %v3547
      %v3549 = vmul.f32 %v3495, 1.442695
      %v3550 = vpow.pop %v3549
      %v3551 = vmul.f32 %v3496, 1.442695
      %v3552 = vpow.pop %v3551
      %v3553 = vmul.f32 %v3497, 1.442695
      %v3554 = vpow.pop %v3553
      %v3555 = vmul.f32 %v3498, 1.442695
      %v3556 = vpow.pop %v3555
      %v3557 = vmul.f32 %v3499, 1.442695
      %v3558 = vpow.pop %v3557
      %v3559 = vmul.f32 %v3500, 1.442695
      %v3560 = vpow.pop %v3559
      %v3561 = vmul.f32 %v3501, 1.442695
      %v3562 = vpow.pop %v3561
      %v3563 = vmul.f32 %v3502, 1.442695
      %v3564 = vpow.pop %v3563
      %v3565 = vmul.f32 %v3503, 1.442695
      %v3566 = vpow.pop %v3565
      %v3567 = vmul.f32 %v3504, 1.442695
      %v3568 = vpow.pop %v3567
      %v3569 = vadd.f32 %v3506, 1.0
      %v3570 = vadd.f32 %v3508, 1.0
      %v3571 = vadd.f32 %v3510, 1.0
      %v3572 = vadd.f32 %v3512, 1.0
      %v3573 = vadd.f32 %v3514, 1.0
      %v3574 = vadd.f32 %v3516, 1.0
      %v3575 = vadd.f32 %v3518, 1.0
      %v3576 = vadd.f32 %v3520, 1.0
      %v3577 = vadd.f32 %v3522, 1.0
      %v3578 = vadd.f32 %v3524, 1.0
      %v3579 = vadd.f32 %v3526, 1.0
      %v3580 = vadd.f32 %v3528, 1.0
      %v3581 = vadd.f32 %v3530, 1.0
      %v3582 = vadd.f32 %v3532, 1.0
      %v3583 = vadd.f32 %v3534, 1.0
      %v3584 = vadd.f32 %v3536, 1.0
      %v3585 = vadd.f32 %v3538, 1.0
      %v3586 = vadd.f32 %v3540, 1.0
      %v3587 = vadd.f32 %v3542, 1.0
      %v3588 = vadd.f32 %v3544, 1.0
      %v3589 = vadd.f32 %v3546, 1.0
      %v3590 = vadd.f32 %v3548, 1.0
      %v3591 = vadd.f32 %v3550, 1.0
      %v3592 = vadd.f32 %v3552, 1.0
      %v3593 = vadd.f32 %v3554, 1.0
      %v3594 = vadd.f32 %v3556, 1.0
      %v3595 = vadd.f32 %v3558, 1.0
      %v3596 = vadd.f32 %v3560, 1.0
      %v3597 = vadd.f32 %v3562, 1.0
      %v3598 = vadd.f32 %v3564, 1.0
      %v3599 = vadd.f32 %v3566, 1.0
      %v3600 = vadd.f32 %v3568, 1.0
      %v3601 = vlog2.pop %v3569
      %v3602 = vmul.f32 %v3601, 0.6931472
      %v3603 = vlog2.pop %v3570
      %v3604 = vmul.f32 %v3603, 0.6931472
      %v3605 = vlog2.pop %v3571
      %v3606 = vmul.f32 %v3605, 0.6931472
      %v3607 = vlog2.pop %v3572
      %v3608 = vmul.f32 %v3607, 0.6931472
      %v3609 = vlog2.pop %v3573
      %v3610 = vmul.f32 %v3609, 0.6931472
      %v3611 = vlog2.pop %v3574
      %v3612 = vmul.f32 %v3611, 0.6931472
      %v3613 = vlog2.pop %v3575
      %v3614 = vmul.f32 %v3613, 0.6931472
      %v3615 = vlog2.pop %v3576
      %v3616 = vmul.f32 %v3615, 0.6931472
      %v3617 = vlog2.pop %v3577
      %v3618 = vmul.f32 %v3617, 0.6931472
      %v3619 = vlog2.pop %v3578
      %v3620 = vmul.f32 %v3619, 0.6931472
      %v3621 = vlog2.pop %v3579
      %v3622 = vmul.f32 %v3621, 0.6931472
      %v3623 = vlog2.pop %v3580
      %v3624 = vmul.f32 %v3623, 0.6931472
      %v3625 = vlog2.pop %v3581
      %v3626 = vmul.f32 %v3625, 0.6931472
      %v3627 = vlog2.pop %v3582
      %v3628 = vmul.f32 %v3627, 0.6931472
      %v3629 = vlog2.pop %v3583
      %v3630 = vmul.f32 %v3629, 0.6931472
      %v3631 = vlog2.pop %v3584
      %v3632 = vmul.f32 %v3631, 0.6931472
      %v3633 = vlog2.pop %v3585
      %v3634 = vmul.f32 %v3633, 0.6931472
      %v3635 = vlog2.pop %v3586
      %v3636 = vmul.f32 %v3635, 0.6931472
      %v3637 = vlog2.pop %v3587
      %v3638 = vmul.f32 %v3637, 0.6931472
      %v3639 = vlog2.pop %v3588
      %v3640 = vmul.f32 %v3639, 0.6931472
      %v3641 = vlog2.pop %v3589
      %v3642 = vmul.f32 %v3641, 0.6931472
      %v3643 = vlog2.pop %v3590
      %v3644 = vmul.f32 %v3643, 0.6931472
      %v3645 = vlog2.pop %v3591
      %v3646 = vmul.f32 %v3645, 0.6931472
      %v3647 = vlog2.pop %v3592
      %v3648 = vmul.f32 %v3647, 0.6931472
      %v3649 = vlog2.pop %v3593
      %v3650 = vmul.f32 %v3649, 0.6931472
      %v3651 = vlog2.pop %v3594
      %v3652 = vmul.f32 %v3651, 0.6931472
      %v3653 = vlog2.pop %v3595
      %v3654 = vmul.f32 %v3653, 0.6931472
      %v3655 = vlog2.pop %v3596
      %v3656 = vmul.f32 %v3655, 0.6931472
      %v3657 = vlog2.pop %v3597
      %v3658 = vmul.f32 %v3657, 0.6931472
      %v3659 = vlog2.pop %v3598
      %v3660 = vmul.f32 %v3659, 0.6931472
      %v3661 = vlog2.pop %v3599
      %v3662 = vmul.f32 %v3661, 0.6931472
      %v3663 = vlog2.pop %v3600
      %v3664 = vmul.f32 %v3663, 0.6931472
      %v3665 = vsel %vm3441, %v3283, %v3602
      %v3666 = vsel %vm3442, %v3288, %v3604
      %v3667 = vsel %vm3443, %v3293, %v3606
      %v3668 = vsel %vm3444, %v3298, %v3608
      %v3669 = vsel %vm3445, %v3303, %v3610
      %v3670 = vsel %vm3446, %v3308, %v3612
      %v3671 = vsel %vm3447, %v3313, %v3614
      %v3672 = vsel %vm3448, %v3318, %v3616
      %v3673 = vsel %vm3449, %v3323, %v3618
      %v3674 = vsel %vm3450, %v3328, %v3620
      %v3675 = vsel %vm3451, %v3333, %v3622
      %v3676 = vsel %vm3452, %v3338, %v3624
      %v3677 = vsel %vm3453, %v3343, %v3626
      %v3678 = vsel %vm3454, %v3348, %v3628
      %v3679 = vsel %vm3455, %v3353, %v3630
      %v3680 = vsel %vm3456, %v3358, %v3632
      %v3681 = vsel %vm3457, %v3363, %v3634
      %v3682 = vsel %vm3458, %v3368, %v3636
      %v3683 = vsel %vm3459, %v3373, %v3638
      %v3684 = vsel %vm3460, %v3378, %v3640
      %v3685 = vsel %vm3461, %v3383, %v3642
      %v3686 = vsel %vm3462, %v3388, %v3644
      %v3687 = vsel %vm3463, %v3393, %v3646
      %v3688 = vsel %vm3464, %v3398, %v3648
      %v3689 = vsel %vm3465, %v3403, %v3650
      %v3690 = vsel %vm3466, %v3408, %v3652
      %v3691 = vsel %vm3467, %v3413, %v3654
      %v3692 = vsel %vm3468, %v3418, %v3656
      %v3693 = vsel %vm3469, %v3423, %v3658
      %v3694 = vsel %vm3470, %v3428, %v3660
      %v3695 = vsel %vm3471, %v3433, %v3662
      %v3696 = vsel %vm3472, %v3438, %v3664
      %v3697 = vld [vmem:[%s12] sm:$0x1]
      %v3698 = vmul.f32 %v3697, 1.442695
      %v3699 = vpow.pop %v3698
      %v3700 = vsub.f32 0.0, %v3699
      %3733 = vrot.lane.b32.xlu0 %v3665, 8
      %v3734 = vpop.permute.xlu0 %3733
      %3735 = vrot.lane.b32.xlu0 %v3666, 8
      %v3736 = vpop.permute.xlu0 %3735
      %3737 = vrot.lane.b32.xlu0 %v3667, 8
      %v3738 = vpop.permute.xlu0 %3737
      %3739 = vrot.lane.b32.xlu0 %v3668, 8
      %v3740 = vpop.permute.xlu0 %3739
      %3741 = vrot.lane.b32.xlu0 %v3669, 8
      %v3742 = vpop.permute.xlu0 %3741
      %3743 = vrot.lane.b32.xlu0 %v3670, 8
      %v3744 = vpop.permute.xlu0 %3743
      %3745 = vrot.lane.b32.xlu0 %v3671, 8
      %v3746 = vpop.permute.xlu0 %3745
      %3747 = vrot.lane.b32.xlu0 %v3672, 8
      %v3748 = vpop.permute.xlu0 %3747
      %3749 = vrot.lane.b32.xlu0 %v3673, 8
      %v3750 = vpop.permute.xlu0 %3749
      %3751 = vrot.lane.b32.xlu0 %v3674, 8
      %v3752 = vpop.permute.xlu0 %3751
      %3753 = vrot.lane.b32.xlu0 %v3675, 8
      %v3754 = vpop.permute.xlu0 %3753
      %3755 = vrot.lane.b32.xlu0 %v3676, 8
      %v3756 = vpop.permute.xlu0 %3755
      %3757 = vrot.lane.b32.xlu0 %v3677, 8
      %v3758 = vpop.permute.xlu0 %3757
      %3759 = vrot.lane.b32.xlu0 %v3678, 8
      %v3760 = vpop.permute.xlu0 %3759
      %3761 = vrot.lane.b32.xlu0 %v3679, 8
      %v3762 = vpop.permute.xlu0 %3761
      %3763 = vrot.lane.b32.xlu0 %v3680, 8
      %v3764 = vpop.permute.xlu0 %3763
      %3765 = vrot.lane.b32.xlu0 %v3681, 8
      %v3766 = vpop.permute.xlu0 %3765
      %3767 = vrot.lane.b32.xlu0 %v3682, 8
      %v3768 = vpop.permute.xlu0 %3767
      %3769 = vrot.lane.b32.xlu0 %v3683, 8
      %v3770 = vpop.permute.xlu0 %3769
      %3771 = vrot.lane.b32.xlu0 %v3684, 8
      %v3772 = vpop.permute.xlu0 %3771
      %3773 = vrot.lane.b32.xlu0 %v3685, 8
      %v3774 = vpop.permute.xlu0 %3773
      %3775 = vrot.lane.b32.xlu0 %v3686, 8
      %v3776 = vpop.permute.xlu0 %3775
      %3777 = vrot.lane.b32.xlu0 %v3687, 8
      %v3778 = vpop.permute.xlu0 %3777
      %3779 = vrot.lane.b32.xlu0 %v3688, 8
      %v3780 = vpop.permute.xlu0 %3779
      %3781 = vrot.lane.b32.xlu0 %v3689, 8
      %v3782 = vpop.permute.xlu0 %3781
      %3783 = vrot.lane.b32.xlu0 %v3690, 8
      %v3784 = vpop.permute.xlu0 %3783
      %3785 = vrot.lane.b32.xlu0 %v3691, 8
      %v3786 = vpop.permute.xlu0 %3785
      %3787 = vrot.lane.b32.xlu0 %v3692, 8
      %v3788 = vpop.permute.xlu0 %3787
      %3789 = vrot.lane.b32.xlu0 %v3693, 8
      %v3790 = vpop.permute.xlu0 %3789
      %3791 = vrot.lane.b32.xlu0 %v3694, 8
      %v3792 = vpop.permute.xlu0 %3791
      %3793 = vrot.lane.b32.xlu0 %v3695, 8
      %v3794 = vpop.permute.xlu0 %3793
      %3795 = vrot.lane.b32.xlu0 %v3696, 8
      %v3796 = vpop.permute.xlu0 %3795
      %3829 = vrot.lane.b32.xlu0 %v3665, 16
      %v3830 = vpop.permute.xlu0 %3829
      %3831 = vrot.lane.b32.xlu0 %v3666, 16
      %v3832 = vpop.permute.xlu0 %3831
      %3833 = vrot.lane.b32.xlu0 %v3667, 16
      %v3834 = vpop.permute.xlu0 %3833
      %3835 = vrot.lane.b32.xlu0 %v3668, 16
      %v3836 = vpop.permute.xlu0 %3835
      %3837 = vrot.lane.b32.xlu0 %v3669, 16
      %v3838 = vpop.permute.xlu0 %3837
      %3839 = vrot.lane.b32.xlu0 %v3670, 16
      %v3840 = vpop.permute.xlu0 %3839
      %3841 = vrot.lane.b32.xlu0 %v3671, 16
      %v3842 = vpop.permute.xlu0 %3841
      %3843 = vrot.lane.b32.xlu0 %v3672, 16
      %v3844 = vpop.permute.xlu0 %3843
      %3845 = vrot.lane.b32.xlu0 %v3673, 16
      %v3846 = vpop.permute.xlu0 %3845
      %3847 = vrot.lane.b32.xlu0 %v3674, 16
      %v3848 = vpop.permute.xlu0 %3847
      %3849 = vrot.lane.b32.xlu0 %v3675, 16
      %v3850 = vpop.permute.xlu0 %3849
      %3851 = vrot.lane.b32.xlu0 %v3676, 16
      %v3852 = vpop.permute.xlu0 %3851
      %3853 = vrot.lane.b32.xlu0 %v3677, 16
      %v3854 = vpop.permute.xlu0 %3853
      %3855 = vrot.lane.b32.xlu0 %v3678, 16
      %v3856 = vpop.permute.xlu0 %3855
      %3857 = vrot.lane.b32.xlu0 %v3679, 16
      %v3858 = vpop.permute.xlu0 %3857
      %3859 = vrot.lane.b32.xlu0 %v3680, 16
      %v3860 = vpop.permute.xlu0 %3859
      %3861 = vrot.lane.b32.xlu0 %v3681, 16
      %v3862 = vpop.permute.xlu0 %3861
      %3863 = vrot.lane.b32.xlu0 %v3682, 16
      %v3864 = vpop.permute.xlu0 %3863
      %3865 = vrot.lane.b32.xlu0 %v3683, 16
      %v3866 = vpop.permute.xlu0 %3865
      %3867 = vrot.lane.b32.xlu0 %v3684, 16
      %v3868 = vpop.permute.xlu0 %3867
      %3869 = vrot.lane.b32.xlu0 %v3685, 16
      %v3870 = vpop.permute.xlu0 %3869
      %3871 = vrot.lane.b32.xlu0 %v3686, 16
      %v3872 = vpop.permute.xlu0 %3871
      %3873 = vrot.lane.b32.xlu0 %v3687, 16
      %v3874 = vpop.permute.xlu0 %3873
      %3875 = vrot.lane.b32.xlu0 %v3688, 16
      %v3876 = vpop.permute.xlu0 %3875
      %3877 = vrot.lane.b32.xlu0 %v3689, 16
      %v3878 = vpop.permute.xlu0 %3877
      %3879 = vrot.lane.b32.xlu0 %v3690, 16
      %v3880 = vpop.permute.xlu0 %3879
      %3881 = vrot.lane.b32.xlu0 %v3691, 16
      %v3882 = vpop.permute.xlu0 %3881
      %3883 = vrot.lane.b32.xlu0 %v3692, 16
      %v3884 = vpop.permute.xlu0 %3883
      %3885 = vrot.lane.b32.xlu0 %v3693, 16
      %v3886 = vpop.permute.xlu0 %3885
      %3887 = vrot.lane.b32.xlu0 %v3694, 16
      %v3888 = vpop.permute.xlu0 %3887
      %3889 = vrot.lane.b32.xlu0 %v3695, 16
      %v3890 = vpop.permute.xlu0 %3889
      %3891 = vrot.lane.b32.xlu0 %v3696, 16
      %v3892 = vpop.permute.xlu0 %3891
      %3925 = vrot.lane.b32.xlu0 %v3665, 24
      %v3926 = vpop.permute.xlu0 %3925
      %3927 = vrot.lane.b32.xlu0 %v3666, 24
      %v3928 = vpop.permute.xlu0 %3927
      %3929 = vrot.lane.b32.xlu0 %v3667, 24
      %v3930 = vpop.permute.xlu0 %3929
      %3931 = vrot.lane.b32.xlu0 %v3668, 24
      %v3932 = vpop.permute.xlu0 %3931
      %3933 = vrot.lane.b32.xlu0 %v3669, 24
      %v3934 = vpop.permute.xlu0 %3933
      %3935 = vrot.lane.b32.xlu0 %v3670, 24
      %v3936 = vpop.permute.xlu0 %3935
      %3937 = vrot.lane.b32.xlu0 %v3671, 24
      %v3938 = vpop.permute.xlu0 %3937
      %3939 = vrot.lane.b32.xlu0 %v3672, 24
      %v3940 = vpop.permute.xlu0 %3939
      %3941 = vrot.lane.b32.xlu0 %v3673, 24
      %v3942 = vpop.permute.xlu0 %3941
      %3943 = vrot.lane.b32.xlu0 %v3674, 24
      %v3944 = vpop.permute.xlu0 %3943
      %3945 = vrot.lane.b32.xlu0 %v3675, 24
      %v3946 = vpop.permute.xlu0 %3945
      %3947 = vrot.lane.b32.xlu0 %v3676, 24
      %v3948 = vpop.permute.xlu0 %3947
      %3949 = vrot.lane.b32.xlu0 %v3677, 24
      %v3950 = vpop.permute.xlu0 %3949
      %3951 = vrot.lane.b32.xlu0 %v3678, 24
      %v3952 = vpop.permute.xlu0 %3951
      %3953 = vrot.lane.b32.xlu0 %v3679, 24
      %v3954 = vpop.permute.xlu0 %3953
      %3955 = vrot.lane.b32.xlu0 %v3680, 24
      %v3956 = vpop.permute.xlu0 %3955
      %3957 = vrot.lane.b32.xlu0 %v3681, 24
      %v3958 = vpop.permute.xlu0 %3957
      %3959 = vrot.lane.b32.xlu0 %v3682, 24
      %v3960 = vpop.permute.xlu0 %3959
      %3961 = vrot.lane.b32.xlu0 %v3683, 24
      %v3962 = vpop.permute.xlu0 %3961
      %3963 = vrot.lane.b32.xlu0 %v3684, 24
      %v3964 = vpop.permute.xlu0 %3963
      %3965 = vrot.lane.b32.xlu0 %v3685, 24
      %v3966 = vpop.permute.xlu0 %3965
      %3967 = vrot.lane.b32.xlu0 %v3686, 24
      %v3968 = vpop.permute.xlu0 %3967
      %3969 = vrot.lane.b32.xlu0 %v3687, 24
      %v3970 = vpop.permute.xlu0 %3969
      %3971 = vrot.lane.b32.xlu0 %v3688, 24
      %v3972 = vpop.permute.xlu0 %3971
      %3973 = vrot.lane.b32.xlu0 %v3689, 24
      %v3974 = vpop.permute.xlu0 %3973
      %3975 = vrot.lane.b32.xlu0 %v3690, 24
      %v3976 = vpop.permute.xlu0 %3975
      %3977 = vrot.lane.b32.xlu0 %v3691, 24
      %v3978 = vpop.permute.xlu0 %3977
      %3979 = vrot.lane.b32.xlu0 %v3692, 24
      %v3980 = vpop.permute.xlu0 %3979
      %3981 = vrot.lane.b32.xlu0 %v3693, 24
      %v3982 = vpop.permute.xlu0 %3981
      %3983 = vrot.lane.b32.xlu0 %v3694, 24
      %v3984 = vpop.permute.xlu0 %3983
      %3985 = vrot.lane.b32.xlu0 %v3695, 24
      %v3986 = vpop.permute.xlu0 %3985
      %3987 = vrot.lane.b32.xlu0 %v3696, 24
      %v3988 = vpop.permute.xlu0 %3987
      %4021 = vrot.lane.b32.xlu0 %v3665, 32
      %v4022 = vpop.permute.xlu0 %4021
      %4023 = vrot.lane.b32.xlu0 %v3666, 32
      %v4024 = vpop.permute.xlu0 %4023
      %4025 = vrot.lane.b32.xlu0 %v3667, 32
      %v4026 = vpop.permute.xlu0 %4025
      %4027 = vrot.lane.b32.xlu0 %v3668, 32
      %v4028 = vpop.permute.xlu0 %4027
      %4029 = vrot.lane.b32.xlu0 %v3669, 32
      %v4030 = vpop.permute.xlu0 %4029
      %4031 = vrot.lane.b32.xlu0 %v3670, 32
      %v4032 = vpop.permute.xlu0 %4031
      %4033 = vrot.lane.b32.xlu0 %v3671, 32
      %v4034 = vpop.permute.xlu0 %4033
      %4035 = vrot.lane.b32.xlu0 %v3672, 32
      %v4036 = vpop.permute.xlu0 %4035
      %4037 = vrot.lane.b32.xlu0 %v3673, 32
      %v4038 = vpop.permute.xlu0 %4037
      %4039 = vrot.lane.b32.xlu0 %v3674, 32
      %v4040 = vpop.permute.xlu0 %4039
      %4041 = vrot.lane.b32.xlu0 %v3675, 32
      %v4042 = vpop.permute.xlu0 %4041
      %4043 = vrot.lane.b32.xlu0 %v3676, 32
      %v4044 = vpop.permute.xlu0 %4043
      %4045 = vrot.lane.b32.xlu0 %v3677, 32
      %v4046 = vpop.permute.xlu0 %4045
      %4047 = vrot.lane.b32.xlu0 %v3678, 32
      %v4048 = vpop.permute.xlu0 %4047
      %4049 = vrot.lane.b32.xlu0 %v3679, 32
      %v4050 = vpop.permute.xlu0 %4049
      %4051 = vrot.lane.b32.xlu0 %v3680, 32
      %v4052 = vpop.permute.xlu0 %4051
      %4053 = vrot.lane.b32.xlu0 %v3681, 32
      %v4054 = vpop.permute.xlu0 %4053
      %4055 = vrot.lane.b32.xlu0 %v3682, 32
      %v4056 = vpop.permute.xlu0 %4055
      %4057 = vrot.lane.b32.xlu0 %v3683, 32
      %v4058 = vpop.permute.xlu0 %4057
      %4059 = vrot.lane.b32.xlu0 %v3684, 32
      %v4060 = vpop.permute.xlu0 %4059
      %4061 = vrot.lane.b32.xlu0 %v3685, 32
      %v4062 = vpop.permute.xlu0 %4061
      %4063 = vrot.lane.b32.xlu0 %v3686, 32
      %v4064 = vpop.permute.xlu0 %4063
      %4065 = vrot.lane.b32.xlu0 %v3687, 32
      %v4066 = vpop.permute.xlu0 %4065
      %4067 = vrot.lane.b32.xlu0 %v3688, 32
      %v4068 = vpop.permute.xlu0 %4067
      %4069 = vrot.lane.b32.xlu0 %v3689, 32
      %v4070 = vpop.permute.xlu0 %4069
      %4071 = vrot.lane.b32.xlu0 %v3690, 32
      %v4072 = vpop.permute.xlu0 %4071
      %4073 = vrot.lane.b32.xlu0 %v3691, 32
      %v4074 = vpop.permute.xlu0 %4073
      %4075 = vrot.lane.b32.xlu0 %v3692, 32
      %v4076 = vpop.permute.xlu0 %4075
      %4077 = vrot.lane.b32.xlu0 %v3693, 32
      %v4078 = vpop.permute.xlu0 %4077
      %4079 = vrot.lane.b32.xlu0 %v3694, 32
      %v4080 = vpop.permute.xlu0 %4079
      %4081 = vrot.lane.b32.xlu0 %v3695, 32
      %v4082 = vpop.permute.xlu0 %4081
      %4083 = vrot.lane.b32.xlu0 %v3696, 32
      %v4084 = vpop.permute.xlu0 %4083
      %4117 = vrot.lane.b32.xlu0 %v3665, 40
      %v4118 = vpop.permute.xlu0 %4117
      %4119 = vrot.lane.b32.xlu0 %v3666, 40
      %v4120 = vpop.permute.xlu0 %4119
      %4121 = vrot.lane.b32.xlu0 %v3667, 40
      %v4122 = vpop.permute.xlu0 %4121
      %4123 = vrot.lane.b32.xlu0 %v3668, 40
      %v4124 = vpop.permute.xlu0 %4123
      %4125 = vrot.lane.b32.xlu0 %v3669, 40
      %v4126 = vpop.permute.xlu0 %4125
      %4127 = vrot.lane.b32.xlu0 %v3670, 40
      %v4128 = vpop.permute.xlu0 %4127
      %4129 = vrot.lane.b32.xlu0 %v3671, 40
      %v4130 = vpop.permute.xlu0 %4129
      %4131 = vrot.lane.b32.xlu0 %v3672, 40
      %v4132 = vpop.permute.xlu0 %4131
      %4133 = vrot.lane.b32.xlu0 %v3673, 40
      %v4134 = vpop.permute.xlu0 %4133
      %4135 = vrot.lane.b32.xlu0 %v3674, 40
      %v4136 = vpop.permute.xlu0 %4135
      %4137 = vrot.lane.b32.xlu0 %v3675, 40
      %v4138 = vpop.permute.xlu0 %4137
      %4139 = vrot.lane.b32.xlu0 %v3676, 40
      %v4140 = vpop.permute.xlu0 %4139
      %4141 = vrot.lane.b32.xlu0 %v3677, 40
      %v4142 = vpop.permute.xlu0 %4141
      %4143 = vrot.lane.b32.xlu0 %v3678, 40
      %v4144 = vpop.permute.xlu0 %4143
      %4145 = vrot.lane.b32.xlu0 %v3679, 40
      %v4146 = vpop.permute.xlu0 %4145
      %4147 = vrot.lane.b32.xlu0 %v3680, 40
      %v4148 = vpop.permute.xlu0 %4147
      %4149 = vrot.lane.b32.xlu0 %v3681, 40
      %v4150 = vpop.permute.xlu0 %4149
      %4151 = vrot.lane.b32.xlu0 %v3682, 40
      %v4152 = vpop.permute.xlu0 %4151
      %4153 = vrot.lane.b32.xlu0 %v3683, 40
      %v4154 = vpop.permute.xlu0 %4153
      %4155 = vrot.lane.b32.xlu0 %v3684, 40
      %v4156 = vpop.permute.xlu0 %4155
      %4157 = vrot.lane.b32.xlu0 %v3685, 40
      %v4158 = vpop.permute.xlu0 %4157
      %4159 = vrot.lane.b32.xlu0 %v3686, 40
      %v4160 = vpop.permute.xlu0 %4159
      %4161 = vrot.lane.b32.xlu0 %v3687, 40
      %v4162 = vpop.permute.xlu0 %4161
      %4163 = vrot.lane.b32.xlu0 %v3688, 40
      %v4164 = vpop.permute.xlu0 %4163
      %4165 = vrot.lane.b32.xlu0 %v3689, 40
      %v4166 = vpop.permute.xlu0 %4165
      %4167 = vrot.lane.b32.xlu0 %v3690, 40
      %v4168 = vpop.permute.xlu0 %4167
      %4169 = vrot.lane.b32.xlu0 %v3691, 40
      %v4170 = vpop.permute.xlu0 %4169
      %4171 = vrot.lane.b32.xlu0 %v3692, 40
      %v4172 = vpop.permute.xlu0 %4171
      %4173 = vrot.lane.b32.xlu0 %v3693, 40
      %v4174 = vpop.permute.xlu0 %4173
      %4175 = vrot.lane.b32.xlu0 %v3694, 40
      %v4176 = vpop.permute.xlu0 %4175
      %4177 = vrot.lane.b32.xlu0 %v3695, 40
      %v4178 = vpop.permute.xlu0 %4177
      %4179 = vrot.lane.b32.xlu0 %v3696, 40
      %v4180 = vpop.permute.xlu0 %4179
      %4213 = vrot.lane.b32.xlu0 %v3665, 48
      %v4214 = vpop.permute.xlu0 %4213
      %4215 = vrot.lane.b32.xlu0 %v3666, 48
      %v4216 = vpop.permute.xlu0 %4215
      %4217 = vrot.lane.b32.xlu0 %v3667, 48
      %v4218 = vpop.permute.xlu0 %4217
      %4219 = vrot.lane.b32.xlu0 %v3668, 48
      %v4220 = vpop.permute.xlu0 %4219
      %4221 = vrot.lane.b32.xlu0 %v3669, 48
      %v4222 = vpop.permute.xlu0 %4221
      %4223 = vrot.lane.b32.xlu0 %v3670, 48
      %v4224 = vpop.permute.xlu0 %4223
      %4225 = vrot.lane.b32.xlu0 %v3671, 48
      %v4226 = vpop.permute.xlu0 %4225
      %4227 = vrot.lane.b32.xlu0 %v3672, 48
      %v4228 = vpop.permute.xlu0 %4227
      %4229 = vrot.lane.b32.xlu0 %v3673, 48
      %v4230 = vpop.permute.xlu0 %4229
      %4231 = vrot.lane.b32.xlu0 %v3674, 48
      %v4232 = vpop.permute.xlu0 %4231
      %4233 = vrot.lane.b32.xlu0 %v3675, 48
      %v4234 = vpop.permute.xlu0 %4233
      %4235 = vrot.lane.b32.xlu0 %v3676, 48
      %v4236 = vpop.permute.xlu0 %4235
      %4237 = vrot.lane.b32.xlu0 %v3677, 48
      %v4238 = vpop.permute.xlu0 %4237
      %4239 = vrot.lane.b32.xlu0 %v3678, 48
      %v4240 = vpop.permute.xlu0 %4239
      %4241 = vrot.lane.b32.xlu0 %v3679, 48
      %v4242 = vpop.permute.xlu0 %4241
      %4243 = vrot.lane.b32.xlu0 %v3680, 48
      %v4244 = vpop.permute.xlu0 %4243
      %4245 = vrot.lane.b32.xlu0 %v3681, 48
      %v4246 = vpop.permute.xlu0 %4245
      %4247 = vrot.lane.b32.xlu0 %v3682, 48
      %v4248 = vpop.permute.xlu0 %4247
      %4249 = vrot.lane.b32.xlu0 %v3683, 48
      %v4250 = vpop.permute.xlu0 %4249
      %4251 = vrot.lane.b32.xlu0 %v3684, 48
      %v4252 = vpop.permute.xlu0 %4251
      %4253 = vrot.lane.b32.xlu0 %v3685, 48
      %v4254 = vpop.permute.xlu0 %4253
      %4255 = vrot.lane.b32.xlu0 %v3686, 48
      %v4256 = vpop.permute.xlu0 %4255
      %4257 = vrot.lane.b32.xlu0 %v3687, 48
      %v4258 = vpop.permute.xlu0 %4257
      %4259 = vrot.lane.b32.xlu0 %v3688, 48
      %v4260 = vpop.permute.xlu0 %4259
      %4261 = vrot.lane.b32.xlu0 %v3689, 48
      %v4262 = vpop.permute.xlu0 %4261
      %4263 = vrot.lane.b32.xlu0 %v3690, 48
      %v4264 = vpop.permute.xlu0 %4263
      %4265 = vrot.lane.b32.xlu0 %v3691, 48
      %v4266 = vpop.permute.xlu0 %4265
      %4267 = vrot.lane.b32.xlu0 %v3692, 48
      %v4268 = vpop.permute.xlu0 %4267
      %4269 = vrot.lane.b32.xlu0 %v3693, 48
      %v4270 = vpop.permute.xlu0 %4269
      %4271 = vrot.lane.b32.xlu0 %v3694, 48
      %v4272 = vpop.permute.xlu0 %4271
      %4273 = vrot.lane.b32.xlu0 %v3695, 48
      %v4274 = vpop.permute.xlu0 %4273
      %4275 = vrot.lane.b32.xlu0 %v3696, 48
      %v4276 = vpop.permute.xlu0 %4275
      %4309 = vrot.lane.b32.xlu0 %v3665, 56
      %v4310 = vpop.permute.xlu0 %4309
      %4311 = vrot.lane.b32.xlu0 %v3666, 56
      %v4312 = vpop.permute.xlu0 %4311
      %4313 = vrot.lane.b32.xlu0 %v3667, 56
      %v4314 = vpop.permute.xlu0 %4313
      %4315 = vrot.lane.b32.xlu0 %v3668, 56
      %v4316 = vpop.permute.xlu0 %4315
      %4317 = vrot.lane.b32.xlu0 %v3669, 56
      %v4318 = vpop.permute.xlu0 %4317
      %4319 = vrot.lane.b32.xlu0 %v3670, 56
      %v4320 = vpop.permute.xlu0 %4319
      %4321 = vrot.lane.b32.xlu0 %v3671, 56
      %v4322 = vpop.permute.xlu0 %4321
      %4323 = vrot.lane.b32.xlu0 %v3672, 56
      %v4324 = vpop.permute.xlu0 %4323
      %4325 = vrot.lane.b32.xlu0 %v3673, 56
      %v4326 = vpop.permute.xlu0 %4325
      %4327 = vrot.lane.b32.xlu0 %v3674, 56
      %v4328 = vpop.permute.xlu0 %4327
      %4329 = vrot.lane.b32.xlu0 %v3675, 56
      %v4330 = vpop.permute.xlu0 %4329
      %4331 = vrot.lane.b32.xlu0 %v3676, 56
      %v4332 = vpop.permute.xlu0 %4331
      %4333 = vrot.lane.b32.xlu0 %v3677, 56
      %v4334 = vpop.permute.xlu0 %4333
      %4335 = vrot.lane.b32.xlu0 %v3678, 56
      %v4336 = vpop.permute.xlu0 %4335
      %4337 = vrot.lane.b32.xlu0 %v3679, 56
      %v4338 = vpop.permute.xlu0 %4337
      %4339 = vrot.lane.b32.xlu0 %v3680, 56
      %v4340 = vpop.permute.xlu0 %4339
      %4341 = vrot.lane.b32.xlu0 %v3681, 56
      %v4342 = vpop.permute.xlu0 %4341
      %4343 = vrot.lane.b32.xlu0 %v3682, 56
      %v4344 = vpop.permute.xlu0 %4343
      %4345 = vrot.lane.b32.xlu0 %v3683, 56
      %v4346 = vpop.permute.xlu0 %4345
      %4347 = vrot.lane.b32.xlu0 %v3684, 56
      %v4348 = vpop.permute.xlu0 %4347
      %4349 = vrot.lane.b32.xlu0 %v3685, 56
      %v4350 = vpop.permute.xlu0 %4349
      %4351 = vrot.lane.b32.xlu0 %v3686, 56
      %v4352 = vpop.permute.xlu0 %4351
      %4353 = vrot.lane.b32.xlu0 %v3687, 56
      %v4354 = vpop.permute.xlu0 %4353
      %4355 = vrot.lane.b32.xlu0 %v3688, 56
      %v4356 = vpop.permute.xlu0 %4355
      %4357 = vrot.lane.b32.xlu0 %v3689, 56
      %v4358 = vpop.permute.xlu0 %4357
      %4359 = vrot.lane.b32.xlu0 %v3690, 56
      %v4360 = vpop.permute.xlu0 %4359
      %4361 = vrot.lane.b32.xlu0 %v3691, 56
      %v4362 = vpop.permute.xlu0 %4361
      %4363 = vrot.lane.b32.xlu0 %v3692, 56
      %v4364 = vpop.permute.xlu0 %4363
      %4365 = vrot.lane.b32.xlu0 %v3693, 56
      %v4366 = vpop.permute.xlu0 %4365
      %4367 = vrot.lane.b32.xlu0 %v3694, 56
      %v4368 = vpop.permute.xlu0 %4367
      %4369 = vrot.lane.b32.xlu0 %v3695, 56
      %v4370 = vpop.permute.xlu0 %4369
      %4371 = vrot.lane.b32.xlu0 %v3696, 56
      %v4372 = vpop.permute.xlu0 %4371
      %4405 = vrot.lane.b32.xlu0 %v3665, 64
      %v4406 = vpop.permute.xlu0 %4405
      %4407 = vrot.lane.b32.xlu0 %v3666, 64
      %v4408 = vpop.permute.xlu0 %4407
      %4409 = vrot.lane.b32.xlu0 %v3667, 64
      %v4410 = vpop.permute.xlu0 %4409
      %4411 = vrot.lane.b32.xlu0 %v3668, 64
      %v4412 = vpop.permute.xlu0 %4411
      %4413 = vrot.lane.b32.xlu0 %v3669, 64
      %v4414 = vpop.permute.xlu0 %4413
      %4415 = vrot.lane.b32.xlu0 %v3670, 64
      %v4416 = vpop.permute.xlu0 %4415
      %4417 = vrot.lane.b32.xlu0 %v3671, 64
      %v4418 = vpop.permute.xlu0 %4417
      %4419 = vrot.lane.b32.xlu0 %v3672, 64
      %v4420 = vpop.permute.xlu0 %4419
      %4421 = vrot.lane.b32.xlu0 %v3673, 64
      %v4422 = vpop.permute.xlu0 %4421
      %4423 = vrot.lane.b32.xlu0 %v3674, 64
      %v4424 = vpop.permute.xlu0 %4423
      %4425 = vrot.lane.b32.xlu0 %v3675, 64
      %v4426 = vpop.permute.xlu0 %4425
      %4427 = vrot.lane.b32.xlu0 %v3676, 64
      %v4428 = vpop.permute.xlu0 %4427
      %4429 = vrot.lane.b32.xlu0 %v3677, 64
      %v4430 = vpop.permute.xlu0 %4429
      %4431 = vrot.lane.b32.xlu0 %v3678, 64
      %v4432 = vpop.permute.xlu0 %4431
      %4433 = vrot.lane.b32.xlu0 %v3679, 64
      %v4434 = vpop.permute.xlu0 %4433
      %4435 = vrot.lane.b32.xlu0 %v3680, 64
      %v4436 = vpop.permute.xlu0 %4435
      %4437 = vrot.lane.b32.xlu0 %v3681, 64
      %v4438 = vpop.permute.xlu0 %4437
      %4439 = vrot.lane.b32.xlu0 %v3682, 64
      %v4440 = vpop.permute.xlu0 %4439
      %4441 = vrot.lane.b32.xlu0 %v3683, 64
      %v4442 = vpop.permute.xlu0 %4441
      %4443 = vrot.lane.b32.xlu0 %v3684, 64
      %v4444 = vpop.permute.xlu0 %4443
      %4445 = vrot.lane.b32.xlu0 %v3685, 64
      %v4446 = vpop.permute.xlu0 %4445
      %4447 = vrot.lane.b32.xlu0 %v3686, 64
      %v4448 = vpop.permute.xlu0 %4447
      %4449 = vrot.lane.b32.xlu0 %v3687, 64
      %v4450 = vpop.permute.xlu0 %4449
      %4451 = vrot.lane.b32.xlu0 %v3688, 64
      %v4452 = vpop.permute.xlu0 %4451
      %4453 = vrot.lane.b32.xlu0 %v3689, 64
      %v4454 = vpop.permute.xlu0 %4453
      %4455 = vrot.lane.b32.xlu0 %v3690, 64
      %v4456 = vpop.permute.xlu0 %4455
      %4457 = vrot.lane.b32.xlu0 %v3691, 64
      %v4458 = vpop.permute.xlu0 %4457
      %4459 = vrot.lane.b32.xlu0 %v3692, 64
      %v4460 = vpop.permute.xlu0 %4459
      %4461 = vrot.lane.b32.xlu0 %v3693, 64
      %v4462 = vpop.permute.xlu0 %4461
      %4463 = vrot.lane.b32.xlu0 %v3694, 64
      %v4464 = vpop.permute.xlu0 %4463
      %4465 = vrot.lane.b32.xlu0 %v3695, 64
      %v4466 = vpop.permute.xlu0 %4465
      %4467 = vrot.lane.b32.xlu0 %v3696, 64
      %v4468 = vpop.permute.xlu0 %4467
      %4501 = vrot.lane.b32.xlu0 %v3665, 72
      %v4502 = vpop.permute.xlu0 %4501
      %4503 = vrot.lane.b32.xlu0 %v3666, 72
      %v4504 = vpop.permute.xlu0 %4503
      %4505 = vrot.lane.b32.xlu0 %v3667, 72
      %v4506 = vpop.permute.xlu0 %4505
      %4507 = vrot.lane.b32.xlu0 %v3668, 72
      %v4508 = vpop.permute.xlu0 %4507
      %4509 = vrot.lane.b32.xlu0 %v3669, 72
      %v4510 = vpop.permute.xlu0 %4509
      %4511 = vrot.lane.b32.xlu0 %v3670, 72
      %v4512 = vpop.permute.xlu0 %4511
      %4513 = vrot.lane.b32.xlu0 %v3671, 72
      %v4514 = vpop.permute.xlu0 %4513
      %4515 = vrot.lane.b32.xlu0 %v3672, 72
      %v4516 = vpop.permute.xlu0 %4515
      %4517 = vrot.lane.b32.xlu0 %v3673, 72
      %v4518 = vpop.permute.xlu0 %4517
      %4519 = vrot.lane.b32.xlu0 %v3674, 72
      %v4520 = vpop.permute.xlu0 %4519
      %4521 = vrot.lane.b32.xlu0 %v3675, 72
      %v4522 = vpop.permute.xlu0 %4521
      %4523 = vrot.lane.b32.xlu0 %v3676, 72
      %v4524 = vpop.permute.xlu0 %4523
      %4525 = vrot.lane.b32.xlu0 %v3677, 72
      %v4526 = vpop.permute.xlu0 %4525
      %4527 = vrot.lane.b32.xlu0 %v3678, 72
      %v4528 = vpop.permute.xlu0 %4527
      %4529 = vrot.lane.b32.xlu0 %v3679, 72
      %v4530 = vpop.permute.xlu0 %4529
      %4531 = vrot.lane.b32.xlu0 %v3680, 72
      %v4532 = vpop.permute.xlu0 %4531
      %4533 = vrot.lane.b32.xlu0 %v3681, 72
      %v4534 = vpop.permute.xlu0 %4533
      %4535 = vrot.lane.b32.xlu0 %v3682, 72
      %v4536 = vpop.permute.xlu0 %4535
      %4537 = vrot.lane.b32.xlu0 %v3683, 72
      %v4538 = vpop.permute.xlu0 %4537
      %4539 = vrot.lane.b32.xlu0 %v3684, 72
      %v4540 = vpop.permute.xlu0 %4539
      %4541 = vrot.lane.b32.xlu0 %v3685, 72
      %v4542 = vpop.permute.xlu0 %4541
      %4543 = vrot.lane.b32.xlu0 %v3686, 72
      %v4544 = vpop.permute.xlu0 %4543
      %4545 = vrot.lane.b32.xlu0 %v3687, 72
      %v4546 = vpop.permute.xlu0 %4545
      %4547 = vrot.lane.b32.xlu0 %v3688, 72
      %v4548 = vpop.permute.xlu0 %4547
      %4549 = vrot.lane.b32.xlu0 %v3689, 72
      %v4550 = vpop.permute.xlu0 %4549
      %4551 = vrot.lane.b32.xlu0 %v3690, 72
      %v4552 = vpop.permute.xlu0 %4551
      %4553 = vrot.lane.b32.xlu0 %v3691, 72
      %v4554 = vpop.permute.xlu0 %4553
      %4555 = vrot.lane.b32.xlu0 %v3692, 72
      %v4556 = vpop.permute.xlu0 %4555
      %4557 = vrot.lane.b32.xlu0 %v3693, 72
      %v4558 = vpop.permute.xlu0 %4557
      %4559 = vrot.lane.b32.xlu0 %v3694, 72
      %v4560 = vpop.permute.xlu0 %4559
      %4561 = vrot.lane.b32.xlu0 %v3695, 72
      %v4562 = vpop.permute.xlu0 %4561
      %4563 = vrot.lane.b32.xlu0 %v3696, 72
      %v4564 = vpop.permute.xlu0 %4563
      %4597 = vrot.lane.b32.xlu0 %v3665, 80
      %v4598 = vpop.permute.xlu0 %4597
      %4599 = vrot.lane.b32.xlu0 %v3666, 80
      %v4600 = vpop.permute.xlu0 %4599
      %4601 = vrot.lane.b32.xlu0 %v3667, 80
      %v4602 = vpop.permute.xlu0 %4601
      %4603 = vrot.lane.b32.xlu0 %v3668, 80
      %v4604 = vpop.permute.xlu0 %4603
      %4605 = vrot.lane.b32.xlu0 %v3669, 80
      %v4606 = vpop.permute.xlu0 %4605
      %4607 = vrot.lane.b32.xlu0 %v3670, 80
      %v4608 = vpop.permute.xlu0 %4607
      %4609 = vrot.lane.b32.xlu0 %v3671, 80
      %v4610 = vpop.permute.xlu0 %4609
      %4611 = vrot.lane.b32.xlu0 %v3672, 80
      %v4612 = vpop.permute.xlu0 %4611
      %4613 = vrot.lane.b32.xlu0 %v3673, 80
      %v4614 = vpop.permute.xlu0 %4613
      %4615 = vrot.lane.b32.xlu0 %v3674, 80
      %v4616 = vpop.permute.xlu0 %4615
      %4617 = vrot.lane.b32.xlu0 %v3675, 80
      %v4618 = vpop.permute.xlu0 %4617
      %4619 = vrot.lane.b32.xlu0 %v3676, 80
      %v4620 = vpop.permute.xlu0 %4619
      %4621 = vrot.lane.b32.xlu0 %v3677, 80
      %v4622 = vpop.permute.xlu0 %4621
      %4623 = vrot.lane.b32.xlu0 %v3678, 80
      %v4624 = vpop.permute.xlu0 %4623
      %4625 = vrot.lane.b32.xlu0 %v3679, 80
      %v4626 = vpop.permute.xlu0 %4625
      %4627 = vrot.lane.b32.xlu0 %v3680, 80
      %v4628 = vpop.permute.xlu0 %4627
      %4629 = vrot.lane.b32.xlu0 %v3681, 80
      %v4630 = vpop.permute.xlu0 %4629
      %4631 = vrot.lane.b32.xlu0 %v3682, 80
      %v4632 = vpop.permute.xlu0 %4631
      %4633 = vrot.lane.b32.xlu0 %v3683, 80
      %v4634 = vpop.permute.xlu0 %4633
      %4635 = vrot.lane.b32.xlu0 %v3684, 80
      %v4636 = vpop.permute.xlu0 %4635
      %4637 = vrot.lane.b32.xlu0 %v3685, 80
      %v4638 = vpop.permute.xlu0 %4637
      %4639 = vrot.lane.b32.xlu0 %v3686, 80
      %v4640 = vpop.permute.xlu0 %4639
      %4641 = vrot.lane.b32.xlu0 %v3687, 80
      %v4642 = vpop.permute.xlu0 %4641
      %4643 = vrot.lane.b32.xlu0 %v3688, 80
      %v4644 = vpop.permute.xlu0 %4643
      %4645 = vrot.lane.b32.xlu0 %v3689, 80
      %v4646 = vpop.permute.xlu0 %4645
      %4647 = vrot.lane.b32.xlu0 %v3690, 80
      %v4648 = vpop.permute.xlu0 %4647
      %4649 = vrot.lane.b32.xlu0 %v3691, 80
      %v4650 = vpop.permute.xlu0 %4649
      %4651 = vrot.lane.b32.xlu0 %v3692, 80
      %v4652 = vpop.permute.xlu0 %4651
      %4653 = vrot.lane.b32.xlu0 %v3693, 80
      %v4654 = vpop.permute.xlu0 %4653
      %4655 = vrot.lane.b32.xlu0 %v3694, 80
      %v4656 = vpop.permute.xlu0 %4655
      %4657 = vrot.lane.b32.xlu0 %v3695, 80
      %v4658 = vpop.permute.xlu0 %4657
      %4659 = vrot.lane.b32.xlu0 %v3696, 80
      %v4660 = vpop.permute.xlu0 %4659
      %4693 = vrot.lane.b32.xlu0 %v3665, 88
      %v4694 = vpop.permute.xlu0 %4693
      %4695 = vrot.lane.b32.xlu0 %v3666, 88
      %v4696 = vpop.permute.xlu0 %4695
      %4697 = vrot.lane.b32.xlu0 %v3667, 88
      %v4698 = vpop.permute.xlu0 %4697
      %4699 = vrot.lane.b32.xlu0 %v3668, 88
      %v4700 = vpop.permute.xlu0 %4699
      %4701 = vrot.lane.b32.xlu0 %v3669, 88
      %v4702 = vpop.permute.xlu0 %4701
      %4703 = vrot.lane.b32.xlu0 %v3670, 88
      %v4704 = vpop.permute.xlu0 %4703
      %4705 = vrot.lane.b32.xlu0 %v3671, 88
      %v4706 = vpop.permute.xlu0 %4705
      %4707 = vrot.lane.b32.xlu0 %v3672, 88
      %v4708 = vpop.permute.xlu0 %4707
      %4709 = vrot.lane.b32.xlu0 %v3673, 88
      %v4710 = vpop.permute.xlu0 %4709
      %4711 = vrot.lane.b32.xlu0 %v3674, 88
      %v4712 = vpop.permute.xlu0 %4711
      %4713 = vrot.lane.b32.xlu0 %v3675, 88
      %v4714 = vpop.permute.xlu0 %4713
      %4715 = vrot.lane.b32.xlu0 %v3676, 88
      %v4716 = vpop.permute.xlu0 %4715
      %4717 = vrot.lane.b32.xlu0 %v3677, 88
      %v4718 = vpop.permute.xlu0 %4717
      %4719 = vrot.lane.b32.xlu0 %v3678, 88
      %v4720 = vpop.permute.xlu0 %4719
      %4721 = vrot.lane.b32.xlu0 %v3679, 88
      %v4722 = vpop.permute.xlu0 %4721
      %4723 = vrot.lane.b32.xlu0 %v3680, 88
      %v4724 = vpop.permute.xlu0 %4723
      %4725 = vrot.lane.b32.xlu0 %v3681, 88
      %v4726 = vpop.permute.xlu0 %4725
      %4727 = vrot.lane.b32.xlu0 %v3682, 88
      %v4728 = vpop.permute.xlu0 %4727
      %4729 = vrot.lane.b32.xlu0 %v3683, 88
      %v4730 = vpop.permute.xlu0 %4729
      %4731 = vrot.lane.b32.xlu0 %v3684, 88
      %v4732 = vpop.permute.xlu0 %4731
      %4733 = vrot.lane.b32.xlu0 %v3685, 88
      %v4734 = vpop.permute.xlu0 %4733
      %4735 = vrot.lane.b32.xlu0 %v3686, 88
      %v4736 = vpop.permute.xlu0 %4735
      %4737 = vrot.lane.b32.xlu0 %v3687, 88
      %v4738 = vpop.permute.xlu0 %4737
      %4739 = vrot.lane.b32.xlu0 %v3688, 88
      %v4740 = vpop.permute.xlu0 %4739
      %4741 = vrot.lane.b32.xlu0 %v3689, 88
      %v4742 = vpop.permute.xlu0 %4741
      %4743 = vrot.lane.b32.xlu0 %v3690, 88
      %v4744 = vpop.permute.xlu0 %4743
      %4745 = vrot.lane.b32.xlu0 %v3691, 88
      %v4746 = vpop.permute.xlu0 %4745
      %4747 = vrot.lane.b32.xlu0 %v3692, 88
      %v4748 = vpop.permute.xlu0 %4747
      %4749 = vrot.lane.b32.xlu0 %v3693, 88
      %v4750 = vpop.permute.xlu0 %4749
      %4751 = vrot.lane.b32.xlu0 %v3694, 88
      %v4752 = vpop.permute.xlu0 %4751
      %4753 = vrot.lane.b32.xlu0 %v3695, 88
      %v4754 = vpop.permute.xlu0 %4753
      %4755 = vrot.lane.b32.xlu0 %v3696, 88
      %v4756 = vpop.permute.xlu0 %4755
      %4789 = vrot.lane.b32.xlu0 %v3665, 96
      %v4790 = vpop.permute.xlu0 %4789
      %4791 = vrot.lane.b32.xlu0 %v3666, 96
      %v4792 = vpop.permute.xlu0 %4791
      %4793 = vrot.lane.b32.xlu0 %v3667, 96
      %v4794 = vpop.permute.xlu0 %4793
      %4795 = vrot.lane.b32.xlu0 %v3668, 96
      %v4796 = vpop.permute.xlu0 %4795
      %4797 = vrot.lane.b32.xlu0 %v3669, 96
      %v4798 = vpop.permute.xlu0 %4797
      %4799 = vrot.lane.b32.xlu0 %v3670, 96
      %v4800 = vpop.permute.xlu0 %4799
      %4801 = vrot.lane.b32.xlu0 %v3671, 96
      %v4802 = vpop.permute.xlu0 %4801
      %4803 = vrot.lane.b32.xlu0 %v3672, 96
      %v4804 = vpop.permute.xlu0 %4803
      %4805 = vrot.lane.b32.xlu0 %v3673, 96
      %v4806 = vpop.permute.xlu0 %4805
      %4807 = vrot.lane.b32.xlu0 %v3674, 96
      %v4808 = vpop.permute.xlu0 %4807
      %4809 = vrot.lane.b32.xlu0 %v3675, 96
      %v4810 = vpop.permute.xlu0 %4809
      %4811 = vrot.lane.b32.xlu0 %v3676, 96
      %v4812 = vpop.permute.xlu0 %4811
      %4813 = vrot.lane.b32.xlu0 %v3677, 96
      %v4814 = vpop.permute.xlu0 %4813
      %4815 = vrot.lane.b32.xlu0 %v3678, 96
      %v4816 = vpop.permute.xlu0 %4815
      %4817 = vrot.lane.b32.xlu0 %v3679, 96
      %v4818 = vpop.permute.xlu0 %4817
      %4819 = vrot.lane.b32.xlu0 %v3680, 96
      %v4820 = vpop.permute.xlu0 %4819
      %4821 = vrot.lane.b32.xlu0 %v3681, 96
      %v4822 = vpop.permute.xlu0 %4821
      %4823 = vrot.lane.b32.xlu0 %v3682, 96
      %v4824 = vpop.permute.xlu0 %4823
      %4825 = vrot.lane.b32.xlu0 %v3683, 96
      %v4826 = vpop.permute.xlu0 %4825
      %4827 = vrot.lane.b32.xlu0 %v3684, 96
      %v4828 = vpop.permute.xlu0 %4827
      %4829 = vrot.lane.b32.xlu0 %v3685, 96
      %v4830 = vpop.permute.xlu0 %4829
      %4831 = vrot.lane.b32.xlu0 %v3686, 96
      %v4832 = vpop.permute.xlu0 %4831
      %4833 = vrot.lane.b32.xlu0 %v3687, 96
      %v4834 = vpop.permute.xlu0 %4833
      %4835 = vrot.lane.b32.xlu0 %v3688, 96
      %v4836 = vpop.permute.xlu0 %4835
      %4837 = vrot.lane.b32.xlu0 %v3689, 96
      %v4838 = vpop.permute.xlu0 %4837
      %4839 = vrot.lane.b32.xlu0 %v3690, 96
      %v4840 = vpop.permute.xlu0 %4839
      %4841 = vrot.lane.b32.xlu0 %v3691, 96
      %v4842 = vpop.permute.xlu0 %4841
      %4843 = vrot.lane.b32.xlu0 %v3692, 96
      %v4844 = vpop.permute.xlu0 %4843
      %4845 = vrot.lane.b32.xlu0 %v3693, 96
      %v4846 = vpop.permute.xlu0 %4845
      %4847 = vrot.lane.b32.xlu0 %v3694, 96
      %v4848 = vpop.permute.xlu0 %4847
      %4849 = vrot.lane.b32.xlu0 %v3695, 96
      %v4850 = vpop.permute.xlu0 %4849
      %4851 = vrot.lane.b32.xlu0 %v3696, 96
      %v4852 = vpop.permute.xlu0 %4851
      %4885 = vrot.lane.b32.xlu0 %v3665, 104
      %v4886 = vpop.permute.xlu0 %4885
      %4887 = vrot.lane.b32.xlu0 %v3666, 104
      %v4888 = vpop.permute.xlu0 %4887
      %4889 = vrot.lane.b32.xlu0 %v3667, 104
      %v4890 = vpop.permute.xlu0 %4889
      %4891 = vrot.lane.b32.xlu0 %v3668, 104
      %v4892 = vpop.permute.xlu0 %4891
      %4893 = vrot.lane.b32.xlu0 %v3669, 104
      %v4894 = vpop.permute.xlu0 %4893
      %4895 = vrot.lane.b32.xlu0 %v3670, 104
      %v4896 = vpop.permute.xlu0 %4895
      %4897 = vrot.lane.b32.xlu0 %v3671, 104
      %v4898 = vpop.permute.xlu0 %4897
      %4899 = vrot.lane.b32.xlu0 %v3672, 104
      %v4900 = vpop.permute.xlu0 %4899
      %4901 = vrot.lane.b32.xlu0 %v3673, 104
      %v4902 = vpop.permute.xlu0 %4901
      %4903 = vrot.lane.b32.xlu0 %v3674, 104
      %v4904 = vpop.permute.xlu0 %4903
      %4905 = vrot.lane.b32.xlu0 %v3675, 104
      %v4906 = vpop.permute.xlu0 %4905
      %4907 = vrot.lane.b32.xlu0 %v3676, 104
      %v4908 = vpop.permute.xlu0 %4907
      %4909 = vrot.lane.b32.xlu0 %v3677, 104
      %v4910 = vpop.permute.xlu0 %4909
      %4911 = vrot.lane.b32.xlu0 %v3678, 104
      %v4912 = vpop.permute.xlu0 %4911
      %4913 = vrot.lane.b32.xlu0 %v3679, 104
      %v4914 = vpop.permute.xlu0 %4913
      %4915 = vrot.lane.b32.xlu0 %v3680, 104
      %v4916 = vpop.permute.xlu0 %4915
      %4917 = vrot.lane.b32.xlu0 %v3681, 104
      %v4918 = vpop.permute.xlu0 %4917
      %4919 = vrot.lane.b32.xlu0 %v3682, 104
      %v4920 = vpop.permute.xlu0 %4919
      %4921 = vrot.lane.b32.xlu0 %v3683, 104
      %v4922 = vpop.permute.xlu0 %4921
      %4923 = vrot.lane.b32.xlu0 %v3684, 104
      %v4924 = vpop.permute.xlu0 %4923
      %4925 = vrot.lane.b32.xlu0 %v3685, 104
      %v4926 = vpop.permute.xlu0 %4925
      %4927 = vrot.lane.b32.xlu0 %v3686, 104
      %v4928 = vpop.permute.xlu0 %4927
      %4929 = vrot.lane.b32.xlu0 %v3687, 104
      %v4930 = vpop.permute.xlu0 %4929
      %4931 = vrot.lane.b32.xlu0 %v3688, 104
      %v4932 = vpop.permute.xlu0 %4931
      %4933 = vrot.lane.b32.xlu0 %v3689, 104
      %v4934 = vpop.permute.xlu0 %4933
      %4935 = vrot.lane.b32.xlu0 %v3690, 104
      %v4936 = vpop.permute.xlu0 %4935
      %4937 = vrot.lane.b32.xlu0 %v3691, 104
      %v4938 = vpop.permute.xlu0 %4937
      %4939 = vrot.lane.b32.xlu0 %v3692, 104
      %v4940 = vpop.permute.xlu0 %4939
      %4941 = vrot.lane.b32.xlu0 %v3693, 104
      %v4942 = vpop.permute.xlu0 %4941
      %4943 = vrot.lane.b32.xlu0 %v3694, 104
      %v4944 = vpop.permute.xlu0 %4943
      %4945 = vrot.lane.b32.xlu0 %v3695, 104
      %v4946 = vpop.permute.xlu0 %4945
      %4947 = vrot.lane.b32.xlu0 %v3696, 104
      %v4948 = vpop.permute.xlu0 %4947
      %4981 = vrot.lane.b32.xlu0 %v3665, 112
      %v4982 = vpop.permute.xlu0 %4981
      %4983 = vrot.lane.b32.xlu0 %v3666, 112
      %v4984 = vpop.permute.xlu0 %4983
      %4985 = vrot.lane.b32.xlu0 %v3667, 112
      %v4986 = vpop.permute.xlu0 %4985
      %4987 = vrot.lane.b32.xlu0 %v3668, 112
      %v4988 = vpop.permute.xlu0 %4987
      %4989 = vrot.lane.b32.xlu0 %v3669, 112
      %v4990 = vpop.permute.xlu0 %4989
      %4991 = vrot.lane.b32.xlu0 %v3670, 112
      %v4992 = vpop.permute.xlu0 %4991
      %4993 = vrot.lane.b32.xlu0 %v3671, 112
      %v4994 = vpop.permute.xlu0 %4993
      %4995 = vrot.lane.b32.xlu0 %v3672, 112
      %v4996 = vpop.permute.xlu0 %4995
      %4997 = vrot.lane.b32.xlu0 %v3673, 112
      %v4998 = vpop.permute.xlu0 %4997
      %4999 = vrot.lane.b32.xlu0 %v3674, 112
      %v5000 = vpop.permute.xlu0 %4999
      %5001 = vrot.lane.b32.xlu0 %v3675, 112
      %v5002 = vpop.permute.xlu0 %5001
      %5003 = vrot.lane.b32.xlu0 %v3676, 112
      %v5004 = vpop.permute.xlu0 %5003
      %5005 = vrot.lane.b32.xlu0 %v3677, 112
      %v5006 = vpop.permute.xlu0 %5005
      %5007 = vrot.lane.b32.xlu0 %v3678, 112
      %v5008 = vpop.permute.xlu0 %5007
      %5009 = vrot.lane.b32.xlu0 %v3679, 112
      %v5010 = vpop.permute.xlu0 %5009
      %5011 = vrot.lane.b32.xlu0 %v3680, 112
      %v5012 = vpop.permute.xlu0 %5011
      %5013 = vrot.lane.b32.xlu0 %v3681, 112
      %v5014 = vpop.permute.xlu0 %5013
      %5015 = vrot.lane.b32.xlu0 %v3682, 112
      %v5016 = vpop.permute.xlu0 %5015
      %5017 = vrot.lane.b32.xlu0 %v3683, 112
      %v5018 = vpop.permute.xlu0 %5017
      %5019 = vrot.lane.b32.xlu0 %v3684, 112
      %v5020 = vpop.permute.xlu0 %5019
      %5021 = vrot.lane.b32.xlu0 %v3685, 112
      %v5022 = vpop.permute.xlu0 %5021
      %5023 = vrot.lane.b32.xlu0 %v3686, 112
      %v5024 = vpop.permute.xlu0 %5023
      %5025 = vrot.lane.b32.xlu0 %v3687, 112
      %v5026 = vpop.permute.xlu0 %5025
      %5027 = vrot.lane.b32.xlu0 %v3688, 112
      %v5028 = vpop.permute.xlu0 %5027
      %5029 = vrot.lane.b32.xlu0 %v3689, 112
      %v5030 = vpop.permute.xlu0 %5029
      %5031 = vrot.lane.b32.xlu0 %v3690, 112
      %v5032 = vpop.permute.xlu0 %5031
      %5033 = vrot.lane.b32.xlu0 %v3691, 112
      %v5034 = vpop.permute.xlu0 %5033
      %5035 = vrot.lane.b32.xlu0 %v3692, 112
      %v5036 = vpop.permute.xlu0 %5035
      %5037 = vrot.lane.b32.xlu0 %v3693, 112
      %v5038 = vpop.permute.xlu0 %5037
      %5039 = vrot.lane.b32.xlu0 %v3694, 112
      %v5040 = vpop.permute.xlu0 %5039
      %5041 = vrot.lane.b32.xlu0 %v3695, 112
      %v5042 = vpop.permute.xlu0 %5041
      %5043 = vrot.lane.b32.xlu0 %v3696, 112
      %v5044 = vpop.permute.xlu0 %5043
      %5077 = vrot.lane.b32.xlu0 %v3665, 120
      %v5078 = vpop.permute.xlu0 %5077
      %5079 = vrot.lane.b32.xlu0 %v3666, 120
      %v5080 = vpop.permute.xlu0 %5079
      %5081 = vrot.lane.b32.xlu0 %v3667, 120
      %v5082 = vpop.permute.xlu0 %5081
      %5083 = vrot.lane.b32.xlu0 %v3668, 120
      %v5084 = vpop.permute.xlu0 %5083
      %5085 = vrot.lane.b32.xlu0 %v3669, 120
      %v5086 = vpop.permute.xlu0 %5085
      %5087 = vrot.lane.b32.xlu0 %v3670, 120
      %v5088 = vpop.permute.xlu0 %5087
      %5089 = vrot.lane.b32.xlu0 %v3671, 120
      %v5090 = vpop.permute.xlu0 %5089
      %5091 = vrot.lane.b32.xlu0 %v3672, 120
      %v5092 = vpop.permute.xlu0 %5091
      %5093 = vrot.lane.b32.xlu0 %v3673, 120
      %v5094 = vpop.permute.xlu0 %5093
      %5095 = vrot.lane.b32.xlu0 %v3674, 120
      %v5096 = vpop.permute.xlu0 %5095
      %5097 = vrot.lane.b32.xlu0 %v3675, 120
      %v5098 = vpop.permute.xlu0 %5097
      %5099 = vrot.lane.b32.xlu0 %v3676, 120
      %v5100 = vpop.permute.xlu0 %5099
      %5101 = vrot.lane.b32.xlu0 %v3677, 120
      %v5102 = vpop.permute.xlu0 %5101
      %5103 = vrot.lane.b32.xlu0 %v3678, 120
      %v5104 = vpop.permute.xlu0 %5103
      %5105 = vrot.lane.b32.xlu0 %v3679, 120
      %v5106 = vpop.permute.xlu0 %5105
      %5107 = vrot.lane.b32.xlu0 %v3680, 120
      %v5108 = vpop.permute.xlu0 %5107
      %5109 = vrot.lane.b32.xlu0 %v3681, 120
      %v5110 = vpop.permute.xlu0 %5109
      %5111 = vrot.lane.b32.xlu0 %v3682, 120
      %v5112 = vpop.permute.xlu0 %5111
      %5113 = vrot.lane.b32.xlu0 %v3683, 120
      %v5114 = vpop.permute.xlu0 %5113
      %5115 = vrot.lane.b32.xlu0 %v3684, 120
      %v5116 = vpop.permute.xlu0 %5115
      %5117 = vrot.lane.b32.xlu0 %v3685, 120
      %v5118 = vpop.permute.xlu0 %5117
      %5119 = vrot.lane.b32.xlu0 %v3686, 120
      %v5120 = vpop.permute.xlu0 %5119
      %5121 = vrot.lane.b32.xlu0 %v3687, 120
      %v5122 = vpop.permute.xlu0 %5121
      %5123 = vrot.lane.b32.xlu0 %v3688, 120
      %v5124 = vpop.permute.xlu0 %5123
      %5125 = vrot.lane.b32.xlu0 %v3689, 120
      %v5126 = vpop.permute.xlu0 %5125
      %5127 = vrot.lane.b32.xlu0 %v3690, 120
      %v5128 = vpop.permute.xlu0 %5127
      %5129 = vrot.lane.b32.xlu0 %v3691, 120
      %v5130 = vpop.permute.xlu0 %5129
      %5131 = vrot.lane.b32.xlu0 %v3692, 120
      %v5132 = vpop.permute.xlu0 %5131
      %5133 = vrot.lane.b32.xlu0 %v3693, 120
      %v5134 = vpop.permute.xlu0 %5133
      %5135 = vrot.lane.b32.xlu0 %v3694, 120
      %v5136 = vpop.permute.xlu0 %5135
      %5137 = vrot.lane.b32.xlu0 %v3695, 120
      %v5138 = vpop.permute.xlu0 %5137
      %5139 = vrot.lane.b32.xlu0 %v3696, 120
      %v5140 = vpop.permute.xlu0 %5139
      %v5173 = vsel %vm1632, %v3665, %v3734
      %v5174 = vsel %vm1632, %v3666, %v3736
      %v5175 = vsel %vm1632, %v3667, %v3738
      %v5176 = vsel %vm1632, %v3668, %v3740
      %v5177 = vsel %vm1632, %v3669, %v3742
      %v5178 = vsel %vm1632, %v3670, %v3744
      %v5179 = vsel %vm1632, %v3671, %v3746
      %v5180 = vsel %vm1632, %v3672, %v3748
      %v5181 = vsel %vm1632, %v3673, %v3750
      %v5182 = vsel %vm1632, %v3674, %v3752
      %v5183 = vsel %vm1632, %v3675, %v3754
      %v5184 = vsel %vm1632, %v3676, %v3756
      %v5185 = vsel %vm1632, %v3677, %v3758
      %v5186 = vsel %vm1632, %v3678, %v3760
      %v5187 = vsel %vm1632, %v3679, %v3762
      %v5188 = vsel %vm1632, %v3680, %v3764
      %v5189 = vsel %vm1632, %v3681, %v3766
      %v5190 = vsel %vm1632, %v3682, %v3768
      %v5191 = vsel %vm1632, %v3683, %v3770
      %v5192 = vsel %vm1632, %v3684, %v3772
      %v5193 = vsel %vm1632, %v3685, %v3774
      %v5194 = vsel %vm1632, %v3686, %v3776
      %v5195 = vsel %vm1632, %v3687, %v3778
      %v5196 = vsel %vm1632, %v3688, %v3780
      %v5197 = vsel %vm1632, %v3689, %v3782
      %v5198 = vsel %vm1632, %v3690, %v3784
      %v5199 = vsel %vm1632, %v3691, %v3786
      %v5200 = vsel %vm1632, %v3692, %v3788
      %v5201 = vsel %vm1632, %v3693, %v3790
      %v5202 = vsel %vm1632, %v3694, %v3792
      %v5203 = vsel %vm1632, %v3695, %v3794
      %v5204 = vsel %vm1632, %v3696, %v3796
      %vm5205 = vcmask 130048
      %v5206 = vsel %vm5205, %v5173, %v3830
      %v5207 = vsel %vm5205, %v5174, %v3832
      %v5208 = vsel %vm5205, %v5175, %v3834
      %v5209 = vsel %vm5205, %v5176, %v3836
      %v5210 = vsel %vm5205, %v5177, %v3838
      %v5211 = vsel %vm5205, %v5178, %v3840
      %v5212 = vsel %vm5205, %v5179, %v3842
      %v5213 = vsel %vm5205, %v5180, %v3844
      %v5214 = vsel %vm5205, %v5181, %v3846
      %v5215 = vsel %vm5205, %v5182, %v3848
      %v5216 = vsel %vm5205, %v5183, %v3850
      %v5217 = vsel %vm5205, %v5184, %v3852
      %v5218 = vsel %vm5205, %v5185, %v3854
      %v5219 = vsel %vm5205, %v5186, %v3856
      %v5220 = vsel %vm5205, %v5187, %v3858
      %v5221 = vsel %vm5205, %v5188, %v3860
      %v5222 = vsel %vm5205, %v5189, %v3862
      %v5223 = vsel %vm5205, %v5190, %v3864
      %v5224 = vsel %vm5205, %v5191, %v3866
      %v5225 = vsel %vm5205, %v5192, %v3868
      %v5226 = vsel %vm5205, %v5193, %v3870
      %v5227 = vsel %vm5205, %v5194, %v3872
      %v5228 = vsel %vm5205, %v5195, %v3874
      %v5229 = vsel %vm5205, %v5196, %v3876
      %v5230 = vsel %vm5205, %v5197, %v3878
      %v5231 = vsel %vm5205, %v5198, %v3880
      %v5232 = vsel %vm5205, %v5199, %v3882
      %v5233 = vsel %vm5205, %v5200, %v3884
      %v5234 = vsel %vm5205, %v5201, %v3886
      %v5235 = vsel %vm5205, %v5202, %v3888
      %v5236 = vsel %vm5205, %v5203, %v3890
      %v5237 = vsel %vm5205, %v5204, %v3892
      %vm5238 = vcmask 195584
      %v5239 = vsel %vm5238, %v5206, %v3926
      %v5240 = vsel %vm5238, %v5207, %v3928
      %v5241 = vsel %vm5238, %v5208, %v3930
      %v5242 = vsel %vm5238, %v5209, %v3932
      %v5243 = vsel %vm5238, %v5210, %v3934
      %v5244 = vsel %vm5238, %v5211, %v3936
      %v5245 = vsel %vm5238, %v5212, %v3938
      %v5246 = vsel %vm5238, %v5213, %v3940
      %v5247 = vsel %vm5238, %v5214, %v3942
      %v5248 = vsel %vm5238, %v5215, %v3944
      %v5249 = vsel %vm5238, %v5216, %v3946
      %v5250 = vsel %vm5238, %v5217, %v3948
      %v5251 = vsel %vm5238, %v5218, %v3950
      %v5252 = vsel %vm5238, %v5219, %v3952
      %v5253 = vsel %vm5238, %v5220, %v3954
      %v5254 = vsel %vm5238, %v5221, %v3956
      %v5255 = vsel %vm5238, %v5222, %v3958
      %v5256 = vsel %vm5238, %v5223, %v3960
      %v5257 = vsel %vm5238, %v5224, %v3962
      %v5258 = vsel %vm5238, %v5225, %v3964
      %v5259 = vsel %vm5238, %v5226, %v3966
      %v5260 = vsel %vm5238, %v5227, %v3968
      %v5261 = vsel %vm5238, %v5228, %v3970
      %v5262 = vsel %vm5238, %v5229, %v3972
      %v5263 = vsel %vm5238, %v5230, %v3974
      %v5264 = vsel %vm5238, %v5231, %v3976
      %v5265 = vsel %vm5238, %v5232, %v3978
      %v5266 = vsel %vm5238, %v5233, %v3980
      %v5267 = vsel %vm5238, %v5234, %v3982
      %v5268 = vsel %vm5238, %v5235, %v3984
      %v5269 = vsel %vm5238, %v5236, %v3986
      %v5270 = vsel %vm5238, %v5237, %v3988
      %vm5271 = vcmask 261120
      %v5272 = vsel %vm5271, %v5239, %v4022
      %v5273 = vsel %vm5271, %v5240, %v4024
      %v5274 = vsel %vm5271, %v5241, %v4026
      %v5275 = vsel %vm5271, %v5242, %v4028
      %v5276 = vsel %vm5271, %v5243, %v4030
      %v5277 = vsel %vm5271, %v5244, %v4032
      %v5278 = vsel %vm5271, %v5245, %v4034
      %v5279 = vsel %vm5271, %v5246, %v4036
      %v5280 = vsel %vm5271, %v5247, %v4038
      %v5281 = vsel %vm5271, %v5248, %v4040
      %v5282 = vsel %vm5271, %v5249, %v4042
      %v5283 = vsel %vm5271, %v5250, %v4044
      %v5284 = vsel %vm5271, %v5251, %v4046
      %v5285 = vsel %vm5271, %v5252, %v4048
      %v5286 = vsel %vm5271, %v5253, %v4050
      %v5287 = vsel %vm5271, %v5254, %v4052
      %v5288 = vsel %vm5271, %v5255, %v4054
      %v5289 = vsel %vm5271, %v5256, %v4056
      %v5290 = vsel %vm5271, %v5257, %v4058
      %v5291 = vsel %vm5271, %v5258, %v4060
      %v5292 = vsel %vm5271, %v5259, %v4062
      %v5293 = vsel %vm5271, %v5260, %v4064
      %v5294 = vsel %vm5271, %v5261, %v4066
      %v5295 = vsel %vm5271, %v5262, %v4068
      %v5296 = vsel %vm5271, %v5263, %v4070
      %v5297 = vsel %vm5271, %v5264, %v4072
      %v5298 = vsel %vm5271, %v5265, %v4074
      %v5299 = vsel %vm5271, %v5266, %v4076
      %v5300 = vsel %vm5271, %v5267, %v4078
      %v5301 = vsel %vm5271, %v5268, %v4080
      %v5302 = vsel %vm5271, %v5269, %v4082
      %v5303 = vsel %vm5271, %v5270, %v4084
      %vm5304 = vcmask 326656
      %v5305 = vsel %vm5304, %v5272, %v4118
      %v5306 = vsel %vm5304, %v5273, %v4120
      %v5307 = vsel %vm5304, %v5274, %v4122
      %v5308 = vsel %vm5304, %v5275, %v4124
      %v5309 = vsel %vm5304, %v5276, %v4126
      %v5310 = vsel %vm5304, %v5277, %v4128
      %v5311 = vsel %vm5304, %v5278, %v4130
      %v5312 = vsel %vm5304, %v5279, %v4132
      %v5313 = vsel %vm5304, %v5280, %v4134
      %v5314 = vsel %vm5304, %v5281, %v4136
      %v5315 = vsel %vm5304, %v5282, %v4138
      %v5316 = vsel %vm5304, %v5283, %v4140
      %v5317 = vsel %vm5304, %v5284, %v4142
      %v5318 = vsel %vm5304, %v5285, %v4144
      %v5319 = vsel %vm5304, %v5286, %v4146
      %v5320 = vsel %vm5304, %v5287, %v4148
      %v5321 = vsel %vm5304, %v5288, %v4150
      %v5322 = vsel %vm5304, %v5289, %v4152
      %v5323 = vsel %vm5304, %v5290, %v4154
      %v5324 = vsel %vm5304, %v5291, %v4156
      %v5325 = vsel %vm5304, %v5292, %v4158
      %v5326 = vsel %vm5304, %v5293, %v4160
      %v5327 = vsel %vm5304, %v5294, %v4162
      %v5328 = vsel %vm5304, %v5295, %v4164
      %v5329 = vsel %vm5304, %v5296, %v4166
      %v5330 = vsel %vm5304, %v5297, %v4168
      %v5331 = vsel %vm5304, %v5298, %v4170
      %v5332 = vsel %vm5304, %v5299, %v4172
      %v5333 = vsel %vm5304, %v5300, %v4174
      %v5334 = vsel %vm5304, %v5301, %v4176
      %v5335 = vsel %vm5304, %v5302, %v4178
      %v5336 = vsel %vm5304, %v5303, %v4180
      %vm5337 = vcmask 392192
      %v5338 = vsel %vm5337, %v5305, %v4214
      %v5339 = vsel %vm5337, %v5306, %v4216
      %v5340 = vsel %vm5337, %v5307, %v4218
      %v5341 = vsel %vm5337, %v5308, %v4220
      %v5342 = vsel %vm5337, %v5309, %v4222
      %v5343 = vsel %vm5337, %v5310, %v4224
      %v5344 = vsel %vm5337, %v5311, %v4226
      %v5345 = vsel %vm5337, %v5312, %v4228
      %v5346 = vsel %vm5337, %v5313, %v4230
      %v5347 = vsel %vm5337, %v5314, %v4232
      %v5348 = vsel %vm5337, %v5315, %v4234
      %v5349 = vsel %vm5337, %v5316, %v4236
      %v5350 = vsel %vm5337, %v5317, %v4238
      %v5351 = vsel %vm5337, %v5318, %v4240
      %v5352 = vsel %vm5337, %v5319, %v4242
      %v5353 = vsel %vm5337, %v5320, %v4244
      %v5354 = vsel %vm5337, %v5321, %v4246
      %v5355 = vsel %vm5337, %v5322, %v4248
      %v5356 = vsel %vm5337, %v5323, %v4250
      %v5357 = vsel %vm5337, %v5324, %v4252
      %v5358 = vsel %vm5337, %v5325, %v4254
      %v5359 = vsel %vm5337, %v5326, %v4256
      %v5360 = vsel %vm5337, %v5327, %v4258
      %v5361 = vsel %vm5337, %v5328, %v4260
      %v5362 = vsel %vm5337, %v5329, %v4262
      %v5363 = vsel %vm5337, %v5330, %v4264
      %v5364 = vsel %vm5337, %v5331, %v4266
      %v5365 = vsel %vm5337, %v5332, %v4268
      %v5366 = vsel %vm5337, %v5333, %v4270
      %v5367 = vsel %vm5337, %v5334, %v4272
      %v5368 = vsel %vm5337, %v5335, %v4274
      %v5369 = vsel %vm5337, %v5336, %v4276
      %vm5370 = vcmask 457728
      %v5371 = vsel %vm5370, %v5338, %v4310
      %v5372 = vsel %vm5370, %v5339, %v4312
      %v5373 = vsel %vm5370, %v5340, %v4314
      %v5374 = vsel %vm5370, %v5341, %v4316
      %v5375 = vsel %vm5370, %v5342, %v4318
      %v5376 = vsel %vm5370, %v5343, %v4320
      %v5377 = vsel %vm5370, %v5344, %v4322
      %v5378 = vsel %vm5370, %v5345, %v4324
      %v5379 = vsel %vm5370, %v5346, %v4326
      %v5380 = vsel %vm5370, %v5347, %v4328
      %v5381 = vsel %vm5370, %v5348, %v4330
      %v5382 = vsel %vm5370, %v5349, %v4332
      %v5383 = vsel %vm5370, %v5350, %v4334
      %v5384 = vsel %vm5370, %v5351, %v4336
      %v5385 = vsel %vm5370, %v5352, %v4338
      %v5386 = vsel %vm5370, %v5353, %v4340
      %v5387 = vsel %vm5370, %v5354, %v4342
      %v5388 = vsel %vm5370, %v5355, %v4344
      %v5389 = vsel %vm5370, %v5356, %v4346
      %v5390 = vsel %vm5370, %v5357, %v4348
      %v5391 = vsel %vm5370, %v5358, %v4350
      %v5392 = vsel %vm5370, %v5359, %v4352
      %v5393 = vsel %vm5370, %v5360, %v4354
      %v5394 = vsel %vm5370, %v5361, %v4356
      %v5395 = vsel %vm5370, %v5362, %v4358
      %v5396 = vsel %vm5370, %v5363, %v4360
      %v5397 = vsel %vm5370, %v5364, %v4362
      %v5398 = vsel %vm5370, %v5365, %v4364
      %v5399 = vsel %vm5370, %v5366, %v4366
      %v5400 = vsel %vm5370, %v5367, %v4368
      %v5401 = vsel %vm5370, %v5368, %v4370
      %v5402 = vsel %vm5370, %v5369, %v4372
      %vm5403 = vcmask 523264
      %v5404 = vsel %vm5403, %v5371, %v4406
      %v5405 = vsel %vm5403, %v5372, %v4408
      %v5406 = vsel %vm5403, %v5373, %v4410
      %v5407 = vsel %vm5403, %v5374, %v4412
      %v5408 = vsel %vm5403, %v5375, %v4414
      %v5409 = vsel %vm5403, %v5376, %v4416
      %v5410 = vsel %vm5403, %v5377, %v4418
      %v5411 = vsel %vm5403, %v5378, %v4420
      %v5412 = vsel %vm5403, %v5379, %v4422
      %v5413 = vsel %vm5403, %v5380, %v4424
      %v5414 = vsel %vm5403, %v5381, %v4426
      %v5415 = vsel %vm5403, %v5382, %v4428
      %v5416 = vsel %vm5403, %v5383, %v4430
      %v5417 = vsel %vm5403, %v5384, %v4432
      %v5418 = vsel %vm5403, %v5385, %v4434
      %v5419 = vsel %vm5403, %v5386, %v4436
      %v5420 = vsel %vm5403, %v5387, %v4438
      %v5421 = vsel %vm5403, %v5388, %v4440
      %v5422 = vsel %vm5403, %v5389, %v4442
      %v5423 = vsel %vm5403, %v5390, %v4444
      %v5424 = vsel %vm5403, %v5391, %v4446
      %v5425 = vsel %vm5403, %v5392, %v4448
      %v5426 = vsel %vm5403, %v5393, %v4450
      %v5427 = vsel %vm5403, %v5394, %v4452
      %v5428 = vsel %vm5403, %v5395, %v4454
      %v5429 = vsel %vm5403, %v5396, %v4456
      %v5430 = vsel %vm5403, %v5397, %v4458
      %v5431 = vsel %vm5403, %v5398, %v4460
      %v5432 = vsel %vm5403, %v5399, %v4462
      %v5433 = vsel %vm5403, %v5400, %v4464
      %v5434 = vsel %vm5403, %v5401, %v4466
      %v5435 = vsel %vm5403, %v5402, %v4468
      %vm5436 = vcmask 588800
      %v5437 = vsel %vm5436, %v5404, %v4502
      %v5438 = vsel %vm5436, %v5405, %v4504
      %v5439 = vsel %vm5436, %v5406, %v4506
      %v5440 = vsel %vm5436, %v5407, %v4508
      %v5441 = vsel %vm5436, %v5408, %v4510
      %v5442 = vsel %vm5436, %v5409, %v4512
      %v5443 = vsel %vm5436, %v5410, %v4514
      %v5444 = vsel %vm5436, %v5411, %v4516
      %v5445 = vsel %vm5436, %v5412, %v4518
      %v5446 = vsel %vm5436, %v5413, %v4520
      %v5447 = vsel %vm5436, %v5414, %v4522
      %v5448 = vsel %vm5436, %v5415, %v4524
      %v5449 = vsel %vm5436, %v5416, %v4526
      %v5450 = vsel %vm5436, %v5417, %v4528
      %v5451 = vsel %vm5436, %v5418, %v4530
      %v5452 = vsel %vm5436, %v5419, %v4532
      %v5453 = vsel %vm5436, %v5420, %v4534
      %v5454 = vsel %vm5436, %v5421, %v4536
      %v5455 = vsel %vm5436, %v5422, %v4538
      %v5456 = vsel %vm5436, %v5423, %v4540
      %v5457 = vsel %vm5436, %v5424, %v4542
      %v5458 = vsel %vm5436, %v5425, %v4544
      %v5459 = vsel %vm5436, %v5426, %v4546
      %v5460 = vsel %vm5436, %v5427, %v4548
      %v5461 = vsel %vm5436, %v5428, %v4550
      %v5462 = vsel %vm5436, %v5429, %v4552
      %v5463 = vsel %vm5436, %v5430, %v4554
      %v5464 = vsel %vm5436, %v5431, %v4556
      %v5465 = vsel %vm5436, %v5432, %v4558
      %v5466 = vsel %vm5436, %v5433, %v4560
      %v5467 = vsel %vm5436, %v5434, %v4562
      %v5468 = vsel %vm5436, %v5435, %v4564
      %vm5469 = vcmask 654336
      %v5470 = vsel %vm5469, %v5437, %v4598
      %v5471 = vsel %vm5469, %v5438, %v4600
      %v5472 = vsel %vm5469, %v5439, %v4602
      %v5473 = vsel %vm5469, %v5440, %v4604
      %v5474 = vsel %vm5469, %v5441, %v4606
      %v5475 = vsel %vm5469, %v5442, %v4608
      %v5476 = vsel %vm5469, %v5443, %v4610
      %v5477 = vsel %vm5469, %v5444, %v4612
      %v5478 = vsel %vm5469, %v5445, %v4614
      %v5479 = vsel %vm5469, %v5446, %v4616
      %v5480 = vsel %vm5469, %v5447, %v4618
      %v5481 = vsel %vm5469, %v5448, %v4620
      %v5482 = vsel %vm5469, %v5449, %v4622
      %v5483 = vsel %vm5469, %v5450, %v4624
      %v5484 = vsel %vm5469, %v5451, %v4626
      %v5485 = vsel %vm5469, %v5452, %v4628
      %v5486 = vsel %vm5469, %v5453, %v4630
      %v5487 = vsel %vm5469, %v5454, %v4632
      %v5488 = vsel %vm5469, %v5455, %v4634
      %v5489 = vsel %vm5469, %v5456, %v4636
      %v5490 = vsel %vm5469, %v5457, %v4638
      %v5491 = vsel %vm5469, %v5458, %v4640
      %v5492 = vsel %vm5469, %v5459, %v4642
      %v5493 = vsel %vm5469, %v5460, %v4644
      %v5494 = vsel %vm5469, %v5461, %v4646
      %v5495 = vsel %vm5469, %v5462, %v4648
      %v5496 = vsel %vm5469, %v5463, %v4650
      %v5497 = vsel %vm5469, %v5464, %v4652
      %v5498 = vsel %vm5469, %v5465, %v4654
      %v5499 = vsel %vm5469, %v5466, %v4656
      %v5500 = vsel %vm5469, %v5467, %v4658
      %v5501 = vsel %vm5469, %v5468, %v4660
      %vm5502 = vcmask 719872
      %v5503 = vsel %vm5502, %v5470, %v4694
      %v5504 = vsel %vm5502, %v5471, %v4696
      %v5505 = vsel %vm5502, %v5472, %v4698
      %v5506 = vsel %vm5502, %v5473, %v4700
      %v5507 = vsel %vm5502, %v5474, %v4702
      %v5508 = vsel %vm5502, %v5475, %v4704
      %v5509 = vsel %vm5502, %v5476, %v4706
      %v5510 = vsel %vm5502, %v5477, %v4708
      %v5511 = vsel %vm5502, %v5478, %v4710
      %v5512 = vsel %vm5502, %v5479, %v4712
      %v5513 = vsel %vm5502, %v5480, %v4714
      %v5514 = vsel %vm5502, %v5481, %v4716
      %v5515 = vsel %vm5502, %v5482, %v4718
      %v5516 = vsel %vm5502, %v5483, %v4720
      %v5517 = vsel %vm5502, %v5484, %v4722
      %v5518 = vsel %vm5502, %v5485, %v4724
      %v5519 = vsel %vm5502, %v5486, %v4726
      %v5520 = vsel %vm5502, %v5487, %v4728
      %v5521 = vsel %vm5502, %v5488, %v4730
      %v5522 = vsel %vm5502, %v5489, %v4732
      %v5523 = vsel %vm5502, %v5490, %v4734
      %v5524 = vsel %vm5502, %v5491, %v4736
      %v5525 = vsel %vm5502, %v5492, %v4738
      %v5526 = vsel %vm5502, %v5493, %v4740
      %v5527 = vsel %vm5502, %v5494, %v4742
      %v5528 = vsel %vm5502, %v5495, %v4744
      %v5529 = vsel %vm5502, %v5496, %v4746
      %v5530 = vsel %vm5502, %v5497, %v4748
      %v5531 = vsel %vm5502, %v5498, %v4750
      %v5532 = vsel %vm5502, %v5499, %v4752
      %v5533 = vsel %vm5502, %v5500, %v4754
      %v5534 = vsel %vm5502, %v5501, %v4756
      %vm5535 = vcmask 785408
      %v5536 = vsel %vm5535, %v5503, %v4790
      %v5537 = vsel %vm5535, %v5504, %v4792
      %v5538 = vsel %vm5535, %v5505, %v4794
      %v5539 = vsel %vm5535, %v5506, %v4796
      %v5540 = vsel %vm5535, %v5507, %v4798
      %v5541 = vsel %vm5535, %v5508, %v4800
      %v5542 = vsel %vm5535, %v5509, %v4802
      %v5543 = vsel %vm5535, %v5510, %v4804
      %v5544 = vsel %vm5535, %v5511, %v4806
      %v5545 = vsel %vm5535, %v5512, %v4808
      %v5546 = vsel %vm5535, %v5513, %v4810
      %v5547 = vsel %vm5535, %v5514, %v4812
      %v5548 = vsel %vm5535, %v5515, %v4814
      %v5549 = vsel %vm5535, %v5516, %v4816
      %v5550 = vsel %vm5535, %v5517, %v4818
      %v5551 = vsel %vm5535, %v5518, %v4820
      %v5552 = vsel %vm5535, %v5519, %v4822
      %v5553 = vsel %vm5535, %v5520, %v4824
      %v5554 = vsel %vm5535, %v5521, %v4826
      %v5555 = vsel %vm5535, %v5522, %v4828
      %v5556 = vsel %vm5535, %v5523, %v4830
      %v5557 = vsel %vm5535, %v5524, %v4832
      %v5558 = vsel %vm5535, %v5525, %v4834
      %v5559 = vsel %vm5535, %v5526, %v4836
      %v5560 = vsel %vm5535, %v5527, %v4838
      %v5561 = vsel %vm5535, %v5528, %v4840
      %v5562 = vsel %vm5535, %v5529, %v4842
      %v5563 = vsel %vm5535, %v5530, %v4844
      %v5564 = vsel %vm5535, %v5531, %v4846
      %v5565 = vsel %vm5535, %v5532, %v4848
      %v5566 = vsel %vm5535, %v5533, %v4850
      %v5567 = vsel %vm5535, %v5534, %v4852
      %vm5568 = vcmask 850944
      %v5569 = vsel %vm5568, %v5536, %v4886
      %v5570 = vsel %vm5568, %v5537, %v4888
      %v5571 = vsel %vm5568, %v5538, %v4890
      %v5572 = vsel %vm5568, %v5539, %v4892
      %v5573 = vsel %vm5568, %v5540, %v4894
      %v5574 = vsel %vm5568, %v5541, %v4896
      %v5575 = vsel %vm5568, %v5542, %v4898
      %v5576 = vsel %vm5568, %v5543, %v4900
      %v5577 = vsel %vm5568, %v5544, %v4902
      %v5578 = vsel %vm5568, %v5545, %v4904
      %v5579 = vsel %vm5568, %v5546, %v4906
      %v5580 = vsel %vm5568, %v5547, %v4908
      %v5581 = vsel %vm5568, %v5548, %v4910
      %v5582 = vsel %vm5568, %v5549, %v4912
      %v5583 = vsel %vm5568, %v5550, %v4914
      %v5584 = vsel %vm5568, %v5551, %v4916
      %v5585 = vsel %vm5568, %v5552, %v4918
      %v5586 = vsel %vm5568, %v5553, %v4920
      %v5587 = vsel %vm5568, %v5554, %v4922
      %v5588 = vsel %vm5568, %v5555, %v4924
      %v5589 = vsel %vm5568, %v5556, %v4926
      %v5590 = vsel %vm5568, %v5557, %v4928
      %v5591 = vsel %vm5568, %v5558, %v4930
      %v5592 = vsel %vm5568, %v5559, %v4932
      %v5593 = vsel %vm5568, %v5560, %v4934
      %v5594 = vsel %vm5568, %v5561, %v4936
      %v5595 = vsel %vm5568, %v5562, %v4938
      %v5596 = vsel %vm5568, %v5563, %v4940
      %v5597 = vsel %vm5568, %v5564, %v4942
      %v5598 = vsel %vm5568, %v5565, %v4944
      %v5599 = vsel %vm5568, %v5566, %v4946
      %v5600 = vsel %vm5568, %v5567, %v4948
      %vm5601 = vcmask 916480
      %v5602 = vsel %vm5601, %v5569, %v4982
      %v5603 = vsel %vm5601, %v5570, %v4984
      %v5604 = vsel %vm5601, %v5571, %v4986
      %v5605 = vsel %vm5601, %v5572, %v4988
      %v5606 = vsel %vm5601, %v5573, %v4990
      %v5607 = vsel %vm5601, %v5574, %v4992
      %v5608 = vsel %vm5601, %v5575, %v4994
      %v5609 = vsel %vm5601, %v5576, %v4996
      %v5610 = vsel %vm5601, %v5577, %v4998
      %v5611 = vsel %vm5601, %v5578, %v5000
      %v5612 = vsel %vm5601, %v5579, %v5002
      %v5613 = vsel %vm5601, %v5580, %v5004
      %v5614 = vsel %vm5601, %v5581, %v5006
      %v5615 = vsel %vm5601, %v5582, %v5008
      %v5616 = vsel %vm5601, %v5583, %v5010
      %v5617 = vsel %vm5601, %v5584, %v5012
      %v5618 = vsel %vm5601, %v5585, %v5014
      %v5619 = vsel %vm5601, %v5586, %v5016
      %v5620 = vsel %vm5601, %v5587, %v5018
      %v5621 = vsel %vm5601, %v5588, %v5020
      %v5622 = vsel %vm5601, %v5589, %v5022
      %v5623 = vsel %vm5601, %v5590, %v5024
      %v5624 = vsel %vm5601, %v5591, %v5026
      %v5625 = vsel %vm5601, %v5592, %v5028
      %v5626 = vsel %vm5601, %v5593, %v5030
      %v5627 = vsel %vm5601, %v5594, %v5032
      %v5628 = vsel %vm5601, %v5595, %v5034
      %v5629 = vsel %vm5601, %v5596, %v5036
      %v5630 = vsel %vm5601, %v5597, %v5038
      %v5631 = vsel %vm5601, %v5598, %v5040
      %v5632 = vsel %vm5601, %v5599, %v5042
      %v5633 = vsel %vm5601, %v5600, %v5044
      %vm5634 = vcmask 982016
      %v5635 = vsel %vm5634, %v5602, %v5078
      %v5636 = vsel %vm5634, %v5603, %v5080
      %v5637 = vsel %vm5634, %v5604, %v5082
      %v5638 = vsel %vm5634, %v5605, %v5084
      %v5639 = vsel %vm5634, %v5606, %v5086
      %v5640 = vsel %vm5634, %v5607, %v5088
      %v5641 = vsel %vm5634, %v5608, %v5090
      %v5642 = vsel %vm5634, %v5609, %v5092
      %v5643 = vsel %vm5634, %v5610, %v5094
      %v5644 = vsel %vm5634, %v5611, %v5096
      %v5645 = vsel %vm5634, %v5612, %v5098
      %v5646 = vsel %vm5634, %v5613, %v5100
      %v5647 = vsel %vm5634, %v5614, %v5102
      %v5648 = vsel %vm5634, %v5615, %v5104
      %v5649 = vsel %vm5634, %v5616, %v5106
      %v5650 = vsel %vm5634, %v5617, %v5108
      %v5651 = vsel %vm5634, %v5618, %v5110
      %v5652 = vsel %vm5634, %v5619, %v5112
      %v5653 = vsel %vm5634, %v5620, %v5114
      %v5654 = vsel %vm5634, %v5621, %v5116
      %v5655 = vsel %vm5634, %v5622, %v5118
      %v5656 = vsel %vm5634, %v5623, %v5120
      %v5657 = vsel %vm5634, %v5624, %v5122
      %v5658 = vsel %vm5634, %v5625, %v5124
      %v5659 = vsel %vm5634, %v5626, %v5126
      %v5660 = vsel %vm5634, %v5627, %v5128
      %v5661 = vsel %vm5634, %v5628, %v5130
      %v5662 = vsel %vm5634, %v5629, %v5132
      %v5663 = vsel %vm5634, %v5630, %v5134
      %v5664 = vsel %vm5634, %v5631, %v5136
      %v5665 = vsel %vm5634, %v5632, %v5138
      %v5666 = vsel %vm5634, %v5633, %v5140
      %v5667 = vmul.f32 %v3665, %v2301
      %v5668 = vmul.f32 %v3666, %v2302
      %v5669 = vmul.f32 %v3667, %v2303
      %v5670 = vmul.f32 %v3668, %v2304
      %v5671 = vmul.f32 %v3669, %v2305
      %v5672 = vmul.f32 %v3670, %v2306
      %v5673 = vmul.f32 %v3671, %v2307
      %v5674 = vmul.f32 %v3672, %v2308
      %v5675 = vmul.f32 %v3673, %v2309
      %v5676 = vmul.f32 %v3674, %v2310
      %v5677 = vmul.f32 %v3675, %v2311
      %v5678 = vmul.f32 %v3676, %v2312
      %v5679 = vmul.f32 %v3677, %v2313
      %v5680 = vmul.f32 %v3678, %v2314
      %v5681 = vmul.f32 %v3679, %v2315
      %v5682 = vmul.f32 %v3680, %v2316
      %v5683 = vmul.f32 %v3681, %v2317
      %v5684 = vmul.f32 %v3682, %v2318
      %v5685 = vmul.f32 %v3683, %v2319
      %v5686 = vmul.f32 %v3684, %v2320
      %v5687 = vmul.f32 %v3685, %v2321
      %v5688 = vmul.f32 %v3686, %v2322
      %v5689 = vmul.f32 %v3687, %v2323
      %v5690 = vmul.f32 %v3688, %v2324
      %v5691 = vmul.f32 %v3689, %v2325
      %v5692 = vmul.f32 %v3690, %v2326
      %v5693 = vmul.f32 %v3691, %v2327
      %v5694 = vmul.f32 %v3692, %v2328
      %v5695 = vmul.f32 %v3693, %v2329
      %v5696 = vmul.f32 %v3694, %v2330
      %v5697 = vmul.f32 %v3695, %v2331
      %v5698 = vmul.f32 %v3696, %v2332
      %5731 = vrot.lane.b32.xlu0 %v5667, 8
      %v5732 = vpop.permute.xlu0 %5731
      %5733 = vrot.lane.b32.xlu0 %v5668, 8
      %v5734 = vpop.permute.xlu0 %5733
      %5735 = vrot.lane.b32.xlu0 %v5669, 8
      %v5736 = vpop.permute.xlu0 %5735
      %5737 = vrot.lane.b32.xlu0 %v5670, 8
      %v5738 = vpop.permute.xlu0 %5737
      %5739 = vrot.lane.b32.xlu0 %v5671, 8
      %v5740 = vpop.permute.xlu0 %5739
      %5741 = vrot.lane.b32.xlu0 %v5672, 8
      %v5742 = vpop.permute.xlu0 %5741
      %5743 = vrot.lane.b32.xlu0 %v5673, 8
      %v5744 = vpop.permute.xlu0 %5743
      %5745 = vrot.lane.b32.xlu0 %v5674, 8
      %v5746 = vpop.permute.xlu0 %5745
      %5747 = vrot.lane.b32.xlu0 %v5675, 8
      %v5748 = vpop.permute.xlu0 %5747
      %5749 = vrot.lane.b32.xlu0 %v5676, 8
      %v5750 = vpop.permute.xlu0 %5749
      %5751 = vrot.lane.b32.xlu0 %v5677, 8
      %v5752 = vpop.permute.xlu0 %5751
      %5753 = vrot.lane.b32.xlu0 %v5678, 8
      %v5754 = vpop.permute.xlu0 %5753
      %5755 = vrot.lane.b32.xlu0 %v5679, 8
      %v5756 = vpop.permute.xlu0 %5755
      %5757 = vrot.lane.b32.xlu0 %v5680, 8
      %v5758 = vpop.permute.xlu0 %5757
      %5759 = vrot.lane.b32.xlu0 %v5681, 8
      %v5760 = vpop.permute.xlu0 %5759
      %5761 = vrot.lane.b32.xlu0 %v5682, 8
      %v5762 = vpop.permute.xlu0 %5761
      %5763 = vrot.lane.b32.xlu0 %v5683, 8
      %v5764 = vpop.permute.xlu0 %5763
      %5765 = vrot.lane.b32.xlu0 %v5684, 8
      %v5766 = vpop.permute.xlu0 %5765
      %5767 = vrot.lane.b32.xlu0 %v5685, 8
      %v5768 = vpop.permute.xlu0 %5767
      %5769 = vrot.lane.b32.xlu0 %v5686, 8
      %v5770 = vpop.permute.xlu0 %5769
      %5771 = vrot.lane.b32.xlu0 %v5687, 8
      %v5772 = vpop.permute.xlu0 %5771
      %5773 = vrot.lane.b32.xlu0 %v5688, 8
      %v5774 = vpop.permute.xlu0 %5773
      %5775 = vrot.lane.b32.xlu0 %v5689, 8
      %v5776 = vpop.permute.xlu0 %5775
      %5777 = vrot.lane.b32.xlu0 %v5690, 8
      %v5778 = vpop.permute.xlu0 %5777
      %5779 = vrot.lane.b32.xlu0 %v5691, 8
      %v5780 = vpop.permute.xlu0 %5779
      %5781 = vrot.lane.b32.xlu0 %v5692, 8
      %v5782 = vpop.permute.xlu0 %5781
      %5783 = vrot.lane.b32.xlu0 %v5693, 8
      %v5784 = vpop.permute.xlu0 %5783
      %5785 = vrot.lane.b32.xlu0 %v5694, 8
      %v5786 = vpop.permute.xlu0 %5785
      %5787 = vrot.lane.b32.xlu0 %v5695, 8
      %v5788 = vpop.permute.xlu0 %5787
      %5789 = vrot.lane.b32.xlu0 %v5696, 8
      %v5790 = vpop.permute.xlu0 %5789
      %5791 = vrot.lane.b32.xlu0 %v5697, 8
      %v5792 = vpop.permute.xlu0 %5791
      %5793 = vrot.lane.b32.xlu0 %v5698, 8
      %v5794 = vpop.permute.xlu0 %5793
      %5827 = vrot.lane.b32.xlu0 %v5667, 16
      %v5828 = vpop.permute.xlu0 %5827
      %5829 = vrot.lane.b32.xlu0 %v5668, 16
      %v5830 = vpop.permute.xlu0 %5829
      %5831 = vrot.lane.b32.xlu0 %v5669, 16
      %v5832 = vpop.permute.xlu0 %5831
      %5833 = vrot.lane.b32.xlu0 %v5670, 16
      %v5834 = vpop.permute.xlu0 %5833
      %5835 = vrot.lane.b32.xlu0 %v5671, 16
      %v5836 = vpop.permute.xlu0 %5835
      %5837 = vrot.lane.b32.xlu0 %v5672, 16
      %v5838 = vpop.permute.xlu0 %5837
      %5839 = vrot.lane.b32.xlu0 %v5673, 16
      %v5840 = vpop.permute.xlu0 %5839
      %5841 = vrot.lane.b32.xlu0 %v5674, 16
      %v5842 = vpop.permute.xlu0 %5841
      %5843 = vrot.lane.b32.xlu0 %v5675, 16
      %v5844 = vpop.permute.xlu0 %5843
      %5845 = vrot.lane.b32.xlu0 %v5676, 16
      %v5846 = vpop.permute.xlu0 %5845
      %5847 = vrot.lane.b32.xlu0 %v5677, 16
      %v5848 = vpop.permute.xlu0 %5847
      %5849 = vrot.lane.b32.xlu0 %v5678, 16
      %v5850 = vpop.permute.xlu0 %5849
      %5851 = vrot.lane.b32.xlu0 %v5679, 16
      %v5852 = vpop.permute.xlu0 %5851
      %5853 = vrot.lane.b32.xlu0 %v5680, 16
      %v5854 = vpop.permute.xlu0 %5853
      %5855 = vrot.lane.b32.xlu0 %v5681, 16
      %v5856 = vpop.permute.xlu0 %5855
      %5857 = vrot.lane.b32.xlu0 %v5682, 16
      %v5858 = vpop.permute.xlu0 %5857
      %5859 = vrot.lane.b32.xlu0 %v5683, 16
      %v5860 = vpop.permute.xlu0 %5859
      %5861 = vrot.lane.b32.xlu0 %v5684, 16
      %v5862 = vpop.permute.xlu0 %5861
      %5863 = vrot.lane.b32.xlu0 %v5685, 16
      %v5864 = vpop.permute.xlu0 %5863
      %5865 = vrot.lane.b32.xlu0 %v5686, 16
      %v5866 = vpop.permute.xlu0 %5865
      %5867 = vrot.lane.b32.xlu0 %v5687, 16
      %v5868 = vpop.permute.xlu0 %5867
      %5869 = vrot.lane.b32.xlu0 %v5688, 16
      %v5870 = vpop.permute.xlu0 %5869
      %5871 = vrot.lane.b32.xlu0 %v5689, 16
      %v5872 = vpop.permute.xlu0 %5871
      %5873 = vrot.lane.b32.xlu0 %v5690, 16
      %v5874 = vpop.permute.xlu0 %5873
      %5875 = vrot.lane.b32.xlu0 %v5691, 16
      %v5876 = vpop.permute.xlu0 %5875
      %5877 = vrot.lane.b32.xlu0 %v5692, 16
      %v5878 = vpop.permute.xlu0 %5877
      %5879 = vrot.lane.b32.xlu0 %v5693, 16
      %v5880 = vpop.permute.xlu0 %5879
      %5881 = vrot.lane.b32.xlu0 %v5694, 16
      %v5882 = vpop.permute.xlu0 %5881
      %5883 = vrot.lane.b32.xlu0 %v5695, 16
      %v5884 = vpop.permute.xlu0 %5883
      %5885 = vrot.lane.b32.xlu0 %v5696, 16
      %v5886 = vpop.permute.xlu0 %5885
      %5887 = vrot.lane.b32.xlu0 %v5697, 16
      %v5888 = vpop.permute.xlu0 %5887
      %5889 = vrot.lane.b32.xlu0 %v5698, 16
      %v5890 = vpop.permute.xlu0 %5889
      %5923 = vrot.lane.b32.xlu0 %v5667, 24
      %v5924 = vpop.permute.xlu0 %5923
      %5925 = vrot.lane.b32.xlu0 %v5668, 24
      %v5926 = vpop.permute.xlu0 %5925
      %5927 = vrot.lane.b32.xlu0 %v5669, 24
      %v5928 = vpop.permute.xlu0 %5927
      %5929 = vrot.lane.b32.xlu0 %v5670, 24
      %v5930 = vpop.permute.xlu0 %5929
      %5931 = vrot.lane.b32.xlu0 %v5671, 24
      %v5932 = vpop.permute.xlu0 %5931
      %5933 = vrot.lane.b32.xlu0 %v5672, 24
      %v5934 = vpop.permute.xlu0 %5933
      %5935 = vrot.lane.b32.xlu0 %v5673, 24
      %v5936 = vpop.permute.xlu0 %5935
      %5937 = vrot.lane.b32.xlu0 %v5674, 24
      %v5938 = vpop.permute.xlu0 %5937
      %5939 = vrot.lane.b32.xlu0 %v5675, 24
      %v5940 = vpop.permute.xlu0 %5939
      %5941 = vrot.lane.b32.xlu0 %v5676, 24
      %v5942 = vpop.permute.xlu0 %5941
      %5943 = vrot.lane.b32.xlu0 %v5677, 24
      %v5944 = vpop.permute.xlu0 %5943
      %5945 = vrot.lane.b32.xlu0 %v5678, 24
      %v5946 = vpop.permute.xlu0 %5945
      %5947 = vrot.lane.b32.xlu0 %v5679, 24
      %v5948 = vpop.permute.xlu0 %5947
      %5949 = vrot.lane.b32.xlu0 %v5680, 24
      %v5950 = vpop.permute.xlu0 %5949
      %5951 = vrot.lane.b32.xlu0 %v5681, 24
      %v5952 = vpop.permute.xlu0 %5951
      %5953 = vrot.lane.b32.xlu0 %v5682, 24
      %v5954 = vpop.permute.xlu0 %5953
      %5955 = vrot.lane.b32.xlu0 %v5683, 24
      %v5956 = vpop.permute.xlu0 %5955
      %5957 = vrot.lane.b32.xlu0 %v5684, 24
      %v5958 = vpop.permute.xlu0 %5957
      %5959 = vrot.lane.b32.xlu0 %v5685, 24
      %v5960 = vpop.permute.xlu0 %5959
      %5961 = vrot.lane.b32.xlu0 %v5686, 24
      %v5962 = vpop.permute.xlu0 %5961
      %5963 = vrot.lane.b32.xlu0 %v5687, 24
      %v5964 = vpop.permute.xlu0 %5963
      %5965 = vrot.lane.b32.xlu0 %v5688, 24
      %v5966 = vpop.permute.xlu0 %5965
      %5967 = vrot.lane.b32.xlu0 %v5689, 24
      %v5968 = vpop.permute.xlu0 %5967
      %5969 = vrot.lane.b32.xlu0 %v5690, 24
      %v5970 = vpop.permute.xlu0 %5969
      %5971 = vrot.lane.b32.xlu0 %v5691, 24
      %v5972 = vpop.permute.xlu0 %5971
      %5973 = vrot.lane.b32.xlu0 %v5692, 24
      %v5974 = vpop.permute.xlu0 %5973
      %5975 = vrot.lane.b32.xlu0 %v5693, 24
      %v5976 = vpop.permute.xlu0 %5975
      %5977 = vrot.lane.b32.xlu0 %v5694, 24
      %v5978 = vpop.permute.xlu0 %5977
      %5979 = vrot.lane.b32.xlu0 %v5695, 24
      %v5980 = vpop.permute.xlu0 %5979
      %5981 = vrot.lane.b32.xlu0 %v5696, 24
      %v5982 = vpop.permute.xlu0 %5981
      %5983 = vrot.lane.b32.xlu0 %v5697, 24
      %v5984 = vpop.permute.xlu0 %5983
      %5985 = vrot.lane.b32.xlu0 %v5698, 24
      %v5986 = vpop.permute.xlu0 %5985
      %6019 = vrot.lane.b32.xlu0 %v5667, 32
      %v6020 = vpop.permute.xlu0 %6019
      %6021 = vrot.lane.b32.xlu0 %v5668, 32
      %v6022 = vpop.permute.xlu0 %6021
      %6023 = vrot.lane.b32.xlu0 %v5669, 32
      %v6024 = vpop.permute.xlu0 %6023
      %6025 = vrot.lane.b32.xlu0 %v5670, 32
      %v6026 = vpop.permute.xlu0 %6025
      %6027 = vrot.lane.b32.xlu0 %v5671, 32
      %v6028 = vpop.permute.xlu0 %6027
      %6029 = vrot.lane.b32.xlu0 %v5672, 32
      %v6030 = vpop.permute.xlu0 %6029
      %6031 = vrot.lane.b32.xlu0 %v5673, 32
      %v6032 = vpop.permute.xlu0 %6031
      %6033 = vrot.lane.b32.xlu0 %v5674, 32
      %v6034 = vpop.permute.xlu0 %6033
      %6035 = vrot.lane.b32.xlu0 %v5675, 32
      %v6036 = vpop.permute.xlu0 %6035
      %6037 = vrot.lane.b32.xlu0 %v5676, 32
      %v6038 = vpop.permute.xlu0 %6037
      %6039 = vrot.lane.b32.xlu0 %v5677, 32
      %v6040 = vpop.permute.xlu0 %6039
      %6041 = vrot.lane.b32.xlu0 %v5678, 32
      %v6042 = vpop.permute.xlu0 %6041
      %6043 = vrot.lane.b32.xlu0 %v5679, 32
      %v6044 = vpop.permute.xlu0 %6043
      %6045 = vrot.lane.b32.xlu0 %v5680, 32
      %v6046 = vpop.permute.xlu0 %6045
      %6047 = vrot.lane.b32.xlu0 %v5681, 32
      %v6048 = vpop.permute.xlu0 %6047
      %6049 = vrot.lane.b32.xlu0 %v5682, 32
      %v6050 = vpop.permute.xlu0 %6049
      %6051 = vrot.lane.b32.xlu0 %v5683, 32
      %v6052 = vpop.permute.xlu0 %6051
      %6053 = vrot.lane.b32.xlu0 %v5684, 32
      %v6054 = vpop.permute.xlu0 %6053
      %6055 = vrot.lane.b32.xlu0 %v5685, 32
      %v6056 = vpop.permute.xlu0 %6055
      %6057 = vrot.lane.b32.xlu0 %v5686, 32
      %v6058 = vpop.permute.xlu0 %6057
      %6059 = vrot.lane.b32.xlu0 %v5687, 32
      %v6060 = vpop.permute.xlu0 %6059
      %6061 = vrot.lane.b32.xlu0 %v5688, 32
      %v6062 = vpop.permute.xlu0 %6061
      %6063 = vrot.lane.b32.xlu0 %v5689, 32
      %v6064 = vpop.permute.xlu0 %6063
      %6065 = vrot.lane.b32.xlu0 %v5690, 32
      %v6066 = vpop.permute.xlu0 %6065
      %6067 = vrot.lane.b32.xlu0 %v5691, 32
      %v6068 = vpop.permute.xlu0 %6067
      %6069 = vrot.lane.b32.xlu0 %v5692, 32
      %v6070 = vpop.permute.xlu0 %6069
      %6071 = vrot.lane.b32.xlu0 %v5693, 32
      %v6072 = vpop.permute.xlu0 %6071
      %6073 = vrot.lane.b32.xlu0 %v5694, 32
      %v6074 = vpop.permute.xlu0 %6073
      %6075 = vrot.lane.b32.xlu0 %v5695, 32
      %v6076 = vpop.permute.xlu0 %6075
      %6077 = vrot.lane.b32.xlu0 %v5696, 32
      %v6078 = vpop.permute.xlu0 %6077
      %6079 = vrot.lane.b32.xlu0 %v5697, 32
      %v6080 = vpop.permute.xlu0 %6079
      %6081 = vrot.lane.b32.xlu0 %v5698, 32
      %v6082 = vpop.permute.xlu0 %6081
      %6115 = vrot.lane.b32.xlu0 %v5667, 40
      %v6116 = vpop.permute.xlu0 %6115
      %6117 = vrot.lane.b32.xlu0 %v5668, 40
      %v6118 = vpop.permute.xlu0 %6117
      %6119 = vrot.lane.b32.xlu0 %v5669, 40
      %v6120 = vpop.permute.xlu0 %6119
      %6121 = vrot.lane.b32.xlu0 %v5670, 40
      %v6122 = vpop.permute.xlu0 %6121
      %6123 = vrot.lane.b32.xlu0 %v5671, 40
      %v6124 = vpop.permute.xlu0 %6123
      %6125 = vrot.lane.b32.xlu0 %v5672, 40
      %v6126 = vpop.permute.xlu0 %6125
      %6127 = vrot.lane.b32.xlu0 %v5673, 40
      %v6128 = vpop.permute.xlu0 %6127
      %6129 = vrot.lane.b32.xlu0 %v5674, 40
      %v6130 = vpop.permute.xlu0 %6129
      %6131 = vrot.lane.b32.xlu0 %v5675, 40
      %v6132 = vpop.permute.xlu0 %6131
      %6133 = vrot.lane.b32.xlu0 %v5676, 40
      %v6134 = vpop.permute.xlu0 %6133
      %6135 = vrot.lane.b32.xlu0 %v5677, 40
      %v6136 = vpop.permute.xlu0 %6135
      %6137 = vrot.lane.b32.xlu0 %v5678, 40
      %v6138 = vpop.permute.xlu0 %6137
      %6139 = vrot.lane.b32.xlu0 %v5679, 40
      %v6140 = vpop.permute.xlu0 %6139
      %6141 = vrot.lane.b32.xlu0 %v5680, 40
      %v6142 = vpop.permute.xlu0 %6141
      %6143 = vrot.lane.b32.xlu0 %v5681, 40
      %v6144 = vpop.permute.xlu0 %6143
      %6145 = vrot.lane.b32.xlu0 %v5682, 40
      %v6146 = vpop.permute.xlu0 %6145
      %6147 = vrot.lane.b32.xlu0 %v5683, 40
      %v6148 = vpop.permute.xlu0 %6147
      %6149 = vrot.lane.b32.xlu0 %v5684, 40
      %v6150 = vpop.permute.xlu0 %6149
      %6151 = vrot.lane.b32.xlu0 %v5685, 40
      %v6152 = vpop.permute.xlu0 %6151
      %6153 = vrot.lane.b32.xlu0 %v5686, 40
      %v6154 = vpop.permute.xlu0 %6153
      %6155 = vrot.lane.b32.xlu0 %v5687, 40
      %v6156 = vpop.permute.xlu0 %6155
      %6157 = vrot.lane.b32.xlu0 %v5688, 40
      %v6158 = vpop.permute.xlu0 %6157
      %6159 = vrot.lane.b32.xlu0 %v5689, 40
      %v6160 = vpop.permute.xlu0 %6159
      %6161 = vrot.lane.b32.xlu0 %v5690, 40
      %v6162 = vpop.permute.xlu0 %6161
      %6163 = vrot.lane.b32.xlu0 %v5691, 40
      %v6164 = vpop.permute.xlu0 %6163
      %6165 = vrot.lane.b32.xlu0 %v5692, 40
      %v6166 = vpop.permute.xlu0 %6165
      %6167 = vrot.lane.b32.xlu0 %v5693, 40
      %v6168 = vpop.permute.xlu0 %6167
      %6169 = vrot.lane.b32.xlu0 %v5694, 40
      %v6170 = vpop.permute.xlu0 %6169
      %6171 = vrot.lane.b32.xlu0 %v5695, 40
      %v6172 = vpop.permute.xlu0 %6171
      %6173 = vrot.lane.b32.xlu0 %v5696, 40
      %v6174 = vpop.permute.xlu0 %6173
      %6175 = vrot.lane.b32.xlu0 %v5697, 40
      %v6176 = vpop.permute.xlu0 %6175
      %6177 = vrot.lane.b32.xlu0 %v5698, 40
      %v6178 = vpop.permute.xlu0 %6177
      %6211 = vrot.lane.b32.xlu0 %v5667, 48
      %v6212 = vpop.permute.xlu0 %6211
      %6213 = vrot.lane.b32.xlu0 %v5668, 48
      %v6214 = vpop.permute.xlu0 %6213
      %6215 = vrot.lane.b32.xlu0 %v5669, 48
      %v6216 = vpop.permute.xlu0 %6215
      %6217 = vrot.lane.b32.xlu0 %v5670, 48
      %v6218 = vpop.permute.xlu0 %6217
      %6219 = vrot.lane.b32.xlu0 %v5671, 48
      %v6220 = vpop.permute.xlu0 %6219
      %6221 = vrot.lane.b32.xlu0 %v5672, 48
      %v6222 = vpop.permute.xlu0 %6221
      %6223 = vrot.lane.b32.xlu0 %v5673, 48
      %v6224 = vpop.permute.xlu0 %6223
      %6225 = vrot.lane.b32.xlu0 %v5674, 48
      %v6226 = vpop.permute.xlu0 %6225
      %6227 = vrot.lane.b32.xlu0 %v5675, 48
      %v6228 = vpop.permute.xlu0 %6227
      %6229 = vrot.lane.b32.xlu0 %v5676, 48
      %v6230 = vpop.permute.xlu0 %6229
      %6231 = vrot.lane.b32.xlu0 %v5677, 48
      %v6232 = vpop.permute.xlu0 %6231
      %6233 = vrot.lane.b32.xlu0 %v5678, 48
      %v6234 = vpop.permute.xlu0 %6233
      %6235 = vrot.lane.b32.xlu0 %v5679, 48
      %v6236 = vpop.permute.xlu0 %6235
      %6237 = vrot.lane.b32.xlu0 %v5680, 48
      %v6238 = vpop.permute.xlu0 %6237
      %6239 = vrot.lane.b32.xlu0 %v5681, 48
      %v6240 = vpop.permute.xlu0 %6239
      %6241 = vrot.lane.b32.xlu0 %v5682, 48
      %v6242 = vpop.permute.xlu0 %6241
      %6243 = vrot.lane.b32.xlu0 %v5683, 48
      %v6244 = vpop.permute.xlu0 %6243
      %6245 = vrot.lane.b32.xlu0 %v5684, 48
      %v6246 = vpop.permute.xlu0 %6245
      %6247 = vrot.lane.b32.xlu0 %v5685, 48
      %v6248 = vpop.permute.xlu0 %6247
      %6249 = vrot.lane.b32.xlu0 %v5686, 48
      %v6250 = vpop.permute.xlu0 %6249
      %6251 = vrot.lane.b32.xlu0 %v5687, 48
      %v6252 = vpop.permute.xlu0 %6251
      %6253 = vrot.lane.b32.xlu0 %v5688, 48
      %v6254 = vpop.permute.xlu0 %6253
      %6255 = vrot.lane.b32.xlu0 %v5689, 48
      %v6256 = vpop.permute.xlu0 %6255
      %6257 = vrot.lane.b32.xlu0 %v5690, 48
      %v6258 = vpop.permute.xlu0 %6257
      %6259 = vrot.lane.b32.xlu0 %v5691, 48
      %v6260 = vpop.permute.xlu0 %6259
      %6261 = vrot.lane.b32.xlu0 %v5692, 48
      %v6262 = vpop.permute.xlu0 %6261
      %6263 = vrot.lane.b32.xlu0 %v5693, 48
      %v6264 = vpop.permute.xlu0 %6263
      %6265 = vrot.lane.b32.xlu0 %v5694, 48
      %v6266 = vpop.permute.xlu0 %6265
      %6267 = vrot.lane.b32.xlu0 %v5695, 48
      %v6268 = vpop.permute.xlu0 %6267
      %6269 = vrot.lane.b32.xlu0 %v5696, 48
      %v6270 = vpop.permute.xlu0 %6269
      %6271 = vrot.lane.b32.xlu0 %v5697, 48
      %v6272 = vpop.permute.xlu0 %6271
      %6273 = vrot.lane.b32.xlu0 %v5698, 48
      %v6274 = vpop.permute.xlu0 %6273
      %6307 = vrot.lane.b32.xlu0 %v5667, 56
      %v6308 = vpop.permute.xlu0 %6307
      %6309 = vrot.lane.b32.xlu0 %v5668, 56
      %v6310 = vpop.permute.xlu0 %6309
      %6311 = vrot.lane.b32.xlu0 %v5669, 56
      %v6312 = vpop.permute.xlu0 %6311
      %6313 = vrot.lane.b32.xlu0 %v5670, 56
      %v6314 = vpop.permute.xlu0 %6313
      %6315 = vrot.lane.b32.xlu0 %v5671, 56
      %v6316 = vpop.permute.xlu0 %6315
      %6317 = vrot.lane.b32.xlu0 %v5672, 56
      %v6318 = vpop.permute.xlu0 %6317
      %6319 = vrot.lane.b32.xlu0 %v5673, 56
      %v6320 = vpop.permute.xlu0 %6319
      %6321 = vrot.lane.b32.xlu0 %v5674, 56
      %v6322 = vpop.permute.xlu0 %6321
      %6323 = vrot.lane.b32.xlu0 %v5675, 56
      %v6324 = vpop.permute.xlu0 %6323
      %6325 = vrot.lane.b32.xlu0 %v5676, 56
      %v6326 = vpop.permute.xlu0 %6325
      %6327 = vrot.lane.b32.xlu0 %v5677, 56
      %v6328 = vpop.permute.xlu0 %6327
      %6329 = vrot.lane.b32.xlu0 %v5678, 56
      %v6330 = vpop.permute.xlu0 %6329
      %6331 = vrot.lane.b32.xlu0 %v5679, 56
      %v6332 = vpop.permute.xlu0 %6331
      %6333 = vrot.lane.b32.xlu0 %v5680, 56
      %v6334 = vpop.permute.xlu0 %6333
      %6335 = vrot.lane.b32.xlu0 %v5681, 56
      %v6336 = vpop.permute.xlu0 %6335
      %6337 = vrot.lane.b32.xlu0 %v5682, 56
      %v6338 = vpop.permute.xlu0 %6337
      %6339 = vrot.lane.b32.xlu0 %v5683, 56
      %v6340 = vpop.permute.xlu0 %6339
      %6341 = vrot.lane.b32.xlu0 %v5684, 56
      %v6342 = vpop.permute.xlu0 %6341
      %6343 = vrot.lane.b32.xlu0 %v5685, 56
      %v6344 = vpop.permute.xlu0 %6343
      %6345 = vrot.lane.b32.xlu0 %v5686, 56
      %v6346 = vpop.permute.xlu0 %6345
      %6347 = vrot.lane.b32.xlu0 %v5687, 56
      %v6348 = vpop.permute.xlu0 %6347
      %6349 = vrot.lane.b32.xlu0 %v5688, 56
      %v6350 = vpop.permute.xlu0 %6349
      %6351 = vrot.lane.b32.xlu0 %v5689, 56
      %v6352 = vpop.permute.xlu0 %6351
      %6353 = vrot.lane.b32.xlu0 %v5690, 56
      %v6354 = vpop.permute.xlu0 %6353
      %6355 = vrot.lane.b32.xlu0 %v5691, 56
      %v6356 = vpop.permute.xlu0 %6355
      %6357 = vrot.lane.b32.xlu0 %v5692, 56
      %v6358 = vpop.permute.xlu0 %6357
      %6359 = vrot.lane.b32.xlu0 %v5693, 56
      %v6360 = vpop.permute.xlu0 %6359
      %6361 = vrot.lane.b32.xlu0 %v5694, 56
      %v6362 = vpop.permute.xlu0 %6361
      %6363 = vrot.lane.b32.xlu0 %v5695, 56
      %v6364 = vpop.permute.xlu0 %6363
      %6365 = vrot.lane.b32.xlu0 %v5696, 56
      %v6366 = vpop.permute.xlu0 %6365
      %6367 = vrot.lane.b32.xlu0 %v5697, 56
      %v6368 = vpop.permute.xlu0 %6367
      %6369 = vrot.lane.b32.xlu0 %v5698, 56
      %v6370 = vpop.permute.xlu0 %6369
      %6403 = vrot.lane.b32.xlu0 %v5667, 64
      %v6404 = vpop.permute.xlu0 %6403
      %6405 = vrot.lane.b32.xlu0 %v5668, 64
      %v6406 = vpop.permute.xlu0 %6405
      %6407 = vrot.lane.b32.xlu0 %v5669, 64
      %v6408 = vpop.permute.xlu0 %6407
      %6409 = vrot.lane.b32.xlu0 %v5670, 64
      %v6410 = vpop.permute.xlu0 %6409
      %6411 = vrot.lane.b32.xlu0 %v5671, 64
      %v6412 = vpop.permute.xlu0 %6411
      %6413 = vrot.lane.b32.xlu0 %v5672, 64
      %v6414 = vpop.permute.xlu0 %6413
      %6415 = vrot.lane.b32.xlu0 %v5673, 64
      %v6416 = vpop.permute.xlu0 %6415
      %6417 = vrot.lane.b32.xlu0 %v5674, 64
      %v6418 = vpop.permute.xlu0 %6417
      %6419 = vrot.lane.b32.xlu0 %v5675, 64
      %v6420 = vpop.permute.xlu0 %6419
      %6421 = vrot.lane.b32.xlu0 %v5676, 64
      %v6422 = vpop.permute.xlu0 %6421
      %6423 = vrot.lane.b32.xlu0 %v5677, 64
      %v6424 = vpop.permute.xlu0 %6423
      %6425 = vrot.lane.b32.xlu0 %v5678, 64
      %v6426 = vpop.permute.xlu0 %6425
      %6427 = vrot.lane.b32.xlu0 %v5679, 64
      %v6428 = vpop.permute.xlu0 %6427
      %6429 = vrot.lane.b32.xlu0 %v5680, 64
      %v6430 = vpop.permute.xlu0 %6429
      %6431 = vrot.lane.b32.xlu0 %v5681, 64
      %v6432 = vpop.permute.xlu0 %6431
      %6433 = vrot.lane.b32.xlu0 %v5682, 64
      %v6434 = vpop.permute.xlu0 %6433
      %6435 = vrot.lane.b32.xlu0 %v5683, 64
      %v6436 = vpop.permute.xlu0 %6435
      %6437 = vrot.lane.b32.xlu0 %v5684, 64
      %v6438 = vpop.permute.xlu0 %6437
      %6439 = vrot.lane.b32.xlu0 %v5685, 64
      %v6440 = vpop.permute.xlu0 %6439
      %6441 = vrot.lane.b32.xlu0 %v5686, 64
      %v6442 = vpop.permute.xlu0 %6441
      %6443 = vrot.lane.b32.xlu0 %v5687, 64
      %v6444 = vpop.permute.xlu0 %6443
      %6445 = vrot.lane.b32.xlu0 %v5688, 64
      %v6446 = vpop.permute.xlu0 %6445
      %6447 = vrot.lane.b32.xlu0 %v5689, 64
      %v6448 = vpop.permute.xlu0 %6447
      %6449 = vrot.lane.b32.xlu0 %v5690, 64
      %v6450 = vpop.permute.xlu0 %6449
      %6451 = vrot.lane.b32.xlu0 %v5691, 64
      %v6452 = vpop.permute.xlu0 %6451
      %6453 = vrot.lane.b32.xlu0 %v5692, 64
      %v6454 = vpop.permute.xlu0 %6453
      %6455 = vrot.lane.b32.xlu0 %v5693, 64
      %v6456 = vpop.permute.xlu0 %6455
      %6457 = vrot.lane.b32.xlu0 %v5694, 64
      %v6458 = vpop.permute.xlu0 %6457
      %6459 = vrot.lane.b32.xlu0 %v5695, 64
      %v6460 = vpop.permute.xlu0 %6459
      %6461 = vrot.lane.b32.xlu0 %v5696, 64
      %v6462 = vpop.permute.xlu0 %6461
      %6463 = vrot.lane.b32.xlu0 %v5697, 64
      %v6464 = vpop.permute.xlu0 %6463
      %6465 = vrot.lane.b32.xlu0 %v5698, 64
      %v6466 = vpop.permute.xlu0 %6465
      %6499 = vrot.lane.b32.xlu0 %v5667, 72
      %v6500 = vpop.permute.xlu0 %6499
      %6501 = vrot.lane.b32.xlu0 %v5668, 72
      %v6502 = vpop.permute.xlu0 %6501
      %6503 = vrot.lane.b32.xlu0 %v5669, 72
      %v6504 = vpop.permute.xlu0 %6503
      %6505 = vrot.lane.b32.xlu0 %v5670, 72
      %v6506 = vpop.permute.xlu0 %6505
      %6507 = vrot.lane.b32.xlu0 %v5671, 72
      %v6508 = vpop.permute.xlu0 %6507
      %6509 = vrot.lane.b32.xlu0 %v5672, 72
      %v6510 = vpop.permute.xlu0 %6509
      %6511 = vrot.lane.b32.xlu0 %v5673, 72
      %v6512 = vpop.permute.xlu0 %6511
      %6513 = vrot.lane.b32.xlu0 %v5674, 72
      %v6514 = vpop.permute.xlu0 %6513
      %6515 = vrot.lane.b32.xlu0 %v5675, 72
      %v6516 = vpop.permute.xlu0 %6515
      %6517 = vrot.lane.b32.xlu0 %v5676, 72
      %v6518 = vpop.permute.xlu0 %6517
      %6519 = vrot.lane.b32.xlu0 %v5677, 72
      %v6520 = vpop.permute.xlu0 %6519
      %6521 = vrot.lane.b32.xlu0 %v5678, 72
      %v6522 = vpop.permute.xlu0 %6521
      %6523 = vrot.lane.b32.xlu0 %v5679, 72
      %v6524 = vpop.permute.xlu0 %6523
      %6525 = vrot.lane.b32.xlu0 %v5680, 72
      %v6526 = vpop.permute.xlu0 %6525
      %6527 = vrot.lane.b32.xlu0 %v5681, 72
      %v6528 = vpop.permute.xlu0 %6527
      %6529 = vrot.lane.b32.xlu0 %v5682, 72
      %v6530 = vpop.permute.xlu0 %6529
      %6531 = vrot.lane.b32.xlu0 %v5683, 72
      %v6532 = vpop.permute.xlu0 %6531
      %6533 = vrot.lane.b32.xlu0 %v5684, 72
      %v6534 = vpop.permute.xlu0 %6533
      %6535 = vrot.lane.b32.xlu0 %v5685, 72
      %v6536 = vpop.permute.xlu0 %6535
      %6537 = vrot.lane.b32.xlu0 %v5686, 72
      %v6538 = vpop.permute.xlu0 %6537
      %6539 = vrot.lane.b32.xlu0 %v5687, 72
      %v6540 = vpop.permute.xlu0 %6539
      %6541 = vrot.lane.b32.xlu0 %v5688, 72
      %v6542 = vpop.permute.xlu0 %6541
      %6543 = vrot.lane.b32.xlu0 %v5689, 72
      %v6544 = vpop.permute.xlu0 %6543
      %6545 = vrot.lane.b32.xlu0 %v5690, 72
      %v6546 = vpop.permute.xlu0 %6545
      %6547 = vrot.lane.b32.xlu0 %v5691, 72
      %v6548 = vpop.permute.xlu0 %6547
      %6549 = vrot.lane.b32.xlu0 %v5692, 72
      %v6550 = vpop.permute.xlu0 %6549
      %6551 = vrot.lane.b32.xlu0 %v5693, 72
      %v6552 = vpop.permute.xlu0 %6551
      %6553 = vrot.lane.b32.xlu0 %v5694, 72
      %v6554 = vpop.permute.xlu0 %6553
      %6555 = vrot.lane.b32.xlu0 %v5695, 72
      %v6556 = vpop.permute.xlu0 %6555
      %6557 = vrot.lane.b32.xlu0 %v5696, 72
      %v6558 = vpop.permute.xlu0 %6557
      %6559 = vrot.lane.b32.xlu0 %v5697, 72
      %v6560 = vpop.permute.xlu0 %6559
      %6561 = vrot.lane.b32.xlu0 %v5698, 72
      %v6562 = vpop.permute.xlu0 %6561
      %6595 = vrot.lane.b32.xlu0 %v5667, 80
      %v6596 = vpop.permute.xlu0 %6595
      %6597 = vrot.lane.b32.xlu0 %v5668, 80
      %v6598 = vpop.permute.xlu0 %6597
      %6599 = vrot.lane.b32.xlu0 %v5669, 80
      %v6600 = vpop.permute.xlu0 %6599
      %6601 = vrot.lane.b32.xlu0 %v5670, 80
      %v6602 = vpop.permute.xlu0 %6601
      %6603 = vrot.lane.b32.xlu0 %v5671, 80
      %v6604 = vpop.permute.xlu0 %6603
      %6605 = vrot.lane.b32.xlu0 %v5672, 80
      %v6606 = vpop.permute.xlu0 %6605
      %6607 = vrot.lane.b32.xlu0 %v5673, 80
      %v6608 = vpop.permute.xlu0 %6607
      %6609 = vrot.lane.b32.xlu0 %v5674, 80
      %v6610 = vpop.permute.xlu0 %6609
      %6611 = vrot.lane.b32.xlu0 %v5675, 80
      %v6612 = vpop.permute.xlu0 %6611
      %6613 = vrot.lane.b32.xlu0 %v5676, 80
      %v6614 = vpop.permute.xlu0 %6613
      %6615 = vrot.lane.b32.xlu0 %v5677, 80
      %v6616 = vpop.permute.xlu0 %6615
      %6617 = vrot.lane.b32.xlu0 %v5678, 80
      %v6618 = vpop.permute.xlu0 %6617
      %6619 = vrot.lane.b32.xlu0 %v5679, 80
      %v6620 = vpop.permute.xlu0 %6619
      %6621 = vrot.lane.b32.xlu0 %v5680, 80
      %v6622 = vpop.permute.xlu0 %6621
      %6623 = vrot.lane.b32.xlu0 %v5681, 80
      %v6624 = vpop.permute.xlu0 %6623
      %6625 = vrot.lane.b32.xlu0 %v5682, 80
      %v6626 = vpop.permute.xlu0 %6625
      %6627 = vrot.lane.b32.xlu0 %v5683, 80
      %v6628 = vpop.permute.xlu0 %6627
      %6629 = vrot.lane.b32.xlu0 %v5684, 80
      %v6630 = vpop.permute.xlu0 %6629
      %6631 = vrot.lane.b32.xlu0 %v5685, 80
      %v6632 = vpop.permute.xlu0 %6631
      %6633 = vrot.lane.b32.xlu0 %v5686, 80
      %v6634 = vpop.permute.xlu0 %6633
      %6635 = vrot.lane.b32.xlu0 %v5687, 80
      %v6636 = vpop.permute.xlu0 %6635
      %6637 = vrot.lane.b32.xlu0 %v5688, 80
      %v6638 = vpop.permute.xlu0 %6637
      %6639 = vrot.lane.b32.xlu0 %v5689, 80
      %v6640 = vpop.permute.xlu0 %6639
      %6641 = vrot.lane.b32.xlu0 %v5690, 80
      %v6642 = vpop.permute.xlu0 %6641
      %6643 = vrot.lane.b32.xlu0 %v5691, 80
      %v6644 = vpop.permute.xlu0 %6643
      %6645 = vrot.lane.b32.xlu0 %v5692, 80
      %v6646 = vpop.permute.xlu0 %6645
      %6647 = vrot.lane.b32.xlu0 %v5693, 80
      %v6648 = vpop.permute.xlu0 %6647
      %6649 = vrot.lane.b32.xlu0 %v5694, 80
      %v6650 = vpop.permute.xlu0 %6649
      %6651 = vrot.lane.b32.xlu0 %v5695, 80
      %v6652 = vpop.permute.xlu0 %6651
      %6653 = vrot.lane.b32.xlu0 %v5696, 80
      %v6654 = vpop.permute.xlu0 %6653
      %6655 = vrot.lane.b32.xlu0 %v5697, 80
      %v6656 = vpop.permute.xlu0 %6655
      %6657 = vrot.lane.b32.xlu0 %v5698, 80
      %v6658 = vpop.permute.xlu0 %6657
      %6691 = vrot.lane.b32.xlu0 %v5667, 88
      %v6692 = vpop.permute.xlu0 %6691
      %6693 = vrot.lane.b32.xlu0 %v5668, 88
      %v6694 = vpop.permute.xlu0 %6693
      %6695 = vrot.lane.b32.xlu0 %v5669, 88
      %v6696 = vpop.permute.xlu0 %6695
      %6697 = vrot.lane.b32.xlu0 %v5670, 88
      %v6698 = vpop.permute.xlu0 %6697
      %6699 = vrot.lane.b32.xlu0 %v5671, 88
      %v6700 = vpop.permute.xlu0 %6699
      %6701 = vrot.lane.b32.xlu0 %v5672, 88
      %v6702 = vpop.permute.xlu0 %6701
      %6703 = vrot.lane.b32.xlu0 %v5673, 88
      %v6704 = vpop.permute.xlu0 %6703
      %6705 = vrot.lane.b32.xlu0 %v5674, 88
      %v6706 = vpop.permute.xlu0 %6705
      %6707 = vrot.lane.b32.xlu0 %v5675, 88
      %v6708 = vpop.permute.xlu0 %6707
      %6709 = vrot.lane.b32.xlu0 %v5676, 88
      %v6710 = vpop.permute.xlu0 %6709
      %6711 = vrot.lane.b32.xlu0 %v5677, 88
      %v6712 = vpop.permute.xlu0 %6711
      %6713 = vrot.lane.b32.xlu0 %v5678, 88
      %v6714 = vpop.permute.xlu0 %6713
      %6715 = vrot.lane.b32.xlu0 %v5679, 88
      %v6716 = vpop.permute.xlu0 %6715
      %6717 = vrot.lane.b32.xlu0 %v5680, 88
      %v6718 = vpop.permute.xlu0 %6717
      %6719 = vrot.lane.b32.xlu0 %v5681, 88
      %v6720 = vpop.permute.xlu0 %6719
      %6721 = vrot.lane.b32.xlu0 %v5682, 88
      %v6722 = vpop.permute.xlu0 %6721
      %6723 = vrot.lane.b32.xlu0 %v5683, 88
      %v6724 = vpop.permute.xlu0 %6723
      %6725 = vrot.lane.b32.xlu0 %v5684, 88
      %v6726 = vpop.permute.xlu0 %6725
      %6727 = vrot.lane.b32.xlu0 %v5685, 88
      %v6728 = vpop.permute.xlu0 %6727
      %6729 = vrot.lane.b32.xlu0 %v5686, 88
      %v6730 = vpop.permute.xlu0 %6729
      %6731 = vrot.lane.b32.xlu0 %v5687, 88
      %v6732 = vpop.permute.xlu0 %6731
      %6733 = vrot.lane.b32.xlu0 %v5688, 88
      %v6734 = vpop.permute.xlu0 %6733
      %6735 = vrot.lane.b32.xlu0 %v5689, 88
      %v6736 = vpop.permute.xlu0 %6735
      %6737 = vrot.lane.b32.xlu0 %v5690, 88
      %v6738 = vpop.permute.xlu0 %6737
      %6739 = vrot.lane.b32.xlu0 %v5691, 88
      %v6740 = vpop.permute.xlu0 %6739
      %6741 = vrot.lane.b32.xlu0 %v5692, 88
      %v6742 = vpop.permute.xlu0 %6741
      %6743 = vrot.lane.b32.xlu0 %v5693, 88
      %v6744 = vpop.permute.xlu0 %6743
      %6745 = vrot.lane.b32.xlu0 %v5694, 88
      %v6746 = vpop.permute.xlu0 %6745
      %6747 = vrot.lane.b32.xlu0 %v5695, 88
      %v6748 = vpop.permute.xlu0 %6747
      %6749 = vrot.lane.b32.xlu0 %v5696, 88
      %v6750 = vpop.permute.xlu0 %6749
      %6751 = vrot.lane.b32.xlu0 %v5697, 88
      %v6752 = vpop.permute.xlu0 %6751
      %6753 = vrot.lane.b32.xlu0 %v5698, 88
      %v6754 = vpop.permute.xlu0 %6753
      %6787 = vrot.lane.b32.xlu0 %v5667, 96
      %v6788 = vpop.permute.xlu0 %6787
      %6789 = vrot.lane.b32.xlu0 %v5668, 96
      %v6790 = vpop.permute.xlu0 %6789
      %6791 = vrot.lane.b32.xlu0 %v5669, 96
      %v6792 = vpop.permute.xlu0 %6791
      %6793 = vrot.lane.b32.xlu0 %v5670, 96
      %v6794 = vpop.permute.xlu0 %6793
      %6795 = vrot.lane.b32.xlu0 %v5671, 96
      %v6796 = vpop.permute.xlu0 %6795
      %6797 = vrot.lane.b32.xlu0 %v5672, 96
      %v6798 = vpop.permute.xlu0 %6797
      %6799 = vrot.lane.b32.xlu0 %v5673, 96
      %v6800 = vpop.permute.xlu0 %6799
      %6801 = vrot.lane.b32.xlu0 %v5674, 96
      %v6802 = vpop.permute.xlu0 %6801
      %6803 = vrot.lane.b32.xlu0 %v5675, 96
      %v6804 = vpop.permute.xlu0 %6803
      %6805 = vrot.lane.b32.xlu0 %v5676, 96
      %v6806 = vpop.permute.xlu0 %6805
      %6807 = vrot.lane.b32.xlu0 %v5677, 96
      %v6808 = vpop.permute.xlu0 %6807
      %6809 = vrot.lane.b32.xlu0 %v5678, 96
      %v6810 = vpop.permute.xlu0 %6809
      %6811 = vrot.lane.b32.xlu0 %v5679, 96
      %v6812 = vpop.permute.xlu0 %6811
      %6813 = vrot.lane.b32.xlu0 %v5680, 96
      %v6814 = vpop.permute.xlu0 %6813
      %6815 = vrot.lane.b32.xlu0 %v5681, 96
      %v6816 = vpop.permute.xlu0 %6815
      %6817 = vrot.lane.b32.xlu0 %v5682, 96
      %v6818 = vpop.permute.xlu0 %6817
      %6819 = vrot.lane.b32.xlu0 %v5683, 96
      %v6820 = vpop.permute.xlu0 %6819
      %6821 = vrot.lane.b32.xlu0 %v5684, 96
      %v6822 = vpop.permute.xlu0 %6821
      %6823 = vrot.lane.b32.xlu0 %v5685, 96
      %v6824 = vpop.permute.xlu0 %6823
      %6825 = vrot.lane.b32.xlu0 %v5686, 96
      %v6826 = vpop.permute.xlu0 %6825
      %6827 = vrot.lane.b32.xlu0 %v5687, 96
      %v6828 = vpop.permute.xlu0 %6827
      %6829 = vrot.lane.b32.xlu0 %v5688, 96
      %v6830 = vpop.permute.xlu0 %6829
      %6831 = vrot.lane.b32.xlu0 %v5689, 96
      %v6832 = vpop.permute.xlu0 %6831
      %6833 = vrot.lane.b32.xlu0 %v5690, 96
      %v6834 = vpop.permute.xlu0 %6833
      %6835 = vrot.lane.b32.xlu0 %v5691, 96
      %v6836 = vpop.permute.xlu0 %6835
      %6837 = vrot.lane.b32.xlu0 %v5692, 96
      %v6838 = vpop.permute.xlu0 %6837
      %6839 = vrot.lane.b32.xlu0 %v5693, 96
      %v6840 = vpop.permute.xlu0 %6839
      %6841 = vrot.lane.b32.xlu0 %v5694, 96
      %v6842 = vpop.permute.xlu0 %6841
      %6843 = vrot.lane.b32.xlu0 %v5695, 96
      %v6844 = vpop.permute.xlu0 %6843
      %6845 = vrot.lane.b32.xlu0 %v5696, 96
      %v6846 = vpop.permute.xlu0 %6845
      %6847 = vrot.lane.b32.xlu0 %v5697, 96
      %v6848 = vpop.permute.xlu0 %6847
      %6849 = vrot.lane.b32.xlu0 %v5698, 96
      %v6850 = vpop.permute.xlu0 %6849
      %6883 = vrot.lane.b32.xlu0 %v5667, 104
      %v6884 = vpop.permute.xlu0 %6883
      %6885 = vrot.lane.b32.xlu0 %v5668, 104
      %v6886 = vpop.permute.xlu0 %6885
      %6887 = vrot.lane.b32.xlu0 %v5669, 104
      %v6888 = vpop.permute.xlu0 %6887
      %6889 = vrot.lane.b32.xlu0 %v5670, 104
      %v6890 = vpop.permute.xlu0 %6889
      %6891 = vrot.lane.b32.xlu0 %v5671, 104
      %v6892 = vpop.permute.xlu0 %6891
      %6893 = vrot.lane.b32.xlu0 %v5672, 104
      %v6894 = vpop.permute.xlu0 %6893
      %6895 = vrot.lane.b32.xlu0 %v5673, 104
      %v6896 = vpop.permute.xlu0 %6895
      %6897 = vrot.lane.b32.xlu0 %v5674, 104
      %v6898 = vpop.permute.xlu0 %6897
      %6899 = vrot.lane.b32.xlu0 %v5675, 104
      %v6900 = vpop.permute.xlu0 %6899
      %6901 = vrot.lane.b32.xlu0 %v5676, 104
      %v6902 = vpop.permute.xlu0 %6901
      %6903 = vrot.lane.b32.xlu0 %v5677, 104
      %v6904 = vpop.permute.xlu0 %6903
      %6905 = vrot.lane.b32.xlu0 %v5678, 104
      %v6906 = vpop.permute.xlu0 %6905
      %6907 = vrot.lane.b32.xlu0 %v5679, 104
      %v6908 = vpop.permute.xlu0 %6907
      %6909 = vrot.lane.b32.xlu0 %v5680, 104
      %v6910 = vpop.permute.xlu0 %6909
      %6911 = vrot.lane.b32.xlu0 %v5681, 104
      %v6912 = vpop.permute.xlu0 %6911
      %6913 = vrot.lane.b32.xlu0 %v5682, 104
      %v6914 = vpop.permute.xlu0 %6913
      %6915 = vrot.lane.b32.xlu0 %v5683, 104
      %v6916 = vpop.permute.xlu0 %6915
      %6917 = vrot.lane.b32.xlu0 %v5684, 104
      %v6918 = vpop.permute.xlu0 %6917
      %6919 = vrot.lane.b32.xlu0 %v5685, 104
      %v6920 = vpop.permute.xlu0 %6919
      %6921 = vrot.lane.b32.xlu0 %v5686, 104
      %v6922 = vpop.permute.xlu0 %6921
      %6923 = vrot.lane.b32.xlu0 %v5687, 104
      %v6924 = vpop.permute.xlu0 %6923
      %6925 = vrot.lane.b32.xlu0 %v5688, 104
      %v6926 = vpop.permute.xlu0 %6925
      %6927 = vrot.lane.b32.xlu0 %v5689, 104
      %v6928 = vpop.permute.xlu0 %6927
      %6929 = vrot.lane.b32.xlu0 %v5690, 104
      %v6930 = vpop.permute.xlu0 %6929
      %6931 = vrot.lane.b32.xlu0 %v5691, 104
      %v6932 = vpop.permute.xlu0 %6931
      %6933 = vrot.lane.b32.xlu0 %v5692, 104
      %v6934 = vpop.permute.xlu0 %6933
      %6935 = vrot.lane.b32.xlu0 %v5693, 104
      %v6936 = vpop.permute.xlu0 %6935
      %6937 = vrot.lane.b32.xlu0 %v5694, 104
      %v6938 = vpop.permute.xlu0 %6937
      %6939 = vrot.lane.b32.xlu0 %v5695, 104
      %v6940 = vpop.permute.xlu0 %6939
      %6941 = vrot.lane.b32.xlu0 %v5696, 104
      %v6942 = vpop.permute.xlu0 %6941
      %6943 = vrot.lane.b32.xlu0 %v5697, 104
      %v6944 = vpop.permute.xlu0 %6943
      %6945 = vrot.lane.b32.xlu0 %v5698, 104
      %v6946 = vpop.permute.xlu0 %6945
      %6979 = vrot.lane.b32.xlu0 %v5667, 112
      %v6980 = vpop.permute.xlu0 %6979
      %6981 = vrot.lane.b32.xlu0 %v5668, 112
      %v6982 = vpop.permute.xlu0 %6981
      %6983 = vrot.lane.b32.xlu0 %v5669, 112
      %v6984 = vpop.permute.xlu0 %6983
      %6985 = vrot.lane.b32.xlu0 %v5670, 112
      %v6986 = vpop.permute.xlu0 %6985
      %6987 = vrot.lane.b32.xlu0 %v5671, 112
      %v6988 = vpop.permute.xlu0 %6987
      %6989 = vrot.lane.b32.xlu0 %v5672, 112
      %v6990 = vpop.permute.xlu0 %6989
      %6991 = vrot.lane.b32.xlu0 %v5673, 112
      %v6992 = vpop.permute.xlu0 %6991
      %6993 = vrot.lane.b32.xlu0 %v5674, 112
      %v6994 = vpop.permute.xlu0 %6993
      %6995 = vrot.lane.b32.xlu0 %v5675, 112
      %v6996 = vpop.permute.xlu0 %6995
      %6997 = vrot.lane.b32.xlu0 %v5676, 112
      %v6998 = vpop.permute.xlu0 %6997
      %6999 = vrot.lane.b32.xlu0 %v5677, 112
      %v7000 = vpop.permute.xlu0 %6999
      %7001 = vrot.lane.b32.xlu0 %v5678, 112
      %v7002 = vpop.permute.xlu0 %7001
      %7003 = vrot.lane.b32.xlu0 %v5679, 112
      %v7004 = vpop.permute.xlu0 %7003
      %7005 = vrot.lane.b32.xlu0 %v5680, 112
      %v7006 = vpop.permute.xlu0 %7005
      %7007 = vrot.lane.b32.xlu0 %v5681, 112
      %v7008 = vpop.permute.xlu0 %7007
      %7009 = vrot.lane.b32.xlu0 %v5682, 112
      %v7010 = vpop.permute.xlu0 %7009
      %7011 = vrot.lane.b32.xlu0 %v5683, 112
      %v7012 = vpop.permute.xlu0 %7011
      %7013 = vrot.lane.b32.xlu0 %v5684, 112
      %v7014 = vpop.permute.xlu0 %7013
      %7015 = vrot.lane.b32.xlu0 %v5685, 112
      %v7016 = vpop.permute.xlu0 %7015
      %7017 = vrot.lane.b32.xlu0 %v5686, 112
      %v7018 = vpop.permute.xlu0 %7017
      %7019 = vrot.lane.b32.xlu0 %v5687, 112
      %v7020 = vpop.permute.xlu0 %7019
      %7021 = vrot.lane.b32.xlu0 %v5688, 112
      %v7022 = vpop.permute.xlu0 %7021
      %7023 = vrot.lane.b32.xlu0 %v5689, 112
      %v7024 = vpop.permute.xlu0 %7023
      %7025 = vrot.lane.b32.xlu0 %v5690, 112
      %v7026 = vpop.permute.xlu0 %7025
      %7027 = vrot.lane.b32.xlu0 %v5691, 112
      %v7028 = vpop.permute.xlu0 %7027
      %7029 = vrot.lane.b32.xlu0 %v5692, 112
      %v7030 = vpop.permute.xlu0 %7029
      %7031 = vrot.lane.b32.xlu0 %v5693, 112
      %v7032 = vpop.permute.xlu0 %7031
      %7033 = vrot.lane.b32.xlu0 %v5694, 112
      %v7034 = vpop.permute.xlu0 %7033
      %7035 = vrot.lane.b32.xlu0 %v5695, 112
      %v7036 = vpop.permute.xlu0 %7035
      %7037 = vrot.lane.b32.xlu0 %v5696, 112
      %v7038 = vpop.permute.xlu0 %7037
      %7039 = vrot.lane.b32.xlu0 %v5697, 112
      %v7040 = vpop.permute.xlu0 %7039
      %7041 = vrot.lane.b32.xlu0 %v5698, 112
      %v7042 = vpop.permute.xlu0 %7041
      %7075 = vrot.lane.b32.xlu0 %v5667, 120
      %v7076 = vpop.permute.xlu0 %7075
      %7077 = vrot.lane.b32.xlu0 %v5668, 120
      %v7078 = vpop.permute.xlu0 %7077
      %7079 = vrot.lane.b32.xlu0 %v5669, 120
      %v7080 = vpop.permute.xlu0 %7079
      %7081 = vrot.lane.b32.xlu0 %v5670, 120
      %v7082 = vpop.permute.xlu0 %7081
      %7083 = vrot.lane.b32.xlu0 %v5671, 120
      %v7084 = vpop.permute.xlu0 %7083
      %7085 = vrot.lane.b32.xlu0 %v5672, 120
      %v7086 = vpop.permute.xlu0 %7085
      %7087 = vrot.lane.b32.xlu0 %v5673, 120
      %v7088 = vpop.permute.xlu0 %7087
      %7089 = vrot.lane.b32.xlu0 %v5674, 120
      %v7090 = vpop.permute.xlu0 %7089
      %7091 = vrot.lane.b32.xlu0 %v5675, 120
      %v7092 = vpop.permute.xlu0 %7091
      %7093 = vrot.lane.b32.xlu0 %v5676, 120
      %v7094 = vpop.permute.xlu0 %7093
      %7095 = vrot.lane.b32.xlu0 %v5677, 120
      %v7096 = vpop.permute.xlu0 %7095
      %7097 = vrot.lane.b32.xlu0 %v5678, 120
      %v7098 = vpop.permute.xlu0 %7097
      %7099 = vrot.lane.b32.xlu0 %v5679, 120
      %v7100 = vpop.permute.xlu0 %7099
      %7101 = vrot.lane.b32.xlu0 %v5680, 120
      %v7102 = vpop.permute.xlu0 %7101
      %7103 = vrot.lane.b32.xlu0 %v5681, 120
      %v7104 = vpop.permute.xlu0 %7103
      %7105 = vrot.lane.b32.xlu0 %v5682, 120
      %v7106 = vpop.permute.xlu0 %7105
      %7107 = vrot.lane.b32.xlu0 %v5683, 120
      %v7108 = vpop.permute.xlu0 %7107
      %7109 = vrot.lane.b32.xlu0 %v5684, 120
      %v7110 = vpop.permute.xlu0 %7109
      %7111 = vrot.lane.b32.xlu0 %v5685, 120
      %v7112 = vpop.permute.xlu0 %7111
      %7113 = vrot.lane.b32.xlu0 %v5686, 120
      %v7114 = vpop.permute.xlu0 %7113
      %7115 = vrot.lane.b32.xlu0 %v5687, 120
      %v7116 = vpop.permute.xlu0 %7115
      %7117 = vrot.lane.b32.xlu0 %v5688, 120
      %v7118 = vpop.permute.xlu0 %7117
      %7119 = vrot.lane.b32.xlu0 %v5689, 120
      %v7120 = vpop.permute.xlu0 %7119
      %7121 = vrot.lane.b32.xlu0 %v5690, 120
      %v7122 = vpop.permute.xlu0 %7121
      %7123 = vrot.lane.b32.xlu0 %v5691, 120
      %v7124 = vpop.permute.xlu0 %7123
      %7125 = vrot.lane.b32.xlu0 %v5692, 120
      %v7126 = vpop.permute.xlu0 %7125
      %7127 = vrot.lane.b32.xlu0 %v5693, 120
      %v7128 = vpop.permute.xlu0 %7127
      %7129 = vrot.lane.b32.xlu0 %v5694, 120
      %v7130 = vpop.permute.xlu0 %7129
      %7131 = vrot.lane.b32.xlu0 %v5695, 120
      %v7132 = vpop.permute.xlu0 %7131
      %7133 = vrot.lane.b32.xlu0 %v5696, 120
      %v7134 = vpop.permute.xlu0 %7133
      %7135 = vrot.lane.b32.xlu0 %v5697, 120
      %v7136 = vpop.permute.xlu0 %7135
      %7137 = vrot.lane.b32.xlu0 %v5698, 120
      %v7138 = vpop.permute.xlu0 %7137
      %v7171 = vsel %vm1632, %v5667, %v5732
      %v7172 = vsel %vm1632, %v5668, %v5734
      %v7173 = vsel %vm1632, %v5669, %v5736
      %v7174 = vsel %vm1632, %v5670, %v5738
      %v7175 = vsel %vm1632, %v5671, %v5740
      %v7176 = vsel %vm1632, %v5672, %v5742
      %v7177 = vsel %vm1632, %v5673, %v5744
      %v7178 = vsel %vm1632, %v5674, %v5746
      %v7179 = vsel %vm1632, %v5675, %v5748
      %v7180 = vsel %vm1632, %v5676, %v5750
      %v7181 = vsel %vm1632, %v5677, %v5752
      %v7182 = vsel %vm1632, %v5678, %v5754
      %v7183 = vsel %vm1632, %v5679, %v5756
      %v7184 = vsel %vm1632, %v5680, %v5758
      %v7185 = vsel %vm1632, %v5681, %v5760
      %v7186 = vsel %vm1632, %v5682, %v5762
      %v7187 = vsel %vm1632, %v5683, %v5764
      %v7188 = vsel %vm1632, %v5684, %v5766
      %v7189 = vsel %vm1632, %v5685, %v5768
      %v7190 = vsel %vm1632, %v5686, %v5770
      %v7191 = vsel %vm1632, %v5687, %v5772
      %v7192 = vsel %vm1632, %v5688, %v5774
      %v7193 = vsel %vm1632, %v5689, %v5776
      %v7194 = vsel %vm1632, %v5690, %v5778
      %v7195 = vsel %vm1632, %v5691, %v5780
      %v7196 = vsel %vm1632, %v5692, %v5782
      %v7197 = vsel %vm1632, %v5693, %v5784
      %v7198 = vsel %vm1632, %v5694, %v5786
      %v7199 = vsel %vm1632, %v5695, %v5788
      %v7200 = vsel %vm1632, %v5696, %v5790
      %v7201 = vsel %vm1632, %v5697, %v5792
      %v7202 = vsel %vm1632, %v5698, %v5794
      %v7203 = vsel %vm5205, %v7171, %v5828
      %v7204 = vsel %vm5205, %v7172, %v5830
      %v7205 = vsel %vm5205, %v7173, %v5832
      %v7206 = vsel %vm5205, %v7174, %v5834
      %v7207 = vsel %vm5205, %v7175, %v5836
      %v7208 = vsel %vm5205, %v7176, %v5838
      %v7209 = vsel %vm5205, %v7177, %v5840
      %v7210 = vsel %vm5205, %v7178, %v5842
      %v7211 = vsel %vm5205, %v7179, %v5844
      %v7212 = vsel %vm5205, %v7180, %v5846
      %v7213 = vsel %vm5205, %v7181, %v5848
      %v7214 = vsel %vm5205, %v7182, %v5850
      %v7215 = vsel %vm5205, %v7183, %v5852
      %v7216 = vsel %vm5205, %v7184, %v5854
      %v7217 = vsel %vm5205, %v7185, %v5856
      %v7218 = vsel %vm5205, %v7186, %v5858
      %v7219 = vsel %vm5205, %v7187, %v5860
      %v7220 = vsel %vm5205, %v7188, %v5862
      %v7221 = vsel %vm5205, %v7189, %v5864
      %v7222 = vsel %vm5205, %v7190, %v5866
      %v7223 = vsel %vm5205, %v7191, %v5868
      %v7224 = vsel %vm5205, %v7192, %v5870
      %v7225 = vsel %vm5205, %v7193, %v5872
      %v7226 = vsel %vm5205, %v7194, %v5874
      %v7227 = vsel %vm5205, %v7195, %v5876
      %v7228 = vsel %vm5205, %v7196, %v5878
      %v7229 = vsel %vm5205, %v7197, %v5880
      %v7230 = vsel %vm5205, %v7198, %v5882
      %v7231 = vsel %vm5205, %v7199, %v5884
      %v7232 = vsel %vm5205, %v7200, %v5886
      %v7233 = vsel %vm5205, %v7201, %v5888
      %v7234 = vsel %vm5205, %v7202, %v5890
      %v7235 = vsel %vm5238, %v7203, %v5924
      %v7236 = vsel %vm5238, %v7204, %v5926
      %v7237 = vsel %vm5238, %v7205, %v5928
      %v7238 = vsel %vm5238, %v7206, %v5930
      %v7239 = vsel %vm5238, %v7207, %v5932
      %v7240 = vsel %vm5238, %v7208, %v5934
      %v7241 = vsel %vm5238, %v7209, %v5936
      %v7242 = vsel %vm5238, %v7210, %v5938
      %v7243 = vsel %vm5238, %v7211, %v5940
      %v7244 = vsel %vm5238, %v7212, %v5942
      %v7245 = vsel %vm5238, %v7213, %v5944
      %v7246 = vsel %vm5238, %v7214, %v5946
      %v7247 = vsel %vm5238, %v7215, %v5948
      %v7248 = vsel %vm5238, %v7216, %v5950
      %v7249 = vsel %vm5238, %v7217, %v5952
      %v7250 = vsel %vm5238, %v7218, %v5954
      %v7251 = vsel %vm5238, %v7219, %v5956
      %v7252 = vsel %vm5238, %v7220, %v5958
      %v7253 = vsel %vm5238, %v7221, %v5960
      %v7254 = vsel %vm5238, %v7222, %v5962
      %v7255 = vsel %vm5238, %v7223, %v5964
      %v7256 = vsel %vm5238, %v7224, %v5966
      %v7257 = vsel %vm5238, %v7225, %v5968
      %v7258 = vsel %vm5238, %v7226, %v5970
      %v7259 = vsel %vm5238, %v7227, %v5972
      %v7260 = vsel %vm5238, %v7228, %v5974
      %v7261 = vsel %vm5238, %v7229, %v5976
      %v7262 = vsel %vm5238, %v7230, %v5978
      %v7263 = vsel %vm5238, %v7231, %v5980
      %v7264 = vsel %vm5238, %v7232, %v5982
      %v7265 = vsel %vm5238, %v7233, %v5984
      %v7266 = vsel %vm5238, %v7234, %v5986
      %v7267 = vsel %vm5271, %v7235, %v6020
      %v7268 = vsel %vm5271, %v7236, %v6022
      %v7269 = vsel %vm5271, %v7237, %v6024
      %v7270 = vsel %vm5271, %v7238, %v6026
      %v7271 = vsel %vm5271, %v7239, %v6028
      %v7272 = vsel %vm5271, %v7240, %v6030
      %v7273 = vsel %vm5271, %v7241, %v6032
      %v7274 = vsel %vm5271, %v7242, %v6034
      %v7275 = vsel %vm5271, %v7243, %v6036
      %v7276 = vsel %vm5271, %v7244, %v6038
      %v7277 = vsel %vm5271, %v7245, %v6040
      %v7278 = vsel %vm5271, %v7246, %v6042
      %v7279 = vsel %vm5271, %v7247, %v6044
      %v7280 = vsel %vm5271, %v7248, %v6046
      %v7281 = vsel %vm5271, %v7249, %v6048
      %v7282 = vsel %vm5271, %v7250, %v6050
      %v7283 = vsel %vm5271, %v7251, %v6052
      %v7284 = vsel %vm5271, %v7252, %v6054
      %v7285 = vsel %vm5271, %v7253, %v6056
      %v7286 = vsel %vm5271, %v7254, %v6058
      %v7287 = vsel %vm5271, %v7255, %v6060
      %v7288 = vsel %vm5271, %v7256, %v6062
      %v7289 = vsel %vm5271, %v7257, %v6064
      %v7290 = vsel %vm5271, %v7258, %v6066
      %v7291 = vsel %vm5271, %v7259, %v6068
      %v7292 = vsel %vm5271, %v7260, %v6070
      %v7293 = vsel %vm5271, %v7261, %v6072
      %v7294 = vsel %vm5271, %v7262, %v6074
      %v7295 = vsel %vm5271, %v7263, %v6076
      %v7296 = vsel %vm5271, %v7264, %v6078
      %v7297 = vsel %vm5271, %v7265, %v6080
      %v7298 = vsel %vm5271, %v7266, %v6082
      %v7299 = vsel %vm5304, %v7267, %v6116
      %v7300 = vsel %vm5304, %v7268, %v6118
      %v7301 = vsel %vm5304, %v7269, %v6120
      %v7302 = vsel %vm5304, %v7270, %v6122
      %v7303 = vsel %vm5304, %v7271, %v6124
      %v7304 = vsel %vm5304, %v7272, %v6126
      %v7305 = vsel %vm5304, %v7273, %v6128
      %v7306 = vsel %vm5304, %v7274, %v6130
      %v7307 = vsel %vm5304, %v7275, %v6132
      %v7308 = vsel %vm5304, %v7276, %v6134
      %v7309 = vsel %vm5304, %v7277, %v6136
      %v7310 = vsel %vm5304, %v7278, %v6138
      %v7311 = vsel %vm5304, %v7279, %v6140
      %v7312 = vsel %vm5304, %v7280, %v6142
      %v7313 = vsel %vm5304, %v7281, %v6144
      %v7314 = vsel %vm5304, %v7282, %v6146
      %v7315 = vsel %vm5304, %v7283, %v6148
      %v7316 = vsel %vm5304, %v7284, %v6150
      %v7317 = vsel %vm5304, %v7285, %v6152
      %v7318 = vsel %vm5304, %v7286, %v6154
      %v7319 = vsel %vm5304, %v7287, %v6156
      %v7320 = vsel %vm5304, %v7288, %v6158
      %v7321 = vsel %vm5304, %v7289, %v6160
      %v7322 = vsel %vm5304, %v7290, %v6162
      %v7323 = vsel %vm5304, %v7291, %v6164
      %v7324 = vsel %vm5304, %v7292, %v6166
      %v7325 = vsel %vm5304, %v7293, %v6168
      %v7326 = vsel %vm5304, %v7294, %v6170
      %v7327 = vsel %vm5304, %v7295, %v6172
      %v7328 = vsel %vm5304, %v7296, %v6174
      %v7329 = vsel %vm5304, %v7297, %v6176
      %v7330 = vsel %vm5304, %v7298, %v6178
      %v7331 = vsel %vm5337, %v7299, %v6212
      %v7332 = vsel %vm5337, %v7300, %v6214
      %v7333 = vsel %vm5337, %v7301, %v6216
      %v7334 = vsel %vm5337, %v7302, %v6218
      %v7335 = vsel %vm5337, %v7303, %v6220
      %v7336 = vsel %vm5337, %v7304, %v6222
      %v7337 = vsel %vm5337, %v7305, %v6224
      %v7338 = vsel %vm5337, %v7306, %v6226
      %v7339 = vsel %vm5337, %v7307, %v6228
      %v7340 = vsel %vm5337, %v7308, %v6230
      %v7341 = vsel %vm5337, %v7309, %v6232
      %v7342 = vsel %vm5337, %v7310, %v6234
      %v7343 = vsel %vm5337, %v7311, %v6236
      %v7344 = vsel %vm5337, %v7312, %v6238
      %v7345 = vsel %vm5337, %v7313, %v6240
      %v7346 = vsel %vm5337, %v7314, %v6242
      %v7347 = vsel %vm5337, %v7315, %v6244
      %v7348 = vsel %vm5337, %v7316, %v6246
      %v7349 = vsel %vm5337, %v7317, %v6248
      %v7350 = vsel %vm5337, %v7318, %v6250
      %v7351 = vsel %vm5337, %v7319, %v6252
      %v7352 = vsel %vm5337, %v7320, %v6254
      %v7353 = vsel %vm5337, %v7321, %v6256
      %v7354 = vsel %vm5337, %v7322, %v6258
      %v7355 = vsel %vm5337, %v7323, %v6260
      %v7356 = vsel %vm5337, %v7324, %v6262
      %v7357 = vsel %vm5337, %v7325, %v6264
      %v7358 = vsel %vm5337, %v7326, %v6266
      %v7359 = vsel %vm5337, %v7327, %v6268
      %v7360 = vsel %vm5337, %v7328, %v6270
      %v7361 = vsel %vm5337, %v7329, %v6272
      %v7362 = vsel %vm5337, %v7330, %v6274
      %v7363 = vsel %vm5370, %v7331, %v6308
      %v7364 = vsel %vm5370, %v7332, %v6310
      %v7365 = vsel %vm5370, %v7333, %v6312
      %v7366 = vsel %vm5370, %v7334, %v6314
      %v7367 = vsel %vm5370, %v7335, %v6316
      %v7368 = vsel %vm5370, %v7336, %v6318
      %v7369 = vsel %vm5370, %v7337, %v6320
      %v7370 = vsel %vm5370, %v7338, %v6322
      %v7371 = vsel %vm5370, %v7339, %v6324
      %v7372 = vsel %vm5370, %v7340, %v6326
      %v7373 = vsel %vm5370, %v7341, %v6328
      %v7374 = vsel %vm5370, %v7342, %v6330
      %v7375 = vsel %vm5370, %v7343, %v6332
      %v7376 = vsel %vm5370, %v7344, %v6334
      %v7377 = vsel %vm5370, %v7345, %v6336
      %v7378 = vsel %vm5370, %v7346, %v6338
      %v7379 = vsel %vm5370, %v7347, %v6340
      %v7380 = vsel %vm5370, %v7348, %v6342
      %v7381 = vsel %vm5370, %v7349, %v6344
      %v7382 = vsel %vm5370, %v7350, %v6346
      %v7383 = vsel %vm5370, %v7351, %v6348
      %v7384 = vsel %vm5370, %v7352, %v6350
      %v7385 = vsel %vm5370, %v7353, %v6352
      %v7386 = vsel %vm5370, %v7354, %v6354
      %v7387 = vsel %vm5370, %v7355, %v6356
      %v7388 = vsel %vm5370, %v7356, %v6358
      %v7389 = vsel %vm5370, %v7357, %v6360
      %v7390 = vsel %vm5370, %v7358, %v6362
      %v7391 = vsel %vm5370, %v7359, %v6364
      %v7392 = vsel %vm5370, %v7360, %v6366
      %v7393 = vsel %vm5370, %v7361, %v6368
      %v7394 = vsel %vm5370, %v7362, %v6370
      %v7395 = vsel %vm5403, %v7363, %v6404
      %v7396 = vsel %vm5403, %v7364, %v6406
      %v7397 = vsel %vm5403, %v7365, %v6408
      %v7398 = vsel %vm5403, %v7366, %v6410
      %v7399 = vsel %vm5403, %v7367, %v6412
      %v7400 = vsel %vm5403, %v7368, %v6414
      %v7401 = vsel %vm5403, %v7369, %v6416
      %v7402 = vsel %vm5403, %v7370, %v6418
      %v7403 = vsel %vm5403, %v7371, %v6420
      %v7404 = vsel %vm5403, %v7372, %v6422
      %v7405 = vsel %vm5403, %v7373, %v6424
      %v7406 = vsel %vm5403, %v7374, %v6426
      %v7407 = vsel %vm5403, %v7375, %v6428
      %v7408 = vsel %vm5403, %v7376, %v6430
      %v7409 = vsel %vm5403, %v7377, %v6432
      %v7410 = vsel %vm5403, %v7378, %v6434
      %v7411 = vsel %vm5403, %v7379, %v6436
      %v7412 = vsel %vm5403, %v7380, %v6438
      %v7413 = vsel %vm5403, %v7381, %v6440
      %v7414 = vsel %vm5403, %v7382, %v6442
      %v7415 = vsel %vm5403, %v7383, %v6444
      %v7416 = vsel %vm5403, %v7384, %v6446
      %v7417 = vsel %vm5403, %v7385, %v6448
      %v7418 = vsel %vm5403, %v7386, %v6450
      %v7419 = vsel %vm5403, %v7387, %v6452
      %v7420 = vsel %vm5403, %v7388, %v6454
      %v7421 = vsel %vm5403, %v7389, %v6456
      %v7422 = vsel %vm5403, %v7390, %v6458
      %v7423 = vsel %vm5403, %v7391, %v6460
      %v7424 = vsel %vm5403, %v7392, %v6462
      %v7425 = vsel %vm5403, %v7393, %v6464
      %v7426 = vsel %vm5403, %v7394, %v6466
      %v7427 = vsel %vm5436, %v7395, %v6500
      %v7428 = vsel %vm5436, %v7396, %v6502
      %v7429 = vsel %vm5436, %v7397, %v6504
      %v7430 = vsel %vm5436, %v7398, %v6506
      %v7431 = vsel %vm5436, %v7399, %v6508
      %v7432 = vsel %vm5436, %v7400, %v6510
      %v7433 = vsel %vm5436, %v7401, %v6512
      %v7434 = vsel %vm5436, %v7402, %v6514
      %v7435 = vsel %vm5436, %v7403, %v6516
      %v7436 = vsel %vm5436, %v7404, %v6518
      %v7437 = vsel %vm5436, %v7405, %v6520
      %v7438 = vsel %vm5436, %v7406, %v6522
      %v7439 = vsel %vm5436, %v7407, %v6524
      %v7440 = vsel %vm5436, %v7408, %v6526
      %v7441 = vsel %vm5436, %v7409, %v6528
      %v7442 = vsel %vm5436, %v7410, %v6530
      %v7443 = vsel %vm5436, %v7411, %v6532
      %v7444 = vsel %vm5436, %v7412, %v6534
      %v7445 = vsel %vm5436, %v7413, %v6536
      %v7446 = vsel %vm5436, %v7414, %v6538
      %v7447 = vsel %vm5436, %v7415, %v6540
      %v7448 = vsel %vm5436, %v7416, %v6542
      %v7449 = vsel %vm5436, %v7417, %v6544
      %v7450 = vsel %vm5436, %v7418, %v6546
      %v7451 = vsel %vm5436, %v7419, %v6548
      %v7452 = vsel %vm5436, %v7420, %v6550
      %v7453 = vsel %vm5436, %v7421, %v6552
      %v7454 = vsel %vm5436, %v7422, %v6554
      %v7455 = vsel %vm5436, %v7423, %v6556
      %v7456 = vsel %vm5436, %v7424, %v6558
      %v7457 = vsel %vm5436, %v7425, %v6560
      %v7458 = vsel %vm5436, %v7426, %v6562
      %v7459 = vsel %vm5469, %v7427, %v6596
      %v7460 = vsel %vm5469, %v7428, %v6598
      %v7461 = vsel %vm5469, %v7429, %v6600
      %v7462 = vsel %vm5469, %v7430, %v6602
      %v7463 = vsel %vm5469, %v7431, %v6604
      %v7464 = vsel %vm5469, %v7432, %v6606
      %v7465 = vsel %vm5469, %v7433, %v6608
      %v7466 = vsel %vm5469, %v7434, %v6610
      %v7467 = vsel %vm5469, %v7435, %v6612
      %v7468 = vsel %vm5469, %v7436, %v6614
      %v7469 = vsel %vm5469, %v7437, %v6616
      %v7470 = vsel %vm5469, %v7438, %v6618
      %v7471 = vsel %vm5469, %v7439, %v6620
      %v7472 = vsel %vm5469, %v7440, %v6622
      %v7473 = vsel %vm5469, %v7441, %v6624
      %v7474 = vsel %vm5469, %v7442, %v6626
      %v7475 = vsel %vm5469, %v7443, %v6628
      %v7476 = vsel %vm5469, %v7444, %v6630
      %v7477 = vsel %vm5469, %v7445, %v6632
      %v7478 = vsel %vm5469, %v7446, %v6634
      %v7479 = vsel %vm5469, %v7447, %v6636
      %v7480 = vsel %vm5469, %v7448, %v6638
      %v7481 = vsel %vm5469, %v7449, %v6640
      %v7482 = vsel %vm5469, %v7450, %v6642
      %v7483 = vsel %vm5469, %v7451, %v6644
      %v7484 = vsel %vm5469, %v7452, %v6646
      %v7485 = vsel %vm5469, %v7453, %v6648
      %v7486 = vsel %vm5469, %v7454, %v6650
      %v7487 = vsel %vm5469, %v7455, %v6652
      %v7488 = vsel %vm5469, %v7456, %v6654
      %v7489 = vsel %vm5469, %v7457, %v6656
      %v7490 = vsel %vm5469, %v7458, %v6658
      %v7491 = vsel %vm5502, %v7459, %v6692
      %v7492 = vsel %vm5502, %v7460, %v6694
      %v7493 = vsel %vm5502, %v7461, %v6696
      %v7494 = vsel %vm5502, %v7462, %v6698
      %v7495 = vsel %vm5502, %v7463, %v6700
      %v7496 = vsel %vm5502, %v7464, %v6702
      %v7497 = vsel %vm5502, %v7465, %v6704
      %v7498 = vsel %vm5502, %v7466, %v6706
      %v7499 = vsel %vm5502, %v7467, %v6708
      %v7500 = vsel %vm5502, %v7468, %v6710
      %v7501 = vsel %vm5502, %v7469, %v6712
      %v7502 = vsel %vm5502, %v7470, %v6714
      %v7503 = vsel %vm5502, %v7471, %v6716
      %v7504 = vsel %vm5502, %v7472, %v6718
      %v7505 = vsel %vm5502, %v7473, %v6720
      %v7506 = vsel %vm5502, %v7474, %v6722
      %v7507 = vsel %vm5502, %v7475, %v6724
      %v7508 = vsel %vm5502, %v7476, %v6726
      %v7509 = vsel %vm5502, %v7477, %v6728
      %v7510 = vsel %vm5502, %v7478, %v6730
      %v7511 = vsel %vm5502, %v7479, %v6732
      %v7512 = vsel %vm5502, %v7480, %v6734
      %v7513 = vsel %vm5502, %v7481, %v6736
      %v7514 = vsel %vm5502, %v7482, %v6738
      %v7515 = vsel %vm5502, %v7483, %v6740
      %v7516 = vsel %vm5502, %v7484, %v6742
      %v7517 = vsel %vm5502, %v7485, %v6744
      %v7518 = vsel %vm5502, %v7486, %v6746
      %v7519 = vsel %vm5502, %v7487, %v6748
      %v7520 = vsel %vm5502, %v7488, %v6750
      %v7521 = vsel %vm5502, %v7489, %v6752
      %v7522 = vsel %vm5502, %v7490, %v6754
      %v7523 = vsel %vm5535, %v7491, %v6788
      %v7524 = vsel %vm5535, %v7492, %v6790
      %v7525 = vsel %vm5535, %v7493, %v6792
      %v7526 = vsel %vm5535, %v7494, %v6794
      %v7527 = vsel %vm5535, %v7495, %v6796
      %v7528 = vsel %vm5535, %v7496, %v6798
      %v7529 = vsel %vm5535, %v7497, %v6800
      %v7530 = vsel %vm5535, %v7498, %v6802
      %v7531 = vsel %vm5535, %v7499, %v6804
      %v7532 = vsel %vm5535, %v7500, %v6806
      %v7533 = vsel %vm5535, %v7501, %v6808
      %v7534 = vsel %vm5535, %v7502, %v6810
      %v7535 = vsel %vm5535, %v7503, %v6812
      %v7536 = vsel %vm5535, %v7504, %v6814
      %v7537 = vsel %vm5535, %v7505, %v6816
      %v7538 = vsel %vm5535, %v7506, %v6818
      %v7539 = vsel %vm5535, %v7507, %v6820
      %v7540 = vsel %vm5535, %v7508, %v6822
      %v7541 = vsel %vm5535, %v7509, %v6824
      %v7542 = vsel %vm5535, %v7510, %v6826
      %v7543 = vsel %vm5535, %v7511, %v6828
      %v7544 = vsel %vm5535, %v7512, %v6830
      %v7545 = vsel %vm5535, %v7513, %v6832
      %v7546 = vsel %vm5535, %v7514, %v6834
      %v7547 = vsel %vm5535, %v7515, %v6836
      %v7548 = vsel %vm5535, %v7516, %v6838
      %v7549 = vsel %vm5535, %v7517, %v6840
      %v7550 = vsel %vm5535, %v7518, %v6842
      %v7551 = vsel %vm5535, %v7519, %v6844
      %v7552 = vsel %vm5535, %v7520, %v6846
      %v7553 = vsel %vm5535, %v7521, %v6848
      %v7554 = vsel %vm5535, %v7522, %v6850
      %v7555 = vsel %vm5568, %v7523, %v6884
      %v7556 = vsel %vm5568, %v7524, %v6886
      %v7557 = vsel %vm5568, %v7525, %v6888
      %v7558 = vsel %vm5568, %v7526, %v6890
      %v7559 = vsel %vm5568, %v7527, %v6892
      %v7560 = vsel %vm5568, %v7528, %v6894
      %v7561 = vsel %vm5568, %v7529, %v6896
      %v7562 = vsel %vm5568, %v7530, %v6898
      %v7563 = vsel %vm5568, %v7531, %v6900
      %v7564 = vsel %vm5568, %v7532, %v6902
      %v7565 = vsel %vm5568, %v7533, %v6904
      %v7566 = vsel %vm5568, %v7534, %v6906
      %v7567 = vsel %vm5568, %v7535, %v6908
      %v7568 = vsel %vm5568, %v7536, %v6910
      %v7569 = vsel %vm5568, %v7537, %v6912
      %v7570 = vsel %vm5568, %v7538, %v6914
      %v7571 = vsel %vm5568, %v7539, %v6916
      %v7572 = vsel %vm5568, %v7540, %v6918
      %v7573 = vsel %vm5568, %v7541, %v6920
      %v7574 = vsel %vm5568, %v7542, %v6922
      %v7575 = vsel %vm5568, %v7543, %v6924
      %v7576 = vsel %vm5568, %v7544, %v6926
      %v7577 = vsel %vm5568, %v7545, %v6928
      %v7578 = vsel %vm5568, %v7546, %v6930
      %v7579 = vsel %vm5568, %v7547, %v6932
      %v7580 = vsel %vm5568, %v7548, %v6934
      %v7581 = vsel %vm5568, %v7549, %v6936
      %v7582 = vsel %vm5568, %v7550, %v6938
      %v7583 = vsel %vm5568, %v7551, %v6940
      %v7584 = vsel %vm5568, %v7552, %v6942
      %v7585 = vsel %vm5568, %v7553, %v6944
      %v7586 = vsel %vm5568, %v7554, %v6946
      %v7587 = vsel %vm5601, %v7555, %v6980
      %v7588 = vsel %vm5601, %v7556, %v6982
      %v7589 = vsel %vm5601, %v7557, %v6984
      %v7590 = vsel %vm5601, %v7558, %v6986
      %v7591 = vsel %vm5601, %v7559, %v6988
      %v7592 = vsel %vm5601, %v7560, %v6990
      %v7593 = vsel %vm5601, %v7561, %v6992
      %v7594 = vsel %vm5601, %v7562, %v6994
      %v7595 = vsel %vm5601, %v7563, %v6996
      %v7596 = vsel %vm5601, %v7564, %v6998
      %v7597 = vsel %vm5601, %v7565, %v7000
      %v7598 = vsel %vm5601, %v7566, %v7002
      %v7599 = vsel %vm5601, %v7567, %v7004
      %v7600 = vsel %vm5601, %v7568, %v7006
      %v7601 = vsel %vm5601, %v7569, %v7008
      %v7602 = vsel %vm5601, %v7570, %v7010
      %v7603 = vsel %vm5601, %v7571, %v7012
      %v7604 = vsel %vm5601, %v7572, %v7014
      %v7605 = vsel %vm5601, %v7573, %v7016
      %v7606 = vsel %vm5601, %v7574, %v7018
      %v7607 = vsel %vm5601, %v7575, %v7020
      %v7608 = vsel %vm5601, %v7576, %v7022
      %v7609 = vsel %vm5601, %v7577, %v7024
      %v7610 = vsel %vm5601, %v7578, %v7026
      %v7611 = vsel %vm5601, %v7579, %v7028
      %v7612 = vsel %vm5601, %v7580, %v7030
      %v7613 = vsel %vm5601, %v7581, %v7032
      %v7614 = vsel %vm5601, %v7582, %v7034
      %v7615 = vsel %vm5601, %v7583, %v7036
      %v7616 = vsel %vm5601, %v7584, %v7038
      %v7617 = vsel %vm5601, %v7585, %v7040
      %v7618 = vsel %vm5601, %v7586, %v7042
      %v7619 = vsel %vm5634, %v7587, %v7076
      %v7620 = vsel %vm5634, %v7588, %v7078
      %v7621 = vsel %vm5634, %v7589, %v7080
      %v7622 = vsel %vm5634, %v7590, %v7082
      %v7623 = vsel %vm5634, %v7591, %v7084
      %v7624 = vsel %vm5634, %v7592, %v7086
      %v7625 = vsel %vm5634, %v7593, %v7088
      %v7626 = vsel %vm5634, %v7594, %v7090
      %v7627 = vsel %vm5634, %v7595, %v7092
      %v7628 = vsel %vm5634, %v7596, %v7094
      %v7629 = vsel %vm5634, %v7597, %v7096
      %v7630 = vsel %vm5634, %v7598, %v7098
      %v7631 = vsel %vm5634, %v7599, %v7100
      %v7632 = vsel %vm5634, %v7600, %v7102
      %v7633 = vsel %vm5634, %v7601, %v7104
      %v7634 = vsel %vm5634, %v7602, %v7106
      %v7635 = vsel %vm5634, %v7603, %v7108
      %v7636 = vsel %vm5634, %v7604, %v7110
      %v7637 = vsel %vm5634, %v7605, %v7112
      %v7638 = vsel %vm5634, %v7606, %v7114
      %v7639 = vsel %vm5634, %v7607, %v7116
      %v7640 = vsel %vm5634, %v7608, %v7118
      %v7641 = vsel %vm5634, %v7609, %v7120
      %v7642 = vsel %vm5634, %v7610, %v7122
      %v7643 = vsel %vm5634, %v7611, %v7124
      %v7644 = vsel %vm5634, %v7612, %v7126
      %v7645 = vsel %vm5634, %v7613, %v7128
      %v7646 = vsel %vm5634, %v7614, %v7130
      %v7647 = vsel %vm5634, %v7615, %v7132
      %v7648 = vsel %vm5634, %v7616, %v7134
      %v7649 = vsel %vm5634, %v7617, %v7136
      %v7650 = vsel %vm5634, %v7618, %v7138
      %v7651 = vld [vmem:[%s15] sm:$0xff]
      %v7652 = vld [vmem:[%s15 + $0x8] sm:$0xff]
      %v7654 = vsel %vm5205, %v2723, 0
      %v7657 = vsel %vm5205, %v2728, 0
      %v7660 = vsel %vm5205, %v2733, 0
      %v7663 = vsel %vm5205, %v2738, 0
      %v7666 = vsel %vm5205, %v2743, 0
      %v7669 = vsel %vm5205, %v2748, 0
      %v7672 = vsel %vm5205, %v2753, 0
      %v7675 = vsel %vm5205, %v2758, 0
      %v7678 = vsel %vm5205, %v2763, 0
      %v7681 = vsel %vm5205, %v2768, 0
      %v7684 = vsel %vm5205, %v2773, 0
      %v7687 = vsel %vm5205, %v2778, 0
      %v7690 = vsel %vm5205, %v2783, 0
      %v7693 = vsel %vm5205, %v2788, 0
      %v7696 = vsel %vm5205, %v2793, 0
      %v7699 = vsel %vm5205, %v2798, 0
      %v7702 = vsel %vm5205, %v2803, 0
      %v7705 = vsel %vm5205, %v2808, 0
      %v7708 = vsel %vm5205, %v2813, 0
      %v7711 = vsel %vm5205, %v2818, 0
      %v7714 = vsel %vm5205, %v2823, 0
      %v7717 = vsel %vm5205, %v2828, 0
      %v7720 = vsel %vm5205, %v2833, 0
      %v7723 = vsel %vm5205, %v2838, 0
      %v7726 = vsel %vm5205, %v2843, 0
      %v7729 = vsel %vm5205, %v2848, 0
      %v7732 = vsel %vm5205, %v2853, 0
      %v7735 = vsel %vm5205, %v2858, 0
      %v7738 = vsel %vm5205, %v2863, 0
      %v7741 = vsel %vm5205, %v2868, 0
      %v7744 = vsel %vm5205, %v2873, 0
      %v7747 = vsel %vm5205, %v2878, 0
      %7749 = vmatprep.subr.mxu0 0.0
      %7750 = vmatpush1.msra.mxu0 0.0
      %7751 = vmatprep.subr.mxu0 0.0
      %7752 = vmatpush1.msra.mxu0 0.0
      %7753 = vmatprep.subr.mxu0 0.0
      %7754 = vmatpush1.msra.mxu0 0.0
      %7755 = vmatprep.subr.mxu0 0.0
      %7756 = vmatpush1.msra.mxu0 0.0
      %7757 = vmatprep.subr.mxu0 0.0
      %7758 = vmatpush1.msra.mxu0 0.0
      %7759 = vmatprep.subr.mxu0 0.0
      %7760 = vmatpush1.msra.mxu0 0.0
      %7761 = vmatprep.subr.mxu0 0.0
      %7762 = vmatpush1.msra.mxu0 0.0
      %7763 = vmatprep.subr.mxu0 0.0
      %7764 = vmatpush1.msra.mxu0 0.0
      %7765 = vmatprep.subr.mxu0 0.0
      %7766 = vmatpush1.msra.mxu0 0.0
      %7767 = vmatprep.subr.mxu0 0.0
      %7768 = vmatpush1.msra.mxu0 0.0
      %7769 = vmatprep.subr.mxu0 0.0
      %7770 = vmatpush1.msra.mxu0 0.0
      %7771 = vmatprep.subr.mxu0 0.0
      %7772 = vmatpush1.msra.mxu0 0.0
      %7773 = vmatprep.subr.mxu0 0.0
      %7774 = vmatpush1.msra.mxu0 0.0
      %7775 = vmatprep.subr.mxu0 0.0
      %7776 = vmatpush1.msra.mxu0 0.0
      %7777 = vmatprep.subr.mxu0 0.0
      %7778 = vmatpush1.msra.mxu0 %v7652
      %7779 = vmatprep.subr.mxu0 0.0
      %7780 = vmatpush1.msra.mxu0 %v7651
      %7781 = vmatprep.subr.mxu0 0.0
      %7782 = vmatpush2.msra.mxu0 0.0
      %7783 = vmatprep.subr.mxu0 0.0
      %7784 = vmatpush2.msra.mxu0 0.0
      %7785 = vmatprep.subr.mxu0 0.0
      %7786 = vmatpush2.msra.mxu0 0.0
      %7787 = vmatprep.subr.mxu0 0.0
      %7788 = vmatpush2.msra.mxu0 0.0
      %7789 = vmatprep.subr.mxu0 0.0
      %7790 = vmatpush2.msra.mxu0 0.0
      %7791 = vmatprep.subr.mxu0 0.0
      %7792 = vmatpush2.msra.mxu0 0.0
      %7793 = vmatprep.subr.mxu0 0.0
      %7794 = vmatpush2.msra.mxu0 0.0
      %7795 = vmatprep.subr.mxu0 0.0
      %7796 = vmatpush2.msra.mxu0 0.0
      %7797 = vmatprep.subr.mxu0 0.0
      %7798 = vmatpush2.msra.mxu0 0.0
      %7799 = vmatprep.subr.mxu0 0.0
      %7800 = vmatpush2.msra.mxu0 0.0
      %7801 = vmatprep.subr.mxu0 0.0
      %7802 = vmatpush2.msra.mxu0 0.0
      %7803 = vmatprep.subr.mxu0 0.0
      %7804 = vmatpush2.msra.mxu0 0.0
      %7805 = vmatprep.subr.mxu0 0.0
      %7806 = vmatpush2.msra.mxu0 0.0
      %7807 = vmatprep.subr.mxu0 0.0
      %7808 = vmatpush2.msra.mxu0 0.0
      %7809 = vmatprep.subr.mxu0 0.0
      %7810 = vmatpush2.msra.mxu0 0.0
      %7811 = vmatprep.subr.mxu0 0.0
      %7812 = vmatpush2.msra.mxu0 0.0
      %7813 = vmatprep.mubr.f32.mxu0 0.0
      %7814 = vmatmul.mubr.f32.gmra.mxu0 %v7654
      %v7815 = vpop.f32.mrf.mxu0
      %v7816 = vadd.f32 0.0, %v7815
      %v7817 = vpop.f32.mrf.mxu0
      %7818 = vmatprep.mubr.f32.mxu0 0.0
      %7819 = vmatmul.mubr.f32.gmra.mxu0 %v7657
      %v7820 = vpop.f32.mrf.mxu0
      %v7821 = vadd.f32 0.0, %v7820
      %v7822 = vpop.f32.mrf.mxu0
      %7823 = vmatprep.mubr.f32.mxu0 0.0
      %7824 = vmatmul.mubr.f32.gmra.mxu0 %v7660
      %v7825 = vpop.f32.mrf.mxu0
      %v7826 = vadd.f32 0.0, %v7825
      %v7827 = vpop.f32.mrf.mxu0
      %7828 = vmatprep.mubr.f32.mxu0 0.0
      %7829 = vmatmul.mubr.f32.gmra.mxu0 %v7663
      %v7830 = vpop.f32.mrf.mxu0
      %v7831 = vadd.f32 0.0, %v7830
      %v7832 = vpop.f32.mrf.mxu0
      %7833 = vmatprep.mubr.f32.mxu0 0.0
      %7834 = vmatmul.mubr.f32.gmra.mxu0 %v7666
      %v7835 = vpop.f32.mrf.mxu0
      %v7836 = vadd.f32 0.0, %v7835
      %v7837 = vpop.f32.mrf.mxu0
      %7838 = vmatprep.mubr.f32.mxu0 0.0
      %7839 = vmatmul.mubr.f32.gmra.mxu0 %v7669
      %v7840 = vpop.f32.mrf.mxu0
      %v7841 = vadd.f32 0.0, %v7840
      %v7842 = vpop.f32.mrf.mxu0
      %7843 = vmatprep.mubr.f32.mxu0 0.0
      %7844 = vmatmul.mubr.f32.gmra.mxu0 %v7672
      %v7845 = vpop.f32.mrf.mxu0
      %v7846 = vadd.f32 0.0, %v7845
      %v7847 = vpop.f32.mrf.mxu0
      %7848 = vmatprep.mubr.f32.mxu0 0.0
      %7849 = vmatmul.mubr.f32.gmra.mxu0 %v7675
      %v7850 = vpop.f32.mrf.mxu0
      %v7851 = vadd.f32 0.0, %v7850
      %v7852 = vpop.f32.mrf.mxu0
      %7853 = vmatprep.mubr.f32.mxu0 0.0
      %7854 = vmatmul.mubr.f32.gmra.mxu0 %v7678
      %v7855 = vpop.f32.mrf.mxu0
      %v7856 = vadd.f32 0.0, %v7855
      %v7857 = vpop.f32.mrf.mxu0
      %7858 = vmatprep.mubr.f32.mxu0 0.0
      %7859 = vmatmul.mubr.f32.gmra.mxu0 %v7681
      %v7860 = vpop.f32.mrf.mxu0
      %v7861 = vadd.f32 0.0, %v7860
      %v7862 = vpop.f32.mrf.mxu0
      %7863 = vmatprep.mubr.f32.mxu0 0.0
      %7864 = vmatmul.mubr.f32.gmra.mxu0 %v7684
      %v7865 = vpop.f32.mrf.mxu0
      %v7866 = vadd.f32 0.0, %v7865
      %v7867 = vpop.f32.mrf.mxu0
      %7868 = vmatprep.mubr.f32.mxu0 0.0
      %7869 = vmatmul.mubr.f32.gmra.mxu0 %v7687
      %v7870 = vpop.f32.mrf.mxu0
      %v7871 = vadd.f32 0.0, %v7870
      %v7872 = vpop.f32.mrf.mxu0
      %7873 = vmatprep.mubr.f32.mxu0 0.0
      %7874 = vmatmul.mubr.f32.gmra.mxu0 %v7690
      %v7875 = vpop.f32.mrf.mxu0
      %v7876 = vadd.f32 0.0, %v7875
      %v7877 = vpop.f32.mrf.mxu0
      %7878 = vmatprep.mubr.f32.mxu0 0.0
      %7879 = vmatmul.mubr.f32.gmra.mxu0 %v7693
      %v7880 = vpop.f32.mrf.mxu0
      %v7881 = vadd.f32 0.0, %v7880
      %v7882 = vpop.f32.mrf.mxu0
      %7883 = vmatprep.mubr.f32.mxu0 0.0
      %7884 = vmatmul.mubr.f32.gmra.mxu0 %v7696
      %v7885 = vpop.f32.mrf.mxu0
      %v7886 = vadd.f32 0.0, %v7885
      %v7887 = vpop.f32.mrf.mxu0
      %7888 = vmatprep.mubr.f32.mxu0 0.0
      %7889 = vmatmul.mubr.f32.gmra.mxu0 %v7699
      %v7890 = vpop.f32.mrf.mxu0
      %v7891 = vadd.f32 0.0, %v7890
      %v7892 = vpop.f32.mrf.mxu0
      %7893 = vmatprep.mubr.f32.mxu0 0.0
      %7894 = vmatmul.mubr.f32.gmra.mxu0 %v7702
      %v7895 = vpop.f32.mrf.mxu0
      %v7896 = vadd.f32 0.0, %v7895
      %v7897 = vpop.f32.mrf.mxu0
      %7898 = vmatprep.mubr.f32.mxu0 0.0
      %7899 = vmatmul.mubr.f32.gmra.mxu0 %v7705
      %v7900 = vpop.f32.mrf.mxu0
      %v7901 = vadd.f32 0.0, %v7900
      %v7902 = vpop.f32.mrf.mxu0
      %7903 = vmatprep.mubr.f32.mxu0 0.0
      %7904 = vmatmul.mubr.f32.gmra.mxu0 %v7708
      %v7905 = vpop.f32.mrf.mxu0
      %v7906 = vadd.f32 0.0, %v7905
      %v7907 = vpop.f32.mrf.mxu0
      %7908 = vmatprep.mubr.f32.mxu0 0.0
      %7909 = vmatmul.mubr.f32.gmra.mxu0 %v7711
      %v7910 = vpop.f32.mrf.mxu0
      %v7911 = vadd.f32 0.0, %v7910
      %v7912 = vpop.f32.mrf.mxu0
      %7913 = vmatprep.mubr.f32.mxu0 0.0
      %7914 = vmatmul.mubr.f32.gmra.mxu0 %v7714
      %v7915 = vpop.f32.mrf.mxu0
      %v7916 = vadd.f32 0.0, %v7915
      %v7917 = vpop.f32.mrf.mxu0
      %7918 = vmatprep.mubr.f32.mxu0 0.0
      %7919 = vmatmul.mubr.f32.gmra.mxu0 %v7717
      %v7920 = vpop.f32.mrf.mxu0
      %v7921 = vadd.f32 0.0, %v7920
      %v7922 = vpop.f32.mrf.mxu0
      %7923 = vmatprep.mubr.f32.mxu0 0.0
      %7924 = vmatmul.mubr.f32.gmra.mxu0 %v7720
      %v7925 = vpop.f32.mrf.mxu0
      %v7926 = vadd.f32 0.0, %v7925
      %v7927 = vpop.f32.mrf.mxu0
      %7928 = vmatprep.mubr.f32.mxu0 0.0
      %7929 = vmatmul.mubr.f32.gmra.mxu0 %v7723
      %v7930 = vpop.f32.mrf.mxu0
      %v7931 = vadd.f32 0.0, %v7930
      %v7932 = vpop.f32.mrf.mxu0
      %7933 = vmatprep.mubr.f32.mxu0 0.0
      %7934 = vmatmul.mubr.f32.gmra.mxu0 %v7726
      %v7935 = vpop.f32.mrf.mxu0
      %v7936 = vadd.f32 0.0, %v7935
      %v7937 = vpop.f32.mrf.mxu0
      %7938 = vmatprep.mubr.f32.mxu0 0.0
      %7939 = vmatmul.mubr.f32.gmra.mxu0 %v7729
      %v7940 = vpop.f32.mrf.mxu0
      %v7941 = vadd.f32 0.0, %v7940
      %v7942 = vpop.f32.mrf.mxu0
      %7943 = vmatprep.mubr.f32.mxu0 0.0
      %7944 = vmatmul.mubr.f32.gmra.mxu0 %v7732
      %v7945 = vpop.f32.mrf.mxu0
      %v7946 = vadd.f32 0.0, %v7945
      %v7947 = vpop.f32.mrf.mxu0
      %7948 = vmatprep.mubr.f32.mxu0 0.0
      %7949 = vmatmul.mubr.f32.gmra.mxu0 %v7735
      %v7950 = vpop.f32.mrf.mxu0
      %v7951 = vadd.f32 0.0, %v7950
      %v7952 = vpop.f32.mrf.mxu0
      %7953 = vmatprep.mubr.f32.mxu0 0.0
      %7954 = vmatmul.mubr.f32.gmra.mxu0 %v7738
      %v7955 = vpop.f32.mrf.mxu0
      %v7956 = vadd.f32 0.0, %v7955
      %v7957 = vpop.f32.mrf.mxu0
      %7958 = vmatprep.mubr.f32.mxu0 0.0
      %7959 = vmatmul.mubr.f32.gmra.mxu0 %v7741
      %v7960 = vpop.f32.mrf.mxu0
      %v7961 = vadd.f32 0.0, %v7960
      %v7962 = vpop.f32.mrf.mxu0
      %7963 = vmatprep.mubr.f32.mxu0 0.0
      %7964 = vmatmul.mubr.f32.gmra.mxu0 %v7744
      %v7965 = vpop.f32.mrf.mxu0
      %v7966 = vadd.f32 0.0, %v7965
      %v7967 = vpop.f32.mrf.mxu0
      %7968 = vmatprep.mubr.f32.mxu0 0.0
      %7969 = vmatmul.mubr.f32.gmra.mxu0 %v7747
      %v7970 = vpop.f32.mrf.mxu0
      %v7971 = vadd.f32 0.0, %v7970
      %v7972 = vpop.f32.mrf.mxu0
      %7973 = vdwg.mxu0
      %v7975 = vsel %vm5205, %v2949, 0
      %v7978 = vsel %vm5205, %v2954, 0
      %v7981 = vsel %vm5205, %v2959, 0
      %v7984 = vsel %vm5205, %v2964, 0
      %v7987 = vsel %vm5205, %v2969, 0
      %v7990 = vsel %vm5205, %v2974, 0
      %v7993 = vsel %vm5205, %v2979, 0
      %v7996 = vsel %vm5205, %v2984, 0
      %v7999 = vsel %vm5205, %v2989, 0
      %v8002 = vsel %vm5205, %v2994, 0
      %v8005 = vsel %vm5205, %v2999, 0
      %v8008 = vsel %vm5205, %v3004, 0
      %v8011 = vsel %vm5205, %v3009, 0
      %v8014 = vsel %vm5205, %v3014, 0
      %v8017 = vsel %vm5205, %v3019, 0
      %v8020 = vsel %vm5205, %v3024, 0
      %v8023 = vsel %vm5205, %v3029, 0
      %v8026 = vsel %vm5205, %v3034, 0
      %v8029 = vsel %vm5205, %v3039, 0
      %v8032 = vsel %vm5205, %v3044, 0
      %v8035 = vsel %vm5205, %v3049, 0
      %v8038 = vsel %vm5205, %v3054, 0
      %v8041 = vsel %vm5205, %v3059, 0
      %v8044 = vsel %vm5205, %v3064, 0
      %v8047 = vsel %vm5205, %v3069, 0
      %v8050 = vsel %vm5205, %v3074, 0
      %v8053 = vsel %vm5205, %v3079, 0
      %v8056 = vsel %vm5205, %v3084, 0
      %v8059 = vsel %vm5205, %v3089, 0
      %v8062 = vsel %vm5205, %v3094, 0
      %v8065 = vsel %vm5205, %v3099, 0
      %v8068 = vsel %vm5205, %v3104, 0
      %8070 = vmatprep.subr.mxu0 0.0
      %8071 = vmatpush1.msra.mxu0 0.0
      %8072 = vmatprep.subr.mxu0 0.0
      %8073 = vmatpush1.msra.mxu0 0.0
      %8074 = vmatprep.subr.mxu0 0.0
      %8075 = vmatpush1.msra.mxu0 0.0
      %8076 = vmatprep.subr.mxu0 0.0
      %8077 = vmatpush1.msra.mxu0 0.0
      %8078 = vmatprep.subr.mxu0 0.0
      %8079 = vmatpush1.msra.mxu0 0.0
      %8080 = vmatprep.subr.mxu0 0.0
      %8081 = vmatpush1.msra.mxu0 0.0
      %8082 = vmatprep.subr.mxu0 0.0
      %8083 = vmatpush1.msra.mxu0 0.0
      %8084 = vmatprep.subr.mxu0 0.0
      %8085 = vmatpush1.msra.mxu0 0.0
      %8086 = vmatprep.subr.mxu0 0.0
      %8087 = vmatpush1.msra.mxu0 0.0
      %8088 = vmatprep.subr.mxu0 0.0
      %8089 = vmatpush1.msra.mxu0 0.0
      %8090 = vmatprep.subr.mxu0 0.0
      %8091 = vmatpush1.msra.mxu0 0.0
      %8092 = vmatprep.subr.mxu0 0.0
      %8093 = vmatpush1.msra.mxu0 0.0
      %8094 = vmatprep.subr.mxu0 0.0
      %8095 = vmatpush1.msra.mxu0 0.0
      %8096 = vmatprep.subr.mxu0 0.0
      %8097 = vmatpush1.msra.mxu0 0.0
      %8098 = vmatprep.subr.mxu0 0.0
      %8099 = vmatpush1.msra.mxu0 %v7652
      %8100 = vmatprep.subr.mxu0 0.0
      %8101 = vmatpush1.msra.mxu0 %v7651
      %8102 = vmatprep.subr.mxu0 0.0
      %8103 = vmatpush2.msra.mxu0 0.0
      %8104 = vmatprep.subr.mxu0 0.0
      %8105 = vmatpush2.msra.mxu0 0.0
      %8106 = vmatprep.subr.mxu0 0.0
      %8107 = vmatpush2.msra.mxu0 0.0
      %8108 = vmatprep.subr.mxu0 0.0
      %8109 = vmatpush2.msra.mxu0 0.0
      %8110 = vmatprep.subr.mxu0 0.0
      %8111 = vmatpush2.msra.mxu0 0.0
      %8112 = vmatprep.subr.mxu0 0.0
      %8113 = vmatpush2.msra.mxu0 0.0
      %8114 = vmatprep.subr.mxu0 0.0
      %8115 = vmatpush2.msra.mxu0 0.0
      %8116 = vmatprep.subr.mxu0 0.0
      %8117 = vmatpush2.msra.mxu0 0.0
      %8118 = vmatprep.subr.mxu0 0.0
      %8119 = vmatpush2.msra.mxu0 0.0
      %8120 = vmatprep.subr.mxu0 0.0
      %8121 = vmatpush2.msra.mxu0 0.0
      %8122 = vmatprep.subr.mxu0 0.0
      %8123 = vmatpush2.msra.mxu0 0.0
      %8124 = vmatprep.subr.mxu0 0.0
      %8125 = vmatpush2.msra.mxu0 0.0
      %8126 = vmatprep.subr.mxu0 0.0
      %8127 = vmatpush2.msra.mxu0 0.0
      %8128 = vmatprep.subr.mxu0 0.0
      %8129 = vmatpush2.msra.mxu0 0.0
      %8130 = vmatprep.subr.mxu0 0.0
      %8131 = vmatpush2.msra.mxu0 0.0
      %8132 = vmatprep.subr.mxu0 0.0
      %8133 = vmatpush2.msra.mxu0 0.0
      %8134 = vmatprep.mubr.f32.mxu0 0.0
      %8135 = vmatmul.mubr.f32.gmra.mxu0 %v7975
      %v8136 = vpop.f32.mrf.mxu0
      %v8137 = vadd.f32 0.0, %v8136
      %v8138 = vpop.f32.mrf.mxu0
      %8139 = vmatprep.mubr.f32.mxu0 0.0
      %8140 = vmatmul.mubr.f32.gmra.mxu0 %v7978
      %v8141 = vpop.f32.mrf.mxu0
      %v8142 = vadd.f32 0.0, %v8141
      %v8143 = vpop.f32.mrf.mxu0
      %8144 = vmatprep.mubr.f32.mxu0 0.0
      %8145 = vmatmul.mubr.f32.gmra.mxu0 %v7981
      %v8146 = vpop.f32.mrf.mxu0
      %v8147 = vadd.f32 0.0, %v8146
      %v8148 = vpop.f32.mrf.mxu0
      %8149 = vmatprep.mubr.f32.mxu0 0.0
      %8150 = vmatmul.mubr.f32.gmra.mxu0 %v7984
      %v8151 = vpop.f32.mrf.mxu0
      %v8152 = vadd.f32 0.0, %v8151
      %v8153 = vpop.f32.mrf.mxu0
      %8154 = vmatprep.mubr.f32.mxu0 0.0
      %8155 = vmatmul.mubr.f32.gmra.mxu0 %v7987
      %v8156 = vpop.f32.mrf.mxu0
      %v8157 = vadd.f32 0.0, %v8156
      %v8158 = vpop.f32.mrf.mxu0
      %8159 = vmatprep.mubr.f32.mxu0 0.0
      %8160 = vmatmul.mubr.f32.gmra.mxu0 %v7990
      %v8161 = vpop.f32.mrf.mxu0
      %v8162 = vadd.f32 0.0, %v8161
      %v8163 = vpop.f32.mrf.mxu0
      %8164 = vmatprep.mubr.f32.mxu0 0.0
      %8165 = vmatmul.mubr.f32.gmra.mxu0 %v7993
      %v8166 = vpop.f32.mrf.mxu0
      %v8167 = vadd.f32 0.0, %v8166
      %v8168 = vpop.f32.mrf.mxu0
      %8169 = vmatprep.mubr.f32.mxu0 0.0
      %8170 = vmatmul.mubr.f32.gmra.mxu0 %v7996
      %v8171 = vpop.f32.mrf.mxu0
      %v8172 = vadd.f32 0.0, %v8171
      %v8173 = vpop.f32.mrf.mxu0
      %8174 = vmatprep.mubr.f32.mxu0 0.0
      %8175 = vmatmul.mubr.f32.gmra.mxu0 %v7999
      %v8176 = vpop.f32.mrf.mxu0
      %v8177 = vadd.f32 0.0, %v8176
      %v8178 = vpop.f32.mrf.mxu0
      %8179 = vmatprep.mubr.f32.mxu0 0.0
      %8180 = vmatmul.mubr.f32.gmra.mxu0 %v8002
      %v8181 = vpop.f32.mrf.mxu0
      %v8182 = vadd.f32 0.0, %v8181
      %v8183 = vpop.f32.mrf.mxu0
      %8184 = vmatprep.mubr.f32.mxu0 0.0
      %8185 = vmatmul.mubr.f32.gmra.mxu0 %v8005
      %v8186 = vpop.f32.mrf.mxu0
      %v8187 = vadd.f32 0.0, %v8186
      %v8188 = vpop.f32.mrf.mxu0
      %8189 = vmatprep.mubr.f32.mxu0 0.0
      %8190 = vmatmul.mubr.f32.gmra.mxu0 %v8008
      %v8191 = vpop.f32.mrf.mxu0
      %v8192 = vadd.f32 0.0, %v8191
      %v8193 = vpop.f32.mrf.mxu0
      %8194 = vmatprep.mubr.f32.mxu0 0.0
      %8195 = vmatmul.mubr.f32.gmra.mxu0 %v8011
      %v8196 = vpop.f32.mrf.mxu0
      %v8197 = vadd.f32 0.0, %v8196
      %v8198 = vpop.f32.mrf.mxu0
      %8199 = vmatprep.mubr.f32.mxu0 0.0
      %8200 = vmatmul.mubr.f32.gmra.mxu0 %v8014
      %v8201 = vpop.f32.mrf.mxu0
      %v8202 = vadd.f32 0.0, %v8201
      %v8203 = vpop.f32.mrf.mxu0
      %8204 = vmatprep.mubr.f32.mxu0 0.0
      %8205 = vmatmul.mubr.f32.gmra.mxu0 %v8017
      %v8206 = vpop.f32.mrf.mxu0
      %v8207 = vadd.f32 0.0, %v8206
      %v8208 = vpop.f32.mrf.mxu0
      %8209 = vmatprep.mubr.f32.mxu0 0.0
      %8210 = vmatmul.mubr.f32.gmra.mxu0 %v8020
      %v8211 = vpop.f32.mrf.mxu0
      %v8212 = vadd.f32 0.0, %v8211
      %v8213 = vpop.f32.mrf.mxu0
      %8214 = vmatprep.mubr.f32.mxu0 0.0
      %8215 = vmatmul.mubr.f32.gmra.mxu0 %v8023
      %v8216 = vpop.f32.mrf.mxu0
      %v8217 = vadd.f32 0.0, %v8216
      %v8218 = vpop.f32.mrf.mxu0
      %8219 = vmatprep.mubr.f32.mxu0 0.0
      %8220 = vmatmul.mubr.f32.gmra.mxu0 %v8026
      %v8221 = vpop.f32.mrf.mxu0
      %v8222 = vadd.f32 0.0, %v8221
      %v8223 = vpop.f32.mrf.mxu0
      %8224 = vmatprep.mubr.f32.mxu0 0.0
      %8225 = vmatmul.mubr.f32.gmra.mxu0 %v8029
      %v8226 = vpop.f32.mrf.mxu0
      %v8227 = vadd.f32 0.0, %v8226
      %v8228 = vpop.f32.mrf.mxu0
      %8229 = vmatprep.mubr.f32.mxu0 0.0
      %8230 = vmatmul.mubr.f32.gmra.mxu0 %v8032
      %v8231 = vpop.f32.mrf.mxu0
      %v8232 = vadd.f32 0.0, %v8231
      %v8233 = vpop.f32.mrf.mxu0
      %8234 = vmatprep.mubr.f32.mxu0 0.0
      %8235 = vmatmul.mubr.f32.gmra.mxu0 %v8035
      %v8236 = vpop.f32.mrf.mxu0
      %v8237 = vadd.f32 0.0, %v8236
      %v8238 = vpop.f32.mrf.mxu0
      %8239 = vmatprep.mubr.f32.mxu0 0.0
      %8240 = vmatmul.mubr.f32.gmra.mxu0 %v8038
      %v8241 = vpop.f32.mrf.mxu0
      %v8242 = vadd.f32 0.0, %v8241
      %v8243 = vpop.f32.mrf.mxu0
      %8244 = vmatprep.mubr.f32.mxu0 0.0
      %8245 = vmatmul.mubr.f32.gmra.mxu0 %v8041
      %v8246 = vpop.f32.mrf.mxu0
      %v8247 = vadd.f32 0.0, %v8246
      %v8248 = vpop.f32.mrf.mxu0
      %8249 = vmatprep.mubr.f32.mxu0 0.0
      %8250 = vmatmul.mubr.f32.gmra.mxu0 %v8044
      %v8251 = vpop.f32.mrf.mxu0
      %v8252 = vadd.f32 0.0, %v8251
      %v8253 = vpop.f32.mrf.mxu0
      %8254 = vmatprep.mubr.f32.mxu0 0.0
      %8255 = vmatmul.mubr.f32.gmra.mxu0 %v8047
      %v8256 = vpop.f32.mrf.mxu0
      %v8257 = vadd.f32 0.0, %v8256
      %v8258 = vpop.f32.mrf.mxu0
      %8259 = vmatprep.mubr.f32.mxu0 0.0
      %8260 = vmatmul.mubr.f32.gmra.mxu0 %v8050
      %v8261 = vpop.f32.mrf.mxu0
      %v8262 = vadd.f32 0.0, %v8261
      %v8263 = vpop.f32.mrf.mxu0
      %8264 = vmatprep.mubr.f32.mxu0 0.0
      %8265 = vmatmul.mubr.f32.gmra.mxu0 %v8053
      %v8266 = vpop.f32.mrf.mxu0
      %v8267 = vadd.f32 0.0, %v8266
      %v8268 = vpop.f32.mrf.mxu0
      %8269 = vmatprep.mubr.f32.mxu0 0.0
      %8270 = vmatmul.mubr.f32.gmra.mxu0 %v8056
      %v8271 = vpop.f32.mrf.mxu0
      %v8272 = vadd.f32 0.0, %v8271
      %v8273 = vpop.f32.mrf.mxu0
      %8274 = vmatprep.mubr.f32.mxu0 0.0
      %8275 = vmatmul.mubr.f32.gmra.mxu0 %v8059
      %v8276 = vpop.f32.mrf.mxu0
      %v8277 = vadd.f32 0.0, %v8276
      %v8278 = vpop.f32.mrf.mxu0
      %8279 = vmatprep.mubr.f32.mxu0 0.0
      %8280 = vmatmul.mubr.f32.gmra.mxu0 %v8062
      %v8281 = vpop.f32.mrf.mxu0
      %v8282 = vadd.f32 0.0, %v8281
      %v8283 = vpop.f32.mrf.mxu0
      %8284 = vmatprep.mubr.f32.mxu0 0.0
      %8285 = vmatmul.mubr.f32.gmra.mxu0 %v8065
      %v8286 = vpop.f32.mrf.mxu0
      %v8287 = vadd.f32 0.0, %v8286
      %v8288 = vpop.f32.mrf.mxu0
      %8289 = vmatprep.mubr.f32.mxu0 0.0
      %8290 = vmatmul.mubr.f32.gmra.mxu0 %v8068
      %v8291 = vpop.f32.mrf.mxu0
      %v8292 = vadd.f32 0.0, %v8291
      %v8293 = vpop.f32.mrf.mxu0
      %8294 = vdwg.mxu0
      %v8296 = vlaneseq
      %v8297 = vshrl.u32 %v8296, 7
      %v8298 = vsub.s32 0, %v8297
      %v8299 = vrot.slane %v3700, %v8298
      %v8301 = vmul.f32 %v5635, %v8299
      %v8302 = vmul.f32 %v5636, %v8299
      %v8303 = vmul.f32 %v5637, %v8299
      %v8304 = vmul.f32 %v5638, %v8299
      %v8305 = vmul.f32 %v5639, %v8299
      %v8306 = vmul.f32 %v5640, %v8299
      %v8307 = vmul.f32 %v5641, %v8299
      %v8308 = vmul.f32 %v5642, %v8299
      %v8309 = vmul.f32 %v5643, %v8299
      %v8310 = vmul.f32 %v5644, %v8299
      %v8311 = vmul.f32 %v5645, %v8299
      %v8312 = vmul.f32 %v5646, %v8299
      %v8313 = vmul.f32 %v5647, %v8299
      %v8314 = vmul.f32 %v5648, %v8299
      %v8315 = vmul.f32 %v5649, %v8299
      %v8316 = vmul.f32 %v5650, %v8299
      %v8317 = vmul.f32 %v5651, %v8299
      %v8318 = vmul.f32 %v5652, %v8299
      %v8319 = vmul.f32 %v5653, %v8299
      %v8320 = vmul.f32 %v5654, %v8299
      %v8321 = vmul.f32 %v5655, %v8299
      %v8322 = vmul.f32 %v5656, %v8299
      %v8323 = vmul.f32 %v5657, %v8299
      %v8324 = vmul.f32 %v5658, %v8299
      %v8325 = vmul.f32 %v5659, %v8299
      %v8326 = vmul.f32 %v5660, %v8299
      %v8327 = vmul.f32 %v5661, %v8299
      %v8328 = vmul.f32 %v5662, %v8299
      %v8329 = vmul.f32 %v5663, %v8299
      %v8330 = vmul.f32 %v5664, %v8299
      %v8331 = vmul.f32 %v5665, %v8299
      %v8332 = vmul.f32 %v5666, %v8299
      %v8333 = vmul.f32 %v8301, 1.442695
      %v8334 = vpow.pop %v8333
      %v8335 = vmul.f32 %v8302, 1.442695
      %v8336 = vpow.pop %v8335
      %v8337 = vmul.f32 %v8303, 1.442695
      %v8338 = vpow.pop %v8337
      %v8339 = vmul.f32 %v8304, 1.442695
      %v8340 = vpow.pop %v8339
      %v8341 = vmul.f32 %v8305, 1.442695
      %v8342 = vpow.pop %v8341
      %v8343 = vmul.f32 %v8306, 1.442695
      %v8344 = vpow.pop %v8343
      %v8345 = vmul.f32 %v8307, 1.442695
      %v8346 = vpow.pop %v8345
      %v8347 = vmul.f32 %v8308, 1.442695
      %v8348 = vpow.pop %v8347
      %v8349 = vmul.f32 %v8309, 1.442695
      %v8350 = vpow.pop %v8349
      %v8351 = vmul.f32 %v8310, 1.442695
      %v8352 = vpow.pop %v8351
      %v8353 = vmul.f32 %v8311, 1.442695
      %v8354 = vpow.pop %v8353
      %v8355 = vmul.f32 %v8312, 1.442695
      %v8356 = vpow.pop %v8355
      %v8357 = vmul.f32 %v8313, 1.442695
      %v8358 = vpow.pop %v8357
      %v8359 = vmul.f32 %v8314, 1.442695
      %v8360 = vpow.pop %v8359
      %v8361 = vmul.f32 %v8315, 1.442695
      %v8362 = vpow.pop %v8361
      %v8363 = vmul.f32 %v8316, 1.442695
      %v8364 = vpow.pop %v8363
      %v8365 = vmul.f32 %v8317, 1.442695
      %v8366 = vpow.pop %v8365
      %v8367 = vmul.f32 %v8318, 1.442695
      %v8368 = vpow.pop %v8367
      %v8369 = vmul.f32 %v8319, 1.442695
      %v8370 = vpow.pop %v8369
      %v8371 = vmul.f32 %v8320, 1.442695
      %v8372 = vpow.pop %v8371
      %v8373 = vmul.f32 %v8321, 1.442695
      %v8374 = vpow.pop %v8373
      %v8375 = vmul.f32 %v8322, 1.442695
      %v8376 = vpow.pop %v8375
      %v8377 = vmul.f32 %v8323, 1.442695
      %v8378 = vpow.pop %v8377
      %v8379 = vmul.f32 %v8324, 1.442695
      %v8380 = vpow.pop %v8379
      %v8381 = vmul.f32 %v8325, 1.442695
      %v8382 = vpow.pop %v8381
      %v8383 = vmul.f32 %v8326, 1.442695
      %v8384 = vpow.pop %v8383
      %v8385 = vmul.f32 %v8327, 1.442695
      %v8386 = vpow.pop %v8385
      %v8387 = vmul.f32 %v8328, 1.442695
      %v8388 = vpow.pop %v8387
      %v8389 = vmul.f32 %v8329, 1.442695
      %v8390 = vpow.pop %v8389
      %v8391 = vmul.f32 %v8330, 1.442695
      %v8392 = vpow.pop %v8391
      %v8393 = vmul.f32 %v8331, 1.442695
      %v8394 = vpow.pop %v8393
      %v8395 = vmul.f32 %v8332, 1.442695
      %v8396 = vpow.pop %v8395
      %8397 = vst [vmem:[#allocation3] sm:$0xff] %v8334
      %8398 = vst [vmem:[#allocation3 + $0x8] sm:$0xff] %v8336
      %8399 = vst [vmem:[#allocation3 + $0x10] sm:$0xff] %v8338
      %8400 = vst [vmem:[#allocation3 + $0x18] sm:$0xff] %v8340
      %8401 = vst [vmem:[#allocation3 + $0x20] sm:$0xff] %v8342
      %8402 = vst [vmem:[#allocation3 + $0x28] sm:$0xff] %v8344
      %8403 = vst [vmem:[#allocation3 + $0x30] sm:$0xff] %v8346
      %8404 = vst [vmem:[#allocation3 + $0x38] sm:$0xff] %v8348
      %8405 = vst [vmem:[#allocation3 + $0x40] sm:$0xff] %v8350
      %8406 = vst [vmem:[#allocation3 + $0x48] sm:$0xff] %v8352
      %8407 = vst [vmem:[#allocation3 + $0x50] sm:$0xff] %v8354
      %8408 = vst [vmem:[#allocation3 + $0x58] sm:$0xff] %v8356
      %8409 = vst [vmem:[#allocation3 + $0x60] sm:$0xff] %v8358
      %8410 = vst [vmem:[#allocation3 + $0x68] sm:$0xff] %v8360
      %8411 = vst [vmem:[#allocation3 + $0x70] sm:$0xff] %v8362
      %8412 = vst [vmem:[#allocation3 + $0x78] sm:$0xff] %v8364
      %8413 = vst [vmem:[#allocation3 + $0x80] sm:$0xff] %v8366
      %8414 = vst [vmem:[#allocation3 + $0x88] sm:$0xff] %v8368
      %8415 = vst [vmem:[#allocation3 + $0x90] sm:$0xff] %v8370
      %8416 = vst [vmem:[#allocation3 + $0x98] sm:$0xff] %v8372
      %8417 = vst [vmem:[#allocation3 + $0xa0] sm:$0xff] %v8374
      %8418 = vst [vmem:[#allocation3 + $0xa8] sm:$0xff] %v8376
      %8419 = vst [vmem:[#allocation3 + $0xb0] sm:$0xff] %v8378
      %8420 = vst [vmem:[#allocation3 + $0xb8] sm:$0xff] %v8380
      %8421 = vst [vmem:[#allocation3 + $0xc0] sm:$0xff] %v8382
      %8422 = vst [vmem:[#allocation3 + $0xc8] sm:$0xff] %v8384
      %8423 = vst [vmem:[#allocation3 + $0xd0] sm:$0xff] %v8386
      %8424 = vst [vmem:[#allocation3 + $0xd8] sm:$0xff] %v8388
      %8425 = vst [vmem:[#allocation3 + $0xe0] sm:$0xff] %v8390
      %8426 = vst [vmem:[#allocation3 + $0xe8] sm:$0xff] %v8392
      %8427 = vst [vmem:[#allocation3 + $0xf0] sm:$0xff] %v8394
      %8428 = vst [vmem:[#allocation3 + $0xf8] sm:$0xff] %v8396
      %v8429 = vmul.f32 %v7619, %v7816
      %v8430 = vmul.f32 %v7620, %v7821
      %v8431 = vmul.f32 %v7621, %v7826
      %v8432 = vmul.f32 %v7622, %v7831
      %v8433 = vmul.f32 %v7623, %v7836
      %v8434 = vmul.f32 %v7624, %v7841
      %v8435 = vmul.f32 %v7625, %v7846
      %v8436 = vmul.f32 %v7626, %v7851
      %v8437 = vmul.f32 %v7627, %v7856
      %v8438 = vmul.f32 %v7628, %v7861
      %v8439 = vmul.f32 %v7629, %v7866
      %v8440 = vmul.f32 %v7630, %v7871
      %v8441 = vmul.f32 %v7631, %v7876
      %v8442 = vmul.f32 %v7632, %v7881
      %v8443 = vmul.f32 %v7633, %v7886
      %v8444 = vmul.f32 %v7634, %v7891
      %v8445 = vmul.f32 %v7635, %v7896
      %v8446 = vmul.f32 %v7636, %v7901
      %v8447 = vmul.f32 %v7637, %v7906
      %v8448 = vmul.f32 %v7638, %v7911
      %v8449 = vmul.f32 %v7639, %v7916
      %v8450 = vmul.f32 %v7640, %v7921
      %v8451 = vmul.f32 %v7641, %v7926
      %v8452 = vmul.f32 %v7642, %v7931
      %v8453 = vmul.f32 %v7643, %v7936
      %v8454 = vmul.f32 %v7644, %v7941
      %v8455 = vmul.f32 %v7645, %v7946
      %v8456 = vmul.f32 %v7646, %v7951
      %v8457 = vmul.f32 %v7647, %v7956
      %v8458 = vmul.f32 %v7648, %v7961
      %v8459 = vmul.f32 %v7649, %v7966
      %v8460 = vmul.f32 %v7650, %v7971
      %8461 = vst [vmem:[#allocation4] sm:$0xff] %v8429
      %8462 = vst [vmem:[#allocation4 + $0x8] sm:$0xff] %v8430
      %8463 = vst [vmem:[#allocation4 + $0x10] sm:$0xff] %v8431
      %8464 = vst [vmem:[#allocation4 + $0x18] sm:$0xff] %v8432
      %8465 = vst [vmem:[#allocation4 + $0x20] sm:$0xff] %v8433
      %8466 = vst [vmem:[#allocation4 + $0x28] sm:$0xff] %v8434
      %8467 = vst [vmem:[#allocation4 + $0x30] sm:$0xff] %v8435
      %8468 = vst [vmem:[#allocation4 + $0x38] sm:$0xff] %v8436
      %8469 = vst [vmem:[#allocation4 + $0x40] sm:$0xff] %v8437
      %8470 = vst [vmem:[#allocation4 + $0x48] sm:$0xff] %v8438
      %8471 = vst [vmem:[#allocation4 + $0x50] sm:$0xff] %v8439
      %8472 = vst [vmem:[#allocation4 + $0x58] sm:$0xff] %v8440
      %8473 = vst [vmem:[#allocation4 + $0x60] sm:$0xff] %v8441
      %8474 = vst [vmem:[#allocation4 + $0x68] sm:$0xff] %v8442
      %8475 = vst [vmem:[#allocation4 + $0x70] sm:$0xff] %v8443
      %8476 = vst [vmem:[#allocation4 + $0x78] sm:$0xff] %v8444
      %8477 = vst [vmem:[#allocation4 + $0x80] sm:$0xff] %v8445
      %8478 = vst [vmem:[#allocation4 + $0x88] sm:$0xff] %v8446
      %8479 = vst [vmem:[#allocation4 + $0x90] sm:$0xff] %v8447
      %8480 = vst [vmem:[#allocation4 + $0x98] sm:$0xff] %v8448
      %8481 = vst [vmem:[#allocation4 + $0xa0] sm:$0xff] %v8449
      %8482 = vst [vmem:[#allocation4 + $0xa8] sm:$0xff] %v8450
      %8483 = vst [vmem:[#allocation4 + $0xb0] sm:$0xff] %v8451
      %8484 = vst [vmem:[#allocation4 + $0xb8] sm:$0xff] %v8452
      %8485 = vst [vmem:[#allocation4 + $0xc0] sm:$0xff] %v8453
      %8486 = vst [vmem:[#allocation4 + $0xc8] sm:$0xff] %v8454
      %8487 = vst [vmem:[#allocation4 + $0xd0] sm:$0xff] %v8455
      %8488 = vst [vmem:[#allocation4 + $0xd8] sm:$0xff] %v8456
      %8489 = vst [vmem:[#allocation4 + $0xe0] sm:$0xff] %v8457
      %8490 = vst [vmem:[#allocation4 + $0xe8] sm:$0xff] %v8458
      %8491 = vst [vmem:[#allocation4 + $0xf0] sm:$0xff] %v8459
      %8492 = vst [vmem:[#allocation4 + $0xf8] sm:$0xff] %v8460
      loop: start=0, step=1, limit=32
      $region89: #{mamba_layer_forward.1} parent=87 // loop_pre_header
        _
      $region90: #{mamba_layer_forward.1} parent=87 // loop_header
        %s8494 = sphi 0, %s8498
        %p8495 = scmp.ge.s32.totalorder %s8494, 32
        %v8499 = vphi 0.0, %v8544
      $region91: #{mamba_layer_forward.1} parent=87 // loop_header_branch
        %8497 = sbr.rel (%p8495) target = $region95
      $region92: #{mamba_layer_forward.1} parent=87 // loop_body
        %s8500 = smul.u32 %s8494, 8
        %s8501 = scalar_lea.vmem [#allocation3], %s8500
        %v8502 = vld [vmem:[%s8501] sm:$0xff]
        %s8503 = scalar_lea.vmem [#allocation4], %s8500
        %v8504 = vld [vmem:[%s8503] sm:$0xff]
        %v8506 = vrot.slane %v8499, 7
        %v8508 = vmul.f32 %v8502, %v8506
        %v8509 = vadd.f32 %v8508, %v8504
        %v8511 = vrot.slane %v8509, 7
        %v8513 = vmul.f32 %v8502, %v8511
        %v8514 = vadd.f32 %v8513, %v8504
        %v8516 = vrot.slane %v8514, 7
        %v8518 = vmul.f32 %v8502, %v8516
        %v8519 = vadd.f32 %v8518, %v8504
        %v8521 = vrot.slane %v8519, 7
        %v8523 = vmul.f32 %v8502, %v8521
        %v8524 = vadd.f32 %v8523, %v8504
        %v8526 = vrot.slane %v8524, 7
        %v8528 = vmul.f32 %v8502, %v8526
        %v8529 = vadd.f32 %v8528, %v8504
        %v8531 = vrot.slane %v8529, 7
        %v8533 = vmul.f32 %v8502, %v8531
        %v8534 = vadd.f32 %v8533, %v8504
        %v8536 = vrot.slane %v8534, 7
        %v8538 = vmul.f32 %v8502, %v8536
        %v8539 = vadd.f32 %v8538, %v8504
        %v8541 = vrot.slane %v8539, 7
        %v8543 = vmul.f32 %v8502, %v8541
        %v8544 = vadd.f32 %v8543, %v8504
        %v8545 = vsel %vm3212, %v8509, %v8514
        %vm8546 = vcmask 1041408
        %v8547 = vsel %vm8546, %v8545, %v8519
        %vm8548 = vcmask 1042432
        %v8549 = vsel %vm8548, %v8547, %v8524
        %v8550 = vsel %vm1174, %v8549, %v8529
        %vm8551 = vcmask 1044480
        %v8552 = vsel %vm8551, %v8550, %v8534
        %vm8553 = vcmask 1045504
        %v8554 = vsel %vm8553, %v8552, %v8539
        %vm8555 = vcmask 1046528
        %v8556 = vsel %vm8555, %v8554, %v8544
        %s8557 = scalar_lea.vmem [#allocation5], %s8500
        %8558 = vst [vmem:[%s8557] sm:$0xff] %v8556
      $region93: #{mamba_layer_forward.1} parent=87 // loop_footer
        %s8498 = sadd.s32 1, %s8494
      $region94: #{mamba_layer_forward.1} parent=87 // loop_footer_branch
        %8493 = sbr.rel target = $region90
      $region95: #{mamba_layer_forward.1} parent=87 // loop_exit
        _
      %v8559 = vld [vmem:[#allocation5] sm:$0xff]
      %v8560 = vld [vmem:[#allocation5 + $0x8] sm:$0xff]
      %v8561 = vld [vmem:[#allocation5 + $0x10] sm:$0xff]
      %v8562 = vld [vmem:[#allocation5 + $0x18] sm:$0xff]
      %v8563 = vld [vmem:[#allocation5 + $0x20] sm:$0xff]
      %v8564 = vld [vmem:[#allocation5 + $0x28] sm:$0xff]
      %v8565 = vld [vmem:[#allocation5 + $0x30] sm:$0xff]
      %v8566 = vld [vmem:[#allocation5 + $0x38] sm:$0xff]
      %v8567 = vld [vmem:[#allocation5 + $0x40] sm:$0xff]
      %v8568 = vld [vmem:[#allocation5 + $0x48] sm:$0xff]
      %v8569 = vld [vmem:[#allocation5 + $0x50] sm:$0xff]
      %v8570 = vld [vmem:[#allocation5 + $0x58] sm:$0xff]
      %v8571 = vld [vmem:[#allocation5 + $0x60] sm:$0xff]
      %v8572 = vld [vmem:[#allocation5 + $0x68] sm:$0xff]
      %v8573 = vld [vmem:[#allocation5 + $0x70] sm:$0xff]
      %v8574 = vld [vmem:[#allocation5 + $0x78] sm:$0xff]
      %v8575 = vld [vmem:[#allocation5 + $0x80] sm:$0xff]
      %v8576 = vld [vmem:[#allocation5 + $0x88] sm:$0xff]
      %v8577 = vld [vmem:[#allocation5 + $0x90] sm:$0xff]
      %v8578 = vld [vmem:[#allocation5 + $0x98] sm:$0xff]
      %v8579 = vld [vmem:[#allocation5 + $0xa0] sm:$0xff]
      %v8580 = vld [vmem:[#allocation5 + $0xa8] sm:$0xff]
      %v8581 = vld [vmem:[#allocation5 + $0xb0] sm:$0xff]
      %v8582 = vld [vmem:[#allocation5 + $0xb8] sm:$0xff]
      %v8583 = vld [vmem:[#allocation5 + $0xc0] sm:$0xff]
      %v8584 = vld [vmem:[#allocation5 + $0xc8] sm:$0xff]
      %v8585 = vld [vmem:[#allocation5 + $0xd0] sm:$0xff]
      %v8586 = vld [vmem:[#allocation5 + $0xd8] sm:$0xff]
      %v8587 = vld [vmem:[#allocation5 + $0xe0] sm:$0xff]
      %v8588 = vld [vmem:[#allocation5 + $0xe8] sm:$0xff]
      %v8589 = vld [vmem:[#allocation5 + $0xf0] sm:$0xff]
      %v8590 = vld [vmem:[#allocation5 + $0xf8] sm:$0xff]
      %v8591 = vmul.f32 %v8559, %v8137
      %v8592 = vmul.f32 %v8560, %v8142
      %v8593 = vmul.f32 %v8561, %v8147
      %v8594 = vmul.f32 %v8562, %v8152
      %v8595 = vmul.f32 %v8563, %v8157
      %v8596 = vmul.f32 %v8564, %v8162
      %v8597 = vmul.f32 %v8565, %v8167
      %v8598 = vmul.f32 %v8566, %v8172
      %v8599 = vmul.f32 %v8567, %v8177
      %v8600 = vmul.f32 %v8568, %v8182
      %v8601 = vmul.f32 %v8569, %v8187
      %v8602 = vmul.f32 %v8570, %v8192
      %v8603 = vmul.f32 %v8571, %v8197
      %v8604 = vmul.f32 %v8572, %v8202
      %v8605 = vmul.f32 %v8573, %v8207
      %v8606 = vmul.f32 %v8574, %v8212
      %v8607 = vmul.f32 %v8575, %v8217
      %v8608 = vmul.f32 %v8576, %v8222
      %v8609 = vmul.f32 %v8577, %v8227
      %v8610 = vmul.f32 %v8578, %v8232
      %v8611 = vmul.f32 %v8579, %v8237
      %v8612 = vmul.f32 %v8580, %v8242
      %v8613 = vmul.f32 %v8581, %v8247
      %v8614 = vmul.f32 %v8582, %v8252
      %v8615 = vmul.f32 %v8583, %v8257
      %v8616 = vmul.f32 %v8584, %v8262
      %v8617 = vmul.f32 %v8585, %v8267
      %v8618 = vmul.f32 %v8586, %v8272
      %v8619 = vmul.f32 %v8587, %v8277
      %v8620 = vmul.f32 %v8588, %v8282
      %v8621 = vmul.f32 %v8589, %v8287
      %v8622 = vmul.f32 %v8590, %v8292
      %v8623 = vld [vmem:[%s16] sm:$0xff]
      %v8624 = vld [vmem:[%s16 + $0x8] sm:$0xff]
      %v8625 = vld [vmem:[%s16 + $0x10] sm:$0xff]
      %v8626 = vld [vmem:[%s16 + $0x18] sm:$0xff]
      %v8627 = vld [vmem:[%s16 + $0x20] sm:$0xff]
      %v8628 = vld [vmem:[%s16 + $0x28] sm:$0xff]
      %v8629 = vld [vmem:[%s16 + $0x30] sm:$0xff]
      %v8630 = vld [vmem:[%s16 + $0x38] sm:$0xff]
      %v8631 = vld [vmem:[%s16 + $0x40] sm:$0xff]
      %v8632 = vld [vmem:[%s16 + $0x48] sm:$0xff]
      %v8633 = vld [vmem:[%s16 + $0x50] sm:$0xff]
      %v8634 = vld [vmem:[%s16 + $0x58] sm:$0xff]
      %v8635 = vld [vmem:[%s16 + $0x60] sm:$0xff]
      %v8636 = vld [vmem:[%s16 + $0x68] sm:$0xff]
      %v8637 = vld [vmem:[%s16 + $0x70] sm:$0xff]
      %v8638 = vld [vmem:[%s16 + $0x78] sm:$0xff]
      %v8639 = vld [vmem:[%s13] sm:$0x1]
      %v8641 = vlaneseq
      %v8642 = vshrl.u32 %v8641, 7
      %v8643 = vsub.s32 0, %v8642
      %v8644 = vrot.slane %v8639, %v8643
      %v8646 = vmul.f32 %v8644, %v2301
      %v8647 = vmul.f32 %v8644, %v2302
      %v8648 = vmul.f32 %v8644, %v2303
      %v8649 = vmul.f32 %v8644, %v2304
      %v8650 = vmul.f32 %v8644, %v2305
      %v8651 = vmul.f32 %v8644, %v2306
      %v8652 = vmul.f32 %v8644, %v2307
      %v8653 = vmul.f32 %v8644, %v2308
      %v8654 = vmul.f32 %v8644, %v2309
      %v8655 = vmul.f32 %v8644, %v2310
      %v8656 = vmul.f32 %v8644, %v2311
      %v8657 = vmul.f32 %v8644, %v2312
      %v8658 = vmul.f32 %v8644, %v2313
      %v8659 = vmul.f32 %v8644, %v2314
      %v8660 = vmul.f32 %v8644, %v2315
      %v8661 = vmul.f32 %v8644, %v2316
      %v8662 = vmul.f32 %v8644, %v2317
      %v8663 = vmul.f32 %v8644, %v2318
      %v8664 = vmul.f32 %v8644, %v2319
      %v8665 = vmul.f32 %v8644, %v2320
      %v8666 = vmul.f32 %v8644, %v2321
      %v8667 = vmul.f32 %v8644, %v2322
      %v8668 = vmul.f32 %v8644, %v2323
      %v8669 = vmul.f32 %v8644, %v2324
      %v8670 = vmul.f32 %v8644, %v2325
      %v8671 = vmul.f32 %v8644, %v2326
      %v8672 = vmul.f32 %v8644, %v2327
      %v8673 = vmul.f32 %v8644, %v2328
      %v8674 = vmul.f32 %v8644, %v2329
      %v8675 = vmul.f32 %v8644, %v2330
      %v8676 = vmul.f32 %v8644, %v2331
      %v8677 = vmul.f32 %v8644, %v2332
      %8678 = vmatprep.subr.mxu0 0.0
      %8679 = vmatpush1.msra.mxu0 %v8638
      %8680 = vmatprep.subr.mxu0 0.0
      %8681 = vmatpush1.msra.mxu0 %v8637
      %8682 = vmatprep.subr.mxu0 0.0
      %8683 = vmatpush1.msra.mxu0 %v8636
      %8684 = vmatprep.subr.mxu0 0.0
      %8685 = vmatpush1.msra.mxu0 %v8635
      %8686 = vmatprep.subr.mxu0 0.0
      %8687 = vmatpush1.msra.mxu0 %v8634
      %8688 = vmatprep.subr.mxu0 0.0
      %8689 = vmatpush1.msra.mxu0 %v8633
      %8690 = vmatprep.subr.mxu0 0.0
      %8691 = vmatpush1.msra.mxu0 %v8632
      %8692 = vmatprep.subr.mxu0 0.0
      %8693 = vmatpush1.msra.mxu0 %v8631
      %8694 = vmatprep.subr.mxu0 0.0
      %8695 = vmatpush1.msra.mxu0 %v8630
      %8696 = vmatprep.subr.mxu0 0.0
      %8697 = vmatpush1.msra.mxu0 %v8629
      %8698 = vmatprep.subr.mxu0 0.0
      %8699 = vmatpush1.msra.mxu0 %v8628
      %8700 = vmatprep.subr.mxu0 0.0
      %8701 = vmatpush1.msra.mxu0 %v8627
      %8702 = vmatprep.subr.mxu0 0.0
      %8703 = vmatpush1.msra.mxu0 %v8626
      %8704 = vmatprep.subr.mxu0 0.0
      %8705 = vmatpush1.msra.mxu0 %v8625
      %8706 = vmatprep.subr.mxu0 0.0
      %8707 = vmatpush1.msra.mxu0 %v8624
      %8708 = vmatprep.subr.mxu0 0.0
      %8709 = vmatpush1.msra.mxu0 %v8623
      %8710 = vmatprep.subr.mxu0 0.0
      %8711 = vmatpush2.msra.mxu0 0.0
      %8712 = vmatprep.subr.mxu0 0.0
      %8713 = vmatpush2.msra.mxu0 0.0
      %8714 = vmatprep.subr.mxu0 0.0
      %8715 = vmatpush2.msra.mxu0 0.0
      %8716 = vmatprep.subr.mxu0 0.0
      %8717 = vmatpush2.msra.mxu0 0.0
      %8718 = vmatprep.subr.mxu0 0.0
      %8719 = vmatpush2.msra.mxu0 0.0
      %8720 = vmatprep.subr.mxu0 0.0
      %8721 = vmatpush2.msra.mxu0 0.0
      %8722 = vmatprep.subr.mxu0 0.0
      %8723 = vmatpush2.msra.mxu0 0.0
      %8724 = vmatprep.subr.mxu0 0.0
      %8725 = vmatpush2.msra.mxu0 0.0
      %8726 = vmatprep.subr.mxu0 0.0
      %8727 = vmatpush2.msra.mxu0 0.0
      %8728 = vmatprep.subr.mxu0 0.0
      %8729 = vmatpush2.msra.mxu0 0.0
      %8730 = vmatprep.subr.mxu0 0.0
      %8731 = vmatpush2.msra.mxu0 0.0
      %8732 = vmatprep.subr.mxu0 0.0
      %8733 = vmatpush2.msra.mxu0 0.0
      %8734 = vmatprep.subr.mxu0 0.0
      %8735 = vmatpush2.msra.mxu0 0.0
      %8736 = vmatprep.subr.mxu0 0.0
      %8737 = vmatpush2.msra.mxu0 0.0
      %8738 = vmatprep.subr.mxu0 0.0
      %8739 = vmatpush2.msra.mxu0 0.0
      %8740 = vmatprep.subr.mxu0 0.0
      %8741 = vmatpush2.msra.mxu0 0.0
      %8742 = vmatprep.mubr.f32.mxu0 0.0
      %8743 = vmatmul.mubr.f32.gmra.mxu0 %v8591
      %v8744 = vpop.f32.mrf.mxu0
      %v8745 = vadd.f32 %v8646, %v8744
      %v8746 = vpop.f32.mrf.mxu0
      %8747 = vmatprep.mubr.f32.mxu0 0.0
      %8748 = vmatmul.mubr.f32.gmra.mxu0 %v8592
      %v8749 = vpop.f32.mrf.mxu0
      %v8750 = vadd.f32 %v8647, %v8749
      %v8751 = vpop.f32.mrf.mxu0
      %8752 = vmatprep.mubr.f32.mxu0 0.0
      %8753 = vmatmul.mubr.f32.gmra.mxu0 %v8593
      %v8754 = vpop.f32.mrf.mxu0
      %v8755 = vadd.f32 %v8648, %v8754
      %v8756 = vpop.f32.mrf.mxu0
      %8757 = vmatprep.mubr.f32.mxu0 0.0
      %8758 = vmatmul.mubr.f32.gmra.mxu0 %v8594
      %v8759 = vpop.f32.mrf.mxu0
      %v8760 = vadd.f32 %v8649, %v8759
      %v8761 = vpop.f32.mrf.mxu0
      %8762 = vmatprep.mubr.f32.mxu0 0.0
      %8763 = vmatmul.mubr.f32.gmra.mxu0 %v8595
      %v8764 = vpop.f32.mrf.mxu0
      %v8765 = vadd.f32 %v8650, %v8764
      %v8766 = vpop.f32.mrf.mxu0
      %8767 = vmatprep.mubr.f32.mxu0 0.0
      %8768 = vmatmul.mubr.f32.gmra.mxu0 %v8596
      %v8769 = vpop.f32.mrf.mxu0
      %v8770 = vadd.f32 %v8651, %v8769
      %v8771 = vpop.f32.mrf.mxu0
      %8772 = vmatprep.mubr.f32.mxu0 0.0
      %8773 = vmatmul.mubr.f32.gmra.mxu0 %v8597
      %v8774 = vpop.f32.mrf.mxu0
      %v8775 = vadd.f32 %v8652, %v8774
      %v8776 = vpop.f32.mrf.mxu0
      %8777 = vmatprep.mubr.f32.mxu0 0.0
      %8778 = vmatmul.mubr.f32.gmra.mxu0 %v8598
      %v8779 = vpop.f32.mrf.mxu0
      %v8780 = vadd.f32 %v8653, %v8779
      %v8781 = vpop.f32.mrf.mxu0
      %8782 = vmatprep.mubr.f32.mxu0 0.0
      %8783 = vmatmul.mubr.f32.gmra.mxu0 %v8599
      %v8784 = vpop.f32.mrf.mxu0
      %v8785 = vadd.f32 %v8654, %v8784
      %v8786 = vpop.f32.mrf.mxu0
      %8787 = vmatprep.mubr.f32.mxu0 0.0
      %8788 = vmatmul.mubr.f32.gmra.mxu0 %v8600
      %v8789 = vpop.f32.mrf.mxu0
      %v8790 = vadd.f32 %v8655, %v8789
      %v8791 = vpop.f32.mrf.mxu0
      %8792 = vmatprep.mubr.f32.mxu0 0.0
      %8793 = vmatmul.mubr.f32.gmra.mxu0 %v8601
      %v8794 = vpop.f32.mrf.mxu0
      %v8795 = vadd.f32 %v8656, %v8794
      %v8796 = vpop.f32.mrf.mxu0
      %8797 = vmatprep.mubr.f32.mxu0 0.0
      %8798 = vmatmul.mubr.f32.gmra.mxu0 %v8602
      %v8799 = vpop.f32.mrf.mxu0
      %v8800 = vadd.f32 %v8657, %v8799
      %v8801 = vpop.f32.mrf.mxu0
      %8802 = vmatprep.mubr.f32.mxu0 0.0
      %8803 = vmatmul.mubr.f32.gmra.mxu0 %v8603
      %v8804 = vpop.f32.mrf.mxu0
      %v8805 = vadd.f32 %v8658, %v8804
      %v8806 = vpop.f32.mrf.mxu0
      %8807 = vmatprep.mubr.f32.mxu0 0.0
      %8808 = vmatmul.mubr.f32.gmra.mxu0 %v8604
      %v8809 = vpop.f32.mrf.mxu0
      %v8810 = vadd.f32 %v8659, %v8809
      %v8811 = vpop.f32.mrf.mxu0
      %8812 = vmatprep.mubr.f32.mxu0 0.0
      %8813 = vmatmul.mubr.f32.gmra.mxu0 %v8605
      %v8814 = vpop.f32.mrf.mxu0
      %v8815 = vadd.f32 %v8660, %v8814
      %v8816 = vpop.f32.mrf.mxu0
      %8817 = vmatprep.mubr.f32.mxu0 0.0
      %8818 = vmatmul.mubr.f32.gmra.mxu0 %v8606
      %v8819 = vpop.f32.mrf.mxu0
      %v8820 = vadd.f32 %v8661, %v8819
      %v8821 = vpop.f32.mrf.mxu0
      %8822 = vmatprep.mubr.f32.mxu0 0.0
      %8823 = vmatmul.mubr.f32.gmra.mxu0 %v8607
      %v8824 = vpop.f32.mrf.mxu0
      %v8825 = vadd.f32 %v8662, %v8824
      %v8826 = vpop.f32.mrf.mxu0
      %8827 = vmatprep.mubr.f32.mxu0 0.0
      %8828 = vmatmul.mubr.f32.gmra.mxu0 %v8608
      %v8829 = vpop.f32.mrf.mxu0
      %v8830 = vadd.f32 %v8663, %v8829
      %v8831 = vpop.f32.mrf.mxu0
      %8832 = vmatprep.mubr.f32.mxu0 0.0
      %8833 = vmatmul.mubr.f32.gmra.mxu0 %v8609
      %v8834 = vpop.f32.mrf.mxu0
      %v8835 = vadd.f32 %v8664, %v8834
      %v8836 = vpop.f32.mrf.mxu0
      %8837 = vmatprep.mubr.f32.mxu0 0.0
      %8838 = vmatmul.mubr.f32.gmra.mxu0 %v8610
      %v8839 = vpop.f32.mrf.mxu0
      %v8840 = vadd.f32 %v8665, %v8839
      %v8841 = vpop.f32.mrf.mxu0
      %8842 = vmatprep.mubr.f32.mxu0 0.0
      %8843 = vmatmul.mubr.f32.gmra.mxu0 %v8611
      %v8844 = vpop.f32.mrf.mxu0
      %v8845 = vadd.f32 %v8666, %v8844
      %v8846 = vpop.f32.mrf.mxu0
      %8847 = vmatprep.mubr.f32.mxu0 0.0
      %8848 = vmatmul.mubr.f32.gmra.mxu0 %v8612
      %v8849 = vpop.f32.mrf.mxu0
      %v8850 = vadd.f32 %v8667, %v8849
      %v8851 = vpop.f32.mrf.mxu0
      %8852 = vmatprep.mubr.f32.mxu0 0.0
      %8853 = vmatmul.mubr.f32.gmra.mxu0 %v8613
      %v8854 = vpop.f32.mrf.mxu0
      %v8855 = vadd.f32 %v8668, %v8854
      %v8856 = vpop.f32.mrf.mxu0
      %8857 = vmatprep.mubr.f32.mxu0 0.0
      %8858 = vmatmul.mubr.f32.gmra.mxu0 %v8614
      %v8859 = vpop.f32.mrf.mxu0
      %v8860 = vadd.f32 %v8669, %v8859
      %v8861 = vpop.f32.mrf.mxu0
      %8862 = vmatprep.mubr.f32.mxu0 0.0
      %8863 = vmatmul.mubr.f32.gmra.mxu0 %v8615
      %v8864 = vpop.f32.mrf.mxu0
      %v8865 = vadd.f32 %v8670, %v8864
      %v8866 = vpop.f32.mrf.mxu0
      %8867 = vmatprep.mubr.f32.mxu0 0.0
      %8868 = vmatmul.mubr.f32.gmra.mxu0 %v8616
      %v8869 = vpop.f32.mrf.mxu0
      %v8870 = vadd.f32 %v8671, %v8869
      %v8871 = vpop.f32.mrf.mxu0
      %8872 = vmatprep.mubr.f32.mxu0 0.0
      %8873 = vmatmul.mubr.f32.gmra.mxu0 %v8617
      %v8874 = vpop.f32.mrf.mxu0
      %v8875 = vadd.f32 %v8672, %v8874
      %v8876 = vpop.f32.mrf.mxu0
      %8877 = vmatprep.mubr.f32.mxu0 0.0
      %8878 = vmatmul.mubr.f32.gmra.mxu0 %v8618
      %v8879 = vpop.f32.mrf.mxu0
      %v8880 = vadd.f32 %v8673, %v8879
      %v8881 = vpop.f32.mrf.mxu0
      %8882 = vmatprep.mubr.f32.mxu0 0.0
      %8883 = vmatmul.mubr.f32.gmra.mxu0 %v8619
      %v8884 = vpop.f32.mrf.mxu0
      %v8885 = vadd.f32 %v8674, %v8884
      %v8886 = vpop.f32.mrf.mxu0
      %8887 = vmatprep.mubr.f32.mxu0 0.0
      %8888 = vmatmul.mubr.f32.gmra.mxu0 %v8620
      %v8889 = vpop.f32.mrf.mxu0
      %v8890 = vadd.f32 %v8675, %v8889
      %v8891 = vpop.f32.mrf.mxu0
      %8892 = vmatprep.mubr.f32.mxu0 0.0
      %8893 = vmatmul.mubr.f32.gmra.mxu0 %v8621
      %v8894 = vpop.f32.mrf.mxu0
      %v8895 = vadd.f32 %v8676, %v8894
      %v8896 = vpop.f32.mrf.mxu0
      %8897 = vmatprep.mubr.f32.mxu0 0.0
      %8898 = vmatmul.mubr.f32.gmra.mxu0 %v8622
      %v8899 = vpop.f32.mrf.mxu0
      %v8900 = vadd.f32 %v8677, %v8899
      %v8901 = vpop.f32.mrf.mxu0
      %8902 = vdwg.mxu0
      %v8903 = vsub.f32 0.0, %v1474
      %v8904 = vsub.f32 0.0, %v1479
      %v8905 = vsub.f32 0.0, %v1484
      %v8906 = vsub.f32 0.0, %v1489
      %v8907 = vsub.f32 0.0, %v1494
      %v8908 = vsub.f32 0.0, %v1499
      %v8909 = vsub.f32 0.0, %v1504
      %v8910 = vsub.f32 0.0, %v1509
      %v8911 = vsub.f32 0.0, %v1514
      %v8912 = vsub.f32 0.0, %v1519
      %v8913 = vsub.f32 0.0, %v1524
      %v8914 = vsub.f32 0.0, %v1529
      %v8915 = vsub.f32 0.0, %v1534
      %v8916 = vsub.f32 0.0, %v1539
      %v8917 = vsub.f32 0.0, %v1544
      %v8918 = vsub.f32 0.0, %v1549
      %v8919 = vsub.f32 0.0, %v1554
      %v8920 = vsub.f32 0.0, %v1559
      %v8921 = vsub.f32 0.0, %v1564
      %v8922 = vsub.f32 0.0, %v1569
      %v8923 = vsub.f32 0.0, %v1574
      %v8924 = vsub.f32 0.0, %v1579
      %v8925 = vsub.f32 0.0, %v1584
      %v8926 = vsub.f32 0.0, %v1589
      %v8927 = vsub.f32 0.0, %v1594
      %v8928 = vsub.f32 0.0, %v1599
      %v8929 = vsub.f32 0.0, %v1604
      %v8930 = vsub.f32 0.0, %v1609
      %v8931 = vsub.f32 0.0, %v1614
      %v8932 = vsub.f32 0.0, %v1619
      %v8933 = vsub.f32 0.0, %v1624
      %v8934 = vsub.f32 0.0, %v1629
      %v8935 = vmul.f32 %v8903, 1.442695
      %v8936 = vpow.pop %v8935
      %v8937 = vmul.f32 %v8904, 1.442695
      %v8938 = vpow.pop %v8937
      %v8939 = vmul.f32 %v8905, 1.442695
      %v8940 = vpow.pop %v8939
      %v8941 = vmul.f32 %v8906, 1.442695
      %v8942 = vpow.pop %v8941
      %v8943 = vmul.f32 %v8907, 1.442695
      %v8944 = vpow.pop %v8943
      %v8945 = vmul.f32 %v8908, 1.442695
      %v8946 = vpow.pop %v8945
      %v8947 = vmul.f32 %v8909, 1.442695
      %v8948 = vpow.pop %v8947
      %v8949 = vmul.f32 %v8910, 1.442695
      %v8950 = vpow.pop %v8949
      %v8951 = vmul.f32 %v8911, 1.442695
      %v8952 = vpow.pop %v8951
      %v8953 = vmul.f32 %v8912, 1.442695
      %v8954 = vpow.pop %v8953
      %v8955 = vmul.f32 %v8913, 1.442695
      %v8956 = vpow.pop %v8955
      %v8957 = vmul.f32 %v8914, 1.442695
      %v8958 = vpow.pop %v8957
      %v8959 = vmul.f32 %v8915, 1.442695
      %v8960 = vpow.pop %v8959
      %v8961 = vmul.f32 %v8916, 1.442695
      %v8962 = vpow.pop %v8961
      %v8963 = vmul.f32 %v8917, 1.442695
      %v8964 = vpow.pop %v8963
      %v8965 = vmul.f32 %v8918, 1.442695
      %v8966 = vpow.pop %v8965
      %v8967 = vmul.f32 %v8919, 1.442695
      %v8968 = vpow.pop %v8967
      %v8969 = vmul.f32 %v8920, 1.442695
      %v8970 = vpow.pop %v8969
      %v8971 = vmul.f32 %v8921, 1.442695
      %v8972 = vpow.pop %v8971
      %v8973 = vmul.f32 %v8922, 1.442695
      %v8974 = vpow.pop %v8973
      %v8975 = vmul.f32 %v8923, 1.442695
      %v8976 = vpow.pop %v8975
      %v8977 = vmul.f32 %v8924, 1.442695
      %v8978 = vpow.pop %v8977
      %v8979 = vmul.f32 %v8925, 1.442695
      %v8980 = vpow.pop %v8979
      %v8981 = vmul.f32 %v8926, 1.442695
      %v8982 = vpow.pop %v8981
      %v8983 = vmul.f32 %v8927, 1.442695
      %v8984 = vpow.pop %v8983
      %v8985 = vmul.f32 %v8928, 1.442695
      %v8986 = vpow.pop %v8985
      %v8987 = vmul.f32 %v8929, 1.442695
      %v8988 = vpow.pop %v8987
      %v8989 = vmul.f32 %v8930, 1.442695
      %v8990 = vpow.pop %v8989
      %v8991 = vmul.f32 %v8931, 1.442695
      %v8992 = vpow.pop %v8991
      %v8993 = vmul.f32 %v8932, 1.442695
      %v8994 = vpow.pop %v8993
      %v8995 = vmul.f32 %v8933, 1.442695
      %v8996 = vpow.pop %v8995
      %v8997 = vmul.f32 %v8934, 1.442695
      %v8998 = vpow.pop %v8997
      %v8999 = vadd.f32 %v8936, 1.0
      %v9000 = vadd.f32 %v8938, 1.0
      %v9001 = vadd.f32 %v8940, 1.0
      %v9002 = vadd.f32 %v8942, 1.0
      %v9003 = vadd.f32 %v8944, 1.0
      %v9004 = vadd.f32 %v8946, 1.0
      %v9005 = vadd.f32 %v8948, 1.0
      %v9006 = vadd.f32 %v8950, 1.0
      %v9007 = vadd.f32 %v8952, 1.0
      %v9008 = vadd.f32 %v8954, 1.0
      %v9009 = vadd.f32 %v8956, 1.0
      %v9010 = vadd.f32 %v8958, 1.0
      %v9011 = vadd.f32 %v8960, 1.0
      %v9012 = vadd.f32 %v8962, 1.0
      %v9013 = vadd.f32 %v8964, 1.0
      %v9014 = vadd.f32 %v8966, 1.0
      %v9015 = vadd.f32 %v8968, 1.0
      %v9016 = vadd.f32 %v8970, 1.0
      %v9017 = vadd.f32 %v8972, 1.0
      %v9018 = vadd.f32 %v8974, 1.0
      %v9019 = vadd.f32 %v8976, 1.0
      %v9020 = vadd.f32 %v8978, 1.0
      %v9021 = vadd.f32 %v8980, 1.0
      %v9022 = vadd.f32 %v8982, 1.0
      %v9023 = vadd.f32 %v8984, 1.0
      %v9024 = vadd.f32 %v8986, 1.0
      %v9025 = vadd.f32 %v8988, 1.0
      %v9026 = vadd.f32 %v8990, 1.0
      %v9027 = vadd.f32 %v8992, 1.0
      %v9028 = vadd.f32 %v8994, 1.0
      %v9029 = vadd.f32 %v8996, 1.0
      %v9030 = vadd.f32 %v8998, 1.0
      %v9031 = vrcp.pop %v8999
      %v9032 = vmul.f32 1.0, %v9031
      %v9033 = vrcp.pop %v9000
      %v9034 = vmul.f32 1.0, %v9033
      %v9035 = vrcp.pop %v9001
      %v9036 = vmul.f32 1.0, %v9035
      %v9037 = vrcp.pop %v9002
      %v9038 = vmul.f32 1.0, %v9037
      %v9039 = vrcp.pop %v9003
      %v9040 = vmul.f32 1.0, %v9039
      %v9041 = vrcp.pop %v9004
      %v9042 = vmul.f32 1.0, %v9041
      %v9043 = vrcp.pop %v9005
      %v9044 = vmul.f32 1.0, %v9043
      %v9045 = vrcp.pop %v9006
      %v9046 = vmul.f32 1.0, %v9045
      %v9047 = vrcp.pop %v9007
      %v9048 = vmul.f32 1.0, %v9047
      %v9049 = vrcp.pop %v9008
      %v9050 = vmul.f32 1.0, %v9049
      %v9051 = vrcp.pop %v9009
      %v9052 = vmul.f32 1.0, %v9051
      %v9053 = vrcp.pop %v9010
      %v9054 = vmul.f32 1.0, %v9053
      %v9055 = vrcp.pop %v9011
      %v9056 = vmul.f32 1.0, %v9055
      %v9057 = vrcp.pop %v9012
      %v9058 = vmul.f32 1.0, %v9057
      %v9059 = vrcp.pop %v9013
      %v9060 = vmul.f32 1.0, %v9059
      %v9061 = vrcp.pop %v9014
      %v9062 = vmul.f32 1.0, %v9061
      %v9063 = vrcp.pop %v9015
      %v9064 = vmul.f32 1.0, %v9063
      %v9065 = vrcp.pop %v9016
      %v9066 = vmul.f32 1.0, %v9065
      %v9067 = vrcp.pop %v9017
      %v9068 = vmul.f32 1.0, %v9067
      %v9069 = vrcp.pop %v9018
      %v9070 = vmul.f32 1.0, %v9069
      %v9071 = vrcp.pop %v9019
      %v9072 = vmul.f32 1.0, %v9071
      %v9073 = vrcp.pop %v9020
      %v9074 = vmul.f32 1.0, %v9073
      %v9075 = vrcp.pop %v9021
      %v9076 = vmul.f32 1.0, %v9075
      %v9077 = vrcp.pop %v9022
      %v9078 = vmul.f32 1.0, %v9077
      %v9079 = vrcp.pop %v9023
      %v9080 = vmul.f32 1.0, %v9079
      %v9081 = vrcp.pop %v9024
      %v9082 = vmul.f32 1.0, %v9081
      %v9083 = vrcp.pop %v9025
      %v9084 = vmul.f32 1.0, %v9083
      %v9085 = vrcp.pop %v9026
      %v9086 = vmul.f32 1.0, %v9085
      %v9087 = vrcp.pop %v9027
      %v9088 = vmul.f32 1.0, %v9087
      %v9089 = vrcp.pop %v9028
      %v9090 = vmul.f32 1.0, %v9089
      %v9091 = vrcp.pop %v9029
      %v9092 = vmul.f32 1.0, %v9091
      %v9093 = vrcp.pop %v9030
      %v9094 = vmul.f32 1.0, %v9093
      %v9095 = vmul.f32 %v1474, %v9032
      %v9096 = vmul.f32 %v1479, %v9034
      %v9097 = vmul.f32 %v1484, %v9036
      %v9098 = vmul.f32 %v1489, %v9038
      %v9099 = vmul.f32 %v1494, %v9040
      %v9100 = vmul.f32 %v1499, %v9042
      %v9101 = vmul.f32 %v1504, %v9044
      %v9102 = vmul.f32 %v1509, %v9046
      %v9103 = vmul.f32 %v1514, %v9048
      %v9104 = vmul.f32 %v1519, %v9050
      %v9105 = vmul.f32 %v1524, %v9052
      %v9106 = vmul.f32 %v1529, %v9054
      %v9107 = vmul.f32 %v1534, %v9056
      %v9108 = vmul.f32 %v1539, %v9058
      %v9109 = vmul.f32 %v1544, %v9060
      %v9110 = vmul.f32 %v1549, %v9062
      %v9111 = vmul.f32 %v1554, %v9064
      %v9112 = vmul.f32 %v1559, %v9066
      %v9113 = vmul.f32 %v1564, %v9068
      %v9114 = vmul.f32 %v1569, %v9070
      %v9115 = vmul.f32 %v1574, %v9072
      %v9116 = vmul.f32 %v1579, %v9074
      %v9117 = vmul.f32 %v1584, %v9076
      %v9118 = vmul.f32 %v1589, %v9078
      %v9119 = vmul.f32 %v1594, %v9080
      %v9120 = vmul.f32 %v1599, %v9082
      %v9121 = vmul.f32 %v1604, %v9084
      %v9122 = vmul.f32 %v1609, %v9086
      %v9123 = vmul.f32 %v1614, %v9088
      %v9124 = vmul.f32 %v1619, %v9090
      %v9125 = vmul.f32 %v1624, %v9092
      %v9126 = vmul.f32 %v1629, %v9094
      %v9127 = vmul.f32 %v8745, %v9095
      %v9128 = vmul.f32 %v8750, %v9096
      %v9129 = vmul.f32 %v8755, %v9097
      %v9130 = vmul.f32 %v8760, %v9098
      %v9131 = vmul.f32 %v8765, %v9099
      %v9132 = vmul.f32 %v8770, %v9100
      %v9133 = vmul.f32 %v8775, %v9101
      %v9134 = vmul.f32 %v8780, %v9102
      %v9135 = vmul.f32 %v8785, %v9103
      %v9136 = vmul.f32 %v8790, %v9104
      %v9137 = vmul.f32 %v8795, %v9105
      %v9138 = vmul.f32 %v8800, %v9106
      %v9139 = vmul.f32 %v8805, %v9107
      %v9140 = vmul.f32 %v8810, %v9108
      %v9141 = vmul.f32 %v8815, %v9109
      %v9142 = vmul.f32 %v8820, %v9110
      %v9143 = vmul.f32 %v8825, %v9111
      %v9144 = vmul.f32 %v8830, %v9112
      %v9145 = vmul.f32 %v8835, %v9113
      %v9146 = vmul.f32 %v8840, %v9114
      %v9147 = vmul.f32 %v8845, %v9115
      %v9148 = vmul.f32 %v8850, %v9116
      %v9149 = vmul.f32 %v8855, %v9117
      %v9150 = vmul.f32 %v8860, %v9118
      %v9151 = vmul.f32 %v8865, %v9119
      %v9152 = vmul.f32 %v8870, %v9120
      %v9153 = vmul.f32 %v8875, %v9121
      %v9154 = vmul.f32 %v8880, %v9122
      %v9155 = vmul.f32 %v8885, %v9123
      %v9156 = vmul.f32 %v8890, %v9124
      %v9157 = vmul.f32 %v8895, %v9125
      %v9158 = vmul.f32 %v8900, %v9126
      %v9159 = vld [vmem:[%s14] sm:$0xff]
      %v9161 = vsel %vm1632, %v9127, 0
      %v9164 = vsel %vm1632, %v9128, 0
      %v9167 = vsel %vm1632, %v9129, 0
      %v9170 = vsel %vm1632, %v9130, 0
      %v9173 = vsel %vm1632, %v9131, 0
      %v9176 = vsel %vm1632, %v9132, 0
      %v9179 = vsel %vm1632, %v9133, 0
      %v9182 = vsel %vm1632, %v9134, 0
      %v9185 = vsel %vm1632, %v9135, 0
      %v9188 = vsel %vm1632, %v9136, 0
      %v9191 = vsel %vm1632, %v9137, 0
      %v9194 = vsel %vm1632, %v9138, 0
      %v9197 = vsel %vm1632, %v9139, 0
      %v9200 = vsel %vm1632, %v9140, 0
      %v9203 = vsel %vm1632, %v9141, 0
      %v9206 = vsel %vm1632, %v9142, 0
      %v9209 = vsel %vm1632, %v9143, 0
      %v9212 = vsel %vm1632, %v9144, 0
      %v9215 = vsel %vm1632, %v9145, 0
      %v9218 = vsel %vm1632, %v9146, 0
      %v9221 = vsel %vm1632, %v9147, 0
      %v9224 = vsel %vm1632, %v9148, 0
      %v9227 = vsel %vm1632, %v9149, 0
      %v9230 = vsel %vm1632, %v9150, 0
      %v9233 = vsel %vm1632, %v9151, 0
      %v9236 = vsel %vm1632, %v9152, 0
      %v9239 = vsel %vm1632, %v9153, 0
      %v9242 = vsel %vm1632, %v9154, 0
      %v9245 = vsel %vm1632, %v9155, 0
      %v9248 = vsel %vm1632, %v9156, 0
      %v9251 = vsel %vm1632, %v9157, 0
      %v9254 = vsel %vm1632, %v9158, 0
      %9256 = vmatprep.subr.mxu0 0.0
      %9257 = vmatpush1.msra.mxu0 0.0
      %9258 = vmatprep.subr.mxu0 0.0
      %9259 = vmatpush1.msra.mxu0 0.0
      %9260 = vmatprep.subr.mxu0 0.0
      %9261 = vmatpush1.msra.mxu0 0.0
      %9262 = vmatprep.subr.mxu0 0.0
      %9263 = vmatpush1.msra.mxu0 0.0
      %9264 = vmatprep.subr.mxu0 0.0
      %9265 = vmatpush1.msra.mxu0 0.0
      %9266 = vmatprep.subr.mxu0 0.0
      %9267 = vmatpush1.msra.mxu0 0.0
      %9268 = vmatprep.subr.mxu0 0.0
      %9269 = vmatpush1.msra.mxu0 0.0
      %9270 = vmatprep.subr.mxu0 0.0
      %9271 = vmatpush1.msra.mxu0 0.0
      %9272 = vmatprep.subr.mxu0 0.0
      %9273 = vmatpush1.msra.mxu0 0.0
      %9274 = vmatprep.subr.mxu0 0.0
      %9275 = vmatpush1.msra.mxu0 0.0
      %9276 = vmatprep.subr.mxu0 0.0
      %9277 = vmatpush1.msra.mxu0 0.0
      %9278 = vmatprep.subr.mxu0 0.0
      %9279 = vmatpush1.msra.mxu0 0.0
      %9280 = vmatprep.subr.mxu0 0.0
      %9281 = vmatpush1.msra.mxu0 0.0
      %9282 = vmatprep.subr.mxu0 0.0
      %9283 = vmatpush1.msra.mxu0 0.0
      %9284 = vmatprep.subr.mxu0 0.0
      %9285 = vmatpush1.msra.mxu0 0.0
      %9286 = vmatprep.subr.mxu0 0.0
      %9287 = vmatpush1.msra.mxu0 %v9159
      %9288 = vmatprep.subr.mxu0 0.0
      %9289 = vmatpush2.msra.mxu0 0.0
      %9290 = vmatprep.subr.mxu0 0.0
      %9291 = vmatpush2.msra.mxu0 0.0
      %9292 = vmatprep.subr.mxu0 0.0
      %9293 = vmatpush2.msra.mxu0 0.0
      %9294 = vmatprep.subr.mxu0 0.0
      %9295 = vmatpush2.msra.mxu0 0.0
      %9296 = vmatprep.subr.mxu0 0.0
      %9297 = vmatpush2.msra.mxu0 0.0
      %9298 = vmatprep.subr.mxu0 0.0
      %9299 = vmatpush2.msra.mxu0 0.0
      %9300 = vmatprep.subr.mxu0 0.0
      %9301 = vmatpush2.msra.mxu0 0.0
      %9302 = vmatprep.subr.mxu0 0.0
      %9303 = vmatpush2.msra.mxu0 0.0
      %9304 = vmatprep.subr.mxu0 0.0
      %9305 = vmatpush2.msra.mxu0 0.0
      %9306 = vmatprep.subr.mxu0 0.0
      %9307 = vmatpush2.msra.mxu0 0.0
      %9308 = vmatprep.subr.mxu0 0.0
      %9309 = vmatpush2.msra.mxu0 0.0
      %9310 = vmatprep.subr.mxu0 0.0
      %9311 = vmatpush2.msra.mxu0 0.0
      %9312 = vmatprep.subr.mxu0 0.0
      %9313 = vmatpush2.msra.mxu0 0.0
      %9314 = vmatprep.subr.mxu0 0.0
      %9315 = vmatpush2.msra.mxu0 0.0
      %9316 = vmatprep.subr.mxu0 0.0
      %9317 = vmatpush2.msra.mxu0 0.0
      %9318 = vmatprep.subr.mxu0 0.0
      %9319 = vmatpush2.msra.mxu0 0.0
      %9320 = vmatprep.mubr.f32.mxu0 0.0
      %9321 = vmatmul.mubr.f32.gmra.mxu0 %v9161
      %v9322 = vpop.f32.mrf.mxu0
      %v9323 = vadd.f32 0.0, %v9322
      %v9324 = vpop.f32.mrf.mxu0
      %9325 = vmatprep.mubr.f32.mxu0 0.0
      %9326 = vmatmul.mubr.f32.gmra.mxu0 %v9164
      %v9327 = vpop.f32.mrf.mxu0
      %v9328 = vadd.f32 0.0, %v9327
      %v9329 = vpop.f32.mrf.mxu0
      %9330 = vmatprep.mubr.f32.mxu0 0.0
      %9331 = vmatmul.mubr.f32.gmra.mxu0 %v9167
      %v9332 = vpop.f32.mrf.mxu0
      %v9333 = vadd.f32 0.0, %v9332
      %v9334 = vpop.f32.mrf.mxu0
      %9335 = vmatprep.mubr.f32.mxu0 0.0
      %9336 = vmatmul.mubr.f32.gmra.mxu0 %v9170
      %v9337 = vpop.f32.mrf.mxu0
      %v9338 = vadd.f32 0.0, %v9337
      %v9339 = vpop.f32.mrf.mxu0
      %9340 = vmatprep.mubr.f32.mxu0 0.0
      %9341 = vmatmul.mubr.f32.gmra.mxu0 %v9173
      %v9342 = vpop.f32.mrf.mxu0
      %v9343 = vadd.f32 0.0, %v9342
      %v9344 = vpop.f32.mrf.mxu0
      %9345 = vmatprep.mubr.f32.mxu0 0.0
      %9346 = vmatmul.mubr.f32.gmra.mxu0 %v9176
      %v9347 = vpop.f32.mrf.mxu0
      %v9348 = vadd.f32 0.0, %v9347
      %v9349 = vpop.f32.mrf.mxu0
      %9350 = vmatprep.mubr.f32.mxu0 0.0
      %9351 = vmatmul.mubr.f32.gmra.mxu0 %v9179
      %v9352 = vpop.f32.mrf.mxu0
      %v9353 = vadd.f32 0.0, %v9352
      %v9354 = vpop.f32.mrf.mxu0
      %9355 = vmatprep.mubr.f32.mxu0 0.0
      %9356 = vmatmul.mubr.f32.gmra.mxu0 %v9182
      %v9357 = vpop.f32.mrf.mxu0
      %v9358 = vadd.f32 0.0, %v9357
      %v9359 = vpop.f32.mrf.mxu0
      %9360 = vmatprep.mubr.f32.mxu0 0.0
      %9361 = vmatmul.mubr.f32.gmra.mxu0 %v9185
      %v9362 = vpop.f32.mrf.mxu0
      %v9363 = vadd.f32 0.0, %v9362
      %v9364 = vpop.f32.mrf.mxu0
      %9365 = vmatprep.mubr.f32.mxu0 0.0
      %9366 = vmatmul.mubr.f32.gmra.mxu0 %v9188
      %v9367 = vpop.f32.mrf.mxu0
      %v9368 = vadd.f32 0.0, %v9367
      %v9369 = vpop.f32.mrf.mxu0
      %9370 = vmatprep.mubr.f32.mxu0 0.0
      %9371 = vmatmul.mubr.f32.gmra.mxu0 %v9191
      %v9372 = vpop.f32.mrf.mxu0
      %v9373 = vadd.f32 0.0, %v9372
      %v9374 = vpop.f32.mrf.mxu0
      %9375 = vmatprep.mubr.f32.mxu0 0.0
      %9376 = vmatmul.mubr.f32.gmra.mxu0 %v9194
      %v9377 = vpop.f32.mrf.mxu0
      %v9378 = vadd.f32 0.0, %v9377
      %v9379 = vpop.f32.mrf.mxu0
      %9380 = vmatprep.mubr.f32.mxu0 0.0
      %9381 = vmatmul.mubr.f32.gmra.mxu0 %v9197
      %v9382 = vpop.f32.mrf.mxu0
      %v9383 = vadd.f32 0.0, %v9382
      %v9384 = vpop.f32.mrf.mxu0
      %9385 = vmatprep.mubr.f32.mxu0 0.0
      %9386 = vmatmul.mubr.f32.gmra.mxu0 %v9200
      %v9387 = vpop.f32.mrf.mxu0
      %v9388 = vadd.f32 0.0, %v9387
      %v9389 = vpop.f32.mrf.mxu0
      %9390 = vmatprep.mubr.f32.mxu0 0.0
      %9391 = vmatmul.mubr.f32.gmra.mxu0 %v9203
      %v9392 = vpop.f32.mrf.mxu0
      %v9393 = vadd.f32 0.0, %v9392
      %v9394 = vpop.f32.mrf.mxu0
      %9395 = vmatprep.mubr.f32.mxu0 0.0
      %9396 = vmatmul.mubr.f32.gmra.mxu0 %v9206
      %v9397 = vpop.f32.mrf.mxu0
      %v9398 = vadd.f32 0.0, %v9397
      %v9399 = vpop.f32.mrf.mxu0
      %9400 = vmatprep.mubr.f32.mxu0 0.0
      %9401 = vmatmul.mubr.f32.gmra.mxu0 %v9209
      %v9402 = vpop.f32.mrf.mxu0
      %v9403 = vadd.f32 0.0, %v9402
      %v9404 = vpop.f32.mrf.mxu0
      %9405 = vmatprep.mubr.f32.mxu0 0.0
      %9406 = vmatmul.mubr.f32.gmra.mxu0 %v9212
      %v9407 = vpop.f32.mrf.mxu0
      %v9408 = vadd.f32 0.0, %v9407
      %v9409 = vpop.f32.mrf.mxu0
      %9410 = vmatprep.mubr.f32.mxu0 0.0
      %9411 = vmatmul.mubr.f32.gmra.mxu0 %v9215
      %v9412 = vpop.f32.mrf.mxu0
      %v9413 = vadd.f32 0.0, %v9412
      %v9414 = vpop.f32.mrf.mxu0
      %9415 = vmatprep.mubr.f32.mxu0 0.0
      %9416 = vmatmul.mubr.f32.gmra.mxu0 %v9218
      %v9417 = vpop.f32.mrf.mxu0
      %v9418 = vadd.f32 0.0, %v9417
      %v9419 = vpop.f32.mrf.mxu0
      %9420 = vmatprep.mubr.f32.mxu0 0.0
      %9421 = vmatmul.mubr.f32.gmra.mxu0 %v9221
      %v9422 = vpop.f32.mrf.mxu0
      %v9423 = vadd.f32 0.0, %v9422
      %v9424 = vpop.f32.mrf.mxu0
      %9425 = vmatprep.mubr.f32.mxu0 0.0
      %9426 = vmatmul.mubr.f32.gmra.mxu0 %v9224
      %v9427 = vpop.f32.mrf.mxu0
      %v9428 = vadd.f32 0.0, %v9427
      %v9429 = vpop.f32.mrf.mxu0
      %9430 = vmatprep.mubr.f32.mxu0 0.0
      %9431 = vmatmul.mubr.f32.gmra.mxu0 %v9227
      %v9432 = vpop.f32.mrf.mxu0
      %v9433 = vadd.f32 0.0, %v9432
      %v9434 = vpop.f32.mrf.mxu0
      %9435 = vmatprep.mubr.f32.mxu0 0.0
      %9436 = vmatmul.mubr.f32.gmra.mxu0 %v9230
      %v9437 = vpop.f32.mrf.mxu0
      %v9438 = vadd.f32 0.0, %v9437
      %v9439 = vpop.f32.mrf.mxu0
      %9440 = vmatprep.mubr.f32.mxu0 0.0
      %9441 = vmatmul.mubr.f32.gmra.mxu0 %v9233
      %v9442 = vpop.f32.mrf.mxu0
      %v9443 = vadd.f32 0.0, %v9442
      %v9444 = vpop.f32.mrf.mxu0
      %9445 = vmatprep.mubr.f32.mxu0 0.0
      %9446 = vmatmul.mubr.f32.gmra.mxu0 %v9236
      %v9447 = vpop.f32.mrf.mxu0
      %v9448 = vadd.f32 0.0, %v9447
      %v9449 = vpop.f32.mrf.mxu0
      %9450 = vmatprep.mubr.f32.mxu0 0.0
      %9451 = vmatmul.mubr.f32.gmra.mxu0 %v9239
      %v9452 = vpop.f32.mrf.mxu0
      %v9453 = vadd.f32 0.0, %v9452
      %v9454 = vpop.f32.mrf.mxu0
      %9455 = vmatprep.mubr.f32.mxu0 0.0
      %9456 = vmatmul.mubr.f32.gmra.mxu0 %v9242
      %v9457 = vpop.f32.mrf.mxu0
      %v9458 = vadd.f32 0.0, %v9457
      %v9459 = vpop.f32.mrf.mxu0
      %9460 = vmatprep.mubr.f32.mxu0 0.0
      %9461 = vmatmul.mubr.f32.gmra.mxu0 %v9245
      %v9462 = vpop.f32.mrf.mxu0
      %v9463 = vadd.f32 0.0, %v9462
      %v9464 = vpop.f32.mrf.mxu0
      %9465 = vmatprep.mubr.f32.mxu0 0.0
      %9466 = vmatmul.mubr.f32.gmra.mxu0 %v9248
      %v9467 = vpop.f32.mrf.mxu0
      %v9468 = vadd.f32 0.0, %v9467
      %v9469 = vpop.f32.mrf.mxu0
      %9470 = vmatprep.mubr.f32.mxu0 0.0
      %9471 = vmatmul.mubr.f32.gmra.mxu0 %v9251
      %v9472 = vpop.f32.mrf.mxu0
      %v9473 = vadd.f32 0.0, %v9472
      %v9474 = vpop.f32.mrf.mxu0
      %9475 = vmatprep.mubr.f32.mxu0 0.0
      %9476 = vmatmul.mubr.f32.gmra.mxu0 %v9254
      %v9477 = vpop.f32.mrf.mxu0
      %v9478 = vadd.f32 0.0, %v9477
      %v9479 = vpop.f32.mrf.mxu0
      %9480 = vdwg.mxu0
      %9481 = vst.msk [vmem:[%s548] sm:$0xff] %vm581, %v9323
      %9482 = vst.msk [vmem:[%s548 + $0x8] sm:$0xff] %vm581, %v9328
      %9483 = vst.msk [vmem:[%s548 + $0x10] sm:$0xff] %vm581, %v9333
      %9484 = vst.msk [vmem:[%s548 + $0x18] sm:$0xff] %vm581, %v9338
      %9485 = vst.msk [vmem:[%s548 + $0x20] sm:$0xff] %vm581, %v9343
      %9486 = vst.msk [vmem:[%s548 + $0x28] sm:$0xff] %vm581, %v9348
      %9487 = vst.msk [vmem:[%s548 + $0x30] sm:$0xff] %vm581, %v9353
      %9488 = vst.msk [vmem:[%s548 + $0x38] sm:$0xff] %vm581, %v9358
      %9489 = vst.msk [vmem:[%s548 + $0x40] sm:$0xff] %vm581, %v9363
      %9490 = vst.msk [vmem:[%s548 + $0x48] sm:$0xff] %vm581, %v9368
      %9491 = vst.msk [vmem:[%s548 + $0x50] sm:$0xff] %vm581, %v9373
      %9492 = vst.msk [vmem:[%s548 + $0x58] sm:$0xff] %vm581, %v9378
      %9493 = vst.msk [vmem:[%s548 + $0x60] sm:$0xff] %vm581, %v9383
      %9494 = vst.msk [vmem:[%s548 + $0x68] sm:$0xff] %vm581, %v9388
      %9495 = vst.msk [vmem:[%s548 + $0x70] sm:$0xff] %vm581, %v9393
      %9496 = vst.msk [vmem:[%s548 + $0x78] sm:$0xff] %vm581, %v9398
      %9497 = vst.msk [vmem:[%s548 + $0x80] sm:$0xff] %vm581, %v9403
      %9498 = vst.msk [vmem:[%s548 + $0x88] sm:$0xff] %vm581, %v9408
      %9499 = vst.msk [vmem:[%s548 + $0x90] sm:$0xff] %vm581, %v9413
      %9500 = vst.msk [vmem:[%s548 + $0x98] sm:$0xff] %vm581, %v9418
      %9501 = vst.msk [vmem:[%s548 + $0xa0] sm:$0xff] %vm581, %v9423
      %9502 = vst.msk [vmem:[%s548 + $0xa8] sm:$0xff] %vm581, %v9428
      %9503 = vst.msk [vmem:[%s548 + $0xb0] sm:$0xff] %vm581, %v9433
      %9504 = vst.msk [vmem:[%s548 + $0xb8] sm:$0xff] %vm581, %v9438
      %9505 = vst.msk [vmem:[%s548 + $0xc0] sm:$0xff] %vm581, %v9443
      %9506 = vst.msk [vmem:[%s548 + $0xc8] sm:$0xff] %vm581, %v9448
      %9507 = vst.msk [vmem:[%s548 + $0xd0] sm:$0xff] %vm581, %v9453
      %9508 = vst.msk [vmem:[%s548 + $0xd8] sm:$0xff] %vm581, %v9458
      %9509 = vst.msk [vmem:[%s548 + $0xe0] sm:$0xff] %vm581, %v9463
      %9510 = vst.msk [vmem:[%s548 + $0xe8] sm:$0xff] %vm581, %v9468
      %9511 = vst.msk [vmem:[%s548 + $0xf0] sm:$0xff] %vm581, %v9473
      %9512 = vst.msk [vmem:[%s548 + $0xf8] sm:$0xff] %vm581, %v9478
      %p9513 = scmp.lt.s32.totalorder %s28, 1
      %s9514 = scalar_select %p9513, %s28, 1
      %s9515 = smul.addr %s9514, 32
      %s9516 = smul.addr %s9515, 8
      %s9517 = scalar_lea.vmem %s17, %s9516
      // Predicated region
      $region96: #{mamba_layer_forward.1} parent=87 // pred_check
        %p9518 = pneg %p408
      $region97: #{mamba_layer_forward.1} parent=87 // pred_check_branch
        %9520 = sbr.rel (%p9518) target = $region99
      $region98: #{mamba_layer_forward.1} parent=87 // pred_region
        _
      $region99: #{mamba_layer_forward.1} parent=87 // pred_fallthru
        _
    $region88: #{mamba_layer_forward.1} parent=5 // pred_fallthru
      _
    %p9521 = scmp.le.s32.totalorder 2, %s23
    // Predicated region
    $region100: #{mamba_layer_forward.1} parent=5 // pred_check
      %p9522 = pneg %p9521
    $region101: #{mamba_layer_forward.1} parent=5 // pred_check_branch
      %9524 = sbr.rel (%p9522) target = $region103
    $region102: #{mamba_layer_forward.1} parent=5 // pred_region
      %s9525 = ssub.s32 %s23, 2
      // Predicated region
      $region104: #{mamba_layer_forward.1} parent=102 // pred_check
        %p9526 = pneg %p414
      $region105: #{mamba_layer_forward.1} parent=102 // pred_check_branch
        %9528 = sbr.rel (%p9526) target = $region107
      $region106: #{mamba_layer_forward.1} parent=102 // pred_region
        %p9529 = scmp.lt.s32.totalorder %s29, 1
        %s9530 = scalar_select %p9529, %s29, 1
        %s9531 = smul.addr %s9530, 32
        %s9532 = smul.addr %s9531, 8
        %s9533 = scalar_lea.vmem %s17, %s9532
      $region107: #{mamba_layer_forward.1} parent=102 // pred_fallthru
        _
    $region103: #{mamba_layer_forward.1} parent=5 // pred_fallthru
      _
  $region6: #{mamba_layer_forward.1} parent=0 // loop_footer
    %s27 = sadd.s32 1, %s23
  $region7: #{mamba_layer_forward.1} parent=0 // loop_footer_branch
    %22 = sbr.rel target = $region3
  $region8: #{mamba_layer_forward.1} parent=0 // loop_exit
    _

</llo_original>
